<compile_context>
chip_gen: v6e
topology: v6e:2x2x1
jax: 0.10.0
libtpu: 0.0.40
codegen_flags: <defaults>
</compile_context>

<pallas_src>
import jax
import jax.numpy as jnp
from jax import lax
from jax.experimental import pallas as pl
from jax.experimental.pallas import tpu as pltpu

EPS = 1e-5


def fused_bn_relu_conv_bn_kernel(x_ref, w_ref, gb1_ref, gb2_ref, o_ref):
    # x_ref  : [C_in, M]      full input (same block every grid step)
    # w_ref  : [Tc,   C_in]   C_out tile of the 1x1 conv weight
    # gb1_ref: [C_in, 2]      BN1 affine, column 0 = gamma, column 1 = beta
    # gb2_ref: [Tc,   2]      BN2 affine tile, same packing
    # o_ref  : [Tc,   M]      output tile
    x = x_ref[...].astype(jnp.float32)
    m = x.shape[1]
    inv_m = 1.0 / float(m)

    g1 = gb1_ref[:, 0:1]                                         # [C_in, 1]
    b1 = gb1_ref[:, 1:2]                                         # [C_in, 1]
    g2 = gb2_ref[:, 0:1]                                         # [Tc, 1]
    b2 = gb2_ref[:, 1:2]                                         # [Tc, 1]

    # ---- BatchNorm2d #1: one-pass stats over pixels (axis -1), per input channel ----
    s1 = jnp.sum(x, axis=-1, keepdims=True)                      # [C_in, 1]
    sq1 = jnp.sum(x * x, axis=-1, keepdims=True)                 # [C_in, 1]
    mean1 = s1 * inv_m
    var1 = jnp.maximum(sq1 * inv_m - mean1 * mean1, 0.0)         # biased variance
    scale1 = g1 * lax.rsqrt(var1 + EPS)                          # [C_in, 1]
    shift1 = b1 - mean1 * scale1                                 # [C_in, 1]

    # ---- BN1 affine + ReLU fused into a single pass over x ----
    xa = jnp.maximum(x * scale1 + shift1, 0.0)                   # [C_in, M]

    # ---- Conv2d 1x1 == channel matmul on the MXU:  [Tc, C_in] @ [C_in, M] ----
    w = w_ref[...].astype(jnp.float32)
    y = jnp.dot(w, xa, preferred_element_type=jnp.float32)       # [Tc, M]

    # ---- BatchNorm2d #2 stats ----
    # Row-sum of y via the MXU (matvec on the much smaller xa row-sum),
    # exact in real arithmetic since sum_pix(W @ xa) = W @ sum_pix(xa).
    rs_xa = jnp.sum(xa, axis=-1, keepdims=True)                  # [C_in, 1]
    s2 = jnp.dot(w, rs_xa, preferred_element_type=jnp.float32)   # [Tc, 1]
    sq2 = jnp.sum(y * y, axis=-1, keepdims=True)                 # [Tc, 1]
    mean2 = s2 * inv_m
    var2 = jnp.maximum(sq2 * inv_m - mean2 * mean2, 0.0)
    scale2 = g2 * lax.rsqrt(var2 + EPS)                          # [Tc, 1]
    shift2 = b2 - mean2 * scale2

    o_ref[...] = (y * scale2 + shift2).astype(o_ref.dtype)


def _default_tile_cout(c_out):
    """512 (whole C_out, single grid step) on v5e/v6e; 256 on v7x so that
    grid=(2,) with "parallel" semantics puts exactly one step on each TC."""
    try:
        kind = jax.devices()[0].device_kind.lower()
    except Exception:
        kind = ""
    if ("v7" in kind or "7x" in kind) and c_out % 256 == 0 and c_out >= 512:
        return 256
    return c_out


def fused_forward(x_nchw, conv_w, g1, b1, g2, b2, *, tile_cout=None):
    """x_nchw: [N, C_in, H, W]; conv_w: [C_out, C_in, 1, 1] (PyTorch layouts)."""
    n, c_in, h, w = x_nchw.shape
    c_out = conv_w.shape[0]
    m = n * h * w

    if tile_cout is None:
        tile_cout = _default_tile_cout(c_out)
    assert c_out % tile_cout == 0

    # NCHW -> [C_in, M].  For N == 1 this is a zero-copy reshape.
    # TODO(synk): for N > 1 this moveaxis costs two HBM round trips; a batched
    # kernel (grid over N, BN stats accumulated in VMEM scratch) would avoid it.
    if n == 1:
        x_mat = x_nchw.reshape(c_in, m)
    else:
        x_mat = jnp.moveaxis(x_nchw, 0, 1).reshape(c_in, m)

    # [C_out, C_in, 1, 1] -> [C_out, C_in]  (zero-copy)
    w_mat = conv_w.reshape(c_out, c_in)

    # Pack BN affine params: column 0 = gamma, column 1 = beta.
    gb1 = jnp.stack([g1, b1], axis=-1).astype(jnp.float32)       # [C_in, 2]
    gb2 = jnp.stack([g2, b2], axis=-1).astype(jnp.float32)       # [C_out, 2]

    grid = (c_out // tile_cout,)

    out = pl.pallas_call(
        fused_bn_relu_conv_bn_kernel,
        out_shape=jax.ShapeDtypeStruct((c_out, m), x_nchw.dtype),
        grid_spec=pltpu.PrefetchScalarGridSpec(
            num_scalar_prefetch=0,
            grid=grid,
            in_specs=[
                pl.BlockSpec((c_in, m), lambda i: (0, 0)),            # x (whole, constant block)
                pl.BlockSpec((tile_cout, c_in), lambda i: (i, 0)),    # W tile
                pl.BlockSpec((c_in, 2), lambda i: (0, 0)),            # packed gamma1/beta1
                pl.BlockSpec((tile_cout, 2), lambda i: (i, 0)),       # packed gamma2/beta2 tile
            ],
            out_specs=pl.BlockSpec((tile_cout, m), lambda i: (i, 0)),
        ),
        compiler_params=pltpu.CompilerParams(
            dimension_semantics=("parallel",)),   # one step per TC on v7x; no-op v5e/v6e
    )(x_mat, w_mat, gb1, gb2)

    # [C_out, M] -> NCHW
    if n == 1:
        return out.reshape(1, c_out, h, w)
    return jnp.moveaxis(out.reshape(c_out, n, h, w), 0, 1)


def reference_forward(x_nchw, conv_w, g1, b1, g2, b2):
    """Pure-JAX reference (train-mode BN) for sanity checking."""
    def bn(x, g, b):
        mean = jnp.mean(x, axis=(0, 2, 3), keepdims=True)
        var = jnp.var(x, axis=(0, 2, 3), keepdims=True)
        xn = (x - mean) * lax.rsqrt(var + EPS)
        return xn * g.reshape(1, -1, 1, 1) + b.reshape(1, -1, 1, 1)

    x = bn(x_nchw, g1, b1)
    x = jnp.maximum(x, 0.0)
    y = lax.conv_general_dilated(
        x, conv_w, window_strides=(1, 1), padding="VALID",
        dimension_numbers=("NCHW", "OIHW", "NCHW"))
    return bn(y, g2, b2)


if __name__ == "__main__":
    key = jax.random.PRNGKey(0)
    k_x, k_w, k_g1, k_b1, k_g2, k_b2 = jax.random.split(key, 6)

    # Channel counts are fixed by the module (128 -> 512); spatial kept small.
    N, C_IN, H, W, C_OUT = 1, 128, 28, 28, 512

    x = jax.random.normal(k_x, (N, C_IN, H, W), dtype=jnp.float32)
    conv_w = jax.random.normal(k_w, (C_OUT, C_IN, 1, 1), dtype=jnp.float32) * 0.05
    gamma1 = 1.0 + 0.1 * jax.random.normal(k_g1, (C_IN,), dtype=jnp.float32)
    beta1 = 0.1 * jax.random.normal(k_b1, (C_IN,), dtype=jnp.float32)
    gamma2 = 1.0 + 0.1 * jax.random.normal(k_g2, (C_OUT,), dtype=jnp.float32)
    beta2 = 0.1 * jax.random.normal(k_b2, (C_OUT,), dtype=jnp.float32)

    out = jax.block_until_ready(
        fused_forward(x, conv_w, gamma1, beta1, gamma2, beta2))

    ref = jax.block_until_ready(
        reference_forward(x, conv_w, gamma1, beta1, gamma2, beta2))

    assert out.shape == (N, C_OUT, H, W), out.shape
    assert jnp.allclose(out, ref, atol=2e-4, rtol=2e-4), float(
        jnp.max(jnp.abs(out - ref)))

    print("KERNEL_OK")
</pallas_src>

<mosaic_0001>
module attributes {stable_mosaic.version = 11 : i64} {
  func.func @fused_bn_relu_conv_bn_kernel(%arg0: i32, %arg1: memref<128x784xf32, #tpu.memory_space<vmem>>, %arg2: memref<512x128xf32, #tpu.memory_space<vmem>>, %arg3: memref<128x2xf32, #tpu.memory_space<vmem>>, %arg4: memref<512x2xf32, #tpu.memory_space<vmem>>, %arg5: memref<512x784xf32, #tpu.memory_space<vmem>>) attributes {dimension_semantics = [#tpu.dimension_semantics<parallel>], iteration_bounds = array<i64: 1>, scalar_prefetch = 0 : i64, scratch_operands = 0 : i64, tpu.core_type = #tpu.core_type<tc>, window_params = [{pipeline_mode = #tpu.pipeline_mode<synchronous>, transform_indices = @transform_0, window_bounds = array<i64: 128, 784>}, {transform_indices = @transform_1, window_bounds = array<i64: 512, 128>}, {pipeline_mode = #tpu.pipeline_mode<synchronous>, transform_indices = @transform_2, window_bounds = array<i64: 128, 2>}, {transform_indices = @transform_3, window_bounds = array<i64: 512, 2>}, {transform_indices = @transform_4, window_bounds = array<i64: 512, 784>}]} {
    %c0 = arith.constant 0 : index
    %c0_0 = arith.constant 0 : index
    %0 = vector.load %arg1[%c0, %c0_0] : memref<128x784xf32, #tpu.memory_space<vmem>>, vector<128x784xf32>
    %c0_1 = arith.constant 0 : index
    %c0_2 = arith.constant 0 : index
    %1 = vector.load %arg3[%c0_1, %c0_2] : memref<128x2xf32, #tpu.memory_space<vmem>>, vector<128x1xf32>
    %c0_3 = arith.constant 0 : index
    %c1 = arith.constant 1 : index
    %2 = vector.load %arg3[%c0_3, %c1] : memref<128x2xf32, #tpu.memory_space<vmem>>, vector<128x1xf32>
    %c0_4 = arith.constant 0 : index
    %c0_5 = arith.constant 0 : index
    %3 = vector.load %arg4[%c0_4, %c0_5] : memref<512x2xf32, #tpu.memory_space<vmem>>, vector<512x1xf32>
    %c0_6 = arith.constant 0 : index
    %c1_7 = arith.constant 1 : index
    %4 = vector.load %arg4[%c0_6, %c1_7] : memref<512x2xf32, #tpu.memory_space<vmem>>, vector<512x1xf32>
    %cst = arith.constant dense<0.000000e+00> : vector<128xf32>
    %5 = vector.multi_reduction <add>, %0, %cst [1] : vector<128x784xf32> to vector<128xf32>
    %6 = vector.shape_cast %5 : vector<128xf32> to vector<128x1xf32>
    %7 = arith.mulf %0, %0 : vector<128x784xf32>
    %cst_8 = arith.constant dense<0.000000e+00> : vector<128xf32>
    %8 = vector.multi_reduction <add>, %7, %cst_8 [1] : vector<128x784xf32> to vector<128xf32>
    %9 = vector.shape_cast %8 : vector<128xf32> to vector<128x1xf32>
    %cst_9 = arith.constant 0.00127551018 : f32
    %10 = vector.broadcast %cst_9 : f32 to vector<128x1xf32>
    %11 = arith.mulf %6, %10 : vector<128x1xf32>
    %cst_10 = arith.constant 0.00127551018 : f32
    %12 = vector.broadcast %cst_10 : f32 to vector<128x1xf32>
    %13 = arith.mulf %9, %12 : vector<128x1xf32>
    %14 = arith.mulf %11, %11 : vector<128x1xf32>
    %15 = arith.subf %13, %14 : vector<128x1xf32>
    %cst_11 = arith.constant 0.000000e+00 : f32
    %16 = vector.broadcast %cst_11 : f32 to vector<128x1xf32>
    %17 = arith.maximumf %15, %16 : vector<128x1xf32>
    %cst_12 = arith.constant 9.99999974E-6 : f32
    %18 = vector.broadcast %cst_12 : f32 to vector<128x1xf32>
    %19 = arith.addf %17, %18 : vector<128x1xf32>
    %20 = math.rsqrt %19 : vector<128x1xf32>
    %21 = arith.mulf %1, %20 : vector<128x1xf32>
    %22 = arith.mulf %11, %21 : vector<128x1xf32>
    %23 = arith.subf %2, %22 : vector<128x1xf32>
    %24 = vector.broadcast %21 : vector<128x1xf32> to vector<128x784xf32>
    %25 = arith.mulf %0, %24 : vector<128x784xf32>
    %26 = vector.broadcast %23 : vector<128x1xf32> to vector<128x784xf32>
    %27 = arith.addf %25, %26 : vector<128x784xf32>
    %cst_13 = arith.constant 0.000000e+00 : f32
    %28 = vector.broadcast %cst_13 : f32 to vector<128x784xf32>
    %29 = arith.maximumf %27, %28 : vector<128x784xf32>
    %c0_14 = arith.constant 0 : index
    %c0_15 = arith.constant 0 : index
    %30 = vector.load %arg2[%c0_14, %c0_15] : memref<512x128xf32, #tpu.memory_space<vmem>>, vector<512x128xf32>
    %cst_16 = arith.constant dense<0.000000e+00> : vector<512x784xf32>
    %31 = tpu.matmul %30, %29, %cst_16 {dimension_numbers = #tpu.dot_dimension_numbers<[1], [0], [0], [1], [0, 0, 1, 1], [], []>} : vector<512x128xf32>, vector<128x784xf32>, vector<512x784xf32> -> vector<512x784xf32>
    %cst_17 = arith.constant dense<0.000000e+00> : vector<128xf32>
    %32 = vector.multi_reduction <add>, %29, %cst_17 [1] : vector<128x784xf32> to vector<128xf32>
    %33 = vector.shape_cast %32 : vector<128xf32> to vector<128x1xf32>
    %cst_18 = arith.constant dense<0.000000e+00> : vector<512x1xf32>
    %34 = tpu.matmul %30, %33, %cst_18 {dimension_numbers = #tpu.dot_dimension_numbers<[1], [0], [0], [1], [0, 0, 1, 1], [], []>} : vector<512x128xf32>, vector<128x1xf32>, vector<512x1xf32> -> vector<512x1xf32>
    %35 = arith.mulf %31, %31 : vector<512x784xf32>
    %cst_19 = arith.constant dense<0.000000e+00> : vector<512xf32>
    %36 = vector.multi_reduction <add>, %35, %cst_19 [1] : vector<512x784xf32> to vector<512xf32>
    %37 = vector.shape_cast %36 : vector<512xf32> to vector<512x1xf32>
    %cst_20 = arith.constant 0.00127551018 : f32
    %38 = vector.broadcast %cst_20 : f32 to vector<512x1xf32>
    %39 = arith.mulf %34, %38 : vector<512x1xf32>
    %cst_21 = arith.constant 0.00127551018 : f32
    %40 = vector.broadcast %cst_21 : f32 to vector<512x1xf32>
    %41 = arith.mulf %37, %40 : vector<512x1xf32>
    %42 = arith.mulf %39, %39 : vector<512x1xf32>
    %43 = arith.subf %41, %42 : vector<512x1xf32>
    %cst_22 = arith.constant 0.000000e+00 : f32
    %44 = vector.broadcast %cst_22 : f32 to vector<512x1xf32>
    %45 = arith.maximumf %43, %44 : vector<512x1xf32>
    %cst_23 = arith.constant 9.99999974E-6 : f32
    %46 = vector.broadcast %cst_23 : f32 to vector<512x1xf32>
    %47 = arith.addf %45, %46 : vector<512x1xf32>
    %48 = math.rsqrt %47 : vector<512x1xf32>
    %49 = arith.mulf %3, %48 : vector<512x1xf32>
    %50 = arith.mulf %39, %49 : vector<512x1xf32>
    %51 = arith.subf %4, %50 : vector<512x1xf32>
    %52 = vector.broadcast %49 : vector<512x1xf32> to vector<512x784xf32>
    %53 = arith.mulf %31, %52 : vector<512x784xf32>
    %54 = vector.broadcast %51 : vector<512x1xf32> to vector<512x784xf32>
    %55 = arith.addf %53, %54 : vector<512x784xf32>
    %c0_24 = arith.constant 0 : index
    %c0_25 = arith.constant 0 : index
    %56 = vector.load %arg5[%c0_24, %c0_25] : memref<512x784xf32, #tpu.memory_space<vmem>>, vector<512x784xf32>
    tpu.vector_store %arg5[%c0_24, %c0_25], %55 {strides = array<i32>} : memref<512x784xf32, #tpu.memory_space<vmem>>, vector<512x784xf32>,
    return
  }
  func.func @transform_0(%arg0: i32) -> (i32, i32) {
    %c0_i32 = arith.constant 0 : i32
    %c0_i32_0 = arith.constant 0 : i32
    %c0_i32_1 = arith.constant 0 : i32
    return %c0_i32, %c0_i32_0 : i32, i32
  }
  func.func @transform_1(%arg0: i32) -> (i32, i32) {
    %c0_i32 = arith.constant 0 : i32
    %c0_i32_0 = arith.constant 0 : i32
    return %arg0, %c0_i32 : i32, i32
  }
  func.func @transform_2(%arg0: i32) -> (i32, i32) {
    %c0_i32 = arith.constant 0 : i32
    %c0_i32_0 = arith.constant 0 : i32
    %c0_i32_1 = arith.constant 0 : i32
    return %c0_i32, %c0_i32_0 : i32, i32
  }
  func.func @transform_3(%arg0: i32) -> (i32, i32) {
    %c0_i32 = arith.constant 0 : i32
    %c0_i32_0 = arith.constant 0 : i32
    return %arg0, %c0_i32 : i32, i32
  }
  func.func @transform_4(%arg0: i32) -> (i32, i32) {
    %c0_i32 = arith.constant 0 : i32
    %c0_i32_0 = arith.constant 0 : i32
    return %arg0, %c0_i32 : i32, i32
  }
}

</mosaic_0001>

<llo_original>
// kernel: tpu_custom_call.1
$region0: #{tpu_custom_call.1}
  #allocation0 [shape = 'u32[]', space=smem, size = 0x4, offset = 0x4, fixed_abs, tag = 'smem constant byte address 0x4 - core index']
  #allocation1 [shape = 'u32[144,128]{1,0:T(1,128)}', space=vmem, size = 0x12000, scoped, tag = 'internal scratch']
  %s0 = inlined_call_operand.vmem [shape: f32[128,784], index: 0, kind: input, shape index: {}]
  %s1 = inlined_call_operand.hbm [shape: f32[512,128], index: 1, kind: input, shape index: {}]
  %s2 = inlined_call_operand.vmem [shape: f32[128,2], index: 2, kind: input, shape index: {}]
  %s3 = inlined_call_operand.vmem [shape: f32[512,2], index: 3, kind: input, shape index: {}]
  %s4 = inlined_call_operand.vmem [shape: f32[512,784], index: 4, kind: output, shape index: {}]
  %s5 = sld [smem:[#allocation0]]
  $region30: #{tpu_custom_call.1} parent=0
    _
  %s7 = ssub.s32 1, %s5
  %s8 = scalar_select 0, %s7, %s5
  $region1: #{tpu_custom_call.1} parent=0
    #allocation2 [shape = 'u8[262144]{0}', space=vmem, size = 0x40000, scoped, tag = 'input window, operand 1, single buffered']
    #allocation3 [shape = 's32[1]{0}', space=sflag, size = 0x4, scoped, tag = 'scoped memory for tpu_custom_call.1']
    %9 = vsyncpa [#allocation3], 0
    // Predicated region
    $region2: #{tpu_custom_call.1} parent=1 // pred_check
      _
    $region3: #{tpu_custom_call.1} parent=1 // pred_check_branch
      %11 = sbr.rel (0) target = $region5
    $region4: #{tpu_custom_call.1} parent=1 // pred_region
      _
    $region5: #{tpu_custom_call.1} parent=1 // pred_fallthru
      _
    // Predicated region
    $region6: #{tpu_custom_call.1} parent=1 // pred_check
      _
    $region7: #{tpu_custom_call.1} parent=1 // pred_check_branch
      %13 = sbr.rel (0) target = $region9
    $region8: #{tpu_custom_call.1} parent=1 // pred_region
      %s15 = ssub.s32 8192, 8192
      %16 = vsyncadd [#allocation3], %s15
      %s17 = sshll.u32 [#allocation2], 4
      %s18 = int_to_ptr.vmem [resolvable:$true] %s17
      %23 = dma.hbm_to_vmem [thread:$0]  %s1, 8192, %s18, [#allocation3], 128, 128, 8
    $region9: #{tpu_custom_call.1} parent=1 // pred_fallthru
      _
    // Predicated region
    $region10: #{tpu_custom_call.1} parent=1 // pred_check
      _
    $region11: #{tpu_custom_call.1} parent=1 // pred_check_branch
      %25 = sbr.rel (0) target = $region13
    $region12: #{tpu_custom_call.1} parent=1 // pred_region
      _
    $region13: #{tpu_custom_call.1} parent=1 // pred_fallthru
      _
    // Predicated region
    $region14: #{tpu_custom_call.1} parent=1 // pred_check
      _
    $region15: #{tpu_custom_call.1} parent=1 // pred_check_branch
      %27 = sbr.rel (0) target = $region17
    $region16: #{tpu_custom_call.1} parent=1 // pred_region
      _
    $region17: #{tpu_custom_call.1} parent=1 // pred_fallthru
      _
    // Predicated region
    $region18: #{tpu_custom_call.1} parent=1 // pred_check
      _
    $region19: #{tpu_custom_call.1} parent=1 // pred_check_branch
      %29 = sbr.rel (0) target = $region21
    $region20: #{tpu_custom_call.1} parent=1 // pred_region
      %30 = dma.done [#allocation3], 8192
    $region21: #{tpu_custom_call.1} parent=1 // pred_fallthru
      _
    %v31 = vld [vmem:[%s0] sm:$0xff]
    %v32 = vld [vmem:[%s0 + $0x8] sm:$0xff]
    %v33 = vld [vmem:[%s0 + $0x10] sm:$0xff]
    %v34 = vld [vmem:[%s0 + $0x18] sm:$0xff]
    %v35 = vld [vmem:[%s0 + $0x20] sm:$0xff]
    %v36 = vld [vmem:[%s0 + $0x28] sm:$0xff]
    %v37 = vld [vmem:[%s0 + $0x30] sm:$0xff]
    %v38 = vld [vmem:[%s0 + $0x38] sm:$0xff]
    %v39 = vld [vmem:[%s0 + $0x40] sm:$0xff]
    %v40 = vld [vmem:[%s0 + $0x48] sm:$0xff]
    %v41 = vld [vmem:[%s0 + $0x50] sm:$0xff]
    %v42 = vld [vmem:[%s0 + $0x58] sm:$0xff]
    %v43 = vld [vmem:[%s0 + $0x60] sm:$0xff]
    %v44 = vld [vmem:[%s0 + $0x68] sm:$0xff]
    %v45 = vld [vmem:[%s0 + $0x70] sm:$0xff]
    %v46 = vld [vmem:[%s0 + $0x78] sm:$0xff]
    %v47 = vld [vmem:[%s0 + $0x80] sm:$0xff]
    %v48 = vld [vmem:[%s0 + $0x88] sm:$0xff]
    %v49 = vld [vmem:[%s0 + $0x90] sm:$0xff]
    %v50 = vld [vmem:[%s0 + $0x98] sm:$0xff]
    %v51 = vld [vmem:[%s0 + $0xa0] sm:$0xff]
    %v52 = vld [vmem:[%s0 + $0xa8] sm:$0xff]
    %v53 = vld [vmem:[%s0 + $0xb0] sm:$0xff]
    %v54 = vld [vmem:[%s0 + $0xb8] sm:$0xff]
    %v55 = vld [vmem:[%s0 + $0xc0] sm:$0xff]
    %v56 = vld [vmem:[%s0 + $0xc8] sm:$0xff]
    %v57 = vld [vmem:[%s0 + $0xd0] sm:$0xff]
    %v58 = vld [vmem:[%s0 + $0xd8] sm:$0xff]
    %v59 = vld [vmem:[%s0 + $0xe0] sm:$0xff]
    %v60 = vld [vmem:[%s0 + $0xe8] sm:$0xff]
    %v61 = vld [vmem:[%s0 + $0xf0] sm:$0xff]
    %v62 = vld [vmem:[%s0 + $0xf8] sm:$0xff]
    %v63 = vld [vmem:[%s0 + $0x100] sm:$0xff]
    %v64 = vld [vmem:[%s0 + $0x108] sm:$0xff]
    %v65 = vld [vmem:[%s0 + $0x110] sm:$0xff]
    %v66 = vld [vmem:[%s0 + $0x118] sm:$0xff]
    %v67 = vld [vmem:[%s0 + $0x120] sm:$0xff]
    %v68 = vld [vmem:[%s0 + $0x128] sm:$0xff]
    %v69 = vld [vmem:[%s0 + $0x130] sm:$0xff]
    %v70 = vld [vmem:[%s0 + $0x138] sm:$0xff]
    %v71 = vld [vmem:[%s0 + $0x140] sm:$0xff]
    %v72 = vld [vmem:[%s0 + $0x148] sm:$0xff]
    %v73 = vld [vmem:[%s0 + $0x150] sm:$0xff]
    %v74 = vld [vmem:[%s0 + $0x158] sm:$0xff]
    %v75 = vld [vmem:[%s0 + $0x160] sm:$0xff]
    %v76 = vld [vmem:[%s0 + $0x168] sm:$0xff]
    %v77 = vld [vmem:[%s0 + $0x170] sm:$0xff]
    %v78 = vld [vmem:[%s0 + $0x178] sm:$0xff]
    %v79 = vld [vmem:[%s0 + $0x180] sm:$0xff]
    %v80 = vld [vmem:[%s0 + $0x188] sm:$0xff]
    %v81 = vld [vmem:[%s0 + $0x190] sm:$0xff]
    %v82 = vld [vmem:[%s0 + $0x198] sm:$0xff]
    %v83 = vld [vmem:[%s0 + $0x1a0] sm:$0xff]
    %v84 = vld [vmem:[%s0 + $0x1a8] sm:$0xff]
    %v85 = vld [vmem:[%s0 + $0x1b0] sm:$0xff]
    %v86 = vld [vmem:[%s0 + $0x1b8] sm:$0xff]
    %v87 = vld [vmem:[%s0 + $0x1c0] sm:$0xff]
    %v88 = vld [vmem:[%s0 + $0x1c8] sm:$0xff]
    %v89 = vld [vmem:[%s0 + $0x1d0] sm:$0xff]
    %v90 = vld [vmem:[%s0 + $0x1d8] sm:$0xff]
    %v91 = vld [vmem:[%s0 + $0x1e0] sm:$0xff]
    %v92 = vld [vmem:[%s0 + $0x1e8] sm:$0xff]
    %v93 = vld [vmem:[%s0 + $0x1f0] sm:$0xff]
    %v94 = vld [vmem:[%s0 + $0x1f8] sm:$0xff]
    %v95 = vld [vmem:[%s0 + $0x200] sm:$0xff]
    %v96 = vld [vmem:[%s0 + $0x208] sm:$0xff]
    %v97 = vld [vmem:[%s0 + $0x210] sm:$0xff]
    %v98 = vld [vmem:[%s0 + $0x218] sm:$0xff]
    %v99 = vld [vmem:[%s0 + $0x220] sm:$0xff]
    %v100 = vld [vmem:[%s0 + $0x228] sm:$0xff]
    %v101 = vld [vmem:[%s0 + $0x230] sm:$0xff]
    %v102 = vld [vmem:[%s0 + $0x238] sm:$0xff]
    %v103 = vld [vmem:[%s0 + $0x240] sm:$0xff]
    %v104 = vld [vmem:[%s0 + $0x248] sm:$0xff]
    %v105 = vld [vmem:[%s0 + $0x250] sm:$0xff]
    %v106 = vld [vmem:[%s0 + $0x258] sm:$0xff]
    %v107 = vld [vmem:[%s0 + $0x260] sm:$0xff]
    %v108 = vld [vmem:[%s0 + $0x268] sm:$0xff]
    %v109 = vld [vmem:[%s0 + $0x270] sm:$0xff]
    %v110 = vld [vmem:[%s0 + $0x278] sm:$0xff]
    %v111 = vld [vmem:[%s0 + $0x280] sm:$0xff]
    %v112 = vld [vmem:[%s0 + $0x288] sm:$0xff]
    %v113 = vld [vmem:[%s0 + $0x290] sm:$0xff]
    %v114 = vld [vmem:[%s0 + $0x298] sm:$0xff]
    %v115 = vld [vmem:[%s0 + $0x2a0] sm:$0xff]
    %v116 = vld [vmem:[%s0 + $0x2a8] sm:$0xff]
    %v117 = vld [vmem:[%s0 + $0x2b0] sm:$0xff]
    %v118 = vld [vmem:[%s0 + $0x2b8] sm:$0xff]
    %v119 = vld [vmem:[%s0 + $0x2c0] sm:$0xff]
    %v120 = vld [vmem:[%s0 + $0x2c8] sm:$0xff]
    %v121 = vld [vmem:[%s0 + $0x2d0] sm:$0xff]
    %v122 = vld [vmem:[%s0 + $0x2d8] sm:$0xff]
    %v123 = vld [vmem:[%s0 + $0x2e0] sm:$0xff]
    %v124 = vld [vmem:[%s0 + $0x2e8] sm:$0xff]
    %v125 = vld [vmem:[%s0 + $0x2f0] sm:$0xff]
    %v126 = vld [vmem:[%s0 + $0x2f8] sm:$0xff]
    %v127 = vld [vmem:[%s0 + $0x300] sm:$0xff]
    %v128 = vld [vmem:[%s0 + $0x308] sm:$0xff]
    %v129 = vld [vmem:[%s0 + $0x310] sm:$0xff]
    %v130 = vld [vmem:[%s0 + $0x318] sm:$0xff]
    %v131 = vld [vmem:[%s0 + $0x320] sm:$0xff]
    %v132 = vld [vmem:[%s0 + $0x328] sm:$0xff]
    %v133 = vld [vmem:[%s0 + $0x330] sm:$0xff]
    %v134 = vld [vmem:[%s0 + $0x338] sm:$0xff]
    %v135 = vld [vmem:[%s0 + $0x340] sm:$0xff]
    %v136 = vld [vmem:[%s0 + $0x348] sm:$0xff]
    %v137 = vld [vmem:[%s0 + $0x350] sm:$0xff]
    %v138 = vld [vmem:[%s0 + $0x358] sm:$0xff]
    %v139 = vld [vmem:[%s0 + $0x360] sm:$0xff]
    %v140 = vld [vmem:[%s0 + $0x368] sm:$0xff]
    %v141 = vld [vmem:[%s0 + $0x370] sm:$0xff]
    %v142 = vld [vmem:[%s0 + $0x378] sm:$0xff]
    %v143 = vld [vmem:[%s2] sm:$0xff]
    %v144 = vld [vmem:[%s2 + $0x8] sm:$0xff]
    %v145 = vld [vmem:[%s2 + $0x10] sm:$0xff]
    %v146 = vld [vmem:[%s2 + $0x18] sm:$0xff]
    %v147 = vld [vmem:[%s2 + $0x20] sm:$0xff]
    %v148 = vld [vmem:[%s2 + $0x28] sm:$0xff]
    %v149 = vld [vmem:[%s2 + $0x30] sm:$0xff]
    %v150 = vld [vmem:[%s2 + $0x38] sm:$0xff]
    %v151 = vld [vmem:[%s2 + $0x40] sm:$0xff]
    %v152 = vld [vmem:[%s2 + $0x48] sm:$0xff]
    %v153 = vld [vmem:[%s2 + $0x50] sm:$0xff]
    %v154 = vld [vmem:[%s2 + $0x58] sm:$0xff]
    %v155 = vld [vmem:[%s2 + $0x60] sm:$0xff]
    %v156 = vld [vmem:[%s2 + $0x68] sm:$0xff]
    %v157 = vld [vmem:[%s2 + $0x70] sm:$0xff]
    %v158 = vld [vmem:[%s2 + $0x78] sm:$0xff]
    %v159 = vld [vmem:[%s3] sm:$0xff]
    %v160 = vld [vmem:[%s3 + $0x8] sm:$0xff]
    %v161 = vld [vmem:[%s3 + $0x10] sm:$0xff]
    %v162 = vld [vmem:[%s3 + $0x18] sm:$0xff]
    %v163 = vld [vmem:[%s3 + $0x20] sm:$0xff]
    %v164 = vld [vmem:[%s3 + $0x28] sm:$0xff]
    %v165 = vld [vmem:[%s3 + $0x30] sm:$0xff]
    %v166 = vld [vmem:[%s3 + $0x38] sm:$0xff]
    %v167 = vld [vmem:[%s3 + $0x40] sm:$0xff]
    %v168 = vld [vmem:[%s3 + $0x48] sm:$0xff]
    %v169 = vld [vmem:[%s3 + $0x50] sm:$0xff]
    %v170 = vld [vmem:[%s3 + $0x58] sm:$0xff]
    %v171 = vld [vmem:[%s3 + $0x60] sm:$0xff]
    %v172 = vld [vmem:[%s3 + $0x68] sm:$0xff]
    %v173 = vld [vmem:[%s3 + $0x70] sm:$0xff]
    %v174 = vld [vmem:[%s3 + $0x78] sm:$0xff]
    %v175 = vld [vmem:[%s3 + $0x80] sm:$0xff]
    %v176 = vld [vmem:[%s3 + $0x88] sm:$0xff]
    %v177 = vld [vmem:[%s3 + $0x90] sm:$0xff]
    %v178 = vld [vmem:[%s3 + $0x98] sm:$0xff]
    %v179 = vld [vmem:[%s3 + $0xa0] sm:$0xff]
    %v180 = vld [vmem:[%s3 + $0xa8] sm:$0xff]
    %v181 = vld [vmem:[%s3 + $0xb0] sm:$0xff]
    %v182 = vld [vmem:[%s3 + $0xb8] sm:$0xff]
    %v183 = vld [vmem:[%s3 + $0xc0] sm:$0xff]
    %v184 = vld [vmem:[%s3 + $0xc8] sm:$0xff]
    %v185 = vld [vmem:[%s3 + $0xd0] sm:$0xff]
    %v186 = vld [vmem:[%s3 + $0xd8] sm:$0xff]
    %v187 = vld [vmem:[%s3 + $0xe0] sm:$0xff]
    %v188 = vld [vmem:[%s3 + $0xe8] sm:$0xff]
    %v189 = vld [vmem:[%s3 + $0xf0] sm:$0xff]
    %v190 = vld [vmem:[%s3 + $0xf8] sm:$0xff]
    %v191 = vld [vmem:[%s3 + $0x100] sm:$0xff]
    %v192 = vld [vmem:[%s3 + $0x108] sm:$0xff]
    %v193 = vld [vmem:[%s3 + $0x110] sm:$0xff]
    %v194 = vld [vmem:[%s3 + $0x118] sm:$0xff]
    %v195 = vld [vmem:[%s3 + $0x120] sm:$0xff]
    %v196 = vld [vmem:[%s3 + $0x128] sm:$0xff]
    %v197 = vld [vmem:[%s3 + $0x130] sm:$0xff]
    %v198 = vld [vmem:[%s3 + $0x138] sm:$0xff]
    %v199 = vld [vmem:[%s3 + $0x140] sm:$0xff]
    %v200 = vld [vmem:[%s3 + $0x148] sm:$0xff]
    %v201 = vld [vmem:[%s3 + $0x150] sm:$0xff]
    %v202 = vld [vmem:[%s3 + $0x158] sm:$0xff]
    %v203 = vld [vmem:[%s3 + $0x160] sm:$0xff]
    %v204 = vld [vmem:[%s3 + $0x168] sm:$0xff]
    %v205 = vld [vmem:[%s3 + $0x170] sm:$0xff]
    %v206 = vld [vmem:[%s3 + $0x178] sm:$0xff]
    %v207 = vld [vmem:[%s3 + $0x180] sm:$0xff]
    %v208 = vld [vmem:[%s3 + $0x188] sm:$0xff]
    %v209 = vld [vmem:[%s3 + $0x190] sm:$0xff]
    %v210 = vld [vmem:[%s3 + $0x198] sm:$0xff]
    %v211 = vld [vmem:[%s3 + $0x1a0] sm:$0xff]
    %v212 = vld [vmem:[%s3 + $0x1a8] sm:$0xff]
    %v213 = vld [vmem:[%s3 + $0x1b0] sm:$0xff]
    %v214 = vld [vmem:[%s3 + $0x1b8] sm:$0xff]
    %v215 = vld [vmem:[%s3 + $0x1c0] sm:$0xff]
    %v216 = vld [vmem:[%s3 + $0x1c8] sm:$0xff]
    %v217 = vld [vmem:[%s3 + $0x1d0] sm:$0xff]
    %v218 = vld [vmem:[%s3 + $0x1d8] sm:$0xff]
    %v219 = vld [vmem:[%s3 + $0x1e0] sm:$0xff]
    %v220 = vld [vmem:[%s3 + $0x1e8] sm:$0xff]
    %v221 = vld [vmem:[%s3 + $0x1f0] sm:$0xff]
    %v222 = vld [vmem:[%s3 + $0x1f8] sm:$0xff]
    %v223 = vadd.f32 %v31, %v32
    %v224 = vadd.f32 %v223, %v33
    %v225 = vadd.f32 %v224, %v34
    %v226 = vadd.f32 %v225, %v35
    %v227 = vadd.f32 %v226, %v36
    %vm228 = vcmask 130048
    %v229 = vsel %vm228, %v37, 0.0
    %v230 = vadd.f32 %v227, %v229
    %231 = vadd.xlane.f32.xlu0 %v230
    %v232 = vpop.xlane.xlu0 %231
    %v233 = vadd.f32 %v38, %v39
    %v234 = vadd.f32 %v233, %v40
    %v235 = vadd.f32 %v234, %v41
    %v236 = vadd.f32 %v235, %v42
    %v237 = vadd.f32 %v236, %v43
    %v238 = vsel %vm228, %v44, 0.0
    %v239 = vadd.f32 %v237, %v238
    %240 = vadd.xlane.f32.xlu0 %v239
    %v241 = vpop.xlane.xlu0 %240
    %v242 = vadd.f32 %v45, %v46
    %v243 = vadd.f32 %v242, %v47
    %v244 = vadd.f32 %v243, %v48
    %v245 = vadd.f32 %v244, %v49
    %v246 = vadd.f32 %v245, %v50
    %v247 = vsel %vm228, %v51, 0.0
    %v248 = vadd.f32 %v246, %v247
    %249 = vadd.xlane.f32.xlu0 %v248
    %v250 = vpop.xlane.xlu0 %249
    %v251 = vadd.f32 %v52, %v53
    %v252 = vadd.f32 %v251, %v54
    %v253 = vadd.f32 %v252, %v55
    %v254 = vadd.f32 %v253, %v56
    %v255 = vadd.f32 %v254, %v57
    %v256 = vsel %vm228, %v58, 0.0
    %v257 = vadd.f32 %v255, %v256
    %258 = vadd.xlane.f32.xlu0 %v257
    %v259 = vpop.xlane.xlu0 %258
    %v260 = vadd.f32 %v59, %v60
    %v261 = vadd.f32 %v260, %v61
    %v262 = vadd.f32 %v261, %v62
    %v263 = vadd.f32 %v262, %v63
    %v264 = vadd.f32 %v263, %v64
    %v265 = vsel %vm228, %v65, 0.0
    %v266 = vadd.f32 %v264, %v265
    %267 = vadd.xlane.f32.xlu0 %v266
    %v268 = vpop.xlane.xlu0 %267
    %v269 = vadd.f32 %v66, %v67
    %v270 = vadd.f32 %v269, %v68
    %v271 = vadd.f32 %v270, %v69
    %v272 = vadd.f32 %v271, %v70
    %v273 = vadd.f32 %v272, %v71
    %v274 = vsel %vm228, %v72, 0.0
    %v275 = vadd.f32 %v273, %v274
    %276 = vadd.xlane.f32.xlu0 %v275
    %v277 = vpop.xlane.xlu0 %276
    %v278 = vadd.f32 %v73, %v74
    %v279 = vadd.f32 %v278, %v75
    %v280 = vadd.f32 %v279, %v76
    %v281 = vadd.f32 %v280, %v77
    %v282 = vadd.f32 %v281, %v78
    %v283 = vsel %vm228, %v79, 0.0
    %v284 = vadd.f32 %v282, %v283
    %285 = vadd.xlane.f32.xlu0 %v284
    %v286 = vpop.xlane.xlu0 %285
    %v287 = vadd.f32 %v80, %v81
    %v288 = vadd.f32 %v287, %v82
    %v289 = vadd.f32 %v288, %v83
    %v290 = vadd.f32 %v289, %v84
    %v291 = vadd.f32 %v290, %v85
    %v292 = vsel %vm228, %v86, 0.0
    %v293 = vadd.f32 %v291, %v292
    %294 = vadd.xlane.f32.xlu0 %v293
    %v295 = vpop.xlane.xlu0 %294
    %v296 = vadd.f32 %v87, %v88
    %v297 = vadd.f32 %v296, %v89
    %v298 = vadd.f32 %v297, %v90
    %v299 = vadd.f32 %v298, %v91
    %v300 = vadd.f32 %v299, %v92
    %v301 = vsel %vm228, %v93, 0.0
    %v302 = vadd.f32 %v300, %v301
    %303 = vadd.xlane.f32.xlu0 %v302
    %v304 = vpop.xlane.xlu0 %303
    %v305 = vadd.f32 %v94, %v95
    %v306 = vadd.f32 %v305, %v96
    %v307 = vadd.f32 %v306, %v97
    %v308 = vadd.f32 %v307, %v98
    %v309 = vadd.f32 %v308, %v99
    %v310 = vsel %vm228, %v100, 0.0
    %v311 = vadd.f32 %v309, %v310
    %312 = vadd.xlane.f32.xlu0 %v311
    %v313 = vpop.xlane.xlu0 %312
    %v314 = vadd.f32 %v101, %v102
    %v315 = vadd.f32 %v314, %v103
    %v316 = vadd.f32 %v315, %v104
    %v317 = vadd.f32 %v316, %v105
    %v318 = vadd.f32 %v317, %v106
    %v319 = vsel %vm228, %v107, 0.0
    %v320 = vadd.f32 %v318, %v319
    %321 = vadd.xlane.f32.xlu0 %v320
    %v322 = vpop.xlane.xlu0 %321
    %v323 = vadd.f32 %v108, %v109
    %v324 = vadd.f32 %v323, %v110
    %v325 = vadd.f32 %v324, %v111
    %v326 = vadd.f32 %v325, %v112
    %v327 = vadd.f32 %v326, %v113
    %v328 = vsel %vm228, %v114, 0.0
    %v329 = vadd.f32 %v327, %v328
    %330 = vadd.xlane.f32.xlu0 %v329
    %v331 = vpop.xlane.xlu0 %330
    %v332 = vadd.f32 %v115, %v116
    %v333 = vadd.f32 %v332, %v117
    %v334 = vadd.f32 %v333, %v118
    %v335 = vadd.f32 %v334, %v119
    %v336 = vadd.f32 %v335, %v120
    %v337 = vsel %vm228, %v121, 0.0
    %v338 = vadd.f32 %v336, %v337
    %339 = vadd.xlane.f32.xlu0 %v338
    %v340 = vpop.xlane.xlu0 %339
    %v341 = vadd.f32 %v122, %v123
    %v342 = vadd.f32 %v341, %v124
    %v343 = vadd.f32 %v342, %v125
    %v344 = vadd.f32 %v343, %v126
    %v345 = vadd.f32 %v344, %v127
    %v346 = vsel %vm228, %v128, 0.0
    %v347 = vadd.f32 %v345, %v346
    %348 = vadd.xlane.f32.xlu0 %v347
    %v349 = vpop.xlane.xlu0 %348
    %v350 = vadd.f32 %v129, %v130
    %v351 = vadd.f32 %v350, %v131
    %v352 = vadd.f32 %v351, %v132
    %v353 = vadd.f32 %v352, %v133
    %v354 = vadd.f32 %v353, %v134
    %v355 = vsel %vm228, %v135, 0.0
    %v356 = vadd.f32 %v354, %v355
    %357 = vadd.xlane.f32.xlu0 %v356
    %v358 = vpop.xlane.xlu0 %357
    %v359 = vadd.f32 %v136, %v137
    %v360 = vadd.f32 %v359, %v138
    %v361 = vadd.f32 %v360, %v139
    %v362 = vadd.f32 %v361, %v140
    %v363 = vadd.f32 %v362, %v141
    %v364 = vsel %vm228, %v142, 0.0
    %v365 = vadd.f32 %v363, %v364
    %366 = vadd.xlane.f32.xlu0 %v365
    %v367 = vpop.xlane.xlu0 %366
    %v368 = vmul.f32 %v31, %v31
    %v369 = vmul.f32 %v32, %v32
    %v370 = vmul.f32 %v33, %v33
    %v371 = vmul.f32 %v34, %v34
    %v372 = vmul.f32 %v35, %v35
    %v373 = vmul.f32 %v36, %v36
    %v374 = vmul.f32 %v37, %v37
    %v375 = vmul.f32 %v38, %v38
    %v376 = vmul.f32 %v39, %v39
    %v377 = vmul.f32 %v40, %v40
    %v378 = vmul.f32 %v41, %v41
    %v379 = vmul.f32 %v42, %v42
    %v380 = vmul.f32 %v43, %v43
    %v381 = vmul.f32 %v44, %v44
    %v382 = vmul.f32 %v45, %v45
    %v383 = vmul.f32 %v46, %v46
    %v384 = vmul.f32 %v47, %v47
    %v385 = vmul.f32 %v48, %v48
    %v386 = vmul.f32 %v49, %v49
    %v387 = vmul.f32 %v50, %v50
    %v388 = vmul.f32 %v51, %v51
    %v389 = vmul.f32 %v52, %v52
    %v390 = vmul.f32 %v53, %v53
    %v391 = vmul.f32 %v54, %v54
    %v392 = vmul.f32 %v55, %v55
    %v393 = vmul.f32 %v56, %v56
    %v394 = vmul.f32 %v57, %v57
    %v395 = vmul.f32 %v58, %v58
    %v396 = vmul.f32 %v59, %v59
    %v397 = vmul.f32 %v60, %v60
    %v398 = vmul.f32 %v61, %v61
    %v399 = vmul.f32 %v62, %v62
    %v400 = vmul.f32 %v63, %v63
    %v401 = vmul.f32 %v64, %v64
    %v402 = vmul.f32 %v65, %v65
    %v403 = vmul.f32 %v66, %v66
    %v404 = vmul.f32 %v67, %v67
    %v405 = vmul.f32 %v68, %v68
    %v406 = vmul.f32 %v69, %v69
    %v407 = vmul.f32 %v70, %v70
    %v408 = vmul.f32 %v71, %v71
    %v409 = vmul.f32 %v72, %v72
    %v410 = vmul.f32 %v73, %v73
    %v411 = vmul.f32 %v74, %v74
    %v412 = vmul.f32 %v75, %v75
    %v413 = vmul.f32 %v76, %v76
    %v414 = vmul.f32 %v77, %v77
    %v415 = vmul.f32 %v78, %v78
    %v416 = vmul.f32 %v79, %v79
    %v417 = vmul.f32 %v80, %v80
    %v418 = vmul.f32 %v81, %v81
    %v419 = vmul.f32 %v82, %v82
    %v420 = vmul.f32 %v83, %v83
    %v421 = vmul.f32 %v84, %v84
    %v422 = vmul.f32 %v85, %v85
    %v423 = vmul.f32 %v86, %v86
    %v424 = vmul.f32 %v87, %v87
    %v425 = vmul.f32 %v88, %v88
    %v426 = vmul.f32 %v89, %v89
    %v427 = vmul.f32 %v90, %v90
    %v428 = vmul.f32 %v91, %v91
    %v429 = vmul.f32 %v92, %v92
    %v430 = vmul.f32 %v93, %v93
    %v431 = vmul.f32 %v94, %v94
    %v432 = vmul.f32 %v95, %v95
    %v433 = vmul.f32 %v96, %v96
    %v434 = vmul.f32 %v97, %v97
    %v435 = vmul.f32 %v98, %v98
    %v436 = vmul.f32 %v99, %v99
    %v437 = vmul.f32 %v100, %v100
    %v438 = vmul.f32 %v101, %v101
    %v439 = vmul.f32 %v102, %v102
    %v440 = vmul.f32 %v103, %v103
    %v441 = vmul.f32 %v104, %v104
    %v442 = vmul.f32 %v105, %v105
    %v443 = vmul.f32 %v106, %v106
    %v444 = vmul.f32 %v107, %v107
    %v445 = vmul.f32 %v108, %v108
    %v446 = vmul.f32 %v109, %v109
    %v447 = vmul.f32 %v110, %v110
    %v448 = vmul.f32 %v111, %v111
    %v449 = vmul.f32 %v112, %v112
    %v450 = vmul.f32 %v113, %v113
    %v451 = vmul.f32 %v114, %v114
    %v452 = vmul.f32 %v115, %v115
    %v453 = vmul.f32 %v116, %v116
    %v454 = vmul.f32 %v117, %v117
    %v455 = vmul.f32 %v118, %v118
    %v456 = vmul.f32 %v119, %v119
    %v457 = vmul.f32 %v120, %v120
    %v458 = vmul.f32 %v121, %v121
    %v459 = vmul.f32 %v122, %v122
    %v460 = vmul.f32 %v123, %v123
    %v461 = vmul.f32 %v124, %v124
    %v462 = vmul.f32 %v125, %v125
    %v463 = vmul.f32 %v126, %v126
    %v464 = vmul.f32 %v127, %v127
    %v465 = vmul.f32 %v128, %v128
    %v466 = vmul.f32 %v129, %v129
    %v467 = vmul.f32 %v130, %v130
    %v468 = vmul.f32 %v131, %v131
    %v469 = vmul.f32 %v132, %v132
    %v470 = vmul.f32 %v133, %v133
    %v471 = vmul.f32 %v134, %v134
    %v472 = vmul.f32 %v135, %v135
    %v473 = vmul.f32 %v136, %v136
    %v474 = vmul.f32 %v137, %v137
    %v475 = vmul.f32 %v138, %v138
    %v476 = vmul.f32 %v139, %v139
    %v477 = vmul.f32 %v140, %v140
    %v478 = vmul.f32 %v141, %v141
    %v479 = vmul.f32 %v142, %v142
    %v480 = vadd.f32 %v368, %v369
    %v481 = vadd.f32 %v480, %v370
    %v482 = vadd.f32 %v481, %v371
    %v483 = vadd.f32 %v482, %v372
    %v484 = vadd.f32 %v483, %v373
    %v485 = vsel %vm228, %v374, 0.0
    %v486 = vadd.f32 %v484, %v485
    %487 = vadd.xlane.f32.xlu0 %v486
    %v488 = vpop.xlane.xlu0 %487
    %v489 = vadd.f32 %v375, %v376
    %v490 = vadd.f32 %v489, %v377
    %v491 = vadd.f32 %v490, %v378
    %v492 = vadd.f32 %v491, %v379
    %v493 = vadd.f32 %v492, %v380
    %v494 = vsel %vm228, %v381, 0.0
    %v495 = vadd.f32 %v493, %v494
    %496 = vadd.xlane.f32.xlu0 %v495
    %v497 = vpop.xlane.xlu0 %496
    %v498 = vadd.f32 %v382, %v383
    %v499 = vadd.f32 %v498, %v384
    %v500 = vadd.f32 %v499, %v385
    %v501 = vadd.f32 %v500, %v386
    %v502 = vadd.f32 %v501, %v387
    %v503 = vsel %vm228, %v388, 0.0
    %v504 = vadd.f32 %v502, %v503
    %505 = vadd.xlane.f32.xlu0 %v504
    %v506 = vpop.xlane.xlu0 %505
    %v507 = vadd.f32 %v389, %v390
    %v508 = vadd.f32 %v507, %v391
    %v509 = vadd.f32 %v508, %v392
    %v510 = vadd.f32 %v509, %v393
    %v511 = vadd.f32 %v510, %v394
    %v512 = vsel %vm228, %v395, 0.0
    %v513 = vadd.f32 %v511, %v512
    %514 = vadd.xlane.f32.xlu0 %v513
    %v515 = vpop.xlane.xlu0 %514
    %v516 = vadd.f32 %v396, %v397
    %v517 = vadd.f32 %v516, %v398
    %v518 = vadd.f32 %v517, %v399
    %v519 = vadd.f32 %v518, %v400
    %v520 = vadd.f32 %v519, %v401
    %v521 = vsel %vm228, %v402, 0.0
    %v522 = vadd.f32 %v520, %v521
    %523 = vadd.xlane.f32.xlu0 %v522
    %v524 = vpop.xlane.xlu0 %523
    %v525 = vadd.f32 %v403, %v404
    %v526 = vadd.f32 %v525, %v405
    %v527 = vadd.f32 %v526, %v406
    %v528 = vadd.f32 %v527, %v407
    %v529 = vadd.f32 %v528, %v408
    %v530 = vsel %vm228, %v409, 0.0
    %v531 = vadd.f32 %v529, %v530
    %532 = vadd.xlane.f32.xlu0 %v531
    %v533 = vpop.xlane.xlu0 %532
    %v534 = vadd.f32 %v410, %v411
    %v535 = vadd.f32 %v534, %v412
    %v536 = vadd.f32 %v535, %v413
    %v537 = vadd.f32 %v536, %v414
    %v538 = vadd.f32 %v537, %v415
    %v539 = vsel %vm228, %v416, 0.0
    %v540 = vadd.f32 %v538, %v539
    %541 = vadd.xlane.f32.xlu0 %v540
    %v542 = vpop.xlane.xlu0 %541
    %v543 = vadd.f32 %v417, %v418
    %v544 = vadd.f32 %v543, %v419
    %v545 = vadd.f32 %v544, %v420
    %v546 = vadd.f32 %v545, %v421
    %v547 = vadd.f32 %v546, %v422
    %v548 = vsel %vm228, %v423, 0.0
    %v549 = vadd.f32 %v547, %v548
    %550 = vadd.xlane.f32.xlu0 %v549
    %v551 = vpop.xlane.xlu0 %550
    %v552 = vadd.f32 %v424, %v425
    %v553 = vadd.f32 %v552, %v426
    %v554 = vadd.f32 %v553, %v427
    %v555 = vadd.f32 %v554, %v428
    %v556 = vadd.f32 %v555, %v429
    %v557 = vsel %vm228, %v430, 0.0
    %v558 = vadd.f32 %v556, %v557
    %559 = vadd.xlane.f32.xlu0 %v558
    %v560 = vpop.xlane.xlu0 %559
    %v561 = vadd.f32 %v431, %v432
    %v562 = vadd.f32 %v561, %v433
    %v563 = vadd.f32 %v562, %v434
    %v564 = vadd.f32 %v563, %v435
    %v565 = vadd.f32 %v564, %v436
    %v566 = vsel %vm228, %v437, 0.0
    %v567 = vadd.f32 %v565, %v566
    %568 = vadd.xlane.f32.xlu0 %v567
    %v569 = vpop.xlane.xlu0 %568
    %v570 = vadd.f32 %v438, %v439
    %v571 = vadd.f32 %v570, %v440
    %v572 = vadd.f32 %v571, %v441
    %v573 = vadd.f32 %v572, %v442
    %v574 = vadd.f32 %v573, %v443
    %v575 = vsel %vm228, %v444, 0.0
    %v576 = vadd.f32 %v574, %v575
    %577 = vadd.xlane.f32.xlu0 %v576
    %v578 = vpop.xlane.xlu0 %577
    %v579 = vadd.f32 %v445, %v446
    %v580 = vadd.f32 %v579, %v447
    %v581 = vadd.f32 %v580, %v448
    %v582 = vadd.f32 %v581, %v449
    %v583 = vadd.f32 %v582, %v450
    %v584 = vsel %vm228, %v451, 0.0
    %v585 = vadd.f32 %v583, %v584
    %586 = vadd.xlane.f32.xlu0 %v585
    %v587 = vpop.xlane.xlu0 %586
    %v588 = vadd.f32 %v452, %v453
    %v589 = vadd.f32 %v588, %v454
    %v590 = vadd.f32 %v589, %v455
    %v591 = vadd.f32 %v590, %v456
    %v592 = vadd.f32 %v591, %v457
    %v593 = vsel %vm228, %v458, 0.0
    %v594 = vadd.f32 %v592, %v593
    %595 = vadd.xlane.f32.xlu0 %v594
    %v596 = vpop.xlane.xlu0 %595
    %v597 = vadd.f32 %v459, %v460
    %v598 = vadd.f32 %v597, %v461
    %v599 = vadd.f32 %v598, %v462
    %v600 = vadd.f32 %v599, %v463
    %v601 = vadd.f32 %v600, %v464
    %v602 = vsel %vm228, %v465, 0.0
    %v603 = vadd.f32 %v601, %v602
    %604 = vadd.xlane.f32.xlu0 %v603
    %v605 = vpop.xlane.xlu0 %604
    %v606 = vadd.f32 %v466, %v467
    %v607 = vadd.f32 %v606, %v468
    %v608 = vadd.f32 %v607, %v469
    %v609 = vadd.f32 %v608, %v470
    %v610 = vadd.f32 %v609, %v471
    %v611 = vsel %vm228, %v472, 0.0
    %v612 = vadd.f32 %v610, %v611
    %613 = vadd.xlane.f32.xlu0 %v612
    %v614 = vpop.xlane.xlu0 %613
    %v615 = vadd.f32 %v473, %v474
    %v616 = vadd.f32 %v615, %v475
    %v617 = vadd.f32 %v616, %v476
    %v618 = vadd.f32 %v617, %v477
    %v619 = vadd.f32 %v618, %v478
    %v620 = vsel %vm228, %v479, 0.0
    %v621 = vadd.f32 %v619, %v620
    %622 = vadd.xlane.f32.xlu0 %v621
    %v623 = vpop.xlane.xlu0 %622
    %v624 = vmul.f32 %v232, 0.0012755102
    %v625 = vmul.f32 %v241, 0.0012755102
    %v626 = vmul.f32 %v250, 0.0012755102
    %v627 = vmul.f32 %v259, 0.0012755102
    %v628 = vmul.f32 %v268, 0.0012755102
    %v629 = vmul.f32 %v277, 0.0012755102
    %v630 = vmul.f32 %v286, 0.0012755102
    %v631 = vmul.f32 %v295, 0.0012755102
    %v632 = vmul.f32 %v304, 0.0012755102
    %v633 = vmul.f32 %v313, 0.0012755102
    %v634 = vmul.f32 %v322, 0.0012755102
    %v635 = vmul.f32 %v331, 0.0012755102
    %v636 = vmul.f32 %v340, 0.0012755102
    %v637 = vmul.f32 %v349, 0.0012755102
    %v638 = vmul.f32 %v358, 0.0012755102
    %v639 = vmul.f32 %v367, 0.0012755102
    %v640 = vmul.f32 %v488, 0.0012755102
    %v641 = vmul.f32 %v497, 0.0012755102
    %v642 = vmul.f32 %v506, 0.0012755102
    %v643 = vmul.f32 %v515, 0.0012755102
    %v644 = vmul.f32 %v524, 0.0012755102
    %v645 = vmul.f32 %v533, 0.0012755102
    %v646 = vmul.f32 %v542, 0.0012755102
    %v647 = vmul.f32 %v551, 0.0012755102
    %v648 = vmul.f32 %v560, 0.0012755102
    %v649 = vmul.f32 %v569, 0.0012755102
    %v650 = vmul.f32 %v578, 0.0012755102
    %v651 = vmul.f32 %v587, 0.0012755102
    %v652 = vmul.f32 %v596, 0.0012755102
    %v653 = vmul.f32 %v605, 0.0012755102
    %v654 = vmul.f32 %v614, 0.0012755102
    %v655 = vmul.f32 %v623, 0.0012755102
    %v656 = vmul.f32 %v624, %v624
    %v657 = vmul.f32 %v625, %v625
    %v658 = vmul.f32 %v626, %v626
    %v659 = vmul.f32 %v627, %v627
    %v660 = vmul.f32 %v628, %v628
    %v661 = vmul.f32 %v629, %v629
    %v662 = vmul.f32 %v630, %v630
    %v663 = vmul.f32 %v631, %v631
    %v664 = vmul.f32 %v632, %v632
    %v665 = vmul.f32 %v633, %v633
    %v666 = vmul.f32 %v634, %v634
    %v667 = vmul.f32 %v635, %v635
    %v668 = vmul.f32 %v636, %v636
    %v669 = vmul.f32 %v637, %v637
    %v670 = vmul.f32 %v638, %v638
    %v671 = vmul.f32 %v639, %v639
    %v672 = vsub.f32 %v640, %v656
    %v673 = vsub.f32 %v641, %v657
    %v674 = vsub.f32 %v642, %v658
    %v675 = vsub.f32 %v643, %v659
    %v676 = vsub.f32 %v644, %v660
    %v677 = vsub.f32 %v645, %v661
    %v678 = vsub.f32 %v646, %v662
    %v679 = vsub.f32 %v647, %v663
    %v680 = vsub.f32 %v648, %v664
    %v681 = vsub.f32 %v649, %v665
    %v682 = vsub.f32 %v650, %v666
    %v683 = vsub.f32 %v651, %v667
    %v684 = vsub.f32 %v652, %v668
    %v685 = vsub.f32 %v653, %v669
    %v686 = vsub.f32 %v654, %v670
    %v687 = vsub.f32 %v655, %v671
    %v688 = vmax.f32 %v672, 0.0
    %v689 = vmax.f32 %v673, 0.0
    %v690 = vmax.f32 %v674, 0.0
    %v691 = vmax.f32 %v675, 0.0
    %v692 = vmax.f32 %v676, 0.0
    %v693 = vmax.f32 %v677, 0.0
    %v694 = vmax.f32 %v678, 0.0
    %v695 = vmax.f32 %v679, 0.0
    %v696 = vmax.f32 %v680, 0.0
    %v697 = vmax.f32 %v681, 0.0
    %v698 = vmax.f32 %v682, 0.0
    %v699 = vmax.f32 %v683, 0.0
    %v700 = vmax.f32 %v684, 0.0
    %v701 = vmax.f32 %v685, 0.0
    %v702 = vmax.f32 %v686, 0.0
    %v703 = vmax.f32 %v687, 0.0
    %v704 = vadd.f32 %v688, 1e-05
    %v705 = vadd.f32 %v689, 1e-05
    %v706 = vadd.f32 %v690, 1e-05
    %v707 = vadd.f32 %v691, 1e-05
    %v708 = vadd.f32 %v692, 1e-05
    %v709 = vadd.f32 %v693, 1e-05
    %v710 = vadd.f32 %v694, 1e-05
    %v711 = vadd.f32 %v695, 1e-05
    %v712 = vadd.f32 %v696, 1e-05
    %v713 = vadd.f32 %v697, 1e-05
    %v714 = vadd.f32 %v698, 1e-05
    %v715 = vadd.f32 %v699, 1e-05
    %v716 = vadd.f32 %v700, 1e-05
    %v717 = vadd.f32 %v701, 1e-05
    %v718 = vadd.f32 %v702, 1e-05
    %v719 = vadd.f32 %v703, 1e-05
    %v720 = vrsqrt.pop %v704
    %v721 = vrsqrt.pop %v705
    %v722 = vrsqrt.pop %v706
    %v723 = vrsqrt.pop %v707
    %v724 = vrsqrt.pop %v708
    %v725 = vrsqrt.pop %v709
    %v726 = vrsqrt.pop %v710
    %v727 = vrsqrt.pop %v711
    %v728 = vrsqrt.pop %v712
    %v729 = vrsqrt.pop %v713
    %v730 = vrsqrt.pop %v714
    %v731 = vrsqrt.pop %v715
    %v732 = vrsqrt.pop %v716
    %v733 = vrsqrt.pop %v717
    %v734 = vrsqrt.pop %v718
    %v735 = vrsqrt.pop %v719
    %v736 = vmul.f32 %v143, %v720
    %v737 = vmul.f32 %v144, %v721
    %v738 = vmul.f32 %v145, %v722
    %v739 = vmul.f32 %v146, %v723
    %v740 = vmul.f32 %v147, %v724
    %v741 = vmul.f32 %v148, %v725
    %v742 = vmul.f32 %v149, %v726
    %v743 = vmul.f32 %v150, %v727
    %v744 = vmul.f32 %v151, %v728
    %v745 = vmul.f32 %v152, %v729
    %v746 = vmul.f32 %v153, %v730
    %v747 = vmul.f32 %v154, %v731
    %v748 = vmul.f32 %v155, %v732
    %v749 = vmul.f32 %v156, %v733
    %v750 = vmul.f32 %v157, %v734
    %v751 = vmul.f32 %v158, %v735
    %v752 = vmul.f32 %v624, %v736
    %v753 = vmul.f32 %v625, %v737
    %v754 = vmul.f32 %v626, %v738
    %v755 = vmul.f32 %v627, %v739
    %v756 = vmul.f32 %v628, %v740
    %v757 = vmul.f32 %v629, %v741
    %v758 = vmul.f32 %v630, %v742
    %v759 = vmul.f32 %v631, %v743
    %v760 = vmul.f32 %v632, %v744
    %v761 = vmul.f32 %v633, %v745
    %v762 = vmul.f32 %v634, %v746
    %v763 = vmul.f32 %v635, %v747
    %v764 = vmul.f32 %v636, %v748
    %v765 = vmul.f32 %v637, %v749
    %v766 = vmul.f32 %v638, %v750
    %v767 = vmul.f32 %v639, %v751
    %784 = vrot.lane.b32.xlu0 %v752, 1
    %v785 = vpop.permute.xlu0 %784
    %786 = vrot.lane.b32.xlu0 %v753, 1
    %v787 = vpop.permute.xlu0 %786
    %788 = vrot.lane.b32.xlu0 %v754, 1
    %v789 = vpop.permute.xlu0 %788
    %790 = vrot.lane.b32.xlu0 %v755, 1
    %v791 = vpop.permute.xlu0 %790
    %792 = vrot.lane.b32.xlu0 %v756, 1
    %v793 = vpop.permute.xlu0 %792
    %794 = vrot.lane.b32.xlu0 %v757, 1
    %v795 = vpop.permute.xlu0 %794
    %796 = vrot.lane.b32.xlu0 %v758, 1
    %v797 = vpop.permute.xlu0 %796
    %798 = vrot.lane.b32.xlu0 %v759, 1
    %v799 = vpop.permute.xlu0 %798
    %800 = vrot.lane.b32.xlu0 %v760, 1
    %v801 = vpop.permute.xlu0 %800
    %802 = vrot.lane.b32.xlu0 %v761, 1
    %v803 = vpop.permute.xlu0 %802
    %804 = vrot.lane.b32.xlu0 %v762, 1
    %v805 = vpop.permute.xlu0 %804
    %806 = vrot.lane.b32.xlu0 %v763, 1
    %v807 = vpop.permute.xlu0 %806
    %808 = vrot.lane.b32.xlu0 %v764, 1
    %v809 = vpop.permute.xlu0 %808
    %810 = vrot.lane.b32.xlu0 %v765, 1
    %v811 = vpop.permute.xlu0 %810
    %812 = vrot.lane.b32.xlu0 %v766, 1
    %v813 = vpop.permute.xlu0 %812
    %814 = vrot.lane.b32.xlu0 %v767, 1
    %v815 = vpop.permute.xlu0 %814
    %v832 = vsub.f32 %v143, %v785
    %v833 = vsub.f32 %v144, %v787
    %v834 = vsub.f32 %v145, %v789
    %v835 = vsub.f32 %v146, %v791
    %v836 = vsub.f32 %v147, %v793
    %v837 = vsub.f32 %v148, %v795
    %v838 = vsub.f32 %v149, %v797
    %v839 = vsub.f32 %v150, %v799
    %v840 = vsub.f32 %v151, %v801
    %v841 = vsub.f32 %v152, %v803
    %v842 = vsub.f32 %v153, %v805
    %v843 = vsub.f32 %v154, %v807
    %v844 = vsub.f32 %v155, %v809
    %v845 = vsub.f32 %v156, %v811
    %v846 = vsub.f32 %v157, %v813
    %v847 = vsub.f32 %v158, %v815
    %849 = vset.pattern.permute.xlu0 0
    %850 = vperm.xlu0 %849, %v736
    %v851 = vpop.permute.xlu0 %850
    %854 = vset.pattern.permute.xlu0 0
    %855 = vperm.xlu0 %854, %v737
    %v856 = vpop.permute.xlu0 %855
    %859 = vset.pattern.permute.xlu0 0
    %860 = vperm.xlu0 %859, %v738
    %v861 = vpop.permute.xlu0 %860
    %864 = vset.pattern.permute.xlu0 0
    %865 = vperm.xlu0 %864, %v739
    %v866 = vpop.permute.xlu0 %865
    %869 = vset.pattern.permute.xlu0 0
    %870 = vperm.xlu0 %869, %v740
    %v871 = vpop.permute.xlu0 %870
    %874 = vset.pattern.permute.xlu0 0
    %875 = vperm.xlu0 %874, %v741
    %v876 = vpop.permute.xlu0 %875
    %879 = vset.pattern.permute.xlu0 0
    %880 = vperm.xlu0 %879, %v742
    %v881 = vpop.permute.xlu0 %880
    %884 = vset.pattern.permute.xlu0 0
    %885 = vperm.xlu0 %884, %v743
    %v886 = vpop.permute.xlu0 %885
    %889 = vset.pattern.permute.xlu0 0
    %890 = vperm.xlu0 %889, %v744
    %v891 = vpop.permute.xlu0 %890
    %894 = vset.pattern.permute.xlu0 0
    %895 = vperm.xlu0 %894, %v745
    %v896 = vpop.permute.xlu0 %895
    %899 = vset.pattern.permute.xlu0 0
    %900 = vperm.xlu0 %899, %v746
    %v901 = vpop.permute.xlu0 %900
    %904 = vset.pattern.permute.xlu0 0
    %905 = vperm.xlu0 %904, %v747
    %v906 = vpop.permute.xlu0 %905
    %909 = vset.pattern.permute.xlu0 0
    %910 = vperm.xlu0 %909, %v748
    %v911 = vpop.permute.xlu0 %910
    %914 = vset.pattern.permute.xlu0 0
    %915 = vperm.xlu0 %914, %v749
    %v916 = vpop.permute.xlu0 %915
    %919 = vset.pattern.permute.xlu0 0
    %920 = vperm.xlu0 %919, %v750
    %v921 = vpop.permute.xlu0 %920
    %924 = vset.pattern.permute.xlu0 0
    %925 = vperm.xlu0 %924, %v751
    %v926 = vpop.permute.xlu0 %925
    %v928 = vmul.f32 %v31, %v851
    %v929 = vmul.f32 %v32, %v851
    %v930 = vmul.f32 %v33, %v851
    %v931 = vmul.f32 %v34, %v851
    %v932 = vmul.f32 %v35, %v851
    %v933 = vmul.f32 %v36, %v851
    %v934 = vmul.f32 %v37, %v851
    %v935 = vmul.f32 %v38, %v856
    %v936 = vmul.f32 %v39, %v856
    %v937 = vmul.f32 %v40, %v856
    %v938 = vmul.f32 %v41, %v856
    %v939 = vmul.f32 %v42, %v856
    %v940 = vmul.f32 %v43, %v856
    %v941 = vmul.f32 %v44, %v856
    %v942 = vmul.f32 %v45, %v861
    %v943 = vmul.f32 %v46, %v861
    %v944 = vmul.f32 %v47, %v861
    %v945 = vmul.f32 %v48, %v861
    %v946 = vmul.f32 %v49, %v861
    %v947 = vmul.f32 %v50, %v861
    %v948 = vmul.f32 %v51, %v861
    %v949 = vmul.f32 %v52, %v866
    %v950 = vmul.f32 %v53, %v866
    %v951 = vmul.f32 %v54, %v866
    %v952 = vmul.f32 %v55, %v866
    %v953 = vmul.f32 %v56, %v866
    %v954 = vmul.f32 %v57, %v866
    %v955 = vmul.f32 %v58, %v866
    %v956 = vmul.f32 %v59, %v871
    %v957 = vmul.f32 %v60, %v871
    %v958 = vmul.f32 %v61, %v871
    %v959 = vmul.f32 %v62, %v871
    %v960 = vmul.f32 %v63, %v871
    %v961 = vmul.f32 %v64, %v871
    %v962 = vmul.f32 %v65, %v871
    %v963 = vmul.f32 %v66, %v876
    %v964 = vmul.f32 %v67, %v876
    %v965 = vmul.f32 %v68, %v876
    %v966 = vmul.f32 %v69, %v876
    %v967 = vmul.f32 %v70, %v876
    %v968 = vmul.f32 %v71, %v876
    %v969 = vmul.f32 %v72, %v876
    %v970 = vmul.f32 %v73, %v881
    %v971 = vmul.f32 %v74, %v881
    %v972 = vmul.f32 %v75, %v881
    %v973 = vmul.f32 %v76, %v881
    %v974 = vmul.f32 %v77, %v881
    %v975 = vmul.f32 %v78, %v881
    %v976 = vmul.f32 %v79, %v881
    %v977 = vmul.f32 %v80, %v886
    %v978 = vmul.f32 %v81, %v886
    %v979 = vmul.f32 %v82, %v886
    %v980 = vmul.f32 %v83, %v886
    %v981 = vmul.f32 %v84, %v886
    %v982 = vmul.f32 %v85, %v886
    %v983 = vmul.f32 %v86, %v886
    %v984 = vmul.f32 %v87, %v891
    %v985 = vmul.f32 %v88, %v891
    %v986 = vmul.f32 %v89, %v891
    %v987 = vmul.f32 %v90, %v891
    %v988 = vmul.f32 %v91, %v891
    %v989 = vmul.f32 %v92, %v891
    %v990 = vmul.f32 %v93, %v891
    %v991 = vmul.f32 %v94, %v896
    %v992 = vmul.f32 %v95, %v896
    %v993 = vmul.f32 %v96, %v896
    %v994 = vmul.f32 %v97, %v896
    %v995 = vmul.f32 %v98, %v896
    %v996 = vmul.f32 %v99, %v896
    %v997 = vmul.f32 %v100, %v896
    %v998 = vmul.f32 %v101, %v901
    %v999 = vmul.f32 %v102, %v901
    %v1000 = vmul.f32 %v103, %v901
    %v1001 = vmul.f32 %v104, %v901
    %v1002 = vmul.f32 %v105, %v901
    %v1003 = vmul.f32 %v106, %v901
    %v1004 = vmul.f32 %v107, %v901
    %v1005 = vmul.f32 %v108, %v906
    %v1006 = vmul.f32 %v109, %v906
    %v1007 = vmul.f32 %v110, %v906
    %v1008 = vmul.f32 %v111, %v906
    %v1009 = vmul.f32 %v112, %v906
    %v1010 = vmul.f32 %v113, %v906
    %v1011 = vmul.f32 %v114, %v906
    %v1012 = vmul.f32 %v115, %v911
    %v1013 = vmul.f32 %v116, %v911
    %v1014 = vmul.f32 %v117, %v911
    %v1015 = vmul.f32 %v118, %v911
    %v1016 = vmul.f32 %v119, %v911
    %v1017 = vmul.f32 %v120, %v911
    %v1018 = vmul.f32 %v121, %v911
    %v1019 = vmul.f32 %v122, %v916
    %v1020 = vmul.f32 %v123, %v916
    %v1021 = vmul.f32 %v124, %v916
    %v1022 = vmul.f32 %v125, %v916
    %v1023 = vmul.f32 %v126, %v916
    %v1024 = vmul.f32 %v127, %v916
    %v1025 = vmul.f32 %v128, %v916
    %v1026 = vmul.f32 %v129, %v921
    %v1027 = vmul.f32 %v130, %v921
    %v1028 = vmul.f32 %v131, %v921
    %v1029 = vmul.f32 %v132, %v921
    %v1030 = vmul.f32 %v133, %v921
    %v1031 = vmul.f32 %v134, %v921
    %v1032 = vmul.f32 %v135, %v921
    %v1033 = vmul.f32 %v136, %v926
    %v1034 = vmul.f32 %v137, %v926
    %v1035 = vmul.f32 %v138, %v926
    %v1036 = vmul.f32 %v139, %v926
    %v1037 = vmul.f32 %v140, %v926
    %v1038 = vmul.f32 %v141, %v926
    %v1039 = vmul.f32 %v142, %v926
    %1041 = vset.pattern.permute.xlu0 1
    %1042 = vperm.xlu0 %1041, %v832
    %v1043 = vpop.permute.xlu0 %1042
    %1046 = vset.pattern.permute.xlu0 1
    %1047 = vperm.xlu0 %1046, %v833
    %v1048 = vpop.permute.xlu0 %1047
    %1051 = vset.pattern.permute.xlu0 1
    %1052 = vperm.xlu0 %1051, %v834
    %v1053 = vpop.permute.xlu0 %1052
    %1056 = vset.pattern.permute.xlu0 1
    %1057 = vperm.xlu0 %1056, %v835
    %v1058 = vpop.permute.xlu0 %1057
    %1061 = vset.pattern.permute.xlu0 1
    %1062 = vperm.xlu0 %1061, %v836
    %v1063 = vpop.permute.xlu0 %1062
    %1066 = vset.pattern.permute.xlu0 1
    %1067 = vperm.xlu0 %1066, %v837
    %v1068 = vpop.permute.xlu0 %1067
    %1071 = vset.pattern.permute.xlu0 1
    %1072 = vperm.xlu0 %1071, %v838
    %v1073 = vpop.permute.xlu0 %1072
    %1076 = vset.pattern.permute.xlu0 1
    %1077 = vperm.xlu0 %1076, %v839
    %v1078 = vpop.permute.xlu0 %1077
    %1081 = vset.pattern.permute.xlu0 1
    %1082 = vperm.xlu0 %1081, %v840
    %v1083 = vpop.permute.xlu0 %1082
    %1086 = vset.pattern.permute.xlu0 1
    %1087 = vperm.xlu0 %1086, %v841
    %v1088 = vpop.permute.xlu0 %1087
    %1091 = vset.pattern.permute.xlu0 1
    %1092 = vperm.xlu0 %1091, %v842
    %v1093 = vpop.permute.xlu0 %1092
    %1096 = vset.pattern.permute.xlu0 1
    %1097 = vperm.xlu0 %1096, %v843
    %v1098 = vpop.permute.xlu0 %1097
    %1101 = vset.pattern.permute.xlu0 1
    %1102 = vperm.xlu0 %1101, %v844
    %v1103 = vpop.permute.xlu0 %1102
    %1106 = vset.pattern.permute.xlu0 1
    %1107 = vperm.xlu0 %1106, %v845
    %v1108 = vpop.permute.xlu0 %1107
    %1111 = vset.pattern.permute.xlu0 1
    %1112 = vperm.xlu0 %1111, %v846
    %v1113 = vpop.permute.xlu0 %1112
    %1116 = vset.pattern.permute.xlu0 1
    %1117 = vperm.xlu0 %1116, %v847
    %v1118 = vpop.permute.xlu0 %1117
    %v1120 = vadd.f32 %v928, %v1043
    %v1121 = vadd.f32 %v929, %v1043
    %v1122 = vadd.f32 %v930, %v1043
    %v1123 = vadd.f32 %v931, %v1043
    %v1124 = vadd.f32 %v932, %v1043
    %v1125 = vadd.f32 %v933, %v1043
    %v1126 = vadd.f32 %v934, %v1043
    %v1127 = vadd.f32 %v935, %v1048
    %v1128 = vadd.f32 %v936, %v1048
    %v1129 = vadd.f32 %v937, %v1048
    %v1130 = vadd.f32 %v938, %v1048
    %v1131 = vadd.f32 %v939, %v1048
    %v1132 = vadd.f32 %v940, %v1048
    %v1133 = vadd.f32 %v941, %v1048
    %v1134 = vadd.f32 %v942, %v1053
    %v1135 = vadd.f32 %v943, %v1053
    %v1136 = vadd.f32 %v944, %v1053
    %v1137 = vadd.f32 %v945, %v1053
    %v1138 = vadd.f32 %v946, %v1053
    %v1139 = vadd.f32 %v947, %v1053
    %v1140 = vadd.f32 %v948, %v1053
    %v1141 = vadd.f32 %v949, %v1058
    %v1142 = vadd.f32 %v950, %v1058
    %v1143 = vadd.f32 %v951, %v1058
    %v1144 = vadd.f32 %v952, %v1058
    %v1145 = vadd.f32 %v953, %v1058
    %v1146 = vadd.f32 %v954, %v1058
    %v1147 = vadd.f32 %v955, %v1058
    %v1148 = vadd.f32 %v956, %v1063
    %v1149 = vadd.f32 %v957, %v1063
    %v1150 = vadd.f32 %v958, %v1063
    %v1151 = vadd.f32 %v959, %v1063
    %v1152 = vadd.f32 %v960, %v1063
    %v1153 = vadd.f32 %v961, %v1063
    %v1154 = vadd.f32 %v962, %v1063
    %v1155 = vadd.f32 %v963, %v1068
    %v1156 = vadd.f32 %v964, %v1068
    %v1157 = vadd.f32 %v965, %v1068
    %v1158 = vadd.f32 %v966, %v1068
    %v1159 = vadd.f32 %v967, %v1068
    %v1160 = vadd.f32 %v968, %v1068
    %v1161 = vadd.f32 %v969, %v1068
    %v1162 = vadd.f32 %v970, %v1073
    %v1163 = vadd.f32 %v971, %v1073
    %v1164 = vadd.f32 %v972, %v1073
    %v1165 = vadd.f32 %v973, %v1073
    %v1166 = vadd.f32 %v974, %v1073
    %v1167 = vadd.f32 %v975, %v1073
    %v1168 = vadd.f32 %v976, %v1073
    %v1169 = vadd.f32 %v977, %v1078
    %v1170 = vadd.f32 %v978, %v1078
    %v1171 = vadd.f32 %v979, %v1078
    %v1172 = vadd.f32 %v980, %v1078
    %v1173 = vadd.f32 %v981, %v1078
    %v1174 = vadd.f32 %v982, %v1078
    %v1175 = vadd.f32 %v983, %v1078
    %v1176 = vadd.f32 %v984, %v1083
    %v1177 = vadd.f32 %v985, %v1083
    %v1178 = vadd.f32 %v986, %v1083
    %v1179 = vadd.f32 %v987, %v1083
    %v1180 = vadd.f32 %v988, %v1083
    %v1181 = vadd.f32 %v989, %v1083
    %v1182 = vadd.f32 %v990, %v1083
    %v1183 = vadd.f32 %v991, %v1088
    %v1184 = vadd.f32 %v992, %v1088
    %v1185 = vadd.f32 %v993, %v1088
    %v1186 = vadd.f32 %v994, %v1088
    %v1187 = vadd.f32 %v995, %v1088
    %v1188 = vadd.f32 %v996, %v1088
    %v1189 = vadd.f32 %v997, %v1088
    %v1190 = vadd.f32 %v998, %v1093
    %v1191 = vadd.f32 %v999, %v1093
    %v1192 = vadd.f32 %v1000, %v1093
    %v1193 = vadd.f32 %v1001, %v1093
    %v1194 = vadd.f32 %v1002, %v1093
    %v1195 = vadd.f32 %v1003, %v1093
    %v1196 = vadd.f32 %v1004, %v1093
    %v1197 = vadd.f32 %v1005, %v1098
    %v1198 = vadd.f32 %v1006, %v1098
    %v1199 = vadd.f32 %v1007, %v1098
    %v1200 = vadd.f32 %v1008, %v1098
    %v1201 = vadd.f32 %v1009, %v1098
    %v1202 = vadd.f32 %v1010, %v1098
    %v1203 = vadd.f32 %v1011, %v1098
    %v1204 = vadd.f32 %v1012, %v1103
    %v1205 = vadd.f32 %v1013, %v1103
    %v1206 = vadd.f32 %v1014, %v1103
    %v1207 = vadd.f32 %v1015, %v1103
    %v1208 = vadd.f32 %v1016, %v1103
    %v1209 = vadd.f32 %v1017, %v1103
    %v1210 = vadd.f32 %v1018, %v1103
    %v1211 = vadd.f32 %v1019, %v1108
    %v1212 = vadd.f32 %v1020, %v1108
    %v1213 = vadd.f32 %v1021, %v1108
    %v1214 = vadd.f32 %v1022, %v1108
    %v1215 = vadd.f32 %v1023, %v1108
    %v1216 = vadd.f32 %v1024, %v1108
    %v1217 = vadd.f32 %v1025, %v1108
    %v1218 = vadd.f32 %v1026, %v1113
    %v1219 = vadd.f32 %v1027, %v1113
    %v1220 = vadd.f32 %v1028, %v1113
    %v1221 = vadd.f32 %v1029, %v1113
    %v1222 = vadd.f32 %v1030, %v1113
    %v1223 = vadd.f32 %v1031, %v1113
    %v1224 = vadd.f32 %v1032, %v1113
    %v1225 = vadd.f32 %v1033, %v1118
    %v1226 = vadd.f32 %v1034, %v1118
    %v1227 = vadd.f32 %v1035, %v1118
    %v1228 = vadd.f32 %v1036, %v1118
    %v1229 = vadd.f32 %v1037, %v1118
    %v1230 = vadd.f32 %v1038, %v1118
    %v1231 = vadd.f32 %v1039, %v1118
    %v1232 = vmax.f32 %v1120, 0.0
    %v1233 = vmax.f32 %v1121, 0.0
    %v1234 = vmax.f32 %v1122, 0.0
    %v1235 = vmax.f32 %v1123, 0.0
    %v1236 = vmax.f32 %v1124, 0.0
    %v1237 = vmax.f32 %v1125, 0.0
    %v1238 = vmax.f32 %v1126, 0.0
    %v1239 = vmax.f32 %v1127, 0.0
    %v1240 = vmax.f32 %v1128, 0.0
    %v1241 = vmax.f32 %v1129, 0.0
    %v1242 = vmax.f32 %v1130, 0.0
    %v1243 = vmax.f32 %v1131, 0.0
    %v1244 = vmax.f32 %v1132, 0.0
    %v1245 = vmax.f32 %v1133, 0.0
    %v1246 = vmax.f32 %v1134, 0.0
    %v1247 = vmax.f32 %v1135, 0.0
    %v1248 = vmax.f32 %v1136, 0.0
    %v1249 = vmax.f32 %v1137, 0.0
    %v1250 = vmax.f32 %v1138, 0.0
    %v1251 = vmax.f32 %v1139, 0.0
    %v1252 = vmax.f32 %v1140, 0.0
    %v1253 = vmax.f32 %v1141, 0.0
    %v1254 = vmax.f32 %v1142, 0.0
    %v1255 = vmax.f32 %v1143, 0.0
    %v1256 = vmax.f32 %v1144, 0.0
    %v1257 = vmax.f32 %v1145, 0.0
    %v1258 = vmax.f32 %v1146, 0.0
    %v1259 = vmax.f32 %v1147, 0.0
    %v1260 = vmax.f32 %v1148, 0.0
    %v1261 = vmax.f32 %v1149, 0.0
    %v1262 = vmax.f32 %v1150, 0.0
    %v1263 = vmax.f32 %v1151, 0.0
    %v1264 = vmax.f32 %v1152, 0.0
    %v1265 = vmax.f32 %v1153, 0.0
    %v1266 = vmax.f32 %v1154, 0.0
    %v1267 = vmax.f32 %v1155, 0.0
    %v1268 = vmax.f32 %v1156, 0.0
    %v1269 = vmax.f32 %v1157, 0.0
    %v1270 = vmax.f32 %v1158, 0.0
    %v1271 = vmax.f32 %v1159, 0.0
    %v1272 = vmax.f32 %v1160, 0.0
    %v1273 = vmax.f32 %v1161, 0.0
    %v1274 = vmax.f32 %v1162, 0.0
    %v1275 = vmax.f32 %v1163, 0.0
    %v1276 = vmax.f32 %v1164, 0.0
    %v1277 = vmax.f32 %v1165, 0.0
    %v1278 = vmax.f32 %v1166, 0.0
    %v1279 = vmax.f32 %v1167, 0.0
    %v1280 = vmax.f32 %v1168, 0.0
    %v1281 = vmax.f32 %v1169, 0.0
    %v1282 = vmax.f32 %v1170, 0.0
    %v1283 = vmax.f32 %v1171, 0.0
    %v1284 = vmax.f32 %v1172, 0.0
    %v1285 = vmax.f32 %v1173, 0.0
    %v1286 = vmax.f32 %v1174, 0.0
    %v1287 = vmax.f32 %v1175, 0.0
    %v1288 = vmax.f32 %v1176, 0.0
    %v1289 = vmax.f32 %v1177, 0.0
    %v1290 = vmax.f32 %v1178, 0.0
    %v1291 = vmax.f32 %v1179, 0.0
    %v1292 = vmax.f32 %v1180, 0.0
    %v1293 = vmax.f32 %v1181, 0.0
    %v1294 = vmax.f32 %v1182, 0.0
    %v1295 = vmax.f32 %v1183, 0.0
    %v1296 = vmax.f32 %v1184, 0.0
    %v1297 = vmax.f32 %v1185, 0.0
    %v1298 = vmax.f32 %v1186, 0.0
    %v1299 = vmax.f32 %v1187, 0.0
    %v1300 = vmax.f32 %v1188, 0.0
    %v1301 = vmax.f32 %v1189, 0.0
    %v1302 = vmax.f32 %v1190, 0.0
    %v1303 = vmax.f32 %v1191, 0.0
    %v1304 = vmax.f32 %v1192, 0.0
    %v1305 = vmax.f32 %v1193, 0.0
    %v1306 = vmax.f32 %v1194, 0.0
    %v1307 = vmax.f32 %v1195, 0.0
    %v1308 = vmax.f32 %v1196, 0.0
    %v1309 = vmax.f32 %v1197, 0.0
    %v1310 = vmax.f32 %v1198, 0.0
    %v1311 = vmax.f32 %v1199, 0.0
    %v1312 = vmax.f32 %v1200, 0.0
    %v1313 = vmax.f32 %v1201, 0.0
    %v1314 = vmax.f32 %v1202, 0.0
    %v1315 = vmax.f32 %v1203, 0.0
    %v1316 = vmax.f32 %v1204, 0.0
    %v1317 = vmax.f32 %v1205, 0.0
    %v1318 = vmax.f32 %v1206, 0.0
    %v1319 = vmax.f32 %v1207, 0.0
    %v1320 = vmax.f32 %v1208, 0.0
    %v1321 = vmax.f32 %v1209, 0.0
    %v1322 = vmax.f32 %v1210, 0.0
    %v1323 = vmax.f32 %v1211, 0.0
    %v1324 = vmax.f32 %v1212, 0.0
    %v1325 = vmax.f32 %v1213, 0.0
    %v1326 = vmax.f32 %v1214, 0.0
    %v1327 = vmax.f32 %v1215, 0.0
    %v1328 = vmax.f32 %v1216, 0.0
    %v1329 = vmax.f32 %v1217, 0.0
    %v1330 = vmax.f32 %v1218, 0.0
    %v1331 = vmax.f32 %v1219, 0.0
    %v1332 = vmax.f32 %v1220, 0.0
    %v1333 = vmax.f32 %v1221, 0.0
    %v1334 = vmax.f32 %v1222, 0.0
    %v1335 = vmax.f32 %v1223, 0.0
    %v1336 = vmax.f32 %v1224, 0.0
    %v1337 = vmax.f32 %v1225, 0.0
    %v1338 = vmax.f32 %v1226, 0.0
    %v1339 = vmax.f32 %v1227, 0.0
    %v1340 = vmax.f32 %v1228, 0.0
    %v1341 = vmax.f32 %v1229, 0.0
    %v1342 = vmax.f32 %v1230, 0.0
    %v1343 = vmax.f32 %v1231, 0.0
    %v1344 = vld [vmem:[#allocation2] sm:$0xff]
    %v1345 = vld [vmem:[#allocation2 + $0x8] sm:$0xff]
    %v1346 = vld [vmem:[#allocation2 + $0x10] sm:$0xff]
    %v1347 = vld [vmem:[#allocation2 + $0x18] sm:$0xff]
    %v1348 = vld [vmem:[#allocation2 + $0x20] sm:$0xff]
    %v1349 = vld [vmem:[#allocation2 + $0x28] sm:$0xff]
    %v1350 = vld [vmem:[#allocation2 + $0x30] sm:$0xff]
    %v1351 = vld [vmem:[#allocation2 + $0x38] sm:$0xff]
    %v1352 = vld [vmem:[#allocation2 + $0x40] sm:$0xff]
    %v1353 = vld [vmem:[#allocation2 + $0x48] sm:$0xff]
    %v1354 = vld [vmem:[#allocation2 + $0x50] sm:$0xff]
    %v1355 = vld [vmem:[#allocation2 + $0x58] sm:$0xff]
    %v1356 = vld [vmem:[#allocation2 + $0x60] sm:$0xff]
    %v1357 = vld [vmem:[#allocation2 + $0x68] sm:$0xff]
    %v1358 = vld [vmem:[#allocation2 + $0x70] sm:$0xff]
    %v1359 = vld [vmem:[#allocation2 + $0x78] sm:$0xff]
    %v1360 = vld [vmem:[#allocation2 + $0x80] sm:$0xff]
    %v1361 = vld [vmem:[#allocation2 + $0x88] sm:$0xff]
    %v1362 = vld [vmem:[#allocation2 + $0x90] sm:$0xff]
    %v1363 = vld [vmem:[#allocation2 + $0x98] sm:$0xff]
    %v1364 = vld [vmem:[#allocation2 + $0xa0] sm:$0xff]
    %v1365 = vld [vmem:[#allocation2 + $0xa8] sm:$0xff]
    %v1366 = vld [vmem:[#allocation2 + $0xb0] sm:$0xff]
    %v1367 = vld [vmem:[#allocation2 + $0xb8] sm:$0xff]
    %v1368 = vld [vmem:[#allocation2 + $0xc0] sm:$0xff]
    %v1369 = vld [vmem:[#allocation2 + $0xc8] sm:$0xff]
    %v1370 = vld [vmem:[#allocation2 + $0xd0] sm:$0xff]
    %v1371 = vld [vmem:[#allocation2 + $0xd8] sm:$0xff]
    %v1372 = vld [vmem:[#allocation2 + $0xe0] sm:$0xff]
    %v1373 = vld [vmem:[#allocation2 + $0xe8] sm:$0xff]
    %v1374 = vld [vmem:[#allocation2 + $0xf0] sm:$0xff]
    %v1375 = vld [vmem:[#allocation2 + $0xf8] sm:$0xff]
    %v1376 = vld [vmem:[#allocation2 + $0x100] sm:$0xff]
    %v1377 = vld [vmem:[#allocation2 + $0x108] sm:$0xff]
    %v1378 = vld [vmem:[#allocation2 + $0x110] sm:$0xff]
    %v1379 = vld [vmem:[#allocation2 + $0x118] sm:$0xff]
    %v1380 = vld [vmem:[#allocation2 + $0x120] sm:$0xff]
    %v1381 = vld [vmem:[#allocation2 + $0x128] sm:$0xff]
    %v1382 = vld [vmem:[#allocation2 + $0x130] sm:$0xff]
    %v1383 = vld [vmem:[#allocation2 + $0x138] sm:$0xff]
    %v1384 = vld [vmem:[#allocation2 + $0x140] sm:$0xff]
    %v1385 = vld [vmem:[#allocation2 + $0x148] sm:$0xff]
    %v1386 = vld [vmem:[#allocation2 + $0x150] sm:$0xff]
    %v1387 = vld [vmem:[#allocation2 + $0x158] sm:$0xff]
    %v1388 = vld [vmem:[#allocation2 + $0x160] sm:$0xff]
    %v1389 = vld [vmem:[#allocation2 + $0x168] sm:$0xff]
    %v1390 = vld [vmem:[#allocation2 + $0x170] sm:$0xff]
    %v1391 = vld [vmem:[#allocation2 + $0x178] sm:$0xff]
    %v1392 = vld [vmem:[#allocation2 + $0x180] sm:$0xff]
    %v1393 = vld [vmem:[#allocation2 + $0x188] sm:$0xff]
    %v1394 = vld [vmem:[#allocation2 + $0x190] sm:$0xff]
    %v1395 = vld [vmem:[#allocation2 + $0x198] sm:$0xff]
    %v1396 = vld [vmem:[#allocation2 + $0x1a0] sm:$0xff]
    %v1397 = vld [vmem:[#allocation2 + $0x1a8] sm:$0xff]
    %v1398 = vld [vmem:[#allocation2 + $0x1b0] sm:$0xff]
    %v1399 = vld [vmem:[#allocation2 + $0x1b8] sm:$0xff]
    %v1400 = vld [vmem:[#allocation2 + $0x1c0] sm:$0xff]
    %v1401 = vld [vmem:[#allocation2 + $0x1c8] sm:$0xff]
    %v1402 = vld [vmem:[#allocation2 + $0x1d0] sm:$0xff]
    %v1403 = vld [vmem:[#allocation2 + $0x1d8] sm:$0xff]
    %v1404 = vld [vmem:[#allocation2 + $0x1e0] sm:$0xff]
    %v1405 = vld [vmem:[#allocation2 + $0x1e8] sm:$0xff]
    %v1406 = vld [vmem:[#allocation2 + $0x1f0] sm:$0xff]
    %v1407 = vld [vmem:[#allocation2 + $0x1f8] sm:$0xff]
    %1408 = vmatprep.subr.mxu0 %v1338
    %1409 = vmatpush1.msra.mxu0 %v1337
    %1410 = vmatprep.subr.mxu0 %v1331
    %1411 = vmatpush1.msra.mxu0 %v1330
    %1412 = vmatprep.subr.mxu0 %v1324
    %1413 = vmatpush1.msra.mxu0 %v1323
    %1414 = vmatprep.subr.mxu0 %v1317
    %1415 = vmatpush1.msra.mxu0 %v1316
    %1416 = vmatprep.subr.mxu0 %v1310
    %1417 = vmatpush1.msra.mxu0 %v1309
    %1418 = vmatprep.subr.mxu0 %v1303
    %1419 = vmatpush1.msra.mxu0 %v1302
    %1420 = vmatprep.subr.mxu0 %v1296
    %1421 = vmatpush1.msra.mxu0 %v1295
    %1422 = vmatprep.subr.mxu0 %v1289
    %1423 = vmatpush1.msra.mxu0 %v1288
    %1424 = vmatprep.subr.mxu0 %v1282
    %1425 = vmatpush1.msra.mxu0 %v1281
    %1426 = vmatprep.subr.mxu0 %v1275
    %1427 = vmatpush1.msra.mxu0 %v1274
    %1428 = vmatprep.subr.mxu0 %v1268
    %1429 = vmatpush1.msra.mxu0 %v1267
    %1430 = vmatprep.subr.mxu0 %v1261
    %1431 = vmatpush1.msra.mxu0 %v1260
    %1432 = vmatprep.subr.mxu0 %v1254
    %1433 = vmatpush1.msra.mxu0 %v1253
    %1434 = vmatprep.subr.mxu0 %v1247
    %1435 = vmatpush1.msra.mxu0 %v1246
    %1436 = vmatprep.subr.mxu0 %v1240
    %1437 = vmatpush1.msra.mxu0 %v1239
    %1438 = vmatprep.subr.mxu0 %v1233
    %1439 = vmatpush1.msra.mxu0 %v1232
    %1440 = vmatprep.subr.mxu0 0.0
    %1441 = vmatpush2.msra.mxu0 0.0
    %1442 = vmatprep.subr.mxu0 0.0
    %1443 = vmatpush2.msra.mxu0 0.0
    %1444 = vmatprep.subr.mxu0 0.0
    %1445 = vmatpush2.msra.mxu0 0.0
    %1446 = vmatprep.subr.mxu0 0.0
    %1447 = vmatpush2.msra.mxu0 0.0
    %1448 = vmatprep.subr.mxu0 0.0
    %1449 = vmatpush2.msra.mxu0 0.0
    %1450 = vmatprep.subr.mxu0 0.0
    %1451 = vmatpush2.msra.mxu0 0.0
    %1452 = vmatprep.subr.mxu0 0.0
    %1453 = vmatpush2.msra.mxu0 0.0
    %1454 = vmatprep.subr.mxu0 0.0
    %1455 = vmatpush2.msra.mxu0 0.0
    %1456 = vmatprep.subr.mxu0 0.0
    %1457 = vmatpush2.msra.mxu0 0.0
    %1458 = vmatprep.subr.mxu0 0.0
    %1459 = vmatpush2.msra.mxu0 0.0
    %1460 = vmatprep.subr.mxu0 0.0
    %1461 = vmatpush2.msra.mxu0 0.0
    %1462 = vmatprep.subr.mxu0 0.0
    %1463 = vmatpush2.msra.mxu0 0.0
    %1464 = vmatprep.subr.mxu0 0.0
    %1465 = vmatpush2.msra.mxu0 0.0
    %1466 = vmatprep.subr.mxu0 0.0
    %1467 = vmatpush2.msra.mxu0 0.0
    %1468 = vmatprep.subr.mxu0 0.0
    %1469 = vmatpush2.msra.mxu0 0.0
    %1470 = vmatprep.subr.mxu0 0.0
    %1471 = vmatpush2.msra.mxu0 0.0
    %1472 = vmatprep.mubr.f32.mxu0 0.0
    %1473 = vmatmul.mubr.f32.gmra.mxu0 %v1344
    %v1474 = vpop.f32.mrf.mxu0
    %v1475 = vadd.f32 0.0, %v1474
    %v1476 = vpop.f32.mrf.mxu0
    %v1477 = vadd.f32 0.0, %v1476
    %1478 = vmatprep.mubr.f32.mxu0 0.0
    %1479 = vmatmul.mubr.f32.gmra.mxu0 %v1345
    %v1480 = vpop.f32.mrf.mxu0
    %v1481 = vadd.f32 0.0, %v1480
    %v1482 = vpop.f32.mrf.mxu0
    %v1483 = vadd.f32 0.0, %v1482
    %1484 = vmatprep.mubr.f32.mxu0 0.0
    %1485 = vmatmul.mubr.f32.gmra.mxu0 %v1346
    %v1486 = vpop.f32.mrf.mxu0
    %v1487 = vadd.f32 0.0, %v1486
    %v1488 = vpop.f32.mrf.mxu0
    %v1489 = vadd.f32 0.0, %v1488
    %1490 = vmatprep.mubr.f32.mxu0 0.0
    %1491 = vmatmul.mubr.f32.gmra.mxu0 %v1347
    %v1492 = vpop.f32.mrf.mxu0
    %v1493 = vadd.f32 0.0, %v1492
    %v1494 = vpop.f32.mrf.mxu0
    %v1495 = vadd.f32 0.0, %v1494
    %1496 = vmatprep.mubr.f32.mxu0 0.0
    %1497 = vmatmul.mubr.f32.gmra.mxu0 %v1348
    %v1498 = vpop.f32.mrf.mxu0
    %v1499 = vadd.f32 0.0, %v1498
    %v1500 = vpop.f32.mrf.mxu0
    %v1501 = vadd.f32 0.0, %v1500
    %1502 = vmatprep.mubr.f32.mxu0 0.0
    %1503 = vmatmul.mubr.f32.gmra.mxu0 %v1349
    %v1504 = vpop.f32.mrf.mxu0
    %v1505 = vadd.f32 0.0, %v1504
    %v1506 = vpop.f32.mrf.mxu0
    %v1507 = vadd.f32 0.0, %v1506
    %1508 = vmatprep.mubr.f32.mxu0 0.0
    %1509 = vmatmul.mubr.f32.gmra.mxu0 %v1350
    %v1510 = vpop.f32.mrf.mxu0
    %v1511 = vadd.f32 0.0, %v1510
    %v1512 = vpop.f32.mrf.mxu0
    %v1513 = vadd.f32 0.0, %v1512
    %1514 = vmatprep.mubr.f32.mxu0 0.0
    %1515 = vmatmul.mubr.f32.gmra.mxu0 %v1351
    %v1516 = vpop.f32.mrf.mxu0
    %v1517 = vadd.f32 0.0, %v1516
    %v1518 = vpop.f32.mrf.mxu0
    %v1519 = vadd.f32 0.0, %v1518
    %1520 = vmatprep.mubr.f32.mxu0 0.0
    %1521 = vmatmul.mubr.f32.gmra.mxu0 %v1352
    %v1522 = vpop.f32.mrf.mxu0
    %v1523 = vadd.f32 0.0, %v1522
    %v1524 = vpop.f32.mrf.mxu0
    %v1525 = vadd.f32 0.0, %v1524
    %1526 = vmatprep.mubr.f32.mxu0 0.0
    %1527 = vmatmul.mubr.f32.gmra.mxu0 %v1353
    %v1528 = vpop.f32.mrf.mxu0
    %v1529 = vadd.f32 0.0, %v1528
    %v1530 = vpop.f32.mrf.mxu0
    %v1531 = vadd.f32 0.0, %v1530
    %1532 = vmatprep.mubr.f32.mxu0 0.0
    %1533 = vmatmul.mubr.f32.gmra.mxu0 %v1354
    %v1534 = vpop.f32.mrf.mxu0
    %v1535 = vadd.f32 0.0, %v1534
    %v1536 = vpop.f32.mrf.mxu0
    %v1537 = vadd.f32 0.0, %v1536
    %1538 = vmatprep.mubr.f32.mxu0 0.0
    %1539 = vmatmul.mubr.f32.gmra.mxu0 %v1355
    %v1540 = vpop.f32.mrf.mxu0
    %v1541 = vadd.f32 0.0, %v1540
    %v1542 = vpop.f32.mrf.mxu0
    %v1543 = vadd.f32 0.0, %v1542
    %1544 = vmatprep.mubr.f32.mxu0 0.0
    %1545 = vmatmul.mubr.f32.gmra.mxu0 %v1356
    %v1546 = vpop.f32.mrf.mxu0
    %v1547 = vadd.f32 0.0, %v1546
    %v1548 = vpop.f32.mrf.mxu0
    %v1549 = vadd.f32 0.0, %v1548
    %1550 = vmatprep.mubr.f32.mxu0 0.0
    %1551 = vmatmul.mubr.f32.gmra.mxu0 %v1357
    %v1552 = vpop.f32.mrf.mxu0
    %v1553 = vadd.f32 0.0, %v1552
    %v1554 = vpop.f32.mrf.mxu0
    %v1555 = vadd.f32 0.0, %v1554
    %1556 = vmatprep.mubr.f32.mxu0 0.0
    %1557 = vmatmul.mubr.f32.gmra.mxu0 %v1358
    %v1558 = vpop.f32.mrf.mxu0
    %v1559 = vadd.f32 0.0, %v1558
    %v1560 = vpop.f32.mrf.mxu0
    %v1561 = vadd.f32 0.0, %v1560
    %1562 = vmatprep.mubr.f32.mxu0 0.0
    %1563 = vmatmul.mubr.f32.gmra.mxu0 %v1359
    %v1564 = vpop.f32.mrf.mxu0
    %v1565 = vadd.f32 0.0, %v1564
    %v1566 = vpop.f32.mrf.mxu0
    %v1567 = vadd.f32 0.0, %v1566
    %1568 = vmatprep.mubr.f32.mxu0 0.0
    %1569 = vmatmul.mubr.f32.gmra.mxu0 %v1360
    %v1570 = vpop.f32.mrf.mxu0
    %v1571 = vadd.f32 0.0, %v1570
    %v1572 = vpop.f32.mrf.mxu0
    %v1573 = vadd.f32 0.0, %v1572
    %1574 = vmatprep.mubr.f32.mxu0 0.0
    %1575 = vmatmul.mubr.f32.gmra.mxu0 %v1361
    %v1576 = vpop.f32.mrf.mxu0
    %v1577 = vadd.f32 0.0, %v1576
    %v1578 = vpop.f32.mrf.mxu0
    %v1579 = vadd.f32 0.0, %v1578
    %1580 = vmatprep.mubr.f32.mxu0 0.0
    %1581 = vmatmul.mubr.f32.gmra.mxu0 %v1362
    %v1582 = vpop.f32.mrf.mxu0
    %v1583 = vadd.f32 0.0, %v1582
    %v1584 = vpop.f32.mrf.mxu0
    %v1585 = vadd.f32 0.0, %v1584
    %1586 = vmatprep.mubr.f32.mxu0 0.0
    %1587 = vmatmul.mubr.f32.gmra.mxu0 %v1363
    %v1588 = vpop.f32.mrf.mxu0
    %v1589 = vadd.f32 0.0, %v1588
    %v1590 = vpop.f32.mrf.mxu0
    %v1591 = vadd.f32 0.0, %v1590
    %1592 = vmatprep.mubr.f32.mxu0 0.0
    %1593 = vmatmul.mubr.f32.gmra.mxu0 %v1364
    %v1594 = vpop.f32.mrf.mxu0
    %v1595 = vadd.f32 0.0, %v1594
    %v1596 = vpop.f32.mrf.mxu0
    %v1597 = vadd.f32 0.0, %v1596
    %1598 = vmatprep.mubr.f32.mxu0 0.0
    %1599 = vmatmul.mubr.f32.gmra.mxu0 %v1365
    %v1600 = vpop.f32.mrf.mxu0
    %v1601 = vadd.f32 0.0, %v1600
    %v1602 = vpop.f32.mrf.mxu0
    %v1603 = vadd.f32 0.0, %v1602
    %1604 = vmatprep.mubr.f32.mxu0 0.0
    %1605 = vmatmul.mubr.f32.gmra.mxu0 %v1366
    %v1606 = vpop.f32.mrf.mxu0
    %v1607 = vadd.f32 0.0, %v1606
    %v1608 = vpop.f32.mrf.mxu0
    %v1609 = vadd.f32 0.0, %v1608
    %1610 = vmatprep.mubr.f32.mxu0 0.0
    %1611 = vmatmul.mubr.f32.gmra.mxu0 %v1367
    %v1612 = vpop.f32.mrf.mxu0
    %v1613 = vadd.f32 0.0, %v1612
    %v1614 = vpop.f32.mrf.mxu0
    %v1615 = vadd.f32 0.0, %v1614
    %1616 = vmatprep.mubr.f32.mxu0 0.0
    %1617 = vmatmul.mubr.f32.gmra.mxu0 %v1368
    %v1618 = vpop.f32.mrf.mxu0
    %v1619 = vadd.f32 0.0, %v1618
    %v1620 = vpop.f32.mrf.mxu0
    %v1621 = vadd.f32 0.0, %v1620
    %1622 = vmatprep.mubr.f32.mxu0 0.0
    %1623 = vmatmul.mubr.f32.gmra.mxu0 %v1369
    %v1624 = vpop.f32.mrf.mxu0
    %v1625 = vadd.f32 0.0, %v1624
    %v1626 = vpop.f32.mrf.mxu0
    %v1627 = vadd.f32 0.0, %v1626
    %1628 = vmatprep.mubr.f32.mxu0 0.0
    %1629 = vmatmul.mubr.f32.gmra.mxu0 %v1370
    %v1630 = vpop.f32.mrf.mxu0
    %v1631 = vadd.f32 0.0, %v1630
    %v1632 = vpop.f32.mrf.mxu0
    %v1633 = vadd.f32 0.0, %v1632
    %1634 = vmatprep.mubr.f32.mxu0 0.0
    %1635 = vmatmul.mubr.f32.gmra.mxu0 %v1371
    %v1636 = vpop.f32.mrf.mxu0
    %v1637 = vadd.f32 0.0, %v1636
    %v1638 = vpop.f32.mrf.mxu0
    %v1639 = vadd.f32 0.0, %v1638
    %1640 = vmatprep.mubr.f32.mxu0 0.0
    %1641 = vmatmul.mubr.f32.gmra.mxu0 %v1372
    %v1642 = vpop.f32.mrf.mxu0
    %v1643 = vadd.f32 0.0, %v1642
    %v1644 = vpop.f32.mrf.mxu0
    %v1645 = vadd.f32 0.0, %v1644
    %1646 = vmatprep.mubr.f32.mxu0 0.0
    %1647 = vmatmul.mubr.f32.gmra.mxu0 %v1373
    %v1648 = vpop.f32.mrf.mxu0
    %v1649 = vadd.f32 0.0, %v1648
    %v1650 = vpop.f32.mrf.mxu0
    %v1651 = vadd.f32 0.0, %v1650
    %1652 = vmatprep.mubr.f32.mxu0 0.0
    %1653 = vmatmul.mubr.f32.gmra.mxu0 %v1374
    %v1654 = vpop.f32.mrf.mxu0
    %v1655 = vadd.f32 0.0, %v1654
    %v1656 = vpop.f32.mrf.mxu0
    %v1657 = vadd.f32 0.0, %v1656
    %1658 = vmatprep.mubr.f32.mxu0 0.0
    %1659 = vmatmul.mubr.f32.gmra.mxu0 %v1375
    %v1660 = vpop.f32.mrf.mxu0
    %v1661 = vadd.f32 0.0, %v1660
    %v1662 = vpop.f32.mrf.mxu0
    %v1663 = vadd.f32 0.0, %v1662
    %1664 = vmatprep.mubr.f32.mxu0 0.0
    %1665 = vmatmul.mubr.f32.gmra.mxu0 %v1376
    %v1666 = vpop.f32.mrf.mxu0
    %v1667 = vadd.f32 0.0, %v1666
    %v1668 = vpop.f32.mrf.mxu0
    %v1669 = vadd.f32 0.0, %v1668
    %1670 = vmatprep.mubr.f32.mxu0 0.0
    %1671 = vmatmul.mubr.f32.gmra.mxu0 %v1377
    %v1672 = vpop.f32.mrf.mxu0
    %v1673 = vadd.f32 0.0, %v1672
    %v1674 = vpop.f32.mrf.mxu0
    %v1675 = vadd.f32 0.0, %v1674
    %1676 = vmatprep.mubr.f32.mxu0 0.0
    %1677 = vmatmul.mubr.f32.gmra.mxu0 %v1378
    %v1678 = vpop.f32.mrf.mxu0
    %v1679 = vadd.f32 0.0, %v1678
    %v1680 = vpop.f32.mrf.mxu0
    %v1681 = vadd.f32 0.0, %v1680
    %1682 = vmatprep.mubr.f32.mxu0 0.0
    %1683 = vmatmul.mubr.f32.gmra.mxu0 %v1379
    %v1684 = vpop.f32.mrf.mxu0
    %v1685 = vadd.f32 0.0, %v1684
    %v1686 = vpop.f32.mrf.mxu0
    %v1687 = vadd.f32 0.0, %v1686
    %1688 = vmatprep.mubr.f32.mxu0 0.0
    %1689 = vmatmul.mubr.f32.gmra.mxu0 %v1380
    %v1690 = vpop.f32.mrf.mxu0
    %v1691 = vadd.f32 0.0, %v1690
    %v1692 = vpop.f32.mrf.mxu0
    %v1693 = vadd.f32 0.0, %v1692
    %1694 = vmatprep.mubr.f32.mxu0 0.0
    %1695 = vmatmul.mubr.f32.gmra.mxu0 %v1381
    %v1696 = vpop.f32.mrf.mxu0
    %v1697 = vadd.f32 0.0, %v1696
    %v1698 = vpop.f32.mrf.mxu0
    %v1699 = vadd.f32 0.0, %v1698
    %1700 = vmatprep.mubr.f32.mxu0 0.0
    %1701 = vmatmul.mubr.f32.gmra.mxu0 %v1382
    %v1702 = vpop.f32.mrf.mxu0
    %v1703 = vadd.f32 0.0, %v1702
    %v1704 = vpop.f32.mrf.mxu0
    %v1705 = vadd.f32 0.0, %v1704
    %1706 = vmatprep.mubr.f32.mxu0 0.0
    %1707 = vmatmul.mubr.f32.gmra.mxu0 %v1383
    %v1708 = vpop.f32.mrf.mxu0
    %v1709 = vadd.f32 0.0, %v1708
    %v1710 = vpop.f32.mrf.mxu0
    %v1711 = vadd.f32 0.0, %v1710
    %1712 = vmatprep.mubr.f32.mxu0 0.0
    %1713 = vmatmul.mubr.f32.gmra.mxu0 %v1384
    %v1714 = vpop.f32.mrf.mxu0
    %v1715 = vadd.f32 0.0, %v1714
    %v1716 = vpop.f32.mrf.mxu0
    %v1717 = vadd.f32 0.0, %v1716
    %1718 = vmatprep.mubr.f32.mxu0 0.0
    %1719 = vmatmul.mubr.f32.gmra.mxu0 %v1385
    %v1720 = vpop.f32.mrf.mxu0
    %v1721 = vadd.f32 0.0, %v1720
    %v1722 = vpop.f32.mrf.mxu0
    %v1723 = vadd.f32 0.0, %v1722
    %1724 = vmatprep.mubr.f32.mxu0 0.0
    %1725 = vmatmul.mubr.f32.gmra.mxu0 %v1386
    %v1726 = vpop.f32.mrf.mxu0
    %v1727 = vadd.f32 0.0, %v1726
    %v1728 = vpop.f32.mrf.mxu0
    %v1729 = vadd.f32 0.0, %v1728
    %1730 = vmatprep.mubr.f32.mxu0 0.0
    %1731 = vmatmul.mubr.f32.gmra.mxu0 %v1387
    %v1732 = vpop.f32.mrf.mxu0
    %v1733 = vadd.f32 0.0, %v1732
    %v1734 = vpop.f32.mrf.mxu0
    %v1735 = vadd.f32 0.0, %v1734
    %1736 = vmatprep.mubr.f32.mxu0 0.0
    %1737 = vmatmul.mubr.f32.gmra.mxu0 %v1388
    %v1738 = vpop.f32.mrf.mxu0
    %v1739 = vadd.f32 0.0, %v1738
    %v1740 = vpop.f32.mrf.mxu0
    %v1741 = vadd.f32 0.0, %v1740
    %1742 = vmatprep.mubr.f32.mxu0 0.0
    %1743 = vmatmul.mubr.f32.gmra.mxu0 %v1389
    %v1744 = vpop.f32.mrf.mxu0
    %v1745 = vadd.f32 0.0, %v1744
    %v1746 = vpop.f32.mrf.mxu0
    %v1747 = vadd.f32 0.0, %v1746
    %1748 = vmatprep.mubr.f32.mxu0 0.0
    %1749 = vmatmul.mubr.f32.gmra.mxu0 %v1390
    %v1750 = vpop.f32.mrf.mxu0
    %v1751 = vadd.f32 0.0, %v1750
    %v1752 = vpop.f32.mrf.mxu0
    %v1753 = vadd.f32 0.0, %v1752
    %1754 = vmatprep.mubr.f32.mxu0 0.0
    %1755 = vmatmul.mubr.f32.gmra.mxu0 %v1391
    %v1756 = vpop.f32.mrf.mxu0
    %v1757 = vadd.f32 0.0, %v1756
    %v1758 = vpop.f32.mrf.mxu0
    %v1759 = vadd.f32 0.0, %v1758
    %1760 = vmatprep.mubr.f32.mxu0 0.0
    %1761 = vmatmul.mubr.f32.gmra.mxu0 %v1392
    %v1762 = vpop.f32.mrf.mxu0
    %v1763 = vadd.f32 0.0, %v1762
    %v1764 = vpop.f32.mrf.mxu0
    %v1765 = vadd.f32 0.0, %v1764
    %1766 = vmatprep.mubr.f32.mxu0 0.0
    %1767 = vmatmul.mubr.f32.gmra.mxu0 %v1393
    %v1768 = vpop.f32.mrf.mxu0
    %v1769 = vadd.f32 0.0, %v1768
    %v1770 = vpop.f32.mrf.mxu0
    %v1771 = vadd.f32 0.0, %v1770
    %1772 = vmatprep.mubr.f32.mxu0 0.0
    %1773 = vmatmul.mubr.f32.gmra.mxu0 %v1394
    %v1774 = vpop.f32.mrf.mxu0
    %v1775 = vadd.f32 0.0, %v1774
    %v1776 = vpop.f32.mrf.mxu0
    %v1777 = vadd.f32 0.0, %v1776
    %1778 = vmatprep.mubr.f32.mxu0 0.0
    %1779 = vmatmul.mubr.f32.gmra.mxu0 %v1395
    %v1780 = vpop.f32.mrf.mxu0
    %v1781 = vadd.f32 0.0, %v1780
    %v1782 = vpop.f32.mrf.mxu0
    %v1783 = vadd.f32 0.0, %v1782
    %1784 = vmatprep.mubr.f32.mxu0 0.0
    %1785 = vmatmul.mubr.f32.gmra.mxu0 %v1396
    %v1786 = vpop.f32.mrf.mxu0
    %v1787 = vadd.f32 0.0, %v1786
    %v1788 = vpop.f32.mrf.mxu0
    %v1789 = vadd.f32 0.0, %v1788
    %1790 = vmatprep.mubr.f32.mxu0 0.0
    %1791 = vmatmul.mubr.f32.gmra.mxu0 %v1397
    %v1792 = vpop.f32.mrf.mxu0
    %v1793 = vadd.f32 0.0, %v1792
    %v1794 = vpop.f32.mrf.mxu0
    %v1795 = vadd.f32 0.0, %v1794
    %1796 = vmatprep.mubr.f32.mxu0 0.0
    %1797 = vmatmul.mubr.f32.gmra.mxu0 %v1398
    %v1798 = vpop.f32.mrf.mxu0
    %v1799 = vadd.f32 0.0, %v1798
    %v1800 = vpop.f32.mrf.mxu0
    %v1801 = vadd.f32 0.0, %v1800
    %1802 = vmatprep.mubr.f32.mxu0 0.0
    %1803 = vmatmul.mubr.f32.gmra.mxu0 %v1399
    %v1804 = vpop.f32.mrf.mxu0
    %v1805 = vadd.f32 0.0, %v1804
    %v1806 = vpop.f32.mrf.mxu0
    %v1807 = vadd.f32 0.0, %v1806
    %1808 = vmatprep.mubr.f32.mxu0 0.0
    %1809 = vmatmul.mubr.f32.gmra.mxu0 %v1400
    %v1810 = vpop.f32.mrf.mxu0
    %v1811 = vadd.f32 0.0, %v1810
    %v1812 = vpop.f32.mrf.mxu0
    %v1813 = vadd.f32 0.0, %v1812
    %1814 = vmatprep.mubr.f32.mxu0 0.0
    %1815 = vmatmul.mubr.f32.gmra.mxu0 %v1401
    %v1816 = vpop.f32.mrf.mxu0
    %v1817 = vadd.f32 0.0, %v1816
    %v1818 = vpop.f32.mrf.mxu0
    %v1819 = vadd.f32 0.0, %v1818
    %1820 = vmatprep.mubr.f32.mxu0 0.0
    %1821 = vmatmul.mubr.f32.gmra.mxu0 %v1402
    %v1822 = vpop.f32.mrf.mxu0
    %v1823 = vadd.f32 0.0, %v1822
    %v1824 = vpop.f32.mrf.mxu0
    %v1825 = vadd.f32 0.0, %v1824
    %1826 = vmatprep.mubr.f32.mxu0 0.0
    %1827 = vmatmul.mubr.f32.gmra.mxu0 %v1403
    %v1828 = vpop.f32.mrf.mxu0
    %v1829 = vadd.f32 0.0, %v1828
    %v1830 = vpop.f32.mrf.mxu0
    %v1831 = vadd.f32 0.0, %v1830
    %1832 = vmatprep.mubr.f32.mxu0 0.0
    %1833 = vmatmul.mubr.f32.gmra.mxu0 %v1404
    %v1834 = vpop.f32.mrf.mxu0
    %v1835 = vadd.f32 0.0, %v1834
    %v1836 = vpop.f32.mrf.mxu0
    %v1837 = vadd.f32 0.0, %v1836
    %1838 = vmatprep.mubr.f32.mxu0 0.0
    %1839 = vmatmul.mubr.f32.gmra.mxu0 %v1405
    %v1840 = vpop.f32.mrf.mxu0
    %v1841 = vadd.f32 0.0, %v1840
    %v1842 = vpop.f32.mrf.mxu0
    %v1843 = vadd.f32 0.0, %v1842
    %1844 = vmatprep.mubr.f32.mxu0 0.0
    %1845 = vmatmul.mubr.f32.gmra.mxu0 %v1406
    %v1846 = vpop.f32.mrf.mxu0
    %v1847 = vadd.f32 0.0, %v1846
    %v1848 = vpop.f32.mrf.mxu0
    %v1849 = vadd.f32 0.0, %v1848
    %1850 = vmatprep.mubr.f32.mxu0 0.0
    %1851 = vmatmul.mubr.f32.gmra.mxu0 %v1407
    %v1852 = vpop.f32.mrf.mxu0
    %v1853 = vadd.f32 0.0, %v1852
    %v1854 = vpop.f32.mrf.mxu0
    %v1855 = vadd.f32 0.0, %v1854
    %1856 = vdwg.mxu0
    %1857 = vmatprep.subr.mxu0 %v1340
    %1858 = vmatpush1.msra.mxu0 %v1339
    %1859 = vmatprep.subr.mxu0 %v1333
    %1860 = vmatpush1.msra.mxu0 %v1332
    %1861 = vmatprep.subr.mxu0 %v1326
    %1862 = vmatpush1.msra.mxu0 %v1325
    %1863 = vmatprep.subr.mxu0 %v1319
    %1864 = vmatpush1.msra.mxu0 %v1318
    %1865 = vmatprep.subr.mxu0 %v1312
    %1866 = vmatpush1.msra.mxu0 %v1311
    %1867 = vmatprep.subr.mxu0 %v1305
    %1868 = vmatpush1.msra.mxu0 %v1304
    %1869 = vmatprep.subr.mxu0 %v1298
    %1870 = vmatpush1.msra.mxu0 %v1297
    %1871 = vmatprep.subr.mxu0 %v1291
    %1872 = vmatpush1.msra.mxu0 %v1290
    %1873 = vmatprep.subr.mxu0 %v1284
    %1874 = vmatpush1.msra.mxu0 %v1283
    %1875 = vmatprep.subr.mxu0 %v1277
    %1876 = vmatpush1.msra.mxu0 %v1276
    %1877 = vmatprep.subr.mxu0 %v1270
    %1878 = vmatpush1.msra.mxu0 %v1269
    %1879 = vmatprep.subr.mxu0 %v1263
    %1880 = vmatpush1.msra.mxu0 %v1262
    %1881 = vmatprep.subr.mxu0 %v1256
    %1882 = vmatpush1.msra.mxu0 %v1255
    %1883 = vmatprep.subr.mxu0 %v1249
    %1884 = vmatpush1.msra.mxu0 %v1248
    %1885 = vmatprep.subr.mxu0 %v1242
    %1886 = vmatpush1.msra.mxu0 %v1241
    %1887 = vmatprep.subr.mxu0 %v1235
    %1888 = vmatpush1.msra.mxu0 %v1234
    %1889 = vmatprep.subr.mxu0 0.0
    %1890 = vmatpush2.msra.mxu0 0.0
    %1891 = vmatprep.subr.mxu0 0.0
    %1892 = vmatpush2.msra.mxu0 0.0
    %1893 = vmatprep.subr.mxu0 0.0
    %1894 = vmatpush2.msra.mxu0 0.0
    %1895 = vmatprep.subr.mxu0 0.0
    %1896 = vmatpush2.msra.mxu0 0.0
    %1897 = vmatprep.subr.mxu0 0.0
    %1898 = vmatpush2.msra.mxu0 0.0
    %1899 = vmatprep.subr.mxu0 0.0
    %1900 = vmatpush2.msra.mxu0 0.0
    %1901 = vmatprep.subr.mxu0 0.0
    %1902 = vmatpush2.msra.mxu0 0.0
    %1903 = vmatprep.subr.mxu0 0.0
    %1904 = vmatpush2.msra.mxu0 0.0
    %1905 = vmatprep.subr.mxu0 0.0
    %1906 = vmatpush2.msra.mxu0 0.0
    %1907 = vmatprep.subr.mxu0 0.0
    %1908 = vmatpush2.msra.mxu0 0.0
    %1909 = vmatprep.subr.mxu0 0.0
    %1910 = vmatpush2.msra.mxu0 0.0
    %1911 = vmatprep.subr.mxu0 0.0
    %1912 = vmatpush2.msra.mxu0 0.0
    %1913 = vmatprep.subr.mxu0 0.0
    %1914 = vmatpush2.msra.mxu0 0.0
    %1915 = vmatprep.subr.mxu0 0.0
    %1916 = vmatpush2.msra.mxu0 0.0
    %1917 = vmatprep.subr.mxu0 0.0
    %1918 = vmatpush2.msra.mxu0 0.0
    %1919 = vmatprep.subr.mxu0 0.0
    %1920 = vmatpush2.msra.mxu0 0.0
    %1921 = vmatprep.mubr.f32.mxu0 0.0
    %1922 = vmatmul.mubr.f32.gmra.mxu0 %v1344
    %v1923 = vpop.f32.mrf.mxu0
    %v1924 = vadd.f32 0.0, %v1923
    %v1925 = vpop.f32.mrf.mxu0
    %v1926 = vadd.f32 0.0, %v1925
    %1927 = vmatprep.mubr.f32.mxu0 0.0
    %1928 = vmatmul.mubr.f32.gmra.mxu0 %v1345
    %v1929 = vpop.f32.mrf.mxu0
    %v1930 = vadd.f32 0.0, %v1929
    %v1931 = vpop.f32.mrf.mxu0
    %v1932 = vadd.f32 0.0, %v1931
    %1933 = vmatprep.mubr.f32.mxu0 0.0
    %1934 = vmatmul.mubr.f32.gmra.mxu0 %v1346
    %v1935 = vpop.f32.mrf.mxu0
    %v1936 = vadd.f32 0.0, %v1935
    %v1937 = vpop.f32.mrf.mxu0
    %v1938 = vadd.f32 0.0, %v1937
    %1939 = vmatprep.mubr.f32.mxu0 0.0
    %1940 = vmatmul.mubr.f32.gmra.mxu0 %v1347
    %v1941 = vpop.f32.mrf.mxu0
    %v1942 = vadd.f32 0.0, %v1941
    %v1943 = vpop.f32.mrf.mxu0
    %v1944 = vadd.f32 0.0, %v1943
    %1945 = vmatprep.mubr.f32.mxu0 0.0
    %1946 = vmatmul.mubr.f32.gmra.mxu0 %v1348
    %v1947 = vpop.f32.mrf.mxu0
    %v1948 = vadd.f32 0.0, %v1947
    %v1949 = vpop.f32.mrf.mxu0
    %v1950 = vadd.f32 0.0, %v1949
    %1951 = vmatprep.mubr.f32.mxu0 0.0
    %1952 = vmatmul.mubr.f32.gmra.mxu0 %v1349
    %v1953 = vpop.f32.mrf.mxu0
    %v1954 = vadd.f32 0.0, %v1953
    %v1955 = vpop.f32.mrf.mxu0
    %v1956 = vadd.f32 0.0, %v1955
    %1957 = vmatprep.mubr.f32.mxu0 0.0
    %1958 = vmatmul.mubr.f32.gmra.mxu0 %v1350
    %v1959 = vpop.f32.mrf.mxu0
    %v1960 = vadd.f32 0.0, %v1959
    %v1961 = vpop.f32.mrf.mxu0
    %v1962 = vadd.f32 0.0, %v1961
    %1963 = vmatprep.mubr.f32.mxu0 0.0
    %1964 = vmatmul.mubr.f32.gmra.mxu0 %v1351
    %v1965 = vpop.f32.mrf.mxu0
    %v1966 = vadd.f32 0.0, %v1965
    %v1967 = vpop.f32.mrf.mxu0
    %v1968 = vadd.f32 0.0, %v1967
    %1969 = vmatprep.mubr.f32.mxu0 0.0
    %1970 = vmatmul.mubr.f32.gmra.mxu0 %v1352
    %v1971 = vpop.f32.mrf.mxu0
    %v1972 = vadd.f32 0.0, %v1971
    %v1973 = vpop.f32.mrf.mxu0
    %v1974 = vadd.f32 0.0, %v1973
    %1975 = vmatprep.mubr.f32.mxu0 0.0
    %1976 = vmatmul.mubr.f32.gmra.mxu0 %v1353
    %v1977 = vpop.f32.mrf.mxu0
    %v1978 = vadd.f32 0.0, %v1977
    %v1979 = vpop.f32.mrf.mxu0
    %v1980 = vadd.f32 0.0, %v1979
    %1981 = vmatprep.mubr.f32.mxu0 0.0
    %1982 = vmatmul.mubr.f32.gmra.mxu0 %v1354
    %v1983 = vpop.f32.mrf.mxu0
    %v1984 = vadd.f32 0.0, %v1983
    %v1985 = vpop.f32.mrf.mxu0
    %v1986 = vadd.f32 0.0, %v1985
    %1987 = vmatprep.mubr.f32.mxu0 0.0
    %1988 = vmatmul.mubr.f32.gmra.mxu0 %v1355
    %v1989 = vpop.f32.mrf.mxu0
    %v1990 = vadd.f32 0.0, %v1989
    %v1991 = vpop.f32.mrf.mxu0
    %v1992 = vadd.f32 0.0, %v1991
    %1993 = vmatprep.mubr.f32.mxu0 0.0
    %1994 = vmatmul.mubr.f32.gmra.mxu0 %v1356
    %v1995 = vpop.f32.mrf.mxu0
    %v1996 = vadd.f32 0.0, %v1995
    %v1997 = vpop.f32.mrf.mxu0
    %v1998 = vadd.f32 0.0, %v1997
    %1999 = vmatprep.mubr.f32.mxu0 0.0
    %2000 = vmatmul.mubr.f32.gmra.mxu0 %v1357
    %v2001 = vpop.f32.mrf.mxu0
    %v2002 = vadd.f32 0.0, %v2001
    %v2003 = vpop.f32.mrf.mxu0
    %v2004 = vadd.f32 0.0, %v2003
    %2005 = vmatprep.mubr.f32.mxu0 0.0
    %2006 = vmatmul.mubr.f32.gmra.mxu0 %v1358
    %v2007 = vpop.f32.mrf.mxu0
    %v2008 = vadd.f32 0.0, %v2007
    %v2009 = vpop.f32.mrf.mxu0
    %v2010 = vadd.f32 0.0, %v2009
    %2011 = vmatprep.mubr.f32.mxu0 0.0
    %2012 = vmatmul.mubr.f32.gmra.mxu0 %v1359
    %v2013 = vpop.f32.mrf.mxu0
    %v2014 = vadd.f32 0.0, %v2013
    %v2015 = vpop.f32.mrf.mxu0
    %v2016 = vadd.f32 0.0, %v2015
    %2017 = vmatprep.mubr.f32.mxu0 0.0
    %2018 = vmatmul.mubr.f32.gmra.mxu0 %v1360
    %v2019 = vpop.f32.mrf.mxu0
    %v2020 = vadd.f32 0.0, %v2019
    %v2021 = vpop.f32.mrf.mxu0
    %v2022 = vadd.f32 0.0, %v2021
    %2023 = vmatprep.mubr.f32.mxu0 0.0
    %2024 = vmatmul.mubr.f32.gmra.mxu0 %v1361
    %v2025 = vpop.f32.mrf.mxu0
    %v2026 = vadd.f32 0.0, %v2025
    %v2027 = vpop.f32.mrf.mxu0
    %v2028 = vadd.f32 0.0, %v2027
    %2029 = vmatprep.mubr.f32.mxu0 0.0
    %2030 = vmatmul.mubr.f32.gmra.mxu0 %v1362
    %v2031 = vpop.f32.mrf.mxu0
    %v2032 = vadd.f32 0.0, %v2031
    %v2033 = vpop.f32.mrf.mxu0
    %v2034 = vadd.f32 0.0, %v2033
    %2035 = vmatprep.mubr.f32.mxu0 0.0
    %2036 = vmatmul.mubr.f32.gmra.mxu0 %v1363
    %v2037 = vpop.f32.mrf.mxu0
    %v2038 = vadd.f32 0.0, %v2037
    %v2039 = vpop.f32.mrf.mxu0
    %v2040 = vadd.f32 0.0, %v2039
    %2041 = vmatprep.mubr.f32.mxu0 0.0
    %2042 = vmatmul.mubr.f32.gmra.mxu0 %v1364
    %v2043 = vpop.f32.mrf.mxu0
    %v2044 = vadd.f32 0.0, %v2043
    %v2045 = vpop.f32.mrf.mxu0
    %v2046 = vadd.f32 0.0, %v2045
    %2047 = vmatprep.mubr.f32.mxu0 0.0
    %2048 = vmatmul.mubr.f32.gmra.mxu0 %v1365
    %v2049 = vpop.f32.mrf.mxu0
    %v2050 = vadd.f32 0.0, %v2049
    %v2051 = vpop.f32.mrf.mxu0
    %v2052 = vadd.f32 0.0, %v2051
    %2053 = vmatprep.mubr.f32.mxu0 0.0
    %2054 = vmatmul.mubr.f32.gmra.mxu0 %v1366
    %v2055 = vpop.f32.mrf.mxu0
    %v2056 = vadd.f32 0.0, %v2055
    %v2057 = vpop.f32.mrf.mxu0
    %v2058 = vadd.f32 0.0, %v2057
    %2059 = vmatprep.mubr.f32.mxu0 0.0
    %2060 = vmatmul.mubr.f32.gmra.mxu0 %v1367
    %v2061 = vpop.f32.mrf.mxu0
    %v2062 = vadd.f32 0.0, %v2061
    %v2063 = vpop.f32.mrf.mxu0
    %v2064 = vadd.f32 0.0, %v2063
    %2065 = vmatprep.mubr.f32.mxu0 0.0
    %2066 = vmatmul.mubr.f32.gmra.mxu0 %v1368
    %v2067 = vpop.f32.mrf.mxu0
    %v2068 = vadd.f32 0.0, %v2067
    %v2069 = vpop.f32.mrf.mxu0
    %v2070 = vadd.f32 0.0, %v2069
    %2071 = vmatprep.mubr.f32.mxu0 0.0
    %2072 = vmatmul.mubr.f32.gmra.mxu0 %v1369
    %v2073 = vpop.f32.mrf.mxu0
    %v2074 = vadd.f32 0.0, %v2073
    %v2075 = vpop.f32.mrf.mxu0
    %v2076 = vadd.f32 0.0, %v2075
    %2077 = vmatprep.mubr.f32.mxu0 0.0
    %2078 = vmatmul.mubr.f32.gmra.mxu0 %v1370
    %v2079 = vpop.f32.mrf.mxu0
    %v2080 = vadd.f32 0.0, %v2079
    %v2081 = vpop.f32.mrf.mxu0
    %v2082 = vadd.f32 0.0, %v2081
    %2083 = vmatprep.mubr.f32.mxu0 0.0
    %2084 = vmatmul.mubr.f32.gmra.mxu0 %v1371
    %v2085 = vpop.f32.mrf.mxu0
    %v2086 = vadd.f32 0.0, %v2085
    %v2087 = vpop.f32.mrf.mxu0
    %v2088 = vadd.f32 0.0, %v2087
    %2089 = vmatprep.mubr.f32.mxu0 0.0
    %2090 = vmatmul.mubr.f32.gmra.mxu0 %v1372
    %v2091 = vpop.f32.mrf.mxu0
    %v2092 = vadd.f32 0.0, %v2091
    %v2093 = vpop.f32.mrf.mxu0
    %v2094 = vadd.f32 0.0, %v2093
    %2095 = vmatprep.mubr.f32.mxu0 0.0
    %2096 = vmatmul.mubr.f32.gmra.mxu0 %v1373
    %v2097 = vpop.f32.mrf.mxu0
    %v2098 = vadd.f32 0.0, %v2097
    %v2099 = vpop.f32.mrf.mxu0
    %v2100 = vadd.f32 0.0, %v2099
    %2101 = vmatprep.mubr.f32.mxu0 0.0
    %2102 = vmatmul.mubr.f32.gmra.mxu0 %v1374
    %v2103 = vpop.f32.mrf.mxu0
    %v2104 = vadd.f32 0.0, %v2103
    %v2105 = vpop.f32.mrf.mxu0
    %v2106 = vadd.f32 0.0, %v2105
    %2107 = vmatprep.mubr.f32.mxu0 0.0
    %2108 = vmatmul.mubr.f32.gmra.mxu0 %v1375
    %v2109 = vpop.f32.mrf.mxu0
    %v2110 = vadd.f32 0.0, %v2109
    %v2111 = vpop.f32.mrf.mxu0
    %v2112 = vadd.f32 0.0, %v2111
    %2113 = vmatprep.mubr.f32.mxu0 0.0
    %2114 = vmatmul.mubr.f32.gmra.mxu0 %v1376
    %v2115 = vpop.f32.mrf.mxu0
    %v2116 = vadd.f32 0.0, %v2115
    %v2117 = vpop.f32.mrf.mxu0
    %v2118 = vadd.f32 0.0, %v2117
    %2119 = vmatprep.mubr.f32.mxu0 0.0
    %2120 = vmatmul.mubr.f32.gmra.mxu0 %v1377
    %v2121 = vpop.f32.mrf.mxu0
    %v2122 = vadd.f32 0.0, %v2121
    %v2123 = vpop.f32.mrf.mxu0
    %v2124 = vadd.f32 0.0, %v2123
    %2125 = vmatprep.mubr.f32.mxu0 0.0
    %2126 = vmatmul.mubr.f32.gmra.mxu0 %v1378
    %v2127 = vpop.f32.mrf.mxu0
    %v2128 = vadd.f32 0.0, %v2127
    %v2129 = vpop.f32.mrf.mxu0
    %v2130 = vadd.f32 0.0, %v2129
    %2131 = vmatprep.mubr.f32.mxu0 0.0
    %2132 = vmatmul.mubr.f32.gmra.mxu0 %v1379
    %v2133 = vpop.f32.mrf.mxu0
    %v2134 = vadd.f32 0.0, %v2133
    %v2135 = vpop.f32.mrf.mxu0
    %v2136 = vadd.f32 0.0, %v2135
    %2137 = vmatprep.mubr.f32.mxu0 0.0
    %2138 = vmatmul.mubr.f32.gmra.mxu0 %v1380
    %v2139 = vpop.f32.mrf.mxu0
    %v2140 = vadd.f32 0.0, %v2139
    %v2141 = vpop.f32.mrf.mxu0
    %v2142 = vadd.f32 0.0, %v2141
    %2143 = vmatprep.mubr.f32.mxu0 0.0
    %2144 = vmatmul.mubr.f32.gmra.mxu0 %v1381
    %v2145 = vpop.f32.mrf.mxu0
    %v2146 = vadd.f32 0.0, %v2145
    %v2147 = vpop.f32.mrf.mxu0
    %v2148 = vadd.f32 0.0, %v2147
    %2149 = vmatprep.mubr.f32.mxu0 0.0
    %2150 = vmatmul.mubr.f32.gmra.mxu0 %v1382
    %v2151 = vpop.f32.mrf.mxu0
    %v2152 = vadd.f32 0.0, %v2151
    %v2153 = vpop.f32.mrf.mxu0
    %v2154 = vadd.f32 0.0, %v2153
    %2155 = vmatprep.mubr.f32.mxu0 0.0
    %2156 = vmatmul.mubr.f32.gmra.mxu0 %v1383
    %v2157 = vpop.f32.mrf.mxu0
    %v2158 = vadd.f32 0.0, %v2157
    %v2159 = vpop.f32.mrf.mxu0
    %v2160 = vadd.f32 0.0, %v2159
    %2161 = vmatprep.mubr.f32.mxu0 0.0
    %2162 = vmatmul.mubr.f32.gmra.mxu0 %v1384
    %v2163 = vpop.f32.mrf.mxu0
    %v2164 = vadd.f32 0.0, %v2163
    %v2165 = vpop.f32.mrf.mxu0
    %v2166 = vadd.f32 0.0, %v2165
    %2167 = vmatprep.mubr.f32.mxu0 0.0
    %2168 = vmatmul.mubr.f32.gmra.mxu0 %v1385
    %v2169 = vpop.f32.mrf.mxu0
    %v2170 = vadd.f32 0.0, %v2169
    %v2171 = vpop.f32.mrf.mxu0
    %v2172 = vadd.f32 0.0, %v2171
    %2173 = vmatprep.mubr.f32.mxu0 0.0
    %2174 = vmatmul.mubr.f32.gmra.mxu0 %v1386
    %v2175 = vpop.f32.mrf.mxu0
    %v2176 = vadd.f32 0.0, %v2175
    %v2177 = vpop.f32.mrf.mxu0
    %v2178 = vadd.f32 0.0, %v2177
    %2179 = vmatprep.mubr.f32.mxu0 0.0
    %2180 = vmatmul.mubr.f32.gmra.mxu0 %v1387
    %v2181 = vpop.f32.mrf.mxu0
    %v2182 = vadd.f32 0.0, %v2181
    %v2183 = vpop.f32.mrf.mxu0
    %v2184 = vadd.f32 0.0, %v2183
    %2185 = vmatprep.mubr.f32.mxu0 0.0
    %2186 = vmatmul.mubr.f32.gmra.mxu0 %v1388
    %v2187 = vpop.f32.mrf.mxu0
    %v2188 = vadd.f32 0.0, %v2187
    %v2189 = vpop.f32.mrf.mxu0
    %v2190 = vadd.f32 0.0, %v2189
    %2191 = vmatprep.mubr.f32.mxu0 0.0
    %2192 = vmatmul.mubr.f32.gmra.mxu0 %v1389
    %v2193 = vpop.f32.mrf.mxu0
    %v2194 = vadd.f32 0.0, %v2193
    %v2195 = vpop.f32.mrf.mxu0
    %v2196 = vadd.f32 0.0, %v2195
    %2197 = vmatprep.mubr.f32.mxu0 0.0
    %2198 = vmatmul.mubr.f32.gmra.mxu0 %v1390
    %v2199 = vpop.f32.mrf.mxu0
    %v2200 = vadd.f32 0.0, %v2199
    %v2201 = vpop.f32.mrf.mxu0
    %v2202 = vadd.f32 0.0, %v2201
    %2203 = vmatprep.mubr.f32.mxu0 0.0
    %2204 = vmatmul.mubr.f32.gmra.mxu0 %v1391
    %v2205 = vpop.f32.mrf.mxu0
    %v2206 = vadd.f32 0.0, %v2205
    %v2207 = vpop.f32.mrf.mxu0
    %v2208 = vadd.f32 0.0, %v2207
    %2209 = vmatprep.mubr.f32.mxu0 0.0
    %2210 = vmatmul.mubr.f32.gmra.mxu0 %v1392
    %v2211 = vpop.f32.mrf.mxu0
    %v2212 = vadd.f32 0.0, %v2211
    %v2213 = vpop.f32.mrf.mxu0
    %v2214 = vadd.f32 0.0, %v2213
    %2215 = vmatprep.mubr.f32.mxu0 0.0
    %2216 = vmatmul.mubr.f32.gmra.mxu0 %v1393
    %v2217 = vpop.f32.mrf.mxu0
    %v2218 = vadd.f32 0.0, %v2217
    %v2219 = vpop.f32.mrf.mxu0
    %v2220 = vadd.f32 0.0, %v2219
    %2221 = vmatprep.mubr.f32.mxu0 0.0
    %2222 = vmatmul.mubr.f32.gmra.mxu0 %v1394
    %v2223 = vpop.f32.mrf.mxu0
    %v2224 = vadd.f32 0.0, %v2223
    %v2225 = vpop.f32.mrf.mxu0
    %v2226 = vadd.f32 0.0, %v2225
    %2227 = vmatprep.mubr.f32.mxu0 0.0
    %2228 = vmatmul.mubr.f32.gmra.mxu0 %v1395
    %v2229 = vpop.f32.mrf.mxu0
    %v2230 = vadd.f32 0.0, %v2229
    %v2231 = vpop.f32.mrf.mxu0
    %v2232 = vadd.f32 0.0, %v2231
    %2233 = vmatprep.mubr.f32.mxu0 0.0
    %2234 = vmatmul.mubr.f32.gmra.mxu0 %v1396
    %v2235 = vpop.f32.mrf.mxu0
    %v2236 = vadd.f32 0.0, %v2235
    %v2237 = vpop.f32.mrf.mxu0
    %v2238 = vadd.f32 0.0, %v2237
    %2239 = vmatprep.mubr.f32.mxu0 0.0
    %2240 = vmatmul.mubr.f32.gmra.mxu0 %v1397
    %v2241 = vpop.f32.mrf.mxu0
    %v2242 = vadd.f32 0.0, %v2241
    %v2243 = vpop.f32.mrf.mxu0
    %v2244 = vadd.f32 0.0, %v2243
    %2245 = vmatprep.mubr.f32.mxu0 0.0
    %2246 = vmatmul.mubr.f32.gmra.mxu0 %v1398
    %v2247 = vpop.f32.mrf.mxu0
    %v2248 = vadd.f32 0.0, %v2247
    %v2249 = vpop.f32.mrf.mxu0
    %v2250 = vadd.f32 0.0, %v2249
    %2251 = vmatprep.mubr.f32.mxu0 0.0
    %2252 = vmatmul.mubr.f32.gmra.mxu0 %v1399
    %v2253 = vpop.f32.mrf.mxu0
    %v2254 = vadd.f32 0.0, %v2253
    %v2255 = vpop.f32.mrf.mxu0
    %v2256 = vadd.f32 0.0, %v2255
    %2257 = vmatprep.mubr.f32.mxu0 0.0
    %2258 = vmatmul.mubr.f32.gmra.mxu0 %v1400
    %v2259 = vpop.f32.mrf.mxu0
    %v2260 = vadd.f32 0.0, %v2259
    %v2261 = vpop.f32.mrf.mxu0
    %v2262 = vadd.f32 0.0, %v2261
    %2263 = vmatprep.mubr.f32.mxu0 0.0
    %2264 = vmatmul.mubr.f32.gmra.mxu0 %v1401
    %v2265 = vpop.f32.mrf.mxu0
    %v2266 = vadd.f32 0.0, %v2265
    %v2267 = vpop.f32.mrf.mxu0
    %v2268 = vadd.f32 0.0, %v2267
    %2269 = vmatprep.mubr.f32.mxu0 0.0
    %2270 = vmatmul.mubr.f32.gmra.mxu0 %v1402
    %v2271 = vpop.f32.mrf.mxu0
    %v2272 = vadd.f32 0.0, %v2271
    %v2273 = vpop.f32.mrf.mxu0
    %v2274 = vadd.f32 0.0, %v2273
    %2275 = vmatprep.mubr.f32.mxu0 0.0
    %2276 = vmatmul.mubr.f32.gmra.mxu0 %v1403
    %v2277 = vpop.f32.mrf.mxu0
    %v2278 = vadd.f32 0.0, %v2277
    %v2279 = vpop.f32.mrf.mxu0
    %v2280 = vadd.f32 0.0, %v2279
    %2281 = vmatprep.mubr.f32.mxu0 0.0
    %2282 = vmatmul.mubr.f32.gmra.mxu0 %v1404
    %v2283 = vpop.f32.mrf.mxu0
    %v2284 = vadd.f32 0.0, %v2283
    %v2285 = vpop.f32.mrf.mxu0
    %v2286 = vadd.f32 0.0, %v2285
    %2287 = vmatprep.mubr.f32.mxu0 0.0
    %2288 = vmatmul.mubr.f32.gmra.mxu0 %v1405
    %v2289 = vpop.f32.mrf.mxu0
    %v2290 = vadd.f32 0.0, %v2289
    %v2291 = vpop.f32.mrf.mxu0
    %v2292 = vadd.f32 0.0, %v2291
    %2293 = vmatprep.mubr.f32.mxu0 0.0
    %2294 = vmatmul.mubr.f32.gmra.mxu0 %v1406
    %v2295 = vpop.f32.mrf.mxu0
    %v2296 = vadd.f32 0.0, %v2295
    %v2297 = vpop.f32.mrf.mxu0
    %v2298 = vadd.f32 0.0, %v2297
    %2299 = vmatprep.mubr.f32.mxu0 0.0
    %2300 = vmatmul.mubr.f32.gmra.mxu0 %v1407
    %v2301 = vpop.f32.mrf.mxu0
    %v2302 = vadd.f32 0.0, %v2301
    %v2303 = vpop.f32.mrf.mxu0
    %v2304 = vadd.f32 0.0, %v2303
    %2305 = vdwg.mxu0
    %2306 = vmatprep.subr.mxu0 %v1342
    %2307 = vmatpush1.msra.mxu0 %v1341
    %2308 = vmatprep.subr.mxu0 %v1335
    %2309 = vmatpush1.msra.mxu0 %v1334
    %2310 = vmatprep.subr.mxu0 %v1328
    %2311 = vmatpush1.msra.mxu0 %v1327
    %2312 = vmatprep.subr.mxu0 %v1321
    %2313 = vmatpush1.msra.mxu0 %v1320
    %2314 = vmatprep.subr.mxu0 %v1314
    %2315 = vmatpush1.msra.mxu0 %v1313
    %2316 = vmatprep.subr.mxu0 %v1307
    %2317 = vmatpush1.msra.mxu0 %v1306
    %2318 = vmatprep.subr.mxu0 %v1300
    %2319 = vmatpush1.msra.mxu0 %v1299
    %2320 = vmatprep.subr.mxu0 %v1293
    %2321 = vmatpush1.msra.mxu0 %v1292
    %2322 = vmatprep.subr.mxu0 %v1286
    %2323 = vmatpush1.msra.mxu0 %v1285
    %2324 = vmatprep.subr.mxu0 %v1279
    %2325 = vmatpush1.msra.mxu0 %v1278
    %2326 = vmatprep.subr.mxu0 %v1272
    %2327 = vmatpush1.msra.mxu0 %v1271
    %2328 = vmatprep.subr.mxu0 %v1265
    %2329 = vmatpush1.msra.mxu0 %v1264
    %2330 = vmatprep.subr.mxu0 %v1258
    %2331 = vmatpush1.msra.mxu0 %v1257
    %2332 = vmatprep.subr.mxu0 %v1251
    %2333 = vmatpush1.msra.mxu0 %v1250
    %2334 = vmatprep.subr.mxu0 %v1244
    %2335 = vmatpush1.msra.mxu0 %v1243
    %2336 = vmatprep.subr.mxu0 %v1237
    %2337 = vmatpush1.msra.mxu0 %v1236
    %2338 = vmatprep.subr.mxu0 0.0
    %2339 = vmatpush2.msra.mxu0 0.0
    %2340 = vmatprep.subr.mxu0 0.0
    %2341 = vmatpush2.msra.mxu0 0.0
    %2342 = vmatprep.subr.mxu0 0.0
    %2343 = vmatpush2.msra.mxu0 0.0
    %2344 = vmatprep.subr.mxu0 0.0
    %2345 = vmatpush2.msra.mxu0 0.0
    %2346 = vmatprep.subr.mxu0 0.0
    %2347 = vmatpush2.msra.mxu0 0.0
    %2348 = vmatprep.subr.mxu0 0.0
    %2349 = vmatpush2.msra.mxu0 0.0
    %2350 = vmatprep.subr.mxu0 0.0
    %2351 = vmatpush2.msra.mxu0 0.0
    %2352 = vmatprep.subr.mxu0 0.0
    %2353 = vmatpush2.msra.mxu0 0.0
    %2354 = vmatprep.subr.mxu0 0.0
    %2355 = vmatpush2.msra.mxu0 0.0
    %2356 = vmatprep.subr.mxu0 0.0
    %2357 = vmatpush2.msra.mxu0 0.0
    %2358 = vmatprep.subr.mxu0 0.0
    %2359 = vmatpush2.msra.mxu0 0.0
    %2360 = vmatprep.subr.mxu0 0.0
    %2361 = vmatpush2.msra.mxu0 0.0
    %2362 = vmatprep.subr.mxu0 0.0
    %2363 = vmatpush2.msra.mxu0 0.0
    %2364 = vmatprep.subr.mxu0 0.0
    %2365 = vmatpush2.msra.mxu0 0.0
    %2366 = vmatprep.subr.mxu0 0.0
    %2367 = vmatpush2.msra.mxu0 0.0
    %2368 = vmatprep.subr.mxu0 0.0
    %2369 = vmatpush2.msra.mxu0 0.0
    %2370 = vmatprep.mubr.f32.mxu0 0.0
    %2371 = vmatmul.mubr.f32.gmra.mxu0 %v1344
    %v2372 = vpop.f32.mrf.mxu0
    %v2373 = vadd.f32 0.0, %v2372
    %v2374 = vpop.f32.mrf.mxu0
    %v2375 = vadd.f32 0.0, %v2374
    %2376 = vmatprep.mubr.f32.mxu0 0.0
    %2377 = vmatmul.mubr.f32.gmra.mxu0 %v1345
    %v2378 = vpop.f32.mrf.mxu0
    %v2379 = vadd.f32 0.0, %v2378
    %v2380 = vpop.f32.mrf.mxu0
    %v2381 = vadd.f32 0.0, %v2380
    %2382 = vmatprep.mubr.f32.mxu0 0.0
    %2383 = vmatmul.mubr.f32.gmra.mxu0 %v1346
    %v2384 = vpop.f32.mrf.mxu0
    %v2385 = vadd.f32 0.0, %v2384
    %v2386 = vpop.f32.mrf.mxu0
    %v2387 = vadd.f32 0.0, %v2386
    %2388 = vmatprep.mubr.f32.mxu0 0.0
    %2389 = vmatmul.mubr.f32.gmra.mxu0 %v1347
    %v2390 = vpop.f32.mrf.mxu0
    %v2391 = vadd.f32 0.0, %v2390
    %v2392 = vpop.f32.mrf.mxu0
    %v2393 = vadd.f32 0.0, %v2392
    %2394 = vmatprep.mubr.f32.mxu0 0.0
    %2395 = vmatmul.mubr.f32.gmra.mxu0 %v1348
    %v2396 = vpop.f32.mrf.mxu0
    %v2397 = vadd.f32 0.0, %v2396
    %v2398 = vpop.f32.mrf.mxu0
    %v2399 = vadd.f32 0.0, %v2398
    %2400 = vmatprep.mubr.f32.mxu0 0.0
    %2401 = vmatmul.mubr.f32.gmra.mxu0 %v1349
    %v2402 = vpop.f32.mrf.mxu0
    %v2403 = vadd.f32 0.0, %v2402
    %v2404 = vpop.f32.mrf.mxu0
    %v2405 = vadd.f32 0.0, %v2404
    %2406 = vmatprep.mubr.f32.mxu0 0.0
    %2407 = vmatmul.mubr.f32.gmra.mxu0 %v1350
    %v2408 = vpop.f32.mrf.mxu0
    %v2409 = vadd.f32 0.0, %v2408
    %v2410 = vpop.f32.mrf.mxu0
    %v2411 = vadd.f32 0.0, %v2410
    %2412 = vmatprep.mubr.f32.mxu0 0.0
    %2413 = vmatmul.mubr.f32.gmra.mxu0 %v1351
    %v2414 = vpop.f32.mrf.mxu0
    %v2415 = vadd.f32 0.0, %v2414
    %v2416 = vpop.f32.mrf.mxu0
    %v2417 = vadd.f32 0.0, %v2416
    %2418 = vmatprep.mubr.f32.mxu0 0.0
    %2419 = vmatmul.mubr.f32.gmra.mxu0 %v1352
    %v2420 = vpop.f32.mrf.mxu0
    %v2421 = vadd.f32 0.0, %v2420
    %v2422 = vpop.f32.mrf.mxu0
    %v2423 = vadd.f32 0.0, %v2422
    %2424 = vmatprep.mubr.f32.mxu0 0.0
    %2425 = vmatmul.mubr.f32.gmra.mxu0 %v1353
    %v2426 = vpop.f32.mrf.mxu0
    %v2427 = vadd.f32 0.0, %v2426
    %v2428 = vpop.f32.mrf.mxu0
    %v2429 = vadd.f32 0.0, %v2428
    %2430 = vmatprep.mubr.f32.mxu0 0.0
    %2431 = vmatmul.mubr.f32.gmra.mxu0 %v1354
    %v2432 = vpop.f32.mrf.mxu0
    %v2433 = vadd.f32 0.0, %v2432
    %v2434 = vpop.f32.mrf.mxu0
    %v2435 = vadd.f32 0.0, %v2434
    %2436 = vmatprep.mubr.f32.mxu0 0.0
    %2437 = vmatmul.mubr.f32.gmra.mxu0 %v1355
    %v2438 = vpop.f32.mrf.mxu0
    %v2439 = vadd.f32 0.0, %v2438
    %v2440 = vpop.f32.mrf.mxu0
    %v2441 = vadd.f32 0.0, %v2440
    %2442 = vmatprep.mubr.f32.mxu0 0.0
    %2443 = vmatmul.mubr.f32.gmra.mxu0 %v1356
    %v2444 = vpop.f32.mrf.mxu0
    %v2445 = vadd.f32 0.0, %v2444
    %v2446 = vpop.f32.mrf.mxu0
    %v2447 = vadd.f32 0.0, %v2446
    %2448 = vmatprep.mubr.f32.mxu0 0.0
    %2449 = vmatmul.mubr.f32.gmra.mxu0 %v1357
    %v2450 = vpop.f32.mrf.mxu0
    %v2451 = vadd.f32 0.0, %v2450
    %v2452 = vpop.f32.mrf.mxu0
    %v2453 = vadd.f32 0.0, %v2452
    %2454 = vmatprep.mubr.f32.mxu0 0.0
    %2455 = vmatmul.mubr.f32.gmra.mxu0 %v1358
    %v2456 = vpop.f32.mrf.mxu0
    %v2457 = vadd.f32 0.0, %v2456
    %v2458 = vpop.f32.mrf.mxu0
    %v2459 = vadd.f32 0.0, %v2458
    %2460 = vmatprep.mubr.f32.mxu0 0.0
    %2461 = vmatmul.mubr.f32.gmra.mxu0 %v1359
    %v2462 = vpop.f32.mrf.mxu0
    %v2463 = vadd.f32 0.0, %v2462
    %v2464 = vpop.f32.mrf.mxu0
    %v2465 = vadd.f32 0.0, %v2464
    %2466 = vmatprep.mubr.f32.mxu0 0.0
    %2467 = vmatmul.mubr.f32.gmra.mxu0 %v1360
    %v2468 = vpop.f32.mrf.mxu0
    %v2469 = vadd.f32 0.0, %v2468
    %v2470 = vpop.f32.mrf.mxu0
    %v2471 = vadd.f32 0.0, %v2470
    %2472 = vmatprep.mubr.f32.mxu0 0.0
    %2473 = vmatmul.mubr.f32.gmra.mxu0 %v1361
    %v2474 = vpop.f32.mrf.mxu0
    %v2475 = vadd.f32 0.0, %v2474
    %v2476 = vpop.f32.mrf.mxu0
    %v2477 = vadd.f32 0.0, %v2476
    %2478 = vmatprep.mubr.f32.mxu0 0.0
    %2479 = vmatmul.mubr.f32.gmra.mxu0 %v1362
    %v2480 = vpop.f32.mrf.mxu0
    %v2481 = vadd.f32 0.0, %v2480
    %v2482 = vpop.f32.mrf.mxu0
    %v2483 = vadd.f32 0.0, %v2482
    %2484 = vmatprep.mubr.f32.mxu0 0.0
    %2485 = vmatmul.mubr.f32.gmra.mxu0 %v1363
    %v2486 = vpop.f32.mrf.mxu0
    %v2487 = vadd.f32 0.0, %v2486
    %v2488 = vpop.f32.mrf.mxu0
    %v2489 = vadd.f32 0.0, %v2488
    %2490 = vmatprep.mubr.f32.mxu0 0.0
    %2491 = vmatmul.mubr.f32.gmra.mxu0 %v1364
    %v2492 = vpop.f32.mrf.mxu0
    %v2493 = vadd.f32 0.0, %v2492
    %v2494 = vpop.f32.mrf.mxu0
    %v2495 = vadd.f32 0.0, %v2494
    %2496 = vmatprep.mubr.f32.mxu0 0.0
    %2497 = vmatmul.mubr.f32.gmra.mxu0 %v1365
    %v2498 = vpop.f32.mrf.mxu0
    %v2499 = vadd.f32 0.0, %v2498
    %v2500 = vpop.f32.mrf.mxu0
    %v2501 = vadd.f32 0.0, %v2500
    %2502 = vmatprep.mubr.f32.mxu0 0.0
    %2503 = vmatmul.mubr.f32.gmra.mxu0 %v1366
    %v2504 = vpop.f32.mrf.mxu0
    %v2505 = vadd.f32 0.0, %v2504
    %v2506 = vpop.f32.mrf.mxu0
    %v2507 = vadd.f32 0.0, %v2506
    %2508 = vmatprep.mubr.f32.mxu0 0.0
    %2509 = vmatmul.mubr.f32.gmra.mxu0 %v1367
    %v2510 = vpop.f32.mrf.mxu0
    %v2511 = vadd.f32 0.0, %v2510
    %v2512 = vpop.f32.mrf.mxu0
    %v2513 = vadd.f32 0.0, %v2512
    %2514 = vmatprep.mubr.f32.mxu0 0.0
    %2515 = vmatmul.mubr.f32.gmra.mxu0 %v1368
    %v2516 = vpop.f32.mrf.mxu0
    %v2517 = vadd.f32 0.0, %v2516
    %v2518 = vpop.f32.mrf.mxu0
    %v2519 = vadd.f32 0.0, %v2518
    %2520 = vmatprep.mubr.f32.mxu0 0.0
    %2521 = vmatmul.mubr.f32.gmra.mxu0 %v1369
    %v2522 = vpop.f32.mrf.mxu0
    %v2523 = vadd.f32 0.0, %v2522
    %v2524 = vpop.f32.mrf.mxu0
    %v2525 = vadd.f32 0.0, %v2524
    %2526 = vmatprep.mubr.f32.mxu0 0.0
    %2527 = vmatmul.mubr.f32.gmra.mxu0 %v1370
    %v2528 = vpop.f32.mrf.mxu0
    %v2529 = vadd.f32 0.0, %v2528
    %v2530 = vpop.f32.mrf.mxu0
    %v2531 = vadd.f32 0.0, %v2530
    %2532 = vmatprep.mubr.f32.mxu0 0.0
    %2533 = vmatmul.mubr.f32.gmra.mxu0 %v1371
    %v2534 = vpop.f32.mrf.mxu0
    %v2535 = vadd.f32 0.0, %v2534
    %v2536 = vpop.f32.mrf.mxu0
    %v2537 = vadd.f32 0.0, %v2536
    %2538 = vmatprep.mubr.f32.mxu0 0.0
    %2539 = vmatmul.mubr.f32.gmra.mxu0 %v1372
    %v2540 = vpop.f32.mrf.mxu0
    %v2541 = vadd.f32 0.0, %v2540
    %v2542 = vpop.f32.mrf.mxu0
    %v2543 = vadd.f32 0.0, %v2542
    %2544 = vmatprep.mubr.f32.mxu0 0.0
    %2545 = vmatmul.mubr.f32.gmra.mxu0 %v1373
    %v2546 = vpop.f32.mrf.mxu0
    %v2547 = vadd.f32 0.0, %v2546
    %v2548 = vpop.f32.mrf.mxu0
    %v2549 = vadd.f32 0.0, %v2548
    %2550 = vmatprep.mubr.f32.mxu0 0.0
    %2551 = vmatmul.mubr.f32.gmra.mxu0 %v1374
    %v2552 = vpop.f32.mrf.mxu0
    %v2553 = vadd.f32 0.0, %v2552
    %v2554 = vpop.f32.mrf.mxu0
    %v2555 = vadd.f32 0.0, %v2554
    %2556 = vmatprep.mubr.f32.mxu0 0.0
    %2557 = vmatmul.mubr.f32.gmra.mxu0 %v1375
    %v2558 = vpop.f32.mrf.mxu0
    %v2559 = vadd.f32 0.0, %v2558
    %v2560 = vpop.f32.mrf.mxu0
    %v2561 = vadd.f32 0.0, %v2560
    %2562 = vmatprep.mubr.f32.mxu0 0.0
    %2563 = vmatmul.mubr.f32.gmra.mxu0 %v1376
    %v2564 = vpop.f32.mrf.mxu0
    %v2565 = vadd.f32 0.0, %v2564
    %v2566 = vpop.f32.mrf.mxu0
    %v2567 = vadd.f32 0.0, %v2566
    %2568 = vmatprep.mubr.f32.mxu0 0.0
    %2569 = vmatmul.mubr.f32.gmra.mxu0 %v1377
    %v2570 = vpop.f32.mrf.mxu0
    %v2571 = vadd.f32 0.0, %v2570
    %v2572 = vpop.f32.mrf.mxu0
    %v2573 = vadd.f32 0.0, %v2572
    %2574 = vmatprep.mubr.f32.mxu0 0.0
    %2575 = vmatmul.mubr.f32.gmra.mxu0 %v1378
    %v2576 = vpop.f32.mrf.mxu0
    %v2577 = vadd.f32 0.0, %v2576
    %v2578 = vpop.f32.mrf.mxu0
    %v2579 = vadd.f32 0.0, %v2578
    %2580 = vmatprep.mubr.f32.mxu0 0.0
    %2581 = vmatmul.mubr.f32.gmra.mxu0 %v1379
    %v2582 = vpop.f32.mrf.mxu0
    %v2583 = vadd.f32 0.0, %v2582
    %v2584 = vpop.f32.mrf.mxu0
    %v2585 = vadd.f32 0.0, %v2584
    %2586 = vmatprep.mubr.f32.mxu0 0.0
    %2587 = vmatmul.mubr.f32.gmra.mxu0 %v1380
    %v2588 = vpop.f32.mrf.mxu0
    %v2589 = vadd.f32 0.0, %v2588
    %v2590 = vpop.f32.mrf.mxu0
    %v2591 = vadd.f32 0.0, %v2590
    %2592 = vmatprep.mubr.f32.mxu0 0.0
    %2593 = vmatmul.mubr.f32.gmra.mxu0 %v1381
    %v2594 = vpop.f32.mrf.mxu0
    %v2595 = vadd.f32 0.0, %v2594
    %v2596 = vpop.f32.mrf.mxu0
    %v2597 = vadd.f32 0.0, %v2596
    %2598 = vmatprep.mubr.f32.mxu0 0.0
    %2599 = vmatmul.mubr.f32.gmra.mxu0 %v1382
    %v2600 = vpop.f32.mrf.mxu0
    %v2601 = vadd.f32 0.0, %v2600
    %v2602 = vpop.f32.mrf.mxu0
    %v2603 = vadd.f32 0.0, %v2602
    %2604 = vmatprep.mubr.f32.mxu0 0.0
    %2605 = vmatmul.mubr.f32.gmra.mxu0 %v1383
    %v2606 = vpop.f32.mrf.mxu0
    %v2607 = vadd.f32 0.0, %v2606
    %v2608 = vpop.f32.mrf.mxu0
    %v2609 = vadd.f32 0.0, %v2608
    %2610 = vmatprep.mubr.f32.mxu0 0.0
    %2611 = vmatmul.mubr.f32.gmra.mxu0 %v1384
    %v2612 = vpop.f32.mrf.mxu0
    %v2613 = vadd.f32 0.0, %v2612
    %v2614 = vpop.f32.mrf.mxu0
    %v2615 = vadd.f32 0.0, %v2614
    %2616 = vmatprep.mubr.f32.mxu0 0.0
    %2617 = vmatmul.mubr.f32.gmra.mxu0 %v1385
    %v2618 = vpop.f32.mrf.mxu0
    %v2619 = vadd.f32 0.0, %v2618
    %v2620 = vpop.f32.mrf.mxu0
    %v2621 = vadd.f32 0.0, %v2620
    %2622 = vmatprep.mubr.f32.mxu0 0.0
    %2623 = vmatmul.mubr.f32.gmra.mxu0 %v1386
    %v2624 = vpop.f32.mrf.mxu0
    %v2625 = vadd.f32 0.0, %v2624
    %v2626 = vpop.f32.mrf.mxu0
    %v2627 = vadd.f32 0.0, %v2626
    %2628 = vmatprep.mubr.f32.mxu0 0.0
    %2629 = vmatmul.mubr.f32.gmra.mxu0 %v1387
    %v2630 = vpop.f32.mrf.mxu0
    %v2631 = vadd.f32 0.0, %v2630
    %v2632 = vpop.f32.mrf.mxu0
    %v2633 = vadd.f32 0.0, %v2632
    %2634 = vmatprep.mubr.f32.mxu0 0.0
    %2635 = vmatmul.mubr.f32.gmra.mxu0 %v1388
    %v2636 = vpop.f32.mrf.mxu0
    %v2637 = vadd.f32 0.0, %v2636
    %v2638 = vpop.f32.mrf.mxu0
    %v2639 = vadd.f32 0.0, %v2638
    %2640 = vmatprep.mubr.f32.mxu0 0.0
    %2641 = vmatmul.mubr.f32.gmra.mxu0 %v1389
    %v2642 = vpop.f32.mrf.mxu0
    %v2643 = vadd.f32 0.0, %v2642
    %v2644 = vpop.f32.mrf.mxu0
    %v2645 = vadd.f32 0.0, %v2644
    %2646 = vmatprep.mubr.f32.mxu0 0.0
    %2647 = vmatmul.mubr.f32.gmra.mxu0 %v1390
    %v2648 = vpop.f32.mrf.mxu0
    %v2649 = vadd.f32 0.0, %v2648
    %v2650 = vpop.f32.mrf.mxu0
    %v2651 = vadd.f32 0.0, %v2650
    %2652 = vmatprep.mubr.f32.mxu0 0.0
    %2653 = vmatmul.mubr.f32.gmra.mxu0 %v1391
    %v2654 = vpop.f32.mrf.mxu0
    %v2655 = vadd.f32 0.0, %v2654
    %v2656 = vpop.f32.mrf.mxu0
    %v2657 = vadd.f32 0.0, %v2656
    %2658 = vmatprep.mubr.f32.mxu0 0.0
    %2659 = vmatmul.mubr.f32.gmra.mxu0 %v1392
    %v2660 = vpop.f32.mrf.mxu0
    %v2661 = vadd.f32 0.0, %v2660
    %v2662 = vpop.f32.mrf.mxu0
    %v2663 = vadd.f32 0.0, %v2662
    %2664 = vmatprep.mubr.f32.mxu0 0.0
    %2665 = vmatmul.mubr.f32.gmra.mxu0 %v1393
    %v2666 = vpop.f32.mrf.mxu0
    %v2667 = vadd.f32 0.0, %v2666
    %v2668 = vpop.f32.mrf.mxu0
    %v2669 = vadd.f32 0.0, %v2668
    %2670 = vmatprep.mubr.f32.mxu0 0.0
    %2671 = vmatmul.mubr.f32.gmra.mxu0 %v1394
    %v2672 = vpop.f32.mrf.mxu0
    %v2673 = vadd.f32 0.0, %v2672
    %v2674 = vpop.f32.mrf.mxu0
    %v2675 = vadd.f32 0.0, %v2674
    %2676 = vmatprep.mubr.f32.mxu0 0.0
    %2677 = vmatmul.mubr.f32.gmra.mxu0 %v1395
    %v2678 = vpop.f32.mrf.mxu0
    %v2679 = vadd.f32 0.0, %v2678
    %v2680 = vpop.f32.mrf.mxu0
    %v2681 = vadd.f32 0.0, %v2680
    %2682 = vmatprep.mubr.f32.mxu0 0.0
    %2683 = vmatmul.mubr.f32.gmra.mxu0 %v1396
    %v2684 = vpop.f32.mrf.mxu0
    %v2685 = vadd.f32 0.0, %v2684
    %v2686 = vpop.f32.mrf.mxu0
    %v2687 = vadd.f32 0.0, %v2686
    %2688 = vmatprep.mubr.f32.mxu0 0.0
    %2689 = vmatmul.mubr.f32.gmra.mxu0 %v1397
    %v2690 = vpop.f32.mrf.mxu0
    %v2691 = vadd.f32 0.0, %v2690
    %v2692 = vpop.f32.mrf.mxu0
    %v2693 = vadd.f32 0.0, %v2692
    %2694 = vmatprep.mubr.f32.mxu0 0.0
    %2695 = vmatmul.mubr.f32.gmra.mxu0 %v1398
    %v2696 = vpop.f32.mrf.mxu0
    %v2697 = vadd.f32 0.0, %v2696
    %v2698 = vpop.f32.mrf.mxu0
    %v2699 = vadd.f32 0.0, %v2698
    %2700 = vmatprep.mubr.f32.mxu0 0.0
    %2701 = vmatmul.mubr.f32.gmra.mxu0 %v1399
    %v2702 = vpop.f32.mrf.mxu0
    %v2703 = vadd.f32 0.0, %v2702
    %v2704 = vpop.f32.mrf.mxu0
    %v2705 = vadd.f32 0.0, %v2704
    %2706 = vmatprep.mubr.f32.mxu0 0.0
    %2707 = vmatmul.mubr.f32.gmra.mxu0 %v1400
    %v2708 = vpop.f32.mrf.mxu0
    %v2709 = vadd.f32 0.0, %v2708
    %v2710 = vpop.f32.mrf.mxu0
    %v2711 = vadd.f32 0.0, %v2710
    %2712 = vmatprep.mubr.f32.mxu0 0.0
    %2713 = vmatmul.mubr.f32.gmra.mxu0 %v1401
    %v2714 = vpop.f32.mrf.mxu0
    %v2715 = vadd.f32 0.0, %v2714
    %v2716 = vpop.f32.mrf.mxu0
    %v2717 = vadd.f32 0.0, %v2716
    %2718 = vmatprep.mubr.f32.mxu0 0.0
    %2719 = vmatmul.mubr.f32.gmra.mxu0 %v1402
    %v2720 = vpop.f32.mrf.mxu0
    %v2721 = vadd.f32 0.0, %v2720
    %v2722 = vpop.f32.mrf.mxu0
    %v2723 = vadd.f32 0.0, %v2722
    %2724 = vmatprep.mubr.f32.mxu0 0.0
    %2725 = vmatmul.mubr.f32.gmra.mxu0 %v1403
    %v2726 = vpop.f32.mrf.mxu0
    %v2727 = vadd.f32 0.0, %v2726
    %v2728 = vpop.f32.mrf.mxu0
    %v2729 = vadd.f32 0.0, %v2728
    %2730 = vmatprep.mubr.f32.mxu0 0.0
    %2731 = vmatmul.mubr.f32.gmra.mxu0 %v1404
    %v2732 = vpop.f32.mrf.mxu0
    %v2733 = vadd.f32 0.0, %v2732
    %v2734 = vpop.f32.mrf.mxu0
    %v2735 = vadd.f32 0.0, %v2734
    %2736 = vmatprep.mubr.f32.mxu0 0.0
    %2737 = vmatmul.mubr.f32.gmra.mxu0 %v1405
    %v2738 = vpop.f32.mrf.mxu0
    %v2739 = vadd.f32 0.0, %v2738
    %v2740 = vpop.f32.mrf.mxu0
    %v2741 = vadd.f32 0.0, %v2740
    %2742 = vmatprep.mubr.f32.mxu0 0.0
    %2743 = vmatmul.mubr.f32.gmra.mxu0 %v1406
    %v2744 = vpop.f32.mrf.mxu0
    %v2745 = vadd.f32 0.0, %v2744
    %v2746 = vpop.f32.mrf.mxu0
    %v2747 = vadd.f32 0.0, %v2746
    %2748 = vmatprep.mubr.f32.mxu0 0.0
    %2749 = vmatmul.mubr.f32.gmra.mxu0 %v1407
    %v2750 = vpop.f32.mrf.mxu0
    %v2751 = vadd.f32 0.0, %v2750
    %v2752 = vpop.f32.mrf.mxu0
    %v2753 = vadd.f32 0.0, %v2752
    %2754 = vdwg.mxu0
    %2755 = vmatprep.subr.mxu0 0.0
    %2756 = vmatpush1.msra.mxu0 %v1343
    %2757 = vmatprep.subr.mxu0 0.0
    %2758 = vmatpush1.msra.mxu0 %v1336
    %2759 = vmatprep.subr.mxu0 0.0
    %2760 = vmatpush1.msra.mxu0 %v1329
    %2761 = vmatprep.subr.mxu0 0.0
    %2762 = vmatpush1.msra.mxu0 %v1322
    %2763 = vmatprep.subr.mxu0 0.0
    %2764 = vmatpush1.msra.mxu0 %v1315
    %2765 = vmatprep.subr.mxu0 0.0
    %2766 = vmatpush1.msra.mxu0 %v1308
    %2767 = vmatprep.subr.mxu0 0.0
    %2768 = vmatpush1.msra.mxu0 %v1301
    %2769 = vmatprep.subr.mxu0 0.0
    %2770 = vmatpush1.msra.mxu0 %v1294
    %2771 = vmatprep.subr.mxu0 0.0
    %2772 = vmatpush1.msra.mxu0 %v1287
    %2773 = vmatprep.subr.mxu0 0.0
    %2774 = vmatpush1.msra.mxu0 %v1280
    %2775 = vmatprep.subr.mxu0 0.0
    %2776 = vmatpush1.msra.mxu0 %v1273
    %2777 = vmatprep.subr.mxu0 0.0
    %2778 = vmatpush1.msra.mxu0 %v1266
    %2779 = vmatprep.subr.mxu0 0.0
    %2780 = vmatpush1.msra.mxu0 %v1259
    %2781 = vmatprep.subr.mxu0 0.0
    %2782 = vmatpush1.msra.mxu0 %v1252
    %2783 = vmatprep.subr.mxu0 0.0
    %2784 = vmatpush1.msra.mxu0 %v1245
    %2785 = vmatprep.subr.mxu0 0.0
    %2786 = vmatpush1.msra.mxu0 %v1238
    %2787 = vmatprep.subr.mxu0 0.0
    %2788 = vmatpush2.msra.mxu0 0.0
    %2789 = vmatprep.subr.mxu0 0.0
    %2790 = vmatpush2.msra.mxu0 0.0
    %2791 = vmatprep.subr.mxu0 0.0
    %2792 = vmatpush2.msra.mxu0 0.0
    %2793 = vmatprep.subr.mxu0 0.0
    %2794 = vmatpush2.msra.mxu0 0.0
    %2795 = vmatprep.subr.mxu0 0.0
    %2796 = vmatpush2.msra.mxu0 0.0
    %2797 = vmatprep.subr.mxu0 0.0
    %2798 = vmatpush2.msra.mxu0 0.0
    %2799 = vmatprep.subr.mxu0 0.0
    %2800 = vmatpush2.msra.mxu0 0.0
    %2801 = vmatprep.subr.mxu0 0.0
    %2802 = vmatpush2.msra.mxu0 0.0
    %2803 = vmatprep.subr.mxu0 0.0
    %2804 = vmatpush2.msra.mxu0 0.0
    %2805 = vmatprep.subr.mxu0 0.0
    %2806 = vmatpush2.msra.mxu0 0.0
    %2807 = vmatprep.subr.mxu0 0.0
    %2808 = vmatpush2.msra.mxu0 0.0
    %2809 = vmatprep.subr.mxu0 0.0
    %2810 = vmatpush2.msra.mxu0 0.0
    %2811 = vmatprep.subr.mxu0 0.0
    %2812 = vmatpush2.msra.mxu0 0.0
    %2813 = vmatprep.subr.mxu0 0.0
    %2814 = vmatpush2.msra.mxu0 0.0
    %2815 = vmatprep.subr.mxu0 0.0
    %2816 = vmatpush2.msra.mxu0 0.0
    %2817 = vmatprep.subr.mxu0 0.0
    %2818 = vmatpush2.msra.mxu0 0.0
    %2819 = vmatprep.mubr.f32.mxu0 0.0
    %2820 = vmatmul.mubr.f32.gmra.mxu0 %v1344
    %v2821 = vpop.f32.mrf.mxu0
    %v2822 = vadd.f32 0.0, %v2821
    %v2823 = vpop.f32.mrf.mxu0
    %2824 = vmatprep.mubr.f32.mxu0 0.0
    %2825 = vmatmul.mubr.f32.gmra.mxu0 %v1345
    %v2826 = vpop.f32.mrf.mxu0
    %v2827 = vadd.f32 0.0, %v2826
    %v2828 = vpop.f32.mrf.mxu0
    %2829 = vmatprep.mubr.f32.mxu0 0.0
    %2830 = vmatmul.mubr.f32.gmra.mxu0 %v1346
    %v2831 = vpop.f32.mrf.mxu0
    %v2832 = vadd.f32 0.0, %v2831
    %v2833 = vpop.f32.mrf.mxu0
    %2834 = vmatprep.mubr.f32.mxu0 0.0
    %2835 = vmatmul.mubr.f32.gmra.mxu0 %v1347
    %v2836 = vpop.f32.mrf.mxu0
    %v2837 = vadd.f32 0.0, %v2836
    %v2838 = vpop.f32.mrf.mxu0
    %2839 = vmatprep.mubr.f32.mxu0 0.0
    %2840 = vmatmul.mubr.f32.gmra.mxu0 %v1348
    %v2841 = vpop.f32.mrf.mxu0
    %v2842 = vadd.f32 0.0, %v2841
    %v2843 = vpop.f32.mrf.mxu0
    %2844 = vmatprep.mubr.f32.mxu0 0.0
    %2845 = vmatmul.mubr.f32.gmra.mxu0 %v1349
    %v2846 = vpop.f32.mrf.mxu0
    %v2847 = vadd.f32 0.0, %v2846
    %v2848 = vpop.f32.mrf.mxu0
    %2849 = vmatprep.mubr.f32.mxu0 0.0
    %2850 = vmatmul.mubr.f32.gmra.mxu0 %v1350
    %v2851 = vpop.f32.mrf.mxu0
    %v2852 = vadd.f32 0.0, %v2851
    %v2853 = vpop.f32.mrf.mxu0
    %2854 = vmatprep.mubr.f32.mxu0 0.0
    %2855 = vmatmul.mubr.f32.gmra.mxu0 %v1351
    %v2856 = vpop.f32.mrf.mxu0
    %v2857 = vadd.f32 0.0, %v2856
    %v2858 = vpop.f32.mrf.mxu0
    %2859 = vmatprep.mubr.f32.mxu0 0.0
    %2860 = vmatmul.mubr.f32.gmra.mxu0 %v1352
    %v2861 = vpop.f32.mrf.mxu0
    %v2862 = vadd.f32 0.0, %v2861
    %v2863 = vpop.f32.mrf.mxu0
    %2864 = vmatprep.mubr.f32.mxu0 0.0
    %2865 = vmatmul.mubr.f32.gmra.mxu0 %v1353
    %v2866 = vpop.f32.mrf.mxu0
    %v2867 = vadd.f32 0.0, %v2866
    %v2868 = vpop.f32.mrf.mxu0
    %2869 = vmatprep.mubr.f32.mxu0 0.0
    %2870 = vmatmul.mubr.f32.gmra.mxu0 %v1354
    %v2871 = vpop.f32.mrf.mxu0
    %v2872 = vadd.f32 0.0, %v2871
    %v2873 = vpop.f32.mrf.mxu0
    %2874 = vmatprep.mubr.f32.mxu0 0.0
    %2875 = vmatmul.mubr.f32.gmra.mxu0 %v1355
    %v2876 = vpop.f32.mrf.mxu0
    %v2877 = vadd.f32 0.0, %v2876
    %v2878 = vpop.f32.mrf.mxu0
    %2879 = vmatprep.mubr.f32.mxu0 0.0
    %2880 = vmatmul.mubr.f32.gmra.mxu0 %v1356
    %v2881 = vpop.f32.mrf.mxu0
    %v2882 = vadd.f32 0.0, %v2881
    %v2883 = vpop.f32.mrf.mxu0
    %2884 = vmatprep.mubr.f32.mxu0 0.0
    %2885 = vmatmul.mubr.f32.gmra.mxu0 %v1357
    %v2886 = vpop.f32.mrf.mxu0
    %v2887 = vadd.f32 0.0, %v2886
    %v2888 = vpop.f32.mrf.mxu0
    %2889 = vmatprep.mubr.f32.mxu0 0.0
    %2890 = vmatmul.mubr.f32.gmra.mxu0 %v1358
    %v2891 = vpop.f32.mrf.mxu0
    %v2892 = vadd.f32 0.0, %v2891
    %v2893 = vpop.f32.mrf.mxu0
    %2894 = vmatprep.mubr.f32.mxu0 0.0
    %2895 = vmatmul.mubr.f32.gmra.mxu0 %v1359
    %v2896 = vpop.f32.mrf.mxu0
    %v2897 = vadd.f32 0.0, %v2896
    %v2898 = vpop.f32.mrf.mxu0
    %2899 = vmatprep.mubr.f32.mxu0 0.0
    %2900 = vmatmul.mubr.f32.gmra.mxu0 %v1360
    %v2901 = vpop.f32.mrf.mxu0
    %v2902 = vadd.f32 0.0, %v2901
    %v2903 = vpop.f32.mrf.mxu0
    %2904 = vmatprep.mubr.f32.mxu0 0.0
    %2905 = vmatmul.mubr.f32.gmra.mxu0 %v1361
    %v2906 = vpop.f32.mrf.mxu0
    %v2907 = vadd.f32 0.0, %v2906
    %v2908 = vpop.f32.mrf.mxu0
    %2909 = vmatprep.mubr.f32.mxu0 0.0
    %2910 = vmatmul.mubr.f32.gmra.mxu0 %v1362
    %v2911 = vpop.f32.mrf.mxu0
    %v2912 = vadd.f32 0.0, %v2911
    %v2913 = vpop.f32.mrf.mxu0
    %2914 = vmatprep.mubr.f32.mxu0 0.0
    %2915 = vmatmul.mubr.f32.gmra.mxu0 %v1363
    %v2916 = vpop.f32.mrf.mxu0
    %v2917 = vadd.f32 0.0, %v2916
    %v2918 = vpop.f32.mrf.mxu0
    %2919 = vmatprep.mubr.f32.mxu0 0.0
    %2920 = vmatmul.mubr.f32.gmra.mxu0 %v1364
    %v2921 = vpop.f32.mrf.mxu0
    %v2922 = vadd.f32 0.0, %v2921
    %v2923 = vpop.f32.mrf.mxu0
    %2924 = vmatprep.mubr.f32.mxu0 0.0
    %2925 = vmatmul.mubr.f32.gmra.mxu0 %v1365
    %v2926 = vpop.f32.mrf.mxu0
    %v2927 = vadd.f32 0.0, %v2926
    %v2928 = vpop.f32.mrf.mxu0
    %2929 = vmatprep.mubr.f32.mxu0 0.0
    %2930 = vmatmul.mubr.f32.gmra.mxu0 %v1366
    %v2931 = vpop.f32.mrf.mxu0
    %v2932 = vadd.f32 0.0, %v2931
    %v2933 = vpop.f32.mrf.mxu0
    %2934 = vmatprep.mubr.f32.mxu0 0.0
    %2935 = vmatmul.mubr.f32.gmra.mxu0 %v1367
    %v2936 = vpop.f32.mrf.mxu0
    %v2937 = vadd.f32 0.0, %v2936
    %v2938 = vpop.f32.mrf.mxu0
    %2939 = vmatprep.mubr.f32.mxu0 0.0
    %2940 = vmatmul.mubr.f32.gmra.mxu0 %v1368
    %v2941 = vpop.f32.mrf.mxu0
    %v2942 = vadd.f32 0.0, %v2941
    %v2943 = vpop.f32.mrf.mxu0
    %2944 = vmatprep.mubr.f32.mxu0 0.0
    %2945 = vmatmul.mubr.f32.gmra.mxu0 %v1369
    %v2946 = vpop.f32.mrf.mxu0
    %v2947 = vadd.f32 0.0, %v2946
    %v2948 = vpop.f32.mrf.mxu0
    %2949 = vmatprep.mubr.f32.mxu0 0.0
    %2950 = vmatmul.mubr.f32.gmra.mxu0 %v1370
    %v2951 = vpop.f32.mrf.mxu0
    %v2952 = vadd.f32 0.0, %v2951
    %v2953 = vpop.f32.mrf.mxu0
    %2954 = vmatprep.mubr.f32.mxu0 0.0
    %2955 = vmatmul.mubr.f32.gmra.mxu0 %v1371
    %v2956 = vpop.f32.mrf.mxu0
    %v2957 = vadd.f32 0.0, %v2956
    %v2958 = vpop.f32.mrf.mxu0
    %2959 = vmatprep.mubr.f32.mxu0 0.0
    %2960 = vmatmul.mubr.f32.gmra.mxu0 %v1372
    %v2961 = vpop.f32.mrf.mxu0
    %v2962 = vadd.f32 0.0, %v2961
    %v2963 = vpop.f32.mrf.mxu0
    %2964 = vmatprep.mubr.f32.mxu0 0.0
    %2965 = vmatmul.mubr.f32.gmra.mxu0 %v1373
    %v2966 = vpop.f32.mrf.mxu0
    %v2967 = vadd.f32 0.0, %v2966
    %v2968 = vpop.f32.mrf.mxu0
    %2969 = vmatprep.mubr.f32.mxu0 0.0
    %2970 = vmatmul.mubr.f32.gmra.mxu0 %v1374
    %v2971 = vpop.f32.mrf.mxu0
    %v2972 = vadd.f32 0.0, %v2971
    %v2973 = vpop.f32.mrf.mxu0
    %2974 = vmatprep.mubr.f32.mxu0 0.0
    %2975 = vmatmul.mubr.f32.gmra.mxu0 %v1375
    %v2976 = vpop.f32.mrf.mxu0
    %v2977 = vadd.f32 0.0, %v2976
    %v2978 = vpop.f32.mrf.mxu0
    %2979 = vmatprep.mubr.f32.mxu0 0.0
    %2980 = vmatmul.mubr.f32.gmra.mxu0 %v1376
    %v2981 = vpop.f32.mrf.mxu0
    %v2982 = vadd.f32 0.0, %v2981
    %v2983 = vpop.f32.mrf.mxu0
    %2984 = vmatprep.mubr.f32.mxu0 0.0
    %2985 = vmatmul.mubr.f32.gmra.mxu0 %v1377
    %v2986 = vpop.f32.mrf.mxu0
    %v2987 = vadd.f32 0.0, %v2986
    %v2988 = vpop.f32.mrf.mxu0
    %2989 = vmatprep.mubr.f32.mxu0 0.0
    %2990 = vmatmul.mubr.f32.gmra.mxu0 %v1378
    %v2991 = vpop.f32.mrf.mxu0
    %v2992 = vadd.f32 0.0, %v2991
    %v2993 = vpop.f32.mrf.mxu0
    %2994 = vmatprep.mubr.f32.mxu0 0.0
    %2995 = vmatmul.mubr.f32.gmra.mxu0 %v1379
    %v2996 = vpop.f32.mrf.mxu0
    %v2997 = vadd.f32 0.0, %v2996
    %v2998 = vpop.f32.mrf.mxu0
    %2999 = vmatprep.mubr.f32.mxu0 0.0
    %3000 = vmatmul.mubr.f32.gmra.mxu0 %v1380
    %v3001 = vpop.f32.mrf.mxu0
    %v3002 = vadd.f32 0.0, %v3001
    %v3003 = vpop.f32.mrf.mxu0
    %3004 = vmatprep.mubr.f32.mxu0 0.0
    %3005 = vmatmul.mubr.f32.gmra.mxu0 %v1381
    %v3006 = vpop.f32.mrf.mxu0
    %v3007 = vadd.f32 0.0, %v3006
    %v3008 = vpop.f32.mrf.mxu0
    %3009 = vmatprep.mubr.f32.mxu0 0.0
    %3010 = vmatmul.mubr.f32.gmra.mxu0 %v1382
    %v3011 = vpop.f32.mrf.mxu0
    %v3012 = vadd.f32 0.0, %v3011
    %v3013 = vpop.f32.mrf.mxu0
    %3014 = vmatprep.mubr.f32.mxu0 0.0
    %3015 = vmatmul.mubr.f32.gmra.mxu0 %v1383
    %v3016 = vpop.f32.mrf.mxu0
    %v3017 = vadd.f32 0.0, %v3016
    %v3018 = vpop.f32.mrf.mxu0
    %3019 = vmatprep.mubr.f32.mxu0 0.0
    %3020 = vmatmul.mubr.f32.gmra.mxu0 %v1384
    %v3021 = vpop.f32.mrf.mxu0
    %v3022 = vadd.f32 0.0, %v3021
    %v3023 = vpop.f32.mrf.mxu0
    %3024 = vmatprep.mubr.f32.mxu0 0.0
    %3025 = vmatmul.mubr.f32.gmra.mxu0 %v1385
    %v3026 = vpop.f32.mrf.mxu0
    %v3027 = vadd.f32 0.0, %v3026
    %v3028 = vpop.f32.mrf.mxu0
    %3029 = vmatprep.mubr.f32.mxu0 0.0
    %3030 = vmatmul.mubr.f32.gmra.mxu0 %v1386
    %v3031 = vpop.f32.mrf.mxu0
    %v3032 = vadd.f32 0.0, %v3031
    %v3033 = vpop.f32.mrf.mxu0
    %3034 = vmatprep.mubr.f32.mxu0 0.0
    %3035 = vmatmul.mubr.f32.gmra.mxu0 %v1387
    %v3036 = vpop.f32.mrf.mxu0
    %v3037 = vadd.f32 0.0, %v3036
    %v3038 = vpop.f32.mrf.mxu0
    %3039 = vmatprep.mubr.f32.mxu0 0.0
    %3040 = vmatmul.mubr.f32.gmra.mxu0 %v1388
    %v3041 = vpop.f32.mrf.mxu0
    %v3042 = vadd.f32 0.0, %v3041
    %v3043 = vpop.f32.mrf.mxu0
    %3044 = vmatprep.mubr.f32.mxu0 0.0
    %3045 = vmatmul.mubr.f32.gmra.mxu0 %v1389
    %v3046 = vpop.f32.mrf.mxu0
    %v3047 = vadd.f32 0.0, %v3046
    %v3048 = vpop.f32.mrf.mxu0
    %3049 = vmatprep.mubr.f32.mxu0 0.0
    %3050 = vmatmul.mubr.f32.gmra.mxu0 %v1390
    %v3051 = vpop.f32.mrf.mxu0
    %v3052 = vadd.f32 0.0, %v3051
    %v3053 = vpop.f32.mrf.mxu0
    %3054 = vmatprep.mubr.f32.mxu0 0.0
    %3055 = vmatmul.mubr.f32.gmra.mxu0 %v1391
    %v3056 = vpop.f32.mrf.mxu0
    %v3057 = vadd.f32 0.0, %v3056
    %v3058 = vpop.f32.mrf.mxu0
    %3059 = vmatprep.mubr.f32.mxu0 0.0
    %3060 = vmatmul.mubr.f32.gmra.mxu0 %v1392
    %v3061 = vpop.f32.mrf.mxu0
    %v3062 = vadd.f32 0.0, %v3061
    %v3063 = vpop.f32.mrf.mxu0
    %3064 = vmatprep.mubr.f32.mxu0 0.0
    %3065 = vmatmul.mubr.f32.gmra.mxu0 %v1393
    %v3066 = vpop.f32.mrf.mxu0
    %v3067 = vadd.f32 0.0, %v3066
    %v3068 = vpop.f32.mrf.mxu0
    %3069 = vmatprep.mubr.f32.mxu0 0.0
    %3070 = vmatmul.mubr.f32.gmra.mxu0 %v1394
    %v3071 = vpop.f32.mrf.mxu0
    %v3072 = vadd.f32 0.0, %v3071
    %v3073 = vpop.f32.mrf.mxu0
    %3074 = vmatprep.mubr.f32.mxu0 0.0
    %3075 = vmatmul.mubr.f32.gmra.mxu0 %v1395
    %v3076 = vpop.f32.mrf.mxu0
    %v3077 = vadd.f32 0.0, %v3076
    %v3078 = vpop.f32.mrf.mxu0
    %3079 = vmatprep.mubr.f32.mxu0 0.0
    %3080 = vmatmul.mubr.f32.gmra.mxu0 %v1396
    %v3081 = vpop.f32.mrf.mxu0
    %v3082 = vadd.f32 0.0, %v3081
    %v3083 = vpop.f32.mrf.mxu0
    %3084 = vmatprep.mubr.f32.mxu0 0.0
    %3085 = vmatmul.mubr.f32.gmra.mxu0 %v1397
    %v3086 = vpop.f32.mrf.mxu0
    %v3087 = vadd.f32 0.0, %v3086
    %v3088 = vpop.f32.mrf.mxu0
    %3089 = vmatprep.mubr.f32.mxu0 0.0
    %3090 = vmatmul.mubr.f32.gmra.mxu0 %v1398
    %v3091 = vpop.f32.mrf.mxu0
    %v3092 = vadd.f32 0.0, %v3091
    %v3093 = vpop.f32.mrf.mxu0
    %3094 = vmatprep.mubr.f32.mxu0 0.0
    %3095 = vmatmul.mubr.f32.gmra.mxu0 %v1399
    %v3096 = vpop.f32.mrf.mxu0
    %v3097 = vadd.f32 0.0, %v3096
    %v3098 = vpop.f32.mrf.mxu0
    %3099 = vmatprep.mubr.f32.mxu0 0.0
    %3100 = vmatmul.mubr.f32.gmra.mxu0 %v1400
    %v3101 = vpop.f32.mrf.mxu0
    %v3102 = vadd.f32 0.0, %v3101
    %v3103 = vpop.f32.mrf.mxu0
    %3104 = vmatprep.mubr.f32.mxu0 0.0
    %3105 = vmatmul.mubr.f32.gmra.mxu0 %v1401
    %v3106 = vpop.f32.mrf.mxu0
    %v3107 = vadd.f32 0.0, %v3106
    %v3108 = vpop.f32.mrf.mxu0
    %3109 = vmatprep.mubr.f32.mxu0 0.0
    %3110 = vmatmul.mubr.f32.gmra.mxu0 %v1402
    %v3111 = vpop.f32.mrf.mxu0
    %v3112 = vadd.f32 0.0, %v3111
    %v3113 = vpop.f32.mrf.mxu0
    %3114 = vmatprep.mubr.f32.mxu0 0.0
    %3115 = vmatmul.mubr.f32.gmra.mxu0 %v1403
    %v3116 = vpop.f32.mrf.mxu0
    %v3117 = vadd.f32 0.0, %v3116
    %v3118 = vpop.f32.mrf.mxu0
    %3119 = vmatprep.mubr.f32.mxu0 0.0
    %3120 = vmatmul.mubr.f32.gmra.mxu0 %v1404
    %v3121 = vpop.f32.mrf.mxu0
    %v3122 = vadd.f32 0.0, %v3121
    %v3123 = vpop.f32.mrf.mxu0
    %3124 = vmatprep.mubr.f32.mxu0 0.0
    %3125 = vmatmul.mubr.f32.gmra.mxu0 %v1405
    %v3126 = vpop.f32.mrf.mxu0
    %v3127 = vadd.f32 0.0, %v3126
    %v3128 = vpop.f32.mrf.mxu0
    %3129 = vmatprep.mubr.f32.mxu0 0.0
    %3130 = vmatmul.mubr.f32.gmra.mxu0 %v1406
    %v3131 = vpop.f32.mrf.mxu0
    %v3132 = vadd.f32 0.0, %v3131
    %v3133 = vpop.f32.mrf.mxu0
    %3134 = vmatprep.mubr.f32.mxu0 0.0
    %3135 = vmatmul.mubr.f32.gmra.mxu0 %v1407
    %v3136 = vpop.f32.mrf.mxu0
    %v3137 = vadd.f32 0.0, %v3136
    %v3138 = vpop.f32.mrf.mxu0
    %3139 = vdwg.mxu0
    %v3140 = vadd.f32 %v1232, %v1233
    %v3141 = vadd.f32 %v3140, %v1234
    %v3142 = vadd.f32 %v3141, %v1235
    %v3143 = vadd.f32 %v3142, %v1236
    %v3144 = vadd.f32 %v3143, %v1237
    %v3145 = vsel %vm228, %v1238, 0.0
    %v3146 = vadd.f32 %v3144, %v3145
    %3147 = vadd.xlane.f32.xlu0 %v3146
    %v3148 = vpop.xlane.xlu0 %3147
    %v3149 = vadd.f32 %v1239, %v1240
    %v3150 = vadd.f32 %v3149, %v1241
    %v3151 = vadd.f32 %v3150, %v1242
    %v3152 = vadd.f32 %v3151, %v1243
    %v3153 = vadd.f32 %v3152, %v1244
    %v3154 = vsel %vm228, %v1245, 0.0
    %v3155 = vadd.f32 %v3153, %v3154
    %3156 = vadd.xlane.f32.xlu0 %v3155
    %v3157 = vpop.xlane.xlu0 %3156
    %v3158 = vadd.f32 %v1246, %v1247
    %v3159 = vadd.f32 %v3158, %v1248
    %v3160 = vadd.f32 %v3159, %v1249
    %v3161 = vadd.f32 %v3160, %v1250
    %v3162 = vadd.f32 %v3161, %v1251
    %v3163 = vsel %vm228, %v1252, 0.0
    %v3164 = vadd.f32 %v3162, %v3163
    %3165 = vadd.xlane.f32.xlu0 %v3164
    %v3166 = vpop.xlane.xlu0 %3165
    %v3167 = vadd.f32 %v1253, %v1254
    %v3168 = vadd.f32 %v3167, %v1255
    %v3169 = vadd.f32 %v3168, %v1256
    %v3170 = vadd.f32 %v3169, %v1257
    %v3171 = vadd.f32 %v3170, %v1258
    %v3172 = vsel %vm228, %v1259, 0.0
    %v3173 = vadd.f32 %v3171, %v3172
    %3174 = vadd.xlane.f32.xlu0 %v3173
    %v3175 = vpop.xlane.xlu0 %3174
    %v3176 = vadd.f32 %v1260, %v1261
    %v3177 = vadd.f32 %v3176, %v1262
    %v3178 = vadd.f32 %v3177, %v1263
    %v3179 = vadd.f32 %v3178, %v1264
    %v3180 = vadd.f32 %v3179, %v1265
    %v3181 = vsel %vm228, %v1266, 0.0
    %v3182 = vadd.f32 %v3180, %v3181
    %3183 = vadd.xlane.f32.xlu0 %v3182
    %v3184 = vpop.xlane.xlu0 %3183
    %v3185 = vadd.f32 %v1267, %v1268
    %v3186 = vadd.f32 %v3185, %v1269
    %v3187 = vadd.f32 %v3186, %v1270
    %v3188 = vadd.f32 %v3187, %v1271
    %v3189 = vadd.f32 %v3188, %v1272
    %v3190 = vsel %vm228, %v1273, 0.0
    %v3191 = vadd.f32 %v3189, %v3190
    %3192 = vadd.xlane.f32.xlu0 %v3191
    %v3193 = vpop.xlane.xlu0 %3192
    %v3194 = vadd.f32 %v1274, %v1275
    %v3195 = vadd.f32 %v3194, %v1276
    %v3196 = vadd.f32 %v3195, %v1277
    %v3197 = vadd.f32 %v3196, %v1278
    %v3198 = vadd.f32 %v3197, %v1279
    %v3199 = vsel %vm228, %v1280, 0.0
    %v3200 = vadd.f32 %v3198, %v3199
    %3201 = vadd.xlane.f32.xlu0 %v3200
    %v3202 = vpop.xlane.xlu0 %3201
    %v3203 = vadd.f32 %v1281, %v1282
    %v3204 = vadd.f32 %v3203, %v1283
    %v3205 = vadd.f32 %v3204, %v1284
    %v3206 = vadd.f32 %v3205, %v1285
    %v3207 = vadd.f32 %v3206, %v1286
    %v3208 = vsel %vm228, %v1287, 0.0
    %v3209 = vadd.f32 %v3207, %v3208
    %3210 = vadd.xlane.f32.xlu0 %v3209
    %v3211 = vpop.xlane.xlu0 %3210
    %v3212 = vadd.f32 %v1288, %v1289
    %v3213 = vadd.f32 %v3212, %v1290
    %v3214 = vadd.f32 %v3213, %v1291
    %v3215 = vadd.f32 %v3214, %v1292
    %v3216 = vadd.f32 %v3215, %v1293
    %v3217 = vsel %vm228, %v1294, 0.0
    %v3218 = vadd.f32 %v3216, %v3217
    %3219 = vadd.xlane.f32.xlu0 %v3218
    %v3220 = vpop.xlane.xlu0 %3219
    %v3221 = vadd.f32 %v1295, %v1296
    %v3222 = vadd.f32 %v3221, %v1297
    %v3223 = vadd.f32 %v3222, %v1298
    %v3224 = vadd.f32 %v3223, %v1299
    %v3225 = vadd.f32 %v3224, %v1300
    %v3226 = vsel %vm228, %v1301, 0.0
    %v3227 = vadd.f32 %v3225, %v3226
    %3228 = vadd.xlane.f32.xlu0 %v3227
    %v3229 = vpop.xlane.xlu0 %3228
    %v3230 = vadd.f32 %v1302, %v1303
    %v3231 = vadd.f32 %v3230, %v1304
    %v3232 = vadd.f32 %v3231, %v1305
    %v3233 = vadd.f32 %v3232, %v1306
    %v3234 = vadd.f32 %v3233, %v1307
    %v3235 = vsel %vm228, %v1308, 0.0
    %v3236 = vadd.f32 %v3234, %v3235
    %3237 = vadd.xlane.f32.xlu0 %v3236
    %v3238 = vpop.xlane.xlu0 %3237
    %v3239 = vadd.f32 %v1309, %v1310
    %v3240 = vadd.f32 %v3239, %v1311
    %v3241 = vadd.f32 %v3240, %v1312
    %v3242 = vadd.f32 %v3241, %v1313
    %v3243 = vadd.f32 %v3242, %v1314
    %v3244 = vsel %vm228, %v1315, 0.0
    %v3245 = vadd.f32 %v3243, %v3244
    %3246 = vadd.xlane.f32.xlu0 %v3245
    %v3247 = vpop.xlane.xlu0 %3246
    %v3248 = vadd.f32 %v1316, %v1317
    %v3249 = vadd.f32 %v3248, %v1318
    %v3250 = vadd.f32 %v3249, %v1319
    %v3251 = vadd.f32 %v3250, %v1320
    %v3252 = vadd.f32 %v3251, %v1321
    %v3253 = vsel %vm228, %v1322, 0.0
    %v3254 = vadd.f32 %v3252, %v3253
    %3255 = vadd.xlane.f32.xlu0 %v3254
    %v3256 = vpop.xlane.xlu0 %3255
    %v3257 = vadd.f32 %v1323, %v1324
    %v3258 = vadd.f32 %v3257, %v1325
    %v3259 = vadd.f32 %v3258, %v1326
    %v3260 = vadd.f32 %v3259, %v1327
    %v3261 = vadd.f32 %v3260, %v1328
    %v3262 = vsel %vm228, %v1329, 0.0
    %v3263 = vadd.f32 %v3261, %v3262
    %3264 = vadd.xlane.f32.xlu0 %v3263
    %v3265 = vpop.xlane.xlu0 %3264
    %v3266 = vadd.f32 %v1330, %v1331
    %v3267 = vadd.f32 %v3266, %v1332
    %v3268 = vadd.f32 %v3267, %v1333
    %v3269 = vadd.f32 %v3268, %v1334
    %v3270 = vadd.f32 %v3269, %v1335
    %v3271 = vsel %vm228, %v1336, 0.0
    %v3272 = vadd.f32 %v3270, %v3271
    %3273 = vadd.xlane.f32.xlu0 %v3272
    %v3274 = vpop.xlane.xlu0 %3273
    %v3275 = vadd.f32 %v1337, %v1338
    %v3276 = vadd.f32 %v3275, %v1339
    %v3277 = vadd.f32 %v3276, %v1340
    %v3278 = vadd.f32 %v3277, %v1341
    %v3279 = vadd.f32 %v3278, %v1342
    %v3280 = vsel %vm228, %v1343, 0.0
    %v3281 = vadd.f32 %v3279, %v3280
    %3282 = vadd.xlane.f32.xlu0 %v3281
    %v3283 = vpop.xlane.xlu0 %3282
    %3284 = vmatprep.subr.mxu0 0.0
    %3285 = vmatpush1.msra.mxu0 %v3283
    %3286 = vmatprep.subr.mxu0 0.0
    %3287 = vmatpush1.msra.mxu0 %v3274
    %3288 = vmatprep.subr.mxu0 0.0
    %3289 = vmatpush1.msra.mxu0 %v3265
    %3290 = vmatprep.subr.mxu0 0.0
    %3291 = vmatpush1.msra.mxu0 %v3256
    %3292 = vmatprep.subr.mxu0 0.0
    %3293 = vmatpush1.msra.mxu0 %v3247
    %3294 = vmatprep.subr.mxu0 0.0
    %3295 = vmatpush1.msra.mxu0 %v3238
    %3296 = vmatprep.subr.mxu0 0.0
    %3297 = vmatpush1.msra.mxu0 %v3229
    %3298 = vmatprep.subr.mxu0 0.0
    %3299 = vmatpush1.msra.mxu0 %v3220
    %3300 = vmatprep.subr.mxu0 0.0
    %3301 = vmatpush1.msra.mxu0 %v3211
    %3302 = vmatprep.subr.mxu0 0.0
    %3303 = vmatpush1.msra.mxu0 %v3202
    %3304 = vmatprep.subr.mxu0 0.0
    %3305 = vmatpush1.msra.mxu0 %v3193
    %3306 = vmatprep.subr.mxu0 0.0
    %3307 = vmatpush1.msra.mxu0 %v3184
    %3308 = vmatprep.subr.mxu0 0.0
    %3309 = vmatpush1.msra.mxu0 %v3175
    %3310 = vmatprep.subr.mxu0 0.0
    %3311 = vmatpush1.msra.mxu0 %v3166
    %3312 = vmatprep.subr.mxu0 0.0
    %3313 = vmatpush1.msra.mxu0 %v3157
    %3314 = vmatprep.subr.mxu0 0.0
    %3315 = vmatpush1.msra.mxu0 %v3148
    %3316 = vmatprep.subr.mxu0 0.0
    %3317 = vmatpush2.msra.mxu0 0.0
    %3318 = vmatprep.subr.mxu0 0.0
    %3319 = vmatpush2.msra.mxu0 0.0
    %3320 = vmatprep.subr.mxu0 0.0
    %3321 = vmatpush2.msra.mxu0 0.0
    %3322 = vmatprep.subr.mxu0 0.0
    %3323 = vmatpush2.msra.mxu0 0.0
    %3324 = vmatprep.subr.mxu0 0.0
    %3325 = vmatpush2.msra.mxu0 0.0
    %3326 = vmatprep.subr.mxu0 0.0
    %3327 = vmatpush2.msra.mxu0 0.0
    %3328 = vmatprep.subr.mxu0 0.0
    %3329 = vmatpush2.msra.mxu0 0.0
    %3330 = vmatprep.subr.mxu0 0.0
    %3331 = vmatpush2.msra.mxu0 0.0
    %3332 = vmatprep.subr.mxu0 0.0
    %3333 = vmatpush2.msra.mxu0 0.0
    %3334 = vmatprep.subr.mxu0 0.0
    %3335 = vmatpush2.msra.mxu0 0.0
    %3336 = vmatprep.subr.mxu0 0.0
    %3337 = vmatpush2.msra.mxu0 0.0
    %3338 = vmatprep.subr.mxu0 0.0
    %3339 = vmatpush2.msra.mxu0 0.0
    %3340 = vmatprep.subr.mxu0 0.0
    %3341 = vmatpush2.msra.mxu0 0.0
    %3342 = vmatprep.subr.mxu0 0.0
    %3343 = vmatpush2.msra.mxu0 0.0
    %3344 = vmatprep.subr.mxu0 0.0
    %3345 = vmatpush2.msra.mxu0 0.0
    %3346 = vmatprep.subr.mxu0 0.0
    %3347 = vmatpush2.msra.mxu0 0.0
    %3348 = vmatprep.mubr.f32.mxu0 0.0
    %3349 = vmatmul.mubr.f32.gmra.mxu0 %v1344
    %v3350 = vpop.f32.mrf.mxu0
    %v3351 = vadd.f32 0.0, %v3350
    %v3352 = vpop.f32.mrf.mxu0
    %3353 = vmatprep.mubr.f32.mxu0 0.0
    %3354 = vmatmul.mubr.f32.gmra.mxu0 %v1345
    %v3355 = vpop.f32.mrf.mxu0
    %v3356 = vadd.f32 0.0, %v3355
    %v3357 = vpop.f32.mrf.mxu0
    %3358 = vmatprep.mubr.f32.mxu0 0.0
    %3359 = vmatmul.mubr.f32.gmra.mxu0 %v1346
    %v3360 = vpop.f32.mrf.mxu0
    %v3361 = vadd.f32 0.0, %v3360
    %v3362 = vpop.f32.mrf.mxu0
    %3363 = vmatprep.mubr.f32.mxu0 0.0
    %3364 = vmatmul.mubr.f32.gmra.mxu0 %v1347
    %v3365 = vpop.f32.mrf.mxu0
    %v3366 = vadd.f32 0.0, %v3365
    %v3367 = vpop.f32.mrf.mxu0
    %3368 = vmatprep.mubr.f32.mxu0 0.0
    %3369 = vmatmul.mubr.f32.gmra.mxu0 %v1348
    %v3370 = vpop.f32.mrf.mxu0
    %v3371 = vadd.f32 0.0, %v3370
    %v3372 = vpop.f32.mrf.mxu0
    %3373 = vmatprep.mubr.f32.mxu0 0.0
    %3374 = vmatmul.mubr.f32.gmra.mxu0 %v1349
    %v3375 = vpop.f32.mrf.mxu0
    %v3376 = vadd.f32 0.0, %v3375
    %v3377 = vpop.f32.mrf.mxu0
    %3378 = vmatprep.mubr.f32.mxu0 0.0
    %3379 = vmatmul.mubr.f32.gmra.mxu0 %v1350
    %v3380 = vpop.f32.mrf.mxu0
    %v3381 = vadd.f32 0.0, %v3380
    %v3382 = vpop.f32.mrf.mxu0
    %3383 = vmatprep.mubr.f32.mxu0 0.0
    %3384 = vmatmul.mubr.f32.gmra.mxu0 %v1351
    %v3385 = vpop.f32.mrf.mxu0
    %v3386 = vadd.f32 0.0, %v3385
    %v3387 = vpop.f32.mrf.mxu0
    %3388 = vmatprep.mubr.f32.mxu0 0.0
    %3389 = vmatmul.mubr.f32.gmra.mxu0 %v1352
    %v3390 = vpop.f32.mrf.mxu0
    %v3391 = vadd.f32 0.0, %v3390
    %v3392 = vpop.f32.mrf.mxu0
    %3393 = vmatprep.mubr.f32.mxu0 0.0
    %3394 = vmatmul.mubr.f32.gmra.mxu0 %v1353
    %v3395 = vpop.f32.mrf.mxu0
    %v3396 = vadd.f32 0.0, %v3395
    %v3397 = vpop.f32.mrf.mxu0
    %3398 = vmatprep.mubr.f32.mxu0 0.0
    %3399 = vmatmul.mubr.f32.gmra.mxu0 %v1354
    %v3400 = vpop.f32.mrf.mxu0
    %v3401 = vadd.f32 0.0, %v3400
    %v3402 = vpop.f32.mrf.mxu0
    %3403 = vmatprep.mubr.f32.mxu0 0.0
    %3404 = vmatmul.mubr.f32.gmra.mxu0 %v1355
    %v3405 = vpop.f32.mrf.mxu0
    %v3406 = vadd.f32 0.0, %v3405
    %v3407 = vpop.f32.mrf.mxu0
    %3408 = vmatprep.mubr.f32.mxu0 0.0
    %3409 = vmatmul.mubr.f32.gmra.mxu0 %v1356
    %v3410 = vpop.f32.mrf.mxu0
    %v3411 = vadd.f32 0.0, %v3410
    %v3412 = vpop.f32.mrf.mxu0
    %3413 = vmatprep.mubr.f32.mxu0 0.0
    %3414 = vmatmul.mubr.f32.gmra.mxu0 %v1357
    %v3415 = vpop.f32.mrf.mxu0
    %v3416 = vadd.f32 0.0, %v3415
    %v3417 = vpop.f32.mrf.mxu0
    %3418 = vmatprep.mubr.f32.mxu0 0.0
    %3419 = vmatmul.mubr.f32.gmra.mxu0 %v1358
    %v3420 = vpop.f32.mrf.mxu0
    %v3421 = vadd.f32 0.0, %v3420
    %v3422 = vpop.f32.mrf.mxu0
    %3423 = vmatprep.mubr.f32.mxu0 0.0
    %3424 = vmatmul.mubr.f32.gmra.mxu0 %v1359
    %v3425 = vpop.f32.mrf.mxu0
    %v3426 = vadd.f32 0.0, %v3425
    %v3427 = vpop.f32.mrf.mxu0
    %3428 = vmatprep.mubr.f32.mxu0 0.0
    %3429 = vmatmul.mubr.f32.gmra.mxu0 %v1360
    %v3430 = vpop.f32.mrf.mxu0
    %v3431 = vadd.f32 0.0, %v3430
    %v3432 = vpop.f32.mrf.mxu0
    %3433 = vmatprep.mubr.f32.mxu0 0.0
    %3434 = vmatmul.mubr.f32.gmra.mxu0 %v1361
    %v3435 = vpop.f32.mrf.mxu0
    %v3436 = vadd.f32 0.0, %v3435
    %v3437 = vpop.f32.mrf.mxu0
    %3438 = vmatprep.mubr.f32.mxu0 0.0
    %3439 = vmatmul.mubr.f32.gmra.mxu0 %v1362
    %v3440 = vpop.f32.mrf.mxu0
    %v3441 = vadd.f32 0.0, %v3440
    %v3442 = vpop.f32.mrf.mxu0
    %3443 = vmatprep.mubr.f32.mxu0 0.0
    %3444 = vmatmul.mubr.f32.gmra.mxu0 %v1363
    %v3445 = vpop.f32.mrf.mxu0
    %v3446 = vadd.f32 0.0, %v3445
    %v3447 = vpop.f32.mrf.mxu0
    %3448 = vmatprep.mubr.f32.mxu0 0.0
    %3449 = vmatmul.mubr.f32.gmra.mxu0 %v1364
    %v3450 = vpop.f32.mrf.mxu0
    %v3451 = vadd.f32 0.0, %v3450
    %v3452 = vpop.f32.mrf.mxu0
    %3453 = vmatprep.mubr.f32.mxu0 0.0
    %3454 = vmatmul.mubr.f32.gmra.mxu0 %v1365
    %v3455 = vpop.f32.mrf.mxu0
    %v3456 = vadd.f32 0.0, %v3455
    %v3457 = vpop.f32.mrf.mxu0
    %3458 = vmatprep.mubr.f32.mxu0 0.0
    %3459 = vmatmul.mubr.f32.gmra.mxu0 %v1366
    %v3460 = vpop.f32.mrf.mxu0
    %v3461 = vadd.f32 0.0, %v3460
    %v3462 = vpop.f32.mrf.mxu0
    %3463 = vmatprep.mubr.f32.mxu0 0.0
    %3464 = vmatmul.mubr.f32.gmra.mxu0 %v1367
    %v3465 = vpop.f32.mrf.mxu0
    %v3466 = vadd.f32 0.0, %v3465
    %v3467 = vpop.f32.mrf.mxu0
    %3468 = vmatprep.mubr.f32.mxu0 0.0
    %3469 = vmatmul.mubr.f32.gmra.mxu0 %v1368
    %v3470 = vpop.f32.mrf.mxu0
    %v3471 = vadd.f32 0.0, %v3470
    %v3472 = vpop.f32.mrf.mxu0
    %3473 = vmatprep.mubr.f32.mxu0 0.0
    %3474 = vmatmul.mubr.f32.gmra.mxu0 %v1369
    %v3475 = vpop.f32.mrf.mxu0
    %v3476 = vadd.f32 0.0, %v3475
    %v3477 = vpop.f32.mrf.mxu0
    %3478 = vmatprep.mubr.f32.mxu0 0.0
    %3479 = vmatmul.mubr.f32.gmra.mxu0 %v1370
    %v3480 = vpop.f32.mrf.mxu0
    %v3481 = vadd.f32 0.0, %v3480
    %v3482 = vpop.f32.mrf.mxu0
    %3483 = vmatprep.mubr.f32.mxu0 0.0
    %3484 = vmatmul.mubr.f32.gmra.mxu0 %v1371
    %v3485 = vpop.f32.mrf.mxu0
    %v3486 = vadd.f32 0.0, %v3485
    %v3487 = vpop.f32.mrf.mxu0
    %3488 = vmatprep.mubr.f32.mxu0 0.0
    %3489 = vmatmul.mubr.f32.gmra.mxu0 %v1372
    %v3490 = vpop.f32.mrf.mxu0
    %v3491 = vadd.f32 0.0, %v3490
    %v3492 = vpop.f32.mrf.mxu0
    %3493 = vmatprep.mubr.f32.mxu0 0.0
    %3494 = vmatmul.mubr.f32.gmra.mxu0 %v1373
    %v3495 = vpop.f32.mrf.mxu0
    %v3496 = vadd.f32 0.0, %v3495
    %v3497 = vpop.f32.mrf.mxu0
    %3498 = vmatprep.mubr.f32.mxu0 0.0
    %3499 = vmatmul.mubr.f32.gmra.mxu0 %v1374
    %v3500 = vpop.f32.mrf.mxu0
    %v3501 = vadd.f32 0.0, %v3500
    %v3502 = vpop.f32.mrf.mxu0
    %3503 = vmatprep.mubr.f32.mxu0 0.0
    %3504 = vmatmul.mubr.f32.gmra.mxu0 %v1375
    %v3505 = vpop.f32.mrf.mxu0
    %v3506 = vadd.f32 0.0, %v3505
    %v3507 = vpop.f32.mrf.mxu0
    %3508 = vmatprep.mubr.f32.mxu0 0.0
    %3509 = vmatmul.mubr.f32.gmra.mxu0 %v1376
    %v3510 = vpop.f32.mrf.mxu0
    %v3511 = vadd.f32 0.0, %v3510
    %v3512 = vpop.f32.mrf.mxu0
    %3513 = vmatprep.mubr.f32.mxu0 0.0
    %3514 = vmatmul.mubr.f32.gmra.mxu0 %v1377
    %v3515 = vpop.f32.mrf.mxu0
    %v3516 = vadd.f32 0.0, %v3515
    %v3517 = vpop.f32.mrf.mxu0
    %3518 = vmatprep.mubr.f32.mxu0 0.0
    %3519 = vmatmul.mubr.f32.gmra.mxu0 %v1378
    %v3520 = vpop.f32.mrf.mxu0
    %v3521 = vadd.f32 0.0, %v3520
    %v3522 = vpop.f32.mrf.mxu0
    %3523 = vmatprep.mubr.f32.mxu0 0.0
    %3524 = vmatmul.mubr.f32.gmra.mxu0 %v1379
    %v3525 = vpop.f32.mrf.mxu0
    %v3526 = vadd.f32 0.0, %v3525
    %v3527 = vpop.f32.mrf.mxu0
    %3528 = vmatprep.mubr.f32.mxu0 0.0
    %3529 = vmatmul.mubr.f32.gmra.mxu0 %v1380
    %v3530 = vpop.f32.mrf.mxu0
    %v3531 = vadd.f32 0.0, %v3530
    %v3532 = vpop.f32.mrf.mxu0
    %3533 = vmatprep.mubr.f32.mxu0 0.0
    %3534 = vmatmul.mubr.f32.gmra.mxu0 %v1381
    %v3535 = vpop.f32.mrf.mxu0
    %v3536 = vadd.f32 0.0, %v3535
    %v3537 = vpop.f32.mrf.mxu0
    %3538 = vmatprep.mubr.f32.mxu0 0.0
    %3539 = vmatmul.mubr.f32.gmra.mxu0 %v1382
    %v3540 = vpop.f32.mrf.mxu0
    %v3541 = vadd.f32 0.0, %v3540
    %v3542 = vpop.f32.mrf.mxu0
    %3543 = vmatprep.mubr.f32.mxu0 0.0
    %3544 = vmatmul.mubr.f32.gmra.mxu0 %v1383
    %v3545 = vpop.f32.mrf.mxu0
    %v3546 = vadd.f32 0.0, %v3545
    %v3547 = vpop.f32.mrf.mxu0
    %3548 = vmatprep.mubr.f32.mxu0 0.0
    %3549 = vmatmul.mubr.f32.gmra.mxu0 %v1384
    %v3550 = vpop.f32.mrf.mxu0
    %v3551 = vadd.f32 0.0, %v3550
    %v3552 = vpop.f32.mrf.mxu0
    %3553 = vmatprep.mubr.f32.mxu0 0.0
    %3554 = vmatmul.mubr.f32.gmra.mxu0 %v1385
    %v3555 = vpop.f32.mrf.mxu0
    %v3556 = vadd.f32 0.0, %v3555
    %v3557 = vpop.f32.mrf.mxu0
    %3558 = vmatprep.mubr.f32.mxu0 0.0
    %3559 = vmatmul.mubr.f32.gmra.mxu0 %v1386
    %v3560 = vpop.f32.mrf.mxu0
    %v3561 = vadd.f32 0.0, %v3560
    %v3562 = vpop.f32.mrf.mxu0
    %3563 = vmatprep.mubr.f32.mxu0 0.0
    %3564 = vmatmul.mubr.f32.gmra.mxu0 %v1387
    %v3565 = vpop.f32.mrf.mxu0
    %v3566 = vadd.f32 0.0, %v3565
    %v3567 = vpop.f32.mrf.mxu0
    %3568 = vmatprep.mubr.f32.mxu0 0.0
    %3569 = vmatmul.mubr.f32.gmra.mxu0 %v1388
    %v3570 = vpop.f32.mrf.mxu0
    %v3571 = vadd.f32 0.0, %v3570
    %v3572 = vpop.f32.mrf.mxu0
    %3573 = vmatprep.mubr.f32.mxu0 0.0
    %3574 = vmatmul.mubr.f32.gmra.mxu0 %v1389
    %v3575 = vpop.f32.mrf.mxu0
    %v3576 = vadd.f32 0.0, %v3575
    %v3577 = vpop.f32.mrf.mxu0
    %3578 = vmatprep.mubr.f32.mxu0 0.0
    %3579 = vmatmul.mubr.f32.gmra.mxu0 %v1390
    %v3580 = vpop.f32.mrf.mxu0
    %v3581 = vadd.f32 0.0, %v3580
    %v3582 = vpop.f32.mrf.mxu0
    %3583 = vmatprep.mubr.f32.mxu0 0.0
    %3584 = vmatmul.mubr.f32.gmra.mxu0 %v1391
    %v3585 = vpop.f32.mrf.mxu0
    %v3586 = vadd.f32 0.0, %v3585
    %v3587 = vpop.f32.mrf.mxu0
    %3588 = vmatprep.mubr.f32.mxu0 0.0
    %3589 = vmatmul.mubr.f32.gmra.mxu0 %v1392
    %v3590 = vpop.f32.mrf.mxu0
    %v3591 = vadd.f32 0.0, %v3590
    %v3592 = vpop.f32.mrf.mxu0
    %3593 = vmatprep.mubr.f32.mxu0 0.0
    %3594 = vmatmul.mubr.f32.gmra.mxu0 %v1393
    %v3595 = vpop.f32.mrf.mxu0
    %v3596 = vadd.f32 0.0, %v3595
    %v3597 = vpop.f32.mrf.mxu0
    %3598 = vmatprep.mubr.f32.mxu0 0.0
    %3599 = vmatmul.mubr.f32.gmra.mxu0 %v1394
    %v3600 = vpop.f32.mrf.mxu0
    %v3601 = vadd.f32 0.0, %v3600
    %v3602 = vpop.f32.mrf.mxu0
    %3603 = vmatprep.mubr.f32.mxu0 0.0
    %3604 = vmatmul.mubr.f32.gmra.mxu0 %v1395
    %v3605 = vpop.f32.mrf.mxu0
    %v3606 = vadd.f32 0.0, %v3605
    %v3607 = vpop.f32.mrf.mxu0
    %3608 = vmatprep.mubr.f32.mxu0 0.0
    %3609 = vmatmul.mubr.f32.gmra.mxu0 %v1396
    %v3610 = vpop.f32.mrf.mxu0
    %v3611 = vadd.f32 0.0, %v3610
    %v3612 = vpop.f32.mrf.mxu0
    %3613 = vmatprep.mubr.f32.mxu0 0.0
    %3614 = vmatmul.mubr.f32.gmra.mxu0 %v1397
    %v3615 = vpop.f32.mrf.mxu0
    %v3616 = vadd.f32 0.0, %v3615
    %v3617 = vpop.f32.mrf.mxu0
    %3618 = vmatprep.mubr.f32.mxu0 0.0
    %3619 = vmatmul.mubr.f32.gmra.mxu0 %v1398
    %v3620 = vpop.f32.mrf.mxu0
    %v3621 = vadd.f32 0.0, %v3620
    %v3622 = vpop.f32.mrf.mxu0
    %3623 = vmatprep.mubr.f32.mxu0 0.0
    %3624 = vmatmul.mubr.f32.gmra.mxu0 %v1399
    %v3625 = vpop.f32.mrf.mxu0
    %v3626 = vadd.f32 0.0, %v3625
    %v3627 = vpop.f32.mrf.mxu0
    %3628 = vmatprep.mubr.f32.mxu0 0.0
    %3629 = vmatmul.mubr.f32.gmra.mxu0 %v1400
    %v3630 = vpop.f32.mrf.mxu0
    %v3631 = vadd.f32 0.0, %v3630
    %v3632 = vpop.f32.mrf.mxu0
    %3633 = vmatprep.mubr.f32.mxu0 0.0
    %3634 = vmatmul.mubr.f32.gmra.mxu0 %v1401
    %v3635 = vpop.f32.mrf.mxu0
    %v3636 = vadd.f32 0.0, %v3635
    %v3637 = vpop.f32.mrf.mxu0
    %3638 = vmatprep.mubr.f32.mxu0 0.0
    %3639 = vmatmul.mubr.f32.gmra.mxu0 %v1402
    %v3640 = vpop.f32.mrf.mxu0
    %v3641 = vadd.f32 0.0, %v3640
    %v3642 = vpop.f32.mrf.mxu0
    %3643 = vmatprep.mubr.f32.mxu0 0.0
    %3644 = vmatmul.mubr.f32.gmra.mxu0 %v1403
    %v3645 = vpop.f32.mrf.mxu0
    %v3646 = vadd.f32 0.0, %v3645
    %v3647 = vpop.f32.mrf.mxu0
    %3648 = vmatprep.mubr.f32.mxu0 0.0
    %3649 = vmatmul.mubr.f32.gmra.mxu0 %v1404
    %v3650 = vpop.f32.mrf.mxu0
    %v3651 = vadd.f32 0.0, %v3650
    %v3652 = vpop.f32.mrf.mxu0
    %3653 = vmatprep.mubr.f32.mxu0 0.0
    %3654 = vmatmul.mubr.f32.gmra.mxu0 %v1405
    %v3655 = vpop.f32.mrf.mxu0
    %v3656 = vadd.f32 0.0, %v3655
    %v3657 = vpop.f32.mrf.mxu0
    %3658 = vmatprep.mubr.f32.mxu0 0.0
    %3659 = vmatmul.mubr.f32.gmra.mxu0 %v1406
    %v3660 = vpop.f32.mrf.mxu0
    %v3661 = vadd.f32 0.0, %v3660
    %v3662 = vpop.f32.mrf.mxu0
    %3663 = vmatprep.mubr.f32.mxu0 0.0
    %3664 = vmatmul.mubr.f32.gmra.mxu0 %v1407
    %v3665 = vpop.f32.mrf.mxu0
    %v3666 = vadd.f32 0.0, %v3665
    %v3667 = vpop.f32.mrf.mxu0
    %3668 = vdwg.mxu0
    %v3669 = vmul.f32 %v1475, %v1475
    %v3670 = vmul.f32 %v1477, %v1477
    %v3671 = vmul.f32 %v1924, %v1924
    %v3672 = vmul.f32 %v1926, %v1926
    %v3673 = vmul.f32 %v2373, %v2373
    %v3674 = vmul.f32 %v2375, %v2375
    %v3675 = vmul.f32 %v2822, %v2822
    %v3676 = vmul.f32 %v1481, %v1481
    %v3677 = vmul.f32 %v1483, %v1483
    %v3678 = vmul.f32 %v1930, %v1930
    %v3679 = vmul.f32 %v1932, %v1932
    %v3680 = vmul.f32 %v2379, %v2379
    %v3681 = vmul.f32 %v2381, %v2381
    %v3682 = vmul.f32 %v2827, %v2827
    %v3683 = vmul.f32 %v1487, %v1487
    %v3684 = vmul.f32 %v1489, %v1489
    %v3685 = vmul.f32 %v1936, %v1936
    %v3686 = vmul.f32 %v1938, %v1938
    %v3687 = vmul.f32 %v2385, %v2385
    %v3688 = vmul.f32 %v2387, %v2387
    %v3689 = vmul.f32 %v2832, %v2832
    %v3690 = vmul.f32 %v1493, %v1493
    %v3691 = vmul.f32 %v1495, %v1495
    %v3692 = vmul.f32 %v1942, %v1942
    %v3693 = vmul.f32 %v1944, %v1944
    %v3694 = vmul.f32 %v2391, %v2391
    %v3695 = vmul.f32 %v2393, %v2393
    %v3696 = vmul.f32 %v2837, %v2837
    %v3697 = vmul.f32 %v1499, %v1499
    %v3698 = vmul.f32 %v1501, %v1501
    %v3699 = vmul.f32 %v1948, %v1948
    %v3700 = vmul.f32 %v1950, %v1950
    %v3701 = vmul.f32 %v2397, %v2397
    %v3702 = vmul.f32 %v2399, %v2399
    %v3703 = vmul.f32 %v2842, %v2842
    %v3704 = vmul.f32 %v1505, %v1505
    %v3705 = vmul.f32 %v1507, %v1507
    %v3706 = vmul.f32 %v1954, %v1954
    %v3707 = vmul.f32 %v1956, %v1956
    %v3708 = vmul.f32 %v2403, %v2403
    %v3709 = vmul.f32 %v2405, %v2405
    %v3710 = vmul.f32 %v2847, %v2847
    %v3711 = vmul.f32 %v1511, %v1511
    %v3712 = vmul.f32 %v1513, %v1513
    %v3713 = vmul.f32 %v1960, %v1960
    %v3714 = vmul.f32 %v1962, %v1962
    %v3715 = vmul.f32 %v2409, %v2409
    %v3716 = vmul.f32 %v2411, %v2411
    %v3717 = vmul.f32 %v2852, %v2852
    %v3718 = vmul.f32 %v1517, %v1517
    %v3719 = vmul.f32 %v1519, %v1519
    %v3720 = vmul.f32 %v1966, %v1966
    %v3721 = vmul.f32 %v1968, %v1968
    %v3722 = vmul.f32 %v2415, %v2415
    %v3723 = vmul.f32 %v2417, %v2417
    %v3724 = vmul.f32 %v2857, %v2857
    %v3725 = vmul.f32 %v1523, %v1523
    %v3726 = vmul.f32 %v1525, %v1525
    %v3727 = vmul.f32 %v1972, %v1972
    %v3728 = vmul.f32 %v1974, %v1974
    %v3729 = vmul.f32 %v2421, %v2421
    %v3730 = vmul.f32 %v2423, %v2423
    %v3731 = vmul.f32 %v2862, %v2862
    %v3732 = vmul.f32 %v1529, %v1529
    %v3733 = vmul.f32 %v1531, %v1531
    %v3734 = vmul.f32 %v1978, %v1978
    %v3735 = vmul.f32 %v1980, %v1980
    %v3736 = vmul.f32 %v2427, %v2427
    %v3737 = vmul.f32 %v2429, %v2429
    %v3738 = vmul.f32 %v2867, %v2867
    %v3739 = vmul.f32 %v1535, %v1535
    %v3740 = vmul.f32 %v1537, %v1537
    %v3741 = vmul.f32 %v1984, %v1984
    %v3742 = vmul.f32 %v1986, %v1986
    %v3743 = vmul.f32 %v2433, %v2433
    %v3744 = vmul.f32 %v2435, %v2435
    %v3745 = vmul.f32 %v2872, %v2872
    %v3746 = vmul.f32 %v1541, %v1541
    %v3747 = vmul.f32 %v1543, %v1543
    %v3748 = vmul.f32 %v1990, %v1990
    %v3749 = vmul.f32 %v1992, %v1992
    %v3750 = vmul.f32 %v2439, %v2439
    %v3751 = vmul.f32 %v2441, %v2441
    %v3752 = vmul.f32 %v2877, %v2877
    %v3753 = vmul.f32 %v1547, %v1547
    %v3754 = vmul.f32 %v1549, %v1549
    %v3755 = vmul.f32 %v1996, %v1996
    %v3756 = vmul.f32 %v1998, %v1998
    %v3757 = vmul.f32 %v2445, %v2445
    %v3758 = vmul.f32 %v2447, %v2447
    %v3759 = vmul.f32 %v2882, %v2882
    %v3760 = vmul.f32 %v1553, %v1553
    %v3761 = vmul.f32 %v1555, %v1555
    %v3762 = vmul.f32 %v2002, %v2002
    %v3763 = vmul.f32 %v2004, %v2004
    %v3764 = vmul.f32 %v2451, %v2451
    %v3765 = vmul.f32 %v2453, %v2453
    %v3766 = vmul.f32 %v2887, %v2887
    %v3767 = vmul.f32 %v1559, %v1559
    %v3768 = vmul.f32 %v1561, %v1561
    %v3769 = vmul.f32 %v2008, %v2008
    %v3770 = vmul.f32 %v2010, %v2010
    %v3771 = vmul.f32 %v2457, %v2457
    %v3772 = vmul.f32 %v2459, %v2459
    %v3773 = vmul.f32 %v2892, %v2892
    %v3774 = vmul.f32 %v1565, %v1565
    %v3775 = vmul.f32 %v1567, %v1567
    %v3776 = vmul.f32 %v2014, %v2014
    %v3777 = vmul.f32 %v2016, %v2016
    %v3778 = vmul.f32 %v2463, %v2463
    %v3779 = vmul.f32 %v2465, %v2465
    %v3780 = vmul.f32 %v2897, %v2897
    %v3781 = vmul.f32 %v1571, %v1571
    %v3782 = vmul.f32 %v1573, %v1573
    %v3783 = vmul.f32 %v2020, %v2020
    %v3784 = vmul.f32 %v2022, %v2022
    %v3785 = vmul.f32 %v2469, %v2469
    %v3786 = vmul.f32 %v2471, %v2471
    %v3787 = vmul.f32 %v2902, %v2902
    %v3788 = vmul.f32 %v1577, %v1577
    %v3789 = vmul.f32 %v1579, %v1579
    %v3790 = vmul.f32 %v2026, %v2026
    %v3791 = vmul.f32 %v2028, %v2028
    %v3792 = vmul.f32 %v2475, %v2475
    %v3793 = vmul.f32 %v2477, %v2477
    %v3794 = vmul.f32 %v2907, %v2907
    %v3795 = vmul.f32 %v1583, %v1583
    %v3796 = vmul.f32 %v1585, %v1585
    %v3797 = vmul.f32 %v2032, %v2032
    %v3798 = vmul.f32 %v2034, %v2034
    %v3799 = vmul.f32 %v2481, %v2481
    %v3800 = vmul.f32 %v2483, %v2483
    %v3801 = vmul.f32 %v2912, %v2912
    %v3802 = vmul.f32 %v1589, %v1589
    %v3803 = vmul.f32 %v1591, %v1591
    %v3804 = vmul.f32 %v2038, %v2038
    %v3805 = vmul.f32 %v2040, %v2040
    %v3806 = vmul.f32 %v2487, %v2487
    %v3807 = vmul.f32 %v2489, %v2489
    %v3808 = vmul.f32 %v2917, %v2917
    %v3809 = vmul.f32 %v1595, %v1595
    %v3810 = vmul.f32 %v1597, %v1597
    %v3811 = vmul.f32 %v2044, %v2044
    %v3812 = vmul.f32 %v2046, %v2046
    %v3813 = vmul.f32 %v2493, %v2493
    %v3814 = vmul.f32 %v2495, %v2495
    %v3815 = vmul.f32 %v2922, %v2922
    %v3816 = vmul.f32 %v1601, %v1601
    %v3817 = vmul.f32 %v1603, %v1603
    %v3818 = vmul.f32 %v2050, %v2050
    %v3819 = vmul.f32 %v2052, %v2052
    %v3820 = vmul.f32 %v2499, %v2499
    %v3821 = vmul.f32 %v2501, %v2501
    %v3822 = vmul.f32 %v2927, %v2927
    %v3823 = vmul.f32 %v1607, %v1607
    %v3824 = vmul.f32 %v1609, %v1609
    %v3825 = vmul.f32 %v2056, %v2056
    %v3826 = vmul.f32 %v2058, %v2058
    %v3827 = vmul.f32 %v2505, %v2505
    %v3828 = vmul.f32 %v2507, %v2507
    %v3829 = vmul.f32 %v2932, %v2932
    %v3830 = vmul.f32 %v1613, %v1613
    %v3831 = vmul.f32 %v1615, %v1615
    %v3832 = vmul.f32 %v2062, %v2062
    %v3833 = vmul.f32 %v2064, %v2064
    %v3834 = vmul.f32 %v2511, %v2511
    %v3835 = vmul.f32 %v2513, %v2513
    %v3836 = vmul.f32 %v2937, %v2937
    %v3837 = vmul.f32 %v1619, %v1619
    %v3838 = vmul.f32 %v1621, %v1621
    %v3839 = vmul.f32 %v2068, %v2068
    %v3840 = vmul.f32 %v2070, %v2070
    %v3841 = vmul.f32 %v2517, %v2517
    %v3842 = vmul.f32 %v2519, %v2519
    %v3843 = vmul.f32 %v2942, %v2942
    %v3844 = vmul.f32 %v1625, %v1625
    %v3845 = vmul.f32 %v1627, %v1627
    %v3846 = vmul.f32 %v2074, %v2074
    %v3847 = vmul.f32 %v2076, %v2076
    %v3848 = vmul.f32 %v2523, %v2523
    %v3849 = vmul.f32 %v2525, %v2525
    %v3850 = vmul.f32 %v2947, %v2947
    %v3851 = vmul.f32 %v1631, %v1631
    %v3852 = vmul.f32 %v1633, %v1633
    %v3853 = vmul.f32 %v2080, %v2080
    %v3854 = vmul.f32 %v2082, %v2082
    %v3855 = vmul.f32 %v2529, %v2529
    %v3856 = vmul.f32 %v2531, %v2531
    %v3857 = vmul.f32 %v2952, %v2952
    %v3858 = vmul.f32 %v1637, %v1637
    %v3859 = vmul.f32 %v1639, %v1639
    %v3860 = vmul.f32 %v2086, %v2086
    %v3861 = vmul.f32 %v2088, %v2088
    %v3862 = vmul.f32 %v2535, %v2535
    %v3863 = vmul.f32 %v2537, %v2537
    %v3864 = vmul.f32 %v2957, %v2957
    %v3865 = vmul.f32 %v1643, %v1643
    %v3866 = vmul.f32 %v1645, %v1645
    %v3867 = vmul.f32 %v2092, %v2092
    %v3868 = vmul.f32 %v2094, %v2094
    %v3869 = vmul.f32 %v2541, %v2541
    %v3870 = vmul.f32 %v2543, %v2543
    %v3871 = vmul.f32 %v2962, %v2962
    %v3872 = vmul.f32 %v1649, %v1649
    %v3873 = vmul.f32 %v1651, %v1651
    %v3874 = vmul.f32 %v2098, %v2098
    %v3875 = vmul.f32 %v2100, %v2100
    %v3876 = vmul.f32 %v2547, %v2547
    %v3877 = vmul.f32 %v2549, %v2549
    %v3878 = vmul.f32 %v2967, %v2967
    %v3879 = vmul.f32 %v1655, %v1655
    %v3880 = vmul.f32 %v1657, %v1657
    %v3881 = vmul.f32 %v2104, %v2104
    %v3882 = vmul.f32 %v2106, %v2106
    %v3883 = vmul.f32 %v2553, %v2553
    %v3884 = vmul.f32 %v2555, %v2555
    %v3885 = vmul.f32 %v2972, %v2972
    %v3886 = vmul.f32 %v1661, %v1661
    %v3887 = vmul.f32 %v1663, %v1663
    %v3888 = vmul.f32 %v2110, %v2110
    %v3889 = vmul.f32 %v2112, %v2112
    %v3890 = vmul.f32 %v2559, %v2559
    %v3891 = vmul.f32 %v2561, %v2561
    %v3892 = vmul.f32 %v2977, %v2977
    %v3893 = vmul.f32 %v1667, %v1667
    %v3894 = vmul.f32 %v1669, %v1669
    %v3895 = vmul.f32 %v2116, %v2116
    %v3896 = vmul.f32 %v2118, %v2118
    %v3897 = vmul.f32 %v2565, %v2565
    %v3898 = vmul.f32 %v2567, %v2567
    %v3899 = vmul.f32 %v2982, %v2982
    %v3900 = vmul.f32 %v1673, %v1673
    %v3901 = vmul.f32 %v1675, %v1675
    %v3902 = vmul.f32 %v2122, %v2122
    %v3903 = vmul.f32 %v2124, %v2124
    %v3904 = vmul.f32 %v2571, %v2571
    %v3905 = vmul.f32 %v2573, %v2573
    %v3906 = vmul.f32 %v2987, %v2987
    %v3907 = vmul.f32 %v1679, %v1679
    %v3908 = vmul.f32 %v1681, %v1681
    %v3909 = vmul.f32 %v2128, %v2128
    %v3910 = vmul.f32 %v2130, %v2130
    %v3911 = vmul.f32 %v2577, %v2577
    %v3912 = vmul.f32 %v2579, %v2579
    %v3913 = vmul.f32 %v2992, %v2992
    %v3914 = vmul.f32 %v1685, %v1685
    %v3915 = vmul.f32 %v1687, %v1687
    %v3916 = vmul.f32 %v2134, %v2134
    %v3917 = vmul.f32 %v2136, %v2136
    %v3918 = vmul.f32 %v2583, %v2583
    %v3919 = vmul.f32 %v2585, %v2585
    %v3920 = vmul.f32 %v2997, %v2997
    %v3921 = vmul.f32 %v1691, %v1691
    %v3922 = vmul.f32 %v1693, %v1693
    %v3923 = vmul.f32 %v2140, %v2140
    %v3924 = vmul.f32 %v2142, %v2142
    %v3925 = vmul.f32 %v2589, %v2589
    %v3926 = vmul.f32 %v2591, %v2591
    %v3927 = vmul.f32 %v3002, %v3002
    %v3928 = vmul.f32 %v1697, %v1697
    %v3929 = vmul.f32 %v1699, %v1699
    %v3930 = vmul.f32 %v2146, %v2146
    %v3931 = vmul.f32 %v2148, %v2148
    %v3932 = vmul.f32 %v2595, %v2595
    %v3933 = vmul.f32 %v2597, %v2597
    %v3934 = vmul.f32 %v3007, %v3007
    %v3935 = vmul.f32 %v1703, %v1703
    %v3936 = vmul.f32 %v1705, %v1705
    %v3937 = vmul.f32 %v2152, %v2152
    %v3938 = vmul.f32 %v2154, %v2154
    %v3939 = vmul.f32 %v2601, %v2601
    %v3940 = vmul.f32 %v2603, %v2603
    %v3941 = vmul.f32 %v3012, %v3012
    %v3942 = vmul.f32 %v1709, %v1709
    %v3943 = vmul.f32 %v1711, %v1711
    %v3944 = vmul.f32 %v2158, %v2158
    %v3945 = vmul.f32 %v2160, %v2160
    %v3946 = vmul.f32 %v2607, %v2607
    %v3947 = vmul.f32 %v2609, %v2609
    %v3948 = vmul.f32 %v3017, %v3017
    %v3949 = vmul.f32 %v1715, %v1715
    %v3950 = vmul.f32 %v1717, %v1717
    %v3951 = vmul.f32 %v2164, %v2164
    %v3952 = vmul.f32 %v2166, %v2166
    %v3953 = vmul.f32 %v2613, %v2613
    %v3954 = vmul.f32 %v2615, %v2615
    %v3955 = vmul.f32 %v3022, %v3022
    %v3956 = vmul.f32 %v1721, %v1721
    %v3957 = vmul.f32 %v1723, %v1723
    %v3958 = vmul.f32 %v2170, %v2170
    %v3959 = vmul.f32 %v2172, %v2172
    %v3960 = vmul.f32 %v2619, %v2619
    %v3961 = vmul.f32 %v2621, %v2621
    %v3962 = vmul.f32 %v3027, %v3027
    %v3963 = vmul.f32 %v1727, %v1727
    %v3964 = vmul.f32 %v1729, %v1729
    %v3965 = vmul.f32 %v2176, %v2176
    %v3966 = vmul.f32 %v2178, %v2178
    %v3967 = vmul.f32 %v2625, %v2625
    %v3968 = vmul.f32 %v2627, %v2627
    %v3969 = vmul.f32 %v3032, %v3032
    %v3970 = vmul.f32 %v1733, %v1733
    %v3971 = vmul.f32 %v1735, %v1735
    %v3972 = vmul.f32 %v2182, %v2182
    %v3973 = vmul.f32 %v2184, %v2184
    %v3974 = vmul.f32 %v2631, %v2631
    %v3975 = vmul.f32 %v2633, %v2633
    %v3976 = vmul.f32 %v3037, %v3037
    %v3977 = vmul.f32 %v1739, %v1739
    %v3978 = vmul.f32 %v1741, %v1741
    %v3979 = vmul.f32 %v2188, %v2188
    %v3980 = vmul.f32 %v2190, %v2190
    %v3981 = vmul.f32 %v2637, %v2637
    %v3982 = vmul.f32 %v2639, %v2639
    %v3983 = vmul.f32 %v3042, %v3042
    %v3984 = vmul.f32 %v1745, %v1745
    %v3985 = vmul.f32 %v1747, %v1747
    %v3986 = vmul.f32 %v2194, %v2194
    %v3987 = vmul.f32 %v2196, %v2196
    %v3988 = vmul.f32 %v2643, %v2643
    %v3989 = vmul.f32 %v2645, %v2645
    %v3990 = vmul.f32 %v3047, %v3047
    %v3991 = vmul.f32 %v1751, %v1751
    %v3992 = vmul.f32 %v1753, %v1753
    %v3993 = vmul.f32 %v2200, %v2200
    %v3994 = vmul.f32 %v2202, %v2202
    %v3995 = vmul.f32 %v2649, %v2649
    %v3996 = vmul.f32 %v2651, %v2651
    %v3997 = vmul.f32 %v3052, %v3052
    %v3998 = vmul.f32 %v1757, %v1757
    %v3999 = vmul.f32 %v1759, %v1759
    %v4000 = vmul.f32 %v2206, %v2206
    %v4001 = vmul.f32 %v2208, %v2208
    %v4002 = vmul.f32 %v2655, %v2655
    %v4003 = vmul.f32 %v2657, %v2657
    %v4004 = vmul.f32 %v3057, %v3057
    %v4005 = vmul.f32 %v1763, %v1763
    %v4006 = vmul.f32 %v1765, %v1765
    %v4007 = vmul.f32 %v2212, %v2212
    %v4008 = vmul.f32 %v2214, %v2214
    %v4009 = vmul.f32 %v2661, %v2661
    %v4010 = vmul.f32 %v2663, %v2663
    %v4011 = vmul.f32 %v3062, %v3062
    %v4012 = vmul.f32 %v1769, %v1769
    %v4013 = vmul.f32 %v1771, %v1771
    %v4014 = vmul.f32 %v2218, %v2218
    %v4015 = vmul.f32 %v2220, %v2220
    %v4016 = vmul.f32 %v2667, %v2667
    %v4017 = vmul.f32 %v2669, %v2669
    %v4018 = vmul.f32 %v3067, %v3067
    %v4019 = vmul.f32 %v1775, %v1775
    %v4020 = vmul.f32 %v1777, %v1777
    %v4021 = vmul.f32 %v2224, %v2224
    %v4022 = vmul.f32 %v2226, %v2226
    %v4023 = vmul.f32 %v2673, %v2673
    %v4024 = vmul.f32 %v2675, %v2675
    %v4025 = vmul.f32 %v3072, %v3072
    %v4026 = vmul.f32 %v1781, %v1781
    %v4027 = vmul.f32 %v1783, %v1783
    %v4028 = vmul.f32 %v2230, %v2230
    %v4029 = vmul.f32 %v2232, %v2232
    %v4030 = vmul.f32 %v2679, %v2679
    %v4031 = vmul.f32 %v2681, %v2681
    %v4032 = vmul.f32 %v3077, %v3077
    %v4033 = vmul.f32 %v1787, %v1787
    %v4034 = vmul.f32 %v1789, %v1789
    %v4035 = vmul.f32 %v2236, %v2236
    %v4036 = vmul.f32 %v2238, %v2238
    %v4037 = vmul.f32 %v2685, %v2685
    %v4038 = vmul.f32 %v2687, %v2687
    %v4039 = vmul.f32 %v3082, %v3082
    %v4040 = vmul.f32 %v1793, %v1793
    %v4041 = vmul.f32 %v1795, %v1795
    %v4042 = vmul.f32 %v2242, %v2242
    %v4043 = vmul.f32 %v2244, %v2244
    %v4044 = vmul.f32 %v2691, %v2691
    %v4045 = vmul.f32 %v2693, %v2693
    %v4046 = vmul.f32 %v3087, %v3087
    %v4047 = vmul.f32 %v1799, %v1799
    %v4048 = vmul.f32 %v1801, %v1801
    %v4049 = vmul.f32 %v2248, %v2248
    %v4050 = vmul.f32 %v2250, %v2250
    %v4051 = vmul.f32 %v2697, %v2697
    %v4052 = vmul.f32 %v2699, %v2699
    %v4053 = vmul.f32 %v3092, %v3092
    %v4054 = vmul.f32 %v1805, %v1805
    %v4055 = vmul.f32 %v1807, %v1807
    %v4056 = vmul.f32 %v2254, %v2254
    %v4057 = vmul.f32 %v2256, %v2256
    %v4058 = vmul.f32 %v2703, %v2703
    %v4059 = vmul.f32 %v2705, %v2705
    %v4060 = vmul.f32 %v3097, %v3097
    %v4061 = vmul.f32 %v1811, %v1811
    %v4062 = vmul.f32 %v1813, %v1813
    %v4063 = vmul.f32 %v2260, %v2260
    %v4064 = vmul.f32 %v2262, %v2262
    %v4065 = vmul.f32 %v2709, %v2709
    %v4066 = vmul.f32 %v2711, %v2711
    %v4067 = vmul.f32 %v3102, %v3102
    %v4068 = vmul.f32 %v1817, %v1817
    %v4069 = vmul.f32 %v1819, %v1819
    %v4070 = vmul.f32 %v2266, %v2266
    %v4071 = vmul.f32 %v2268, %v2268
    %v4072 = vmul.f32 %v2715, %v2715
    %v4073 = vmul.f32 %v2717, %v2717
    %v4074 = vmul.f32 %v3107, %v3107
    %v4075 = vmul.f32 %v1823, %v1823
    %v4076 = vmul.f32 %v1825, %v1825
    %v4077 = vmul.f32 %v2272, %v2272
    %v4078 = vmul.f32 %v2274, %v2274
    %v4079 = vmul.f32 %v2721, %v2721
    %v4080 = vmul.f32 %v2723, %v2723
    %v4081 = vmul.f32 %v3112, %v3112
    %v4082 = vmul.f32 %v1829, %v1829
    %v4083 = vmul.f32 %v1831, %v1831
    %v4084 = vmul.f32 %v2278, %v2278
    %v4085 = vmul.f32 %v2280, %v2280
    %v4086 = vmul.f32 %v2727, %v2727
    %v4087 = vmul.f32 %v2729, %v2729
    %v4088 = vmul.f32 %v3117, %v3117
    %v4089 = vmul.f32 %v1835, %v1835
    %v4090 = vmul.f32 %v1837, %v1837
    %v4091 = vmul.f32 %v2284, %v2284
    %v4092 = vmul.f32 %v2286, %v2286
    %v4093 = vmul.f32 %v2733, %v2733
    %v4094 = vmul.f32 %v2735, %v2735
    %v4095 = vmul.f32 %v3122, %v3122
    %v4096 = vmul.f32 %v1841, %v1841
    %v4097 = vmul.f32 %v1843, %v1843
    %v4098 = vmul.f32 %v2290, %v2290
    %v4099 = vmul.f32 %v2292, %v2292
    %v4100 = vmul.f32 %v2739, %v2739
    %v4101 = vmul.f32 %v2741, %v2741
    %v4102 = vmul.f32 %v3127, %v3127
    %v4103 = vmul.f32 %v1847, %v1847
    %v4104 = vmul.f32 %v1849, %v1849
    %v4105 = vmul.f32 %v2296, %v2296
    %v4106 = vmul.f32 %v2298, %v2298
    %v4107 = vmul.f32 %v2745, %v2745
    %v4108 = vmul.f32 %v2747, %v2747
    %v4109 = vmul.f32 %v3132, %v3132
    %v4110 = vmul.f32 %v1853, %v1853
    %v4111 = vmul.f32 %v1855, %v1855
    %v4112 = vmul.f32 %v2302, %v2302
    %v4113 = vmul.f32 %v2304, %v2304
    %v4114 = vmul.f32 %v2751, %v2751
    %v4115 = vmul.f32 %v2753, %v2753
    %v4116 = vmul.f32 %v3137, %v3137
    %v4117 = vadd.f32 %v3669, %v3670
    %v4118 = vadd.f32 %v4117, %v3671
    %v4119 = vadd.f32 %v4118, %v3672
    %v4120 = vadd.f32 %v4119, %v3673
    %v4121 = vadd.f32 %v4120, %v3674
    %v4122 = vsel %vm228, %v3675, 0.0
    %v4123 = vadd.f32 %v4121, %v4122
    %4124 = vadd.xlane.f32.xlu0 %v4123
    %v4125 = vpop.xlane.xlu0 %4124
    %v4126 = vadd.f32 %v3676, %v3677
    %v4127 = vadd.f32 %v4126, %v3678
    %v4128 = vadd.f32 %v4127, %v3679
    %v4129 = vadd.f32 %v4128, %v3680
    %v4130 = vadd.f32 %v4129, %v3681
    %v4131 = vsel %vm228, %v3682, 0.0
    %v4132 = vadd.f32 %v4130, %v4131
    %4133 = vadd.xlane.f32.xlu0 %v4132
    %v4134 = vpop.xlane.xlu0 %4133
    %v4135 = vadd.f32 %v3683, %v3684
    %v4136 = vadd.f32 %v4135, %v3685
    %v4137 = vadd.f32 %v4136, %v3686
    %v4138 = vadd.f32 %v4137, %v3687
    %v4139 = vadd.f32 %v4138, %v3688
    %v4140 = vsel %vm228, %v3689, 0.0
    %v4141 = vadd.f32 %v4139, %v4140
    %4142 = vadd.xlane.f32.xlu0 %v4141
    %v4143 = vpop.xlane.xlu0 %4142
    %v4144 = vadd.f32 %v3690, %v3691
    %v4145 = vadd.f32 %v4144, %v3692
    %v4146 = vadd.f32 %v4145, %v3693
    %v4147 = vadd.f32 %v4146, %v3694
    %v4148 = vadd.f32 %v4147, %v3695
    %v4149 = vsel %vm228, %v3696, 0.0
    %v4150 = vadd.f32 %v4148, %v4149
    %4151 = vadd.xlane.f32.xlu0 %v4150
    %v4152 = vpop.xlane.xlu0 %4151
    %v4153 = vadd.f32 %v3697, %v3698
    %v4154 = vadd.f32 %v4153, %v3699
    %v4155 = vadd.f32 %v4154, %v3700
    %v4156 = vadd.f32 %v4155, %v3701
    %v4157 = vadd.f32 %v4156, %v3702
    %v4158 = vsel %vm228, %v3703, 0.0
    %v4159 = vadd.f32 %v4157, %v4158
    %4160 = vadd.xlane.f32.xlu0 %v4159
    %v4161 = vpop.xlane.xlu0 %4160
    %v4162 = vadd.f32 %v3704, %v3705
    %v4163 = vadd.f32 %v4162, %v3706
    %v4164 = vadd.f32 %v4163, %v3707
    %v4165 = vadd.f32 %v4164, %v3708
    %v4166 = vadd.f32 %v4165, %v3709
    %v4167 = vsel %vm228, %v3710, 0.0
    %v4168 = vadd.f32 %v4166, %v4167
    %4169 = vadd.xlane.f32.xlu0 %v4168
    %v4170 = vpop.xlane.xlu0 %4169
    %v4171 = vadd.f32 %v3711, %v3712
    %v4172 = vadd.f32 %v4171, %v3713
    %v4173 = vadd.f32 %v4172, %v3714
    %v4174 = vadd.f32 %v4173, %v3715
    %v4175 = vadd.f32 %v4174, %v3716
    %v4176 = vsel %vm228, %v3717, 0.0
    %v4177 = vadd.f32 %v4175, %v4176
    %4178 = vadd.xlane.f32.xlu0 %v4177
    %v4179 = vpop.xlane.xlu0 %4178
    %v4180 = vadd.f32 %v3718, %v3719
    %v4181 = vadd.f32 %v4180, %v3720
    %v4182 = vadd.f32 %v4181, %v3721
    %v4183 = vadd.f32 %v4182, %v3722
    %v4184 = vadd.f32 %v4183, %v3723
    %v4185 = vsel %vm228, %v3724, 0.0
    %v4186 = vadd.f32 %v4184, %v4185
    %4187 = vadd.xlane.f32.xlu0 %v4186
    %v4188 = vpop.xlane.xlu0 %4187
    %v4189 = vadd.f32 %v3725, %v3726
    %v4190 = vadd.f32 %v4189, %v3727
    %v4191 = vadd.f32 %v4190, %v3728
    %v4192 = vadd.f32 %v4191, %v3729
    %v4193 = vadd.f32 %v4192, %v3730
    %v4194 = vsel %vm228, %v3731, 0.0
    %v4195 = vadd.f32 %v4193, %v4194
    %4196 = vadd.xlane.f32.xlu0 %v4195
    %v4197 = vpop.xlane.xlu0 %4196
    %v4198 = vadd.f32 %v3732, %v3733
    %v4199 = vadd.f32 %v4198, %v3734
    %v4200 = vadd.f32 %v4199, %v3735
    %v4201 = vadd.f32 %v4200, %v3736
    %v4202 = vadd.f32 %v4201, %v3737
    %v4203 = vsel %vm228, %v3738, 0.0
    %v4204 = vadd.f32 %v4202, %v4203
    %4205 = vadd.xlane.f32.xlu0 %v4204
    %v4206 = vpop.xlane.xlu0 %4205
    %v4207 = vadd.f32 %v3739, %v3740
    %v4208 = vadd.f32 %v4207, %v3741
    %v4209 = vadd.f32 %v4208, %v3742
    %v4210 = vadd.f32 %v4209, %v3743
    %v4211 = vadd.f32 %v4210, %v3744
    %v4212 = vsel %vm228, %v3745, 0.0
    %v4213 = vadd.f32 %v4211, %v4212
    %4214 = vadd.xlane.f32.xlu0 %v4213
    %v4215 = vpop.xlane.xlu0 %4214
    %v4216 = vadd.f32 %v3746, %v3747
    %v4217 = vadd.f32 %v4216, %v3748
    %v4218 = vadd.f32 %v4217, %v3749
    %v4219 = vadd.f32 %v4218, %v3750
    %v4220 = vadd.f32 %v4219, %v3751
    %v4221 = vsel %vm228, %v3752, 0.0
    %v4222 = vadd.f32 %v4220, %v4221
    %4223 = vadd.xlane.f32.xlu0 %v4222
    %v4224 = vpop.xlane.xlu0 %4223
    %v4225 = vadd.f32 %v3753, %v3754
    %v4226 = vadd.f32 %v4225, %v3755
    %v4227 = vadd.f32 %v4226, %v3756
    %v4228 = vadd.f32 %v4227, %v3757
    %v4229 = vadd.f32 %v4228, %v3758
    %v4230 = vsel %vm228, %v3759, 0.0
    %v4231 = vadd.f32 %v4229, %v4230
    %4232 = vadd.xlane.f32.xlu0 %v4231
    %v4233 = vpop.xlane.xlu0 %4232
    %v4234 = vadd.f32 %v3760, %v3761
    %v4235 = vadd.f32 %v4234, %v3762
    %v4236 = vadd.f32 %v4235, %v3763
    %v4237 = vadd.f32 %v4236, %v3764
    %v4238 = vadd.f32 %v4237, %v3765
    %v4239 = vsel %vm228, %v3766, 0.0
    %v4240 = vadd.f32 %v4238, %v4239
    %4241 = vadd.xlane.f32.xlu0 %v4240
    %v4242 = vpop.xlane.xlu0 %4241
    %v4243 = vadd.f32 %v3767, %v3768
    %v4244 = vadd.f32 %v4243, %v3769
    %v4245 = vadd.f32 %v4244, %v3770
    %v4246 = vadd.f32 %v4245, %v3771
    %v4247 = vadd.f32 %v4246, %v3772
    %v4248 = vsel %vm228, %v3773, 0.0
    %v4249 = vadd.f32 %v4247, %v4248
    %4250 = vadd.xlane.f32.xlu0 %v4249
    %v4251 = vpop.xlane.xlu0 %4250
    %v4252 = vadd.f32 %v3774, %v3775
    %v4253 = vadd.f32 %v4252, %v3776
    %v4254 = vadd.f32 %v4253, %v3777
    %v4255 = vadd.f32 %v4254, %v3778
    %v4256 = vadd.f32 %v4255, %v3779
    %v4257 = vsel %vm228, %v3780, 0.0
    %v4258 = vadd.f32 %v4256, %v4257
    %4259 = vadd.xlane.f32.xlu0 %v4258
    %v4260 = vpop.xlane.xlu0 %4259
    %v4261 = vadd.f32 %v3781, %v3782
    %v4262 = vadd.f32 %v4261, %v3783
    %v4263 = vadd.f32 %v4262, %v3784
    %v4264 = vadd.f32 %v4263, %v3785
    %v4265 = vadd.f32 %v4264, %v3786
    %v4266 = vsel %vm228, %v3787, 0.0
    %v4267 = vadd.f32 %v4265, %v4266
    %4268 = vadd.xlane.f32.xlu0 %v4267
    %v4269 = vpop.xlane.xlu0 %4268
    %v4270 = vadd.f32 %v3788, %v3789
    %v4271 = vadd.f32 %v4270, %v3790
    %v4272 = vadd.f32 %v4271, %v3791
    %v4273 = vadd.f32 %v4272, %v3792
    %v4274 = vadd.f32 %v4273, %v3793
    %v4275 = vsel %vm228, %v3794, 0.0
    %v4276 = vadd.f32 %v4274, %v4275
    %4277 = vadd.xlane.f32.xlu0 %v4276
    %v4278 = vpop.xlane.xlu0 %4277
    %v4279 = vadd.f32 %v3795, %v3796
    %v4280 = vadd.f32 %v4279, %v3797
    %v4281 = vadd.f32 %v4280, %v3798
    %v4282 = vadd.f32 %v4281, %v3799
    %v4283 = vadd.f32 %v4282, %v3800
    %v4284 = vsel %vm228, %v3801, 0.0
    %v4285 = vadd.f32 %v4283, %v4284
    %4286 = vadd.xlane.f32.xlu0 %v4285
    %v4287 = vpop.xlane.xlu0 %4286
    %v4288 = vadd.f32 %v3802, %v3803
    %v4289 = vadd.f32 %v4288, %v3804
    %v4290 = vadd.f32 %v4289, %v3805
    %v4291 = vadd.f32 %v4290, %v3806
    %v4292 = vadd.f32 %v4291, %v3807
    %v4293 = vsel %vm228, %v3808, 0.0
    %v4294 = vadd.f32 %v4292, %v4293
    %4295 = vadd.xlane.f32.xlu0 %v4294
    %v4296 = vpop.xlane.xlu0 %4295
    %v4297 = vadd.f32 %v3809, %v3810
    %v4298 = vadd.f32 %v4297, %v3811
    %v4299 = vadd.f32 %v4298, %v3812
    %v4300 = vadd.f32 %v4299, %v3813
    %v4301 = vadd.f32 %v4300, %v3814
    %v4302 = vsel %vm228, %v3815, 0.0
    %v4303 = vadd.f32 %v4301, %v4302
    %4304 = vadd.xlane.f32.xlu0 %v4303
    %v4305 = vpop.xlane.xlu0 %4304
    %v4306 = vadd.f32 %v3816, %v3817
    %v4307 = vadd.f32 %v4306, %v3818
    %v4308 = vadd.f32 %v4307, %v3819
    %v4309 = vadd.f32 %v4308, %v3820
    %v4310 = vadd.f32 %v4309, %v3821
    %v4311 = vsel %vm228, %v3822, 0.0
    %v4312 = vadd.f32 %v4310, %v4311
    %4313 = vadd.xlane.f32.xlu0 %v4312
    %v4314 = vpop.xlane.xlu0 %4313
    %v4315 = vadd.f32 %v3823, %v3824
    %v4316 = vadd.f32 %v4315, %v3825
    %v4317 = vadd.f32 %v4316, %v3826
    %v4318 = vadd.f32 %v4317, %v3827
    %v4319 = vadd.f32 %v4318, %v3828
    %v4320 = vsel %vm228, %v3829, 0.0
    %v4321 = vadd.f32 %v4319, %v4320
    %4322 = vadd.xlane.f32.xlu0 %v4321
    %v4323 = vpop.xlane.xlu0 %4322
    %v4324 = vadd.f32 %v3830, %v3831
    %v4325 = vadd.f32 %v4324, %v3832
    %v4326 = vadd.f32 %v4325, %v3833
    %v4327 = vadd.f32 %v4326, %v3834
    %v4328 = vadd.f32 %v4327, %v3835
    %v4329 = vsel %vm228, %v3836, 0.0
    %v4330 = vadd.f32 %v4328, %v4329
    %4331 = vadd.xlane.f32.xlu0 %v4330
    %v4332 = vpop.xlane.xlu0 %4331
    %v4333 = vadd.f32 %v3837, %v3838
    %v4334 = vadd.f32 %v4333, %v3839
    %v4335 = vadd.f32 %v4334, %v3840
    %v4336 = vadd.f32 %v4335, %v3841
    %v4337 = vadd.f32 %v4336, %v3842
    %v4338 = vsel %vm228, %v3843, 0.0
    %v4339 = vadd.f32 %v4337, %v4338
    %4340 = vadd.xlane.f32.xlu0 %v4339
    %v4341 = vpop.xlane.xlu0 %4340
    %v4342 = vadd.f32 %v3844, %v3845
    %v4343 = vadd.f32 %v4342, %v3846
    %v4344 = vadd.f32 %v4343, %v3847
    %v4345 = vadd.f32 %v4344, %v3848
    %v4346 = vadd.f32 %v4345, %v3849
    %v4347 = vsel %vm228, %v3850, 0.0
    %v4348 = vadd.f32 %v4346, %v4347
    %4349 = vadd.xlane.f32.xlu0 %v4348
    %v4350 = vpop.xlane.xlu0 %4349
    %v4351 = vadd.f32 %v3851, %v3852
    %v4352 = vadd.f32 %v4351, %v3853
    %v4353 = vadd.f32 %v4352, %v3854
    %v4354 = vadd.f32 %v4353, %v3855
    %v4355 = vadd.f32 %v4354, %v3856
    %v4356 = vsel %vm228, %v3857, 0.0
    %v4357 = vadd.f32 %v4355, %v4356
    %4358 = vadd.xlane.f32.xlu0 %v4357
    %v4359 = vpop.xlane.xlu0 %4358
    %v4360 = vadd.f32 %v3858, %v3859
    %v4361 = vadd.f32 %v4360, %v3860
    %v4362 = vadd.f32 %v4361, %v3861
    %v4363 = vadd.f32 %v4362, %v3862
    %v4364 = vadd.f32 %v4363, %v3863
    %v4365 = vsel %vm228, %v3864, 0.0
    %v4366 = vadd.f32 %v4364, %v4365
    %4367 = vadd.xlane.f32.xlu0 %v4366
    %v4368 = vpop.xlane.xlu0 %4367
    %v4369 = vadd.f32 %v3865, %v3866
    %v4370 = vadd.f32 %v4369, %v3867
    %v4371 = vadd.f32 %v4370, %v3868
    %v4372 = vadd.f32 %v4371, %v3869
    %v4373 = vadd.f32 %v4372, %v3870
    %v4374 = vsel %vm228, %v3871, 0.0
    %v4375 = vadd.f32 %v4373, %v4374
    %4376 = vadd.xlane.f32.xlu0 %v4375
    %v4377 = vpop.xlane.xlu0 %4376
    %v4378 = vadd.f32 %v3872, %v3873
    %v4379 = vadd.f32 %v4378, %v3874
    %v4380 = vadd.f32 %v4379, %v3875
    %v4381 = vadd.f32 %v4380, %v3876
    %v4382 = vadd.f32 %v4381, %v3877
    %v4383 = vsel %vm228, %v3878, 0.0
    %v4384 = vadd.f32 %v4382, %v4383
    %4385 = vadd.xlane.f32.xlu0 %v4384
    %v4386 = vpop.xlane.xlu0 %4385
    %v4387 = vadd.f32 %v3879, %v3880
    %v4388 = vadd.f32 %v4387, %v3881
    %v4389 = vadd.f32 %v4388, %v3882
    %v4390 = vadd.f32 %v4389, %v3883
    %v4391 = vadd.f32 %v4390, %v3884
    %v4392 = vsel %vm228, %v3885, 0.0
    %v4393 = vadd.f32 %v4391, %v4392
    %4394 = vadd.xlane.f32.xlu0 %v4393
    %v4395 = vpop.xlane.xlu0 %4394
    %v4396 = vadd.f32 %v3886, %v3887
    %v4397 = vadd.f32 %v4396, %v3888
    %v4398 = vadd.f32 %v4397, %v3889
    %v4399 = vadd.f32 %v4398, %v3890
    %v4400 = vadd.f32 %v4399, %v3891
    %v4401 = vsel %vm228, %v3892, 0.0
    %v4402 = vadd.f32 %v4400, %v4401
    %4403 = vadd.xlane.f32.xlu0 %v4402
    %v4404 = vpop.xlane.xlu0 %4403
    %v4405 = vadd.f32 %v3893, %v3894
    %v4406 = vadd.f32 %v4405, %v3895
    %v4407 = vadd.f32 %v4406, %v3896
    %v4408 = vadd.f32 %v4407, %v3897
    %v4409 = vadd.f32 %v4408, %v3898
    %v4410 = vsel %vm228, %v3899, 0.0
    %v4411 = vadd.f32 %v4409, %v4410
    %4412 = vadd.xlane.f32.xlu0 %v4411
    %v4413 = vpop.xlane.xlu0 %4412
    %v4414 = vadd.f32 %v3900, %v3901
    %v4415 = vadd.f32 %v4414, %v3902
    %v4416 = vadd.f32 %v4415, %v3903
    %v4417 = vadd.f32 %v4416, %v3904
    %v4418 = vadd.f32 %v4417, %v3905
    %v4419 = vsel %vm228, %v3906, 0.0
    %v4420 = vadd.f32 %v4418, %v4419
    %4421 = vadd.xlane.f32.xlu0 %v4420
    %v4422 = vpop.xlane.xlu0 %4421
    %v4423 = vadd.f32 %v3907, %v3908
    %v4424 = vadd.f32 %v4423, %v3909
    %v4425 = vadd.f32 %v4424, %v3910
    %v4426 = vadd.f32 %v4425, %v3911
    %v4427 = vadd.f32 %v4426, %v3912
    %v4428 = vsel %vm228, %v3913, 0.0
    %v4429 = vadd.f32 %v4427, %v4428
    %4430 = vadd.xlane.f32.xlu0 %v4429
    %v4431 = vpop.xlane.xlu0 %4430
    %v4432 = vadd.f32 %v3914, %v3915
    %v4433 = vadd.f32 %v4432, %v3916
    %v4434 = vadd.f32 %v4433, %v3917
    %v4435 = vadd.f32 %v4434, %v3918
    %v4436 = vadd.f32 %v4435, %v3919
    %v4437 = vsel %vm228, %v3920, 0.0
    %v4438 = vadd.f32 %v4436, %v4437
    %4439 = vadd.xlane.f32.xlu0 %v4438
    %v4440 = vpop.xlane.xlu0 %4439
    %v4441 = vadd.f32 %v3921, %v3922
    %v4442 = vadd.f32 %v4441, %v3923
    %v4443 = vadd.f32 %v4442, %v3924
    %v4444 = vadd.f32 %v4443, %v3925
    %v4445 = vadd.f32 %v4444, %v3926
    %v4446 = vsel %vm228, %v3927, 0.0
    %v4447 = vadd.f32 %v4445, %v4446
    %4448 = vadd.xlane.f32.xlu0 %v4447
    %v4449 = vpop.xlane.xlu0 %4448
    %v4450 = vadd.f32 %v3928, %v3929
    %v4451 = vadd.f32 %v4450, %v3930
    %v4452 = vadd.f32 %v4451, %v3931
    %v4453 = vadd.f32 %v4452, %v3932
    %v4454 = vadd.f32 %v4453, %v3933
    %v4455 = vsel %vm228, %v3934, 0.0
    %v4456 = vadd.f32 %v4454, %v4455
    %4457 = vadd.xlane.f32.xlu0 %v4456
    %v4458 = vpop.xlane.xlu0 %4457
    %v4459 = vadd.f32 %v3935, %v3936
    %v4460 = vadd.f32 %v4459, %v3937
    %v4461 = vadd.f32 %v4460, %v3938
    %v4462 = vadd.f32 %v4461, %v3939
    %v4463 = vadd.f32 %v4462, %v3940
    %v4464 = vsel %vm228, %v3941, 0.0
    %v4465 = vadd.f32 %v4463, %v4464
    %4466 = vadd.xlane.f32.xlu0 %v4465
    %v4467 = vpop.xlane.xlu0 %4466
    %v4468 = vadd.f32 %v3942, %v3943
    %v4469 = vadd.f32 %v4468, %v3944
    %v4470 = vadd.f32 %v4469, %v3945
    %v4471 = vadd.f32 %v4470, %v3946
    %v4472 = vadd.f32 %v4471, %v3947
    %v4473 = vsel %vm228, %v3948, 0.0
    %v4474 = vadd.f32 %v4472, %v4473
    %4475 = vadd.xlane.f32.xlu0 %v4474
    %v4476 = vpop.xlane.xlu0 %4475
    %v4477 = vadd.f32 %v3949, %v3950
    %v4478 = vadd.f32 %v4477, %v3951
    %v4479 = vadd.f32 %v4478, %v3952
    %v4480 = vadd.f32 %v4479, %v3953
    %v4481 = vadd.f32 %v4480, %v3954
    %v4482 = vsel %vm228, %v3955, 0.0
    %v4483 = vadd.f32 %v4481, %v4482
    %4484 = vadd.xlane.f32.xlu0 %v4483
    %v4485 = vpop.xlane.xlu0 %4484
    %v4486 = vadd.f32 %v3956, %v3957
    %v4487 = vadd.f32 %v4486, %v3958
    %v4488 = vadd.f32 %v4487, %v3959
    %v4489 = vadd.f32 %v4488, %v3960
    %v4490 = vadd.f32 %v4489, %v3961
    %v4491 = vsel %vm228, %v3962, 0.0
    %v4492 = vadd.f32 %v4490, %v4491
    %4493 = vadd.xlane.f32.xlu0 %v4492
    %v4494 = vpop.xlane.xlu0 %4493
    %v4495 = vadd.f32 %v3963, %v3964
    %v4496 = vadd.f32 %v4495, %v3965
    %v4497 = vadd.f32 %v4496, %v3966
    %v4498 = vadd.f32 %v4497, %v3967
    %v4499 = vadd.f32 %v4498, %v3968
    %v4500 = vsel %vm228, %v3969, 0.0
    %v4501 = vadd.f32 %v4499, %v4500
    %4502 = vadd.xlane.f32.xlu0 %v4501
    %v4503 = vpop.xlane.xlu0 %4502
    %v4504 = vadd.f32 %v3970, %v3971
    %v4505 = vadd.f32 %v4504, %v3972
    %v4506 = vadd.f32 %v4505, %v3973
    %v4507 = vadd.f32 %v4506, %v3974
    %v4508 = vadd.f32 %v4507, %v3975
    %v4509 = vsel %vm228, %v3976, 0.0
    %v4510 = vadd.f32 %v4508, %v4509
    %4511 = vadd.xlane.f32.xlu0 %v4510
    %v4512 = vpop.xlane.xlu0 %4511
    %v4513 = vadd.f32 %v3977, %v3978
    %v4514 = vadd.f32 %v4513, %v3979
    %v4515 = vadd.f32 %v4514, %v3980
    %v4516 = vadd.f32 %v4515, %v3981
    %v4517 = vadd.f32 %v4516, %v3982
    %v4518 = vsel %vm228, %v3983, 0.0
    %v4519 = vadd.f32 %v4517, %v4518
    %4520 = vadd.xlane.f32.xlu0 %v4519
    %v4521 = vpop.xlane.xlu0 %4520
    %v4522 = vadd.f32 %v3984, %v3985
    %v4523 = vadd.f32 %v4522, %v3986
    %v4524 = vadd.f32 %v4523, %v3987
    %v4525 = vadd.f32 %v4524, %v3988
    %v4526 = vadd.f32 %v4525, %v3989
    %v4527 = vsel %vm228, %v3990, 0.0
    %v4528 = vadd.f32 %v4526, %v4527
    %4529 = vadd.xlane.f32.xlu0 %v4528
    %v4530 = vpop.xlane.xlu0 %4529
    %v4531 = vadd.f32 %v3991, %v3992
    %v4532 = vadd.f32 %v4531, %v3993
    %v4533 = vadd.f32 %v4532, %v3994
    %v4534 = vadd.f32 %v4533, %v3995
    %v4535 = vadd.f32 %v4534, %v3996
    %v4536 = vsel %vm228, %v3997, 0.0
    %v4537 = vadd.f32 %v4535, %v4536
    %4538 = vadd.xlane.f32.xlu0 %v4537
    %v4539 = vpop.xlane.xlu0 %4538
    %v4540 = vadd.f32 %v3998, %v3999
    %v4541 = vadd.f32 %v4540, %v4000
    %v4542 = vadd.f32 %v4541, %v4001
    %v4543 = vadd.f32 %v4542, %v4002
    %v4544 = vadd.f32 %v4543, %v4003
    %v4545 = vsel %vm228, %v4004, 0.0
    %v4546 = vadd.f32 %v4544, %v4545
    %4547 = vadd.xlane.f32.xlu0 %v4546
    %v4548 = vpop.xlane.xlu0 %4547
    %v4549 = vadd.f32 %v4005, %v4006
    %v4550 = vadd.f32 %v4549, %v4007
    %v4551 = vadd.f32 %v4550, %v4008
    %v4552 = vadd.f32 %v4551, %v4009
    %v4553 = vadd.f32 %v4552, %v4010
    %v4554 = vsel %vm228, %v4011, 0.0
    %v4555 = vadd.f32 %v4553, %v4554
    %4556 = vadd.xlane.f32.xlu0 %v4555
    %v4557 = vpop.xlane.xlu0 %4556
    %v4558 = vadd.f32 %v4012, %v4013
    %v4559 = vadd.f32 %v4558, %v4014
    %v4560 = vadd.f32 %v4559, %v4015
    %v4561 = vadd.f32 %v4560, %v4016
    %v4562 = vadd.f32 %v4561, %v4017
    %v4563 = vsel %vm228, %v4018, 0.0
    %v4564 = vadd.f32 %v4562, %v4563
    %4565 = vadd.xlane.f32.xlu0 %v4564
    %v4566 = vpop.xlane.xlu0 %4565
    %v4567 = vadd.f32 %v4019, %v4020
    %v4568 = vadd.f32 %v4567, %v4021
    %v4569 = vadd.f32 %v4568, %v4022
    %v4570 = vadd.f32 %v4569, %v4023
    %v4571 = vadd.f32 %v4570, %v4024
    %v4572 = vsel %vm228, %v4025, 0.0
    %v4573 = vadd.f32 %v4571, %v4572
    %4574 = vadd.xlane.f32.xlu0 %v4573
    %v4575 = vpop.xlane.xlu0 %4574
    %v4576 = vadd.f32 %v4026, %v4027
    %v4577 = vadd.f32 %v4576, %v4028
    %v4578 = vadd.f32 %v4577, %v4029
    %v4579 = vadd.f32 %v4578, %v4030
    %v4580 = vadd.f32 %v4579, %v4031
    %v4581 = vsel %vm228, %v4032, 0.0
    %v4582 = vadd.f32 %v4580, %v4581
    %4583 = vadd.xlane.f32.xlu0 %v4582
    %v4584 = vpop.xlane.xlu0 %4583
    %v4585 = vadd.f32 %v4033, %v4034
    %v4586 = vadd.f32 %v4585, %v4035
    %v4587 = vadd.f32 %v4586, %v4036
    %v4588 = vadd.f32 %v4587, %v4037
    %v4589 = vadd.f32 %v4588, %v4038
    %v4590 = vsel %vm228, %v4039, 0.0
    %v4591 = vadd.f32 %v4589, %v4590
    %4592 = vadd.xlane.f32.xlu0 %v4591
    %v4593 = vpop.xlane.xlu0 %4592
    %v4594 = vadd.f32 %v4040, %v4041
    %v4595 = vadd.f32 %v4594, %v4042
    %v4596 = vadd.f32 %v4595, %v4043
    %v4597 = vadd.f32 %v4596, %v4044
    %v4598 = vadd.f32 %v4597, %v4045
    %v4599 = vsel %vm228, %v4046, 0.0
    %v4600 = vadd.f32 %v4598, %v4599
    %4601 = vadd.xlane.f32.xlu0 %v4600
    %v4602 = vpop.xlane.xlu0 %4601
    %v4603 = vadd.f32 %v4047, %v4048
    %v4604 = vadd.f32 %v4603, %v4049
    %v4605 = vadd.f32 %v4604, %v4050
    %v4606 = vadd.f32 %v4605, %v4051
    %v4607 = vadd.f32 %v4606, %v4052
    %v4608 = vsel %vm228, %v4053, 0.0
    %v4609 = vadd.f32 %v4607, %v4608
    %4610 = vadd.xlane.f32.xlu0 %v4609
    %v4611 = vpop.xlane.xlu0 %4610
    %v4612 = vadd.f32 %v4054, %v4055
    %v4613 = vadd.f32 %v4612, %v4056
    %v4614 = vadd.f32 %v4613, %v4057
    %v4615 = vadd.f32 %v4614, %v4058
    %v4616 = vadd.f32 %v4615, %v4059
    %v4617 = vsel %vm228, %v4060, 0.0
    %v4618 = vadd.f32 %v4616, %v4617
    %4619 = vadd.xlane.f32.xlu0 %v4618
    %v4620 = vpop.xlane.xlu0 %4619
    %v4621 = vadd.f32 %v4061, %v4062
    %v4622 = vadd.f32 %v4621, %v4063
    %v4623 = vadd.f32 %v4622, %v4064
    %v4624 = vadd.f32 %v4623, %v4065
    %v4625 = vadd.f32 %v4624, %v4066
    %v4626 = vsel %vm228, %v4067, 0.0
    %v4627 = vadd.f32 %v4625, %v4626
    %4628 = vadd.xlane.f32.xlu0 %v4627
    %v4629 = vpop.xlane.xlu0 %4628
    %v4630 = vadd.f32 %v4068, %v4069
    %v4631 = vadd.f32 %v4630, %v4070
    %v4632 = vadd.f32 %v4631, %v4071
    %v4633 = vadd.f32 %v4632, %v4072
    %v4634 = vadd.f32 %v4633, %v4073
    %v4635 = vsel %vm228, %v4074, 0.0
    %v4636 = vadd.f32 %v4634, %v4635
    %4637 = vadd.xlane.f32.xlu0 %v4636
    %v4638 = vpop.xlane.xlu0 %4637
    %v4639 = vadd.f32 %v4075, %v4076
    %v4640 = vadd.f32 %v4639, %v4077
    %v4641 = vadd.f32 %v4640, %v4078
    %v4642 = vadd.f32 %v4641, %v4079
    %v4643 = vadd.f32 %v4642, %v4080
    %v4644 = vsel %vm228, %v4081, 0.0
    %v4645 = vadd.f32 %v4643, %v4644
    %4646 = vadd.xlane.f32.xlu0 %v4645
    %v4647 = vpop.xlane.xlu0 %4646
    %v4648 = vadd.f32 %v4082, %v4083
    %v4649 = vadd.f32 %v4648, %v4084
    %v4650 = vadd.f32 %v4649, %v4085
    %v4651 = vadd.f32 %v4650, %v4086
    %v4652 = vadd.f32 %v4651, %v4087
    %v4653 = vsel %vm228, %v4088, 0.0
    %v4654 = vadd.f32 %v4652, %v4653
    %4655 = vadd.xlane.f32.xlu0 %v4654
    %v4656 = vpop.xlane.xlu0 %4655
    %v4657 = vadd.f32 %v4089, %v4090
    %v4658 = vadd.f32 %v4657, %v4091
    %v4659 = vadd.f32 %v4658, %v4092
    %v4660 = vadd.f32 %v4659, %v4093
    %v4661 = vadd.f32 %v4660, %v4094
    %v4662 = vsel %vm228, %v4095, 0.0
    %v4663 = vadd.f32 %v4661, %v4662
    %4664 = vadd.xlane.f32.xlu0 %v4663
    %v4665 = vpop.xlane.xlu0 %4664
    %v4666 = vadd.f32 %v4096, %v4097
    %v4667 = vadd.f32 %v4666, %v4098
    %v4668 = vadd.f32 %v4667, %v4099
    %v4669 = vadd.f32 %v4668, %v4100
    %v4670 = vadd.f32 %v4669, %v4101
    %v4671 = vsel %vm228, %v4102, 0.0
    %v4672 = vadd.f32 %v4670, %v4671
    %4673 = vadd.xlane.f32.xlu0 %v4672
    %v4674 = vpop.xlane.xlu0 %4673
    %v4675 = vadd.f32 %v4103, %v4104
    %v4676 = vadd.f32 %v4675, %v4105
    %v4677 = vadd.f32 %v4676, %v4106
    %v4678 = vadd.f32 %v4677, %v4107
    %v4679 = vadd.f32 %v4678, %v4108
    %v4680 = vsel %vm228, %v4109, 0.0
    %v4681 = vadd.f32 %v4679, %v4680
    %4682 = vadd.xlane.f32.xlu0 %v4681
    %v4683 = vpop.xlane.xlu0 %4682
    %v4684 = vadd.f32 %v4110, %v4111
    %v4685 = vadd.f32 %v4684, %v4112
    %v4686 = vadd.f32 %v4685, %v4113
    %v4687 = vadd.f32 %v4686, %v4114
    %v4688 = vadd.f32 %v4687, %v4115
    %v4689 = vsel %vm228, %v4116, 0.0
    %v4690 = vadd.f32 %v4688, %v4689
    %4691 = vadd.xlane.f32.xlu0 %v4690
    %v4692 = vpop.xlane.xlu0 %4691
    %v4693 = vmul.f32 %v3351, 0.0012755102
    %v4694 = vmul.f32 %v3356, 0.0012755102
    %v4695 = vmul.f32 %v3361, 0.0012755102
    %v4696 = vmul.f32 %v3366, 0.0012755102
    %v4697 = vmul.f32 %v3371, 0.0012755102
    %v4698 = vmul.f32 %v3376, 0.0012755102
    %v4699 = vmul.f32 %v3381, 0.0012755102
    %v4700 = vmul.f32 %v3386, 0.0012755102
    %v4701 = vmul.f32 %v3391, 0.0012755102
    %v4702 = vmul.f32 %v3396, 0.0012755102
    %v4703 = vmul.f32 %v3401, 0.0012755102
    %v4704 = vmul.f32 %v3406, 0.0012755102
    %v4705 = vmul.f32 %v3411, 0.0012755102
    %v4706 = vmul.f32 %v3416, 0.0012755102
    %v4707 = vmul.f32 %v3421, 0.0012755102
    %v4708 = vmul.f32 %v3426, 0.0012755102
    %v4709 = vmul.f32 %v3431, 0.0012755102
    %v4710 = vmul.f32 %v3436, 0.0012755102
    %v4711 = vmul.f32 %v3441, 0.0012755102
    %v4712 = vmul.f32 %v3446, 0.0012755102
    %v4713 = vmul.f32 %v3451, 0.0012755102
    %v4714 = vmul.f32 %v3456, 0.0012755102
    %v4715 = vmul.f32 %v3461, 0.0012755102
    %v4716 = vmul.f32 %v3466, 0.0012755102
    %v4717 = vmul.f32 %v3471, 0.0012755102
    %v4718 = vmul.f32 %v3476, 0.0012755102
    %v4719 = vmul.f32 %v3481, 0.0012755102
    %v4720 = vmul.f32 %v3486, 0.0012755102
    %v4721 = vmul.f32 %v3491, 0.0012755102
    %v4722 = vmul.f32 %v3496, 0.0012755102
    %v4723 = vmul.f32 %v3501, 0.0012755102
    %v4724 = vmul.f32 %v3506, 0.0012755102
    %v4725 = vmul.f32 %v3511, 0.0012755102
    %v4726 = vmul.f32 %v3516, 0.0012755102
    %v4727 = vmul.f32 %v3521, 0.0012755102
    %v4728 = vmul.f32 %v3526, 0.0012755102
    %v4729 = vmul.f32 %v3531, 0.0012755102
    %v4730 = vmul.f32 %v3536, 0.0012755102
    %v4731 = vmul.f32 %v3541, 0.0012755102
    %v4732 = vmul.f32 %v3546, 0.0012755102
    %v4733 = vmul.f32 %v3551, 0.0012755102
    %v4734 = vmul.f32 %v3556, 0.0012755102
    %v4735 = vmul.f32 %v3561, 0.0012755102
    %v4736 = vmul.f32 %v3566, 0.0012755102
    %v4737 = vmul.f32 %v3571, 0.0012755102
    %v4738 = vmul.f32 %v3576, 0.0012755102
    %v4739 = vmul.f32 %v3581, 0.0012755102
    %v4740 = vmul.f32 %v3586, 0.0012755102
    %v4741 = vmul.f32 %v3591, 0.0012755102
    %v4742 = vmul.f32 %v3596, 0.0012755102
    %v4743 = vmul.f32 %v3601, 0.0012755102
    %v4744 = vmul.f32 %v3606, 0.0012755102
    %v4745 = vmul.f32 %v3611, 0.0012755102
    %v4746 = vmul.f32 %v3616, 0.0012755102
    %v4747 = vmul.f32 %v3621, 0.0012755102
    %v4748 = vmul.f32 %v3626, 0.0012755102
    %v4749 = vmul.f32 %v3631, 0.0012755102
    %v4750 = vmul.f32 %v3636, 0.0012755102
    %v4751 = vmul.f32 %v3641, 0.0012755102
    %v4752 = vmul.f32 %v3646, 0.0012755102
    %v4753 = vmul.f32 %v3651, 0.0012755102
    %v4754 = vmul.f32 %v3656, 0.0012755102
    %v4755 = vmul.f32 %v3661, 0.0012755102
    %v4756 = vmul.f32 %v3666, 0.0012755102
    %v4757 = vmul.f32 %v4125, 0.0012755102
    %v4758 = vmul.f32 %v4134, 0.0012755102
    %v4759 = vmul.f32 %v4143, 0.0012755102
    %v4760 = vmul.f32 %v4152, 0.0012755102
    %v4761 = vmul.f32 %v4161, 0.0012755102
    %v4762 = vmul.f32 %v4170, 0.0012755102
    %v4763 = vmul.f32 %v4179, 0.0012755102
    %v4764 = vmul.f32 %v4188, 0.0012755102
    %v4765 = vmul.f32 %v4197, 0.0012755102
    %v4766 = vmul.f32 %v4206, 0.0012755102
    %v4767 = vmul.f32 %v4215, 0.0012755102
    %v4768 = vmul.f32 %v4224, 0.0012755102
    %v4769 = vmul.f32 %v4233, 0.0012755102
    %v4770 = vmul.f32 %v4242, 0.0012755102
    %v4771 = vmul.f32 %v4251, 0.0012755102
    %v4772 = vmul.f32 %v4260, 0.0012755102
    %v4773 = vmul.f32 %v4269, 0.0012755102
    %v4774 = vmul.f32 %v4278, 0.0012755102
    %v4775 = vmul.f32 %v4287, 0.0012755102
    %v4776 = vmul.f32 %v4296, 0.0012755102
    %v4777 = vmul.f32 %v4305, 0.0012755102
    %v4778 = vmul.f32 %v4314, 0.0012755102
    %v4779 = vmul.f32 %v4323, 0.0012755102
    %v4780 = vmul.f32 %v4332, 0.0012755102
    %v4781 = vmul.f32 %v4341, 0.0012755102
    %v4782 = vmul.f32 %v4350, 0.0012755102
    %v4783 = vmul.f32 %v4359, 0.0012755102
    %v4784 = vmul.f32 %v4368, 0.0012755102
    %v4785 = vmul.f32 %v4377, 0.0012755102
    %v4786 = vmul.f32 %v4386, 0.0012755102
    %v4787 = vmul.f32 %v4395, 0.0012755102
    %v4788 = vmul.f32 %v4404, 0.0012755102
    %v4789 = vmul.f32 %v4413, 0.0012755102
    %v4790 = vmul.f32 %v4422, 0.0012755102
    %v4791 = vmul.f32 %v4431, 0.0012755102
    %v4792 = vmul.f32 %v4440, 0.0012755102
    %v4793 = vmul.f32 %v4449, 0.0012755102
    %v4794 = vmul.f32 %v4458, 0.0012755102
    %v4795 = vmul.f32 %v4467, 0.0012755102
    %v4796 = vmul.f32 %v4476, 0.0012755102
    %v4797 = vmul.f32 %v4485, 0.0012755102
    %v4798 = vmul.f32 %v4494, 0.0012755102
    %v4799 = vmul.f32 %v4503, 0.0012755102
    %v4800 = vmul.f32 %v4512, 0.0012755102
    %v4801 = vmul.f32 %v4521, 0.0012755102
    %v4802 = vmul.f32 %v4530, 0.0012755102
    %v4803 = vmul.f32 %v4539, 0.0012755102
    %v4804 = vmul.f32 %v4548, 0.0012755102
    %v4805 = vmul.f32 %v4557, 0.0012755102
    %v4806 = vmul.f32 %v4566, 0.0012755102
    %v4807 = vmul.f32 %v4575, 0.0012755102
    %v4808 = vmul.f32 %v4584, 0.0012755102
    %v4809 = vmul.f32 %v4593, 0.0012755102
    %v4810 = vmul.f32 %v4602, 0.0012755102
    %v4811 = vmul.f32 %v4611, 0.0012755102
    %v4812 = vmul.f32 %v4620, 0.0012755102
    %v4813 = vmul.f32 %v4629, 0.0012755102
    %v4814 = vmul.f32 %v4638, 0.0012755102
    %v4815 = vmul.f32 %v4647, 0.0012755102
    %v4816 = vmul.f32 %v4656, 0.0012755102
    %v4817 = vmul.f32 %v4665, 0.0012755102
    %v4818 = vmul.f32 %v4674, 0.0012755102
    %v4819 = vmul.f32 %v4683, 0.0012755102
    %v4820 = vmul.f32 %v4692, 0.0012755102
    %v4821 = vmul.f32 %v4693, %v4693
    %v4822 = vmul.f32 %v4694, %v4694
    %v4823 = vmul.f32 %v4695, %v4695
    %v4824 = vmul.f32 %v4696, %v4696
    %v4825 = vmul.f32 %v4697, %v4697
    %v4826 = vmul.f32 %v4698, %v4698
    %v4827 = vmul.f32 %v4699, %v4699
    %v4828 = vmul.f32 %v4700, %v4700
    %v4829 = vmul.f32 %v4701, %v4701
    %v4830 = vmul.f32 %v4702, %v4702
    %v4831 = vmul.f32 %v4703, %v4703
    %v4832 = vmul.f32 %v4704, %v4704
    %v4833 = vmul.f32 %v4705, %v4705
    %v4834 = vmul.f32 %v4706, %v4706
    %v4835 = vmul.f32 %v4707, %v4707
    %v4836 = vmul.f32 %v4708, %v4708
    %v4837 = vmul.f32 %v4709, %v4709
    %v4838 = vmul.f32 %v4710, %v4710
    %v4839 = vmul.f32 %v4711, %v4711
    %v4840 = vmul.f32 %v4712, %v4712
    %v4841 = vmul.f32 %v4713, %v4713
    %v4842 = vmul.f32 %v4714, %v4714
    %v4843 = vmul.f32 %v4715, %v4715
    %v4844 = vmul.f32 %v4716, %v4716
    %v4845 = vmul.f32 %v4717, %v4717
    %v4846 = vmul.f32 %v4718, %v4718
    %v4847 = vmul.f32 %v4719, %v4719
    %v4848 = vmul.f32 %v4720, %v4720
    %v4849 = vmul.f32 %v4721, %v4721
    %v4850 = vmul.f32 %v4722, %v4722
    %v4851 = vmul.f32 %v4723, %v4723
    %v4852 = vmul.f32 %v4724, %v4724
    %v4853 = vmul.f32 %v4725, %v4725
    %v4854 = vmul.f32 %v4726, %v4726
    %v4855 = vmul.f32 %v4727, %v4727
    %v4856 = vmul.f32 %v4728, %v4728
    %v4857 = vmul.f32 %v4729, %v4729
    %v4858 = vmul.f32 %v4730, %v4730
    %v4859 = vmul.f32 %v4731, %v4731
    %v4860 = vmul.f32 %v4732, %v4732
    %v4861 = vmul.f32 %v4733, %v4733
    %v4862 = vmul.f32 %v4734, %v4734
    %v4863 = vmul.f32 %v4735, %v4735
    %v4864 = vmul.f32 %v4736, %v4736
    %v4865 = vmul.f32 %v4737, %v4737
    %v4866 = vmul.f32 %v4738, %v4738
    %v4867 = vmul.f32 %v4739, %v4739
    %v4868 = vmul.f32 %v4740, %v4740
    %v4869 = vmul.f32 %v4741, %v4741
    %v4870 = vmul.f32 %v4742, %v4742
    %v4871 = vmul.f32 %v4743, %v4743
    %v4872 = vmul.f32 %v4744, %v4744
    %v4873 = vmul.f32 %v4745, %v4745
    %v4874 = vmul.f32 %v4746, %v4746
    %v4875 = vmul.f32 %v4747, %v4747
    %v4876 = vmul.f32 %v4748, %v4748
    %v4877 = vmul.f32 %v4749, %v4749
    %v4878 = vmul.f32 %v4750, %v4750
    %v4879 = vmul.f32 %v4751, %v4751
    %v4880 = vmul.f32 %v4752, %v4752
    %v4881 = vmul.f32 %v4753, %v4753
    %v4882 = vmul.f32 %v4754, %v4754
    %v4883 = vmul.f32 %v4755, %v4755
    %v4884 = vmul.f32 %v4756, %v4756
    %v4885 = vsub.f32 %v4757, %v4821
    %v4886 = vsub.f32 %v4758, %v4822
    %v4887 = vsub.f32 %v4759, %v4823
    %v4888 = vsub.f32 %v4760, %v4824
    %v4889 = vsub.f32 %v4761, %v4825
    %v4890 = vsub.f32 %v4762, %v4826
    %v4891 = vsub.f32 %v4763, %v4827
    %v4892 = vsub.f32 %v4764, %v4828
    %v4893 = vsub.f32 %v4765, %v4829
    %v4894 = vsub.f32 %v4766, %v4830
    %v4895 = vsub.f32 %v4767, %v4831
    %v4896 = vsub.f32 %v4768, %v4832
    %v4897 = vsub.f32 %v4769, %v4833
    %v4898 = vsub.f32 %v4770, %v4834
    %v4899 = vsub.f32 %v4771, %v4835
    %v4900 = vsub.f32 %v4772, %v4836
    %v4901 = vsub.f32 %v4773, %v4837
    %v4902 = vsub.f32 %v4774, %v4838
    %v4903 = vsub.f32 %v4775, %v4839
    %v4904 = vsub.f32 %v4776, %v4840
    %v4905 = vsub.f32 %v4777, %v4841
    %v4906 = vsub.f32 %v4778, %v4842
    %v4907 = vsub.f32 %v4779, %v4843
    %v4908 = vsub.f32 %v4780, %v4844
    %v4909 = vsub.f32 %v4781, %v4845
    %v4910 = vsub.f32 %v4782, %v4846
    %v4911 = vsub.f32 %v4783, %v4847
    %v4912 = vsub.f32 %v4784, %v4848
    %v4913 = vsub.f32 %v4785, %v4849
    %v4914 = vsub.f32 %v4786, %v4850
    %v4915 = vsub.f32 %v4787, %v4851
    %v4916 = vsub.f32 %v4788, %v4852
    %v4917 = vsub.f32 %v4789, %v4853
    %v4918 = vsub.f32 %v4790, %v4854
    %v4919 = vsub.f32 %v4791, %v4855
    %v4920 = vsub.f32 %v4792, %v4856
    %v4921 = vsub.f32 %v4793, %v4857
    %v4922 = vsub.f32 %v4794, %v4858
    %v4923 = vsub.f32 %v4795, %v4859
    %v4924 = vsub.f32 %v4796, %v4860
    %v4925 = vsub.f32 %v4797, %v4861
    %v4926 = vsub.f32 %v4798, %v4862
    %v4927 = vsub.f32 %v4799, %v4863
    %v4928 = vsub.f32 %v4800, %v4864
    %v4929 = vsub.f32 %v4801, %v4865
    %v4930 = vsub.f32 %v4802, %v4866
    %v4931 = vsub.f32 %v4803, %v4867
    %v4932 = vsub.f32 %v4804, %v4868
    %v4933 = vsub.f32 %v4805, %v4869
    %v4934 = vsub.f32 %v4806, %v4870
    %v4935 = vsub.f32 %v4807, %v4871
    %v4936 = vsub.f32 %v4808, %v4872
    %v4937 = vsub.f32 %v4809, %v4873
    %v4938 = vsub.f32 %v4810, %v4874
    %v4939 = vsub.f32 %v4811, %v4875
    %v4940 = vsub.f32 %v4812, %v4876
    %v4941 = vsub.f32 %v4813, %v4877
    %v4942 = vsub.f32 %v4814, %v4878
    %v4943 = vsub.f32 %v4815, %v4879
    %v4944 = vsub.f32 %v4816, %v4880
    %v4945 = vsub.f32 %v4817, %v4881
    %v4946 = vsub.f32 %v4818, %v4882
    %v4947 = vsub.f32 %v4819, %v4883
    %v4948 = vsub.f32 %v4820, %v4884
    %v4949 = vmax.f32 %v4885, 0.0
    %v4950 = vmax.f32 %v4886, 0.0
    %v4951 = vmax.f32 %v4887, 0.0
    %v4952 = vmax.f32 %v4888, 0.0
    %v4953 = vmax.f32 %v4889, 0.0
    %v4954 = vmax.f32 %v4890, 0.0
    %v4955 = vmax.f32 %v4891, 0.0
    %v4956 = vmax.f32 %v4892, 0.0
    %v4957 = vmax.f32 %v4893, 0.0
    %v4958 = vmax.f32 %v4894, 0.0
    %v4959 = vmax.f32 %v4895, 0.0
    %v4960 = vmax.f32 %v4896, 0.0
    %v4961 = vmax.f32 %v4897, 0.0
    %v4962 = vmax.f32 %v4898, 0.0
    %v4963 = vmax.f32 %v4899, 0.0
    %v4964 = vmax.f32 %v4900, 0.0
    %v4965 = vmax.f32 %v4901, 0.0
    %v4966 = vmax.f32 %v4902, 0.0
    %v4967 = vmax.f32 %v4903, 0.0
    %v4968 = vmax.f32 %v4904, 0.0
    %v4969 = vmax.f32 %v4905, 0.0
    %v4970 = vmax.f32 %v4906, 0.0
    %v4971 = vmax.f32 %v4907, 0.0
    %v4972 = vmax.f32 %v4908, 0.0
    %v4973 = vmax.f32 %v4909, 0.0
    %v4974 = vmax.f32 %v4910, 0.0
    %v4975 = vmax.f32 %v4911, 0.0
    %v4976 = vmax.f32 %v4912, 0.0
    %v4977 = vmax.f32 %v4913, 0.0
    %v4978 = vmax.f32 %v4914, 0.0
    %v4979 = vmax.f32 %v4915, 0.0
    %v4980 = vmax.f32 %v4916, 0.0
    %v4981 = vmax.f32 %v4917, 0.0
    %v4982 = vmax.f32 %v4918, 0.0
    %v4983 = vmax.f32 %v4919, 0.0
    %v4984 = vmax.f32 %v4920, 0.0
    %v4985 = vmax.f32 %v4921, 0.0
    %v4986 = vmax.f32 %v4922, 0.0
    %v4987 = vmax.f32 %v4923, 0.0
    %v4988 = vmax.f32 %v4924, 0.0
    %v4989 = vmax.f32 %v4925, 0.0
    %v4990 = vmax.f32 %v4926, 0.0
    %v4991 = vmax.f32 %v4927, 0.0
    %v4992 = vmax.f32 %v4928, 0.0
    %v4993 = vmax.f32 %v4929, 0.0
    %v4994 = vmax.f32 %v4930, 0.0
    %v4995 = vmax.f32 %v4931, 0.0
    %v4996 = vmax.f32 %v4932, 0.0
    %v4997 = vmax.f32 %v4933, 0.0
    %v4998 = vmax.f32 %v4934, 0.0
    %v4999 = vmax.f32 %v4935, 0.0
    %v5000 = vmax.f32 %v4936, 0.0
    %v5001 = vmax.f32 %v4937, 0.0
    %v5002 = vmax.f32 %v4938, 0.0
    %v5003 = vmax.f32 %v4939, 0.0
    %v5004 = vmax.f32 %v4940, 0.0
    %v5005 = vmax.f32 %v4941, 0.0
    %v5006 = vmax.f32 %v4942, 0.0
    %v5007 = vmax.f32 %v4943, 0.0
    %v5008 = vmax.f32 %v4944, 0.0
    %v5009 = vmax.f32 %v4945, 0.0
    %v5010 = vmax.f32 %v4946, 0.0
    %v5011 = vmax.f32 %v4947, 0.0
    %v5012 = vmax.f32 %v4948, 0.0
    %v5013 = vadd.f32 %v4949, 1e-05
    %v5014 = vadd.f32 %v4950, 1e-05
    %v5015 = vadd.f32 %v4951, 1e-05
    %v5016 = vadd.f32 %v4952, 1e-05
    %v5017 = vadd.f32 %v4953, 1e-05
    %v5018 = vadd.f32 %v4954, 1e-05
    %v5019 = vadd.f32 %v4955, 1e-05
    %v5020 = vadd.f32 %v4956, 1e-05
    %v5021 = vadd.f32 %v4957, 1e-05
    %v5022 = vadd.f32 %v4958, 1e-05
    %v5023 = vadd.f32 %v4959, 1e-05
    %v5024 = vadd.f32 %v4960, 1e-05
    %v5025 = vadd.f32 %v4961, 1e-05
    %v5026 = vadd.f32 %v4962, 1e-05
    %v5027 = vadd.f32 %v4963, 1e-05
    %v5028 = vadd.f32 %v4964, 1e-05
    %v5029 = vadd.f32 %v4965, 1e-05
    %v5030 = vadd.f32 %v4966, 1e-05
    %v5031 = vadd.f32 %v4967, 1e-05
    %v5032 = vadd.f32 %v4968, 1e-05
    %v5033 = vadd.f32 %v4969, 1e-05
    %v5034 = vadd.f32 %v4970, 1e-05
    %v5035 = vadd.f32 %v4971, 1e-05
    %v5036 = vadd.f32 %v4972, 1e-05
    %v5037 = vadd.f32 %v4973, 1e-05
    %v5038 = vadd.f32 %v4974, 1e-05
    %v5039 = vadd.f32 %v4975, 1e-05
    %v5040 = vadd.f32 %v4976, 1e-05
    %v5041 = vadd.f32 %v4977, 1e-05
    %v5042 = vadd.f32 %v4978, 1e-05
    %v5043 = vadd.f32 %v4979, 1e-05
    %v5044 = vadd.f32 %v4980, 1e-05
    %v5045 = vadd.f32 %v4981, 1e-05
    %v5046 = vadd.f32 %v4982, 1e-05
    %v5047 = vadd.f32 %v4983, 1e-05
    %v5048 = vadd.f32 %v4984, 1e-05
    %v5049 = vadd.f32 %v4985, 1e-05
    %v5050 = vadd.f32 %v4986, 1e-05
    %v5051 = vadd.f32 %v4987, 1e-05
    %v5052 = vadd.f32 %v4988, 1e-05
    %v5053 = vadd.f32 %v4989, 1e-05
    %v5054 = vadd.f32 %v4990, 1e-05
    %v5055 = vadd.f32 %v4991, 1e-05
    %v5056 = vadd.f32 %v4992, 1e-05
    %v5057 = vadd.f32 %v4993, 1e-05
    %v5058 = vadd.f32 %v4994, 1e-05
    %v5059 = vadd.f32 %v4995, 1e-05
    %v5060 = vadd.f32 %v4996, 1e-05
    %v5061 = vadd.f32 %v4997, 1e-05
    %v5062 = vadd.f32 %v4998, 1e-05
    %v5063 = vadd.f32 %v4999, 1e-05
    %v5064 = vadd.f32 %v5000, 1e-05
    %v5065 = vadd.f32 %v5001, 1e-05
    %v5066 = vadd.f32 %v5002, 1e-05
    %v5067 = vadd.f32 %v5003, 1e-05
    %v5068 = vadd.f32 %v5004, 1e-05
    %v5069 = vadd.f32 %v5005, 1e-05
    %v5070 = vadd.f32 %v5006, 1e-05
    %v5071 = vadd.f32 %v5007, 1e-05
    %v5072 = vadd.f32 %v5008, 1e-05
    %v5073 = vadd.f32 %v5009, 1e-05
    %v5074 = vadd.f32 %v5010, 1e-05
    %v5075 = vadd.f32 %v5011, 1e-05
    %v5076 = vadd.f32 %v5012, 1e-05
    %v5077 = vrsqrt.pop %v5013
    %v5078 = vrsqrt.pop %v5014
    %v5079 = vrsqrt.pop %v5015
    %v5080 = vrsqrt.pop %v5016
    %v5081 = vrsqrt.pop %v5017
    %v5082 = vrsqrt.pop %v5018
    %v5083 = vrsqrt.pop %v5019
    %v5084 = vrsqrt.pop %v5020
    %v5085 = vrsqrt.pop %v5021
    %v5086 = vrsqrt.pop %v5022
    %v5087 = vrsqrt.pop %v5023
    %v5088 = vrsqrt.pop %v5024
    %v5089 = vrsqrt.pop %v5025
    %v5090 = vrsqrt.pop %v5026
    %v5091 = vrsqrt.pop %v5027
    %v5092 = vrsqrt.pop %v5028
    %v5093 = vrsqrt.pop %v5029
    %v5094 = vrsqrt.pop %v5030
    %v5095 = vrsqrt.pop %v5031
    %v5096 = vrsqrt.pop %v5032
    %v5097 = vrsqrt.pop %v5033
    %v5098 = vrsqrt.pop %v5034
    %v5099 = vrsqrt.pop %v5035
    %v5100 = vrsqrt.pop %v5036
    %v5101 = vrsqrt.pop %v5037
    %v5102 = vrsqrt.pop %v5038
    %v5103 = vrsqrt.pop %v5039
    %v5104 = vrsqrt.pop %v5040
    %v5105 = vrsqrt.pop %v5041
    %v5106 = vrsqrt.pop %v5042
    %v5107 = vrsqrt.pop %v5043
    %v5108 = vrsqrt.pop %v5044
    %v5109 = vrsqrt.pop %v5045
    %v5110 = vrsqrt.pop %v5046
    %v5111 = vrsqrt.pop %v5047
    %v5112 = vrsqrt.pop %v5048
    %v5113 = vrsqrt.pop %v5049
    %v5114 = vrsqrt.pop %v5050
    %v5115 = vrsqrt.pop %v5051
    %v5116 = vrsqrt.pop %v5052
    %v5117 = vrsqrt.pop %v5053
    %v5118 = vrsqrt.pop %v5054
    %v5119 = vrsqrt.pop %v5055
    %v5120 = vrsqrt.pop %v5056
    %v5121 = vrsqrt.pop %v5057
    %v5122 = vrsqrt.pop %v5058
    %v5123 = vrsqrt.pop %v5059
    %v5124 = vrsqrt.pop %v5060
    %v5125 = vrsqrt.pop %v5061
    %v5126 = vrsqrt.pop %v5062
    %v5127 = vrsqrt.pop %v5063
    %v5128 = vrsqrt.pop %v5064
    %v5129 = vrsqrt.pop %v5065
    %v5130 = vrsqrt.pop %v5066
    %v5131 = vrsqrt.pop %v5067
    %v5132 = vrsqrt.pop %v5068
    %v5133 = vrsqrt.pop %v5069
    %v5134 = vrsqrt.pop %v5070
    %v5135 = vrsqrt.pop %v5071
    %v5136 = vrsqrt.pop %v5072
    %v5137 = vrsqrt.pop %v5073
    %v5138 = vrsqrt.pop %v5074
    %v5139 = vrsqrt.pop %v5075
    %v5140 = vrsqrt.pop %v5076
    %v5141 = vmul.f32 %v159, %v5077
    %v5142 = vmul.f32 %v160, %v5078
    %v5143 = vmul.f32 %v161, %v5079
    %v5144 = vmul.f32 %v162, %v5080
    %v5145 = vmul.f32 %v163, %v5081
    %v5146 = vmul.f32 %v164, %v5082
    %v5147 = vmul.f32 %v165, %v5083
    %v5148 = vmul.f32 %v166, %v5084
    %v5149 = vmul.f32 %v167, %v5085
    %v5150 = vmul.f32 %v168, %v5086
    %v5151 = vmul.f32 %v169, %v5087
    %v5152 = vmul.f32 %v170, %v5088
    %v5153 = vmul.f32 %v171, %v5089
    %v5154 = vmul.f32 %v172, %v5090
    %v5155 = vmul.f32 %v173, %v5091
    %v5156 = vmul.f32 %v174, %v5092
    %v5157 = vmul.f32 %v175, %v5093
    %v5158 = vmul.f32 %v176, %v5094
    %v5159 = vmul.f32 %v177, %v5095
    %v5160 = vmul.f32 %v178, %v5096
    %v5161 = vmul.f32 %v179, %v5097
    %v5162 = vmul.f32 %v180, %v5098
    %v5163 = vmul.f32 %v181, %v5099
    %v5164 = vmul.f32 %v182, %v5100
    %v5165 = vmul.f32 %v183, %v5101
    %v5166 = vmul.f32 %v184, %v5102
    %v5167 = vmul.f32 %v185, %v5103
    %v5168 = vmul.f32 %v186, %v5104
    %v5169 = vmul.f32 %v187, %v5105
    %v5170 = vmul.f32 %v188, %v5106
    %v5171 = vmul.f32 %v189, %v5107
    %v5172 = vmul.f32 %v190, %v5108
    %v5173 = vmul.f32 %v191, %v5109
    %v5174 = vmul.f32 %v192, %v5110
    %v5175 = vmul.f32 %v193, %v5111
    %v5176 = vmul.f32 %v194, %v5112
    %v5177 = vmul.f32 %v195, %v5113
    %v5178 = vmul.f32 %v196, %v5114
    %v5179 = vmul.f32 %v197, %v5115
    %v5180 = vmul.f32 %v198, %v5116
    %v5181 = vmul.f32 %v199, %v5117
    %v5182 = vmul.f32 %v200, %v5118
    %v5183 = vmul.f32 %v201, %v5119
    %v5184 = vmul.f32 %v202, %v5120
    %v5185 = vmul.f32 %v203, %v5121
    %v5186 = vmul.f32 %v204, %v5122
    %v5187 = vmul.f32 %v205, %v5123
    %v5188 = vmul.f32 %v206, %v5124
    %v5189 = vmul.f32 %v207, %v5125
    %v5190 = vmul.f32 %v208, %v5126
    %v5191 = vmul.f32 %v209, %v5127
    %v5192 = vmul.f32 %v210, %v5128
    %v5193 = vmul.f32 %v211, %v5129
    %v5194 = vmul.f32 %v212, %v5130
    %v5195 = vmul.f32 %v213, %v5131
    %v5196 = vmul.f32 %v214, %v5132
    %v5197 = vmul.f32 %v215, %v5133
    %v5198 = vmul.f32 %v216, %v5134
    %v5199 = vmul.f32 %v217, %v5135
    %v5200 = vmul.f32 %v218, %v5136
    %v5201 = vmul.f32 %v219, %v5137
    %v5202 = vmul.f32 %v220, %v5138
    %v5203 = vmul.f32 %v221, %v5139
    %v5204 = vmul.f32 %v222, %v5140
    %v5205 = vmul.f32 %v4693, %v5141
    %v5206 = vmul.f32 %v4694, %v5142
    %v5207 = vmul.f32 %v4695, %v5143
    %v5208 = vmul.f32 %v4696, %v5144
    %v5209 = vmul.f32 %v4697, %v5145
    %v5210 = vmul.f32 %v4698, %v5146
    %v5211 = vmul.f32 %v4699, %v5147
    %v5212 = vmul.f32 %v4700, %v5148
    %v5213 = vmul.f32 %v4701, %v5149
    %v5214 = vmul.f32 %v4702, %v5150
    %v5215 = vmul.f32 %v4703, %v5151
    %v5216 = vmul.f32 %v4704, %v5152
    %v5217 = vmul.f32 %v4705, %v5153
    %v5218 = vmul.f32 %v4706, %v5154
    %v5219 = vmul.f32 %v4707, %v5155
    %v5220 = vmul.f32 %v4708, %v5156
    %v5221 = vmul.f32 %v4709, %v5157
    %v5222 = vmul.f32 %v4710, %v5158
    %v5223 = vmul.f32 %v4711, %v5159
    %v5224 = vmul.f32 %v4712, %v5160
    %v5225 = vmul.f32 %v4713, %v5161
    %v5226 = vmul.f32 %v4714, %v5162
    %v5227 = vmul.f32 %v4715, %v5163
    %v5228 = vmul.f32 %v4716, %v5164
    %v5229 = vmul.f32 %v4717, %v5165
    %v5230 = vmul.f32 %v4718, %v5166
    %v5231 = vmul.f32 %v4719, %v5167
    %v5232 = vmul.f32 %v4720, %v5168
    %v5233 = vmul.f32 %v4721, %v5169
    %v5234 = vmul.f32 %v4722, %v5170
    %v5235 = vmul.f32 %v4723, %v5171
    %v5236 = vmul.f32 %v4724, %v5172
    %v5237 = vmul.f32 %v4725, %v5173
    %v5238 = vmul.f32 %v4726, %v5174
    %v5239 = vmul.f32 %v4727, %v5175
    %v5240 = vmul.f32 %v4728, %v5176
    %v5241 = vmul.f32 %v4729, %v5177
    %v5242 = vmul.f32 %v4730, %v5178
    %v5243 = vmul.f32 %v4731, %v5179
    %v5244 = vmul.f32 %v4732, %v5180
    %v5245 = vmul.f32 %v4733, %v5181
    %v5246 = vmul.f32 %v4734, %v5182
    %v5247 = vmul.f32 %v4735, %v5183
    %v5248 = vmul.f32 %v4736, %v5184
    %v5249 = vmul.f32 %v4737, %v5185
    %v5250 = vmul.f32 %v4738, %v5186
    %v5251 = vmul.f32 %v4739, %v5187
    %v5252 = vmul.f32 %v4740, %v5188
    %v5253 = vmul.f32 %v4741, %v5189
    %v5254 = vmul.f32 %v4742, %v5190
    %v5255 = vmul.f32 %v4743, %v5191
    %v5256 = vmul.f32 %v4744, %v5192
    %v5257 = vmul.f32 %v4745, %v5193
    %v5258 = vmul.f32 %v4746, %v5194
    %v5259 = vmul.f32 %v4747, %v5195
    %v5260 = vmul.f32 %v4748, %v5196
    %v5261 = vmul.f32 %v4749, %v5197
    %v5262 = vmul.f32 %v4750, %v5198
    %v5263 = vmul.f32 %v4751, %v5199
    %v5264 = vmul.f32 %v4752, %v5200
    %v5265 = vmul.f32 %v4753, %v5201
    %v5266 = vmul.f32 %v4754, %v5202
    %v5267 = vmul.f32 %v4755, %v5203
    %v5268 = vmul.f32 %v4756, %v5204
    %5333 = vrot.lane.b32.xlu0 %v5205, 1
    %v5334 = vpop.permute.xlu0 %5333
    %5335 = vrot.lane.b32.xlu0 %v5206, 1
    %v5336 = vpop.permute.xlu0 %5335
    %5337 = vrot.lane.b32.xlu0 %v5207, 1
    %v5338 = vpop.permute.xlu0 %5337
    %5339 = vrot.lane.b32.xlu0 %v5208, 1
    %v5340 = vpop.permute.xlu0 %5339
    %5341 = vrot.lane.b32.xlu0 %v5209, 1
    %v5342 = vpop.permute.xlu0 %5341
    %5343 = vrot.lane.b32.xlu0 %v5210, 1
    %v5344 = vpop.permute.xlu0 %5343
    %5345 = vrot.lane.b32.xlu0 %v5211, 1
    %v5346 = vpop.permute.xlu0 %5345
    %5347 = vrot.lane.b32.xlu0 %v5212, 1
    %v5348 = vpop.permute.xlu0 %5347
    %5349 = vrot.lane.b32.xlu0 %v5213, 1
    %v5350 = vpop.permute.xlu0 %5349
    %5351 = vrot.lane.b32.xlu0 %v5214, 1
    %v5352 = vpop.permute.xlu0 %5351
    %5353 = vrot.lane.b32.xlu0 %v5215, 1
    %v5354 = vpop.permute.xlu0 %5353
    %5355 = vrot.lane.b32.xlu0 %v5216, 1
    %v5356 = vpop.permute.xlu0 %5355
    %5357 = vrot.lane.b32.xlu0 %v5217, 1
    %v5358 = vpop.permute.xlu0 %5357
    %5359 = vrot.lane.b32.xlu0 %v5218, 1
    %v5360 = vpop.permute.xlu0 %5359
    %5361 = vrot.lane.b32.xlu0 %v5219, 1
    %v5362 = vpop.permute.xlu0 %5361
    %5363 = vrot.lane.b32.xlu0 %v5220, 1
    %v5364 = vpop.permute.xlu0 %5363
    %5365 = vrot.lane.b32.xlu0 %v5221, 1
    %v5366 = vpop.permute.xlu0 %5365
    %5367 = vrot.lane.b32.xlu0 %v5222, 1
    %v5368 = vpop.permute.xlu0 %5367
    %5369 = vrot.lane.b32.xlu0 %v5223, 1
    %v5370 = vpop.permute.xlu0 %5369
    %5371 = vrot.lane.b32.xlu0 %v5224, 1
    %v5372 = vpop.permute.xlu0 %5371
    %5373 = vrot.lane.b32.xlu0 %v5225, 1
    %v5374 = vpop.permute.xlu0 %5373
    %5375 = vrot.lane.b32.xlu0 %v5226, 1
    %v5376 = vpop.permute.xlu0 %5375
    %5377 = vrot.lane.b32.xlu0 %v5227, 1
    %v5378 = vpop.permute.xlu0 %5377
    %5379 = vrot.lane.b32.xlu0 %v5228, 1
    %v5380 = vpop.permute.xlu0 %5379
    %5381 = vrot.lane.b32.xlu0 %v5229, 1
    %v5382 = vpop.permute.xlu0 %5381
    %5383 = vrot.lane.b32.xlu0 %v5230, 1
    %v5384 = vpop.permute.xlu0 %5383
    %5385 = vrot.lane.b32.xlu0 %v5231, 1
    %v5386 = vpop.permute.xlu0 %5385
    %5387 = vrot.lane.b32.xlu0 %v5232, 1
    %v5388 = vpop.permute.xlu0 %5387
    %5389 = vrot.lane.b32.xlu0 %v5233, 1
    %v5390 = vpop.permute.xlu0 %5389
    %5391 = vrot.lane.b32.xlu0 %v5234, 1
    %v5392 = vpop.permute.xlu0 %5391
    %5393 = vrot.lane.b32.xlu0 %v5235, 1
    %v5394 = vpop.permute.xlu0 %5393
    %5395 = vrot.lane.b32.xlu0 %v5236, 1
    %v5396 = vpop.permute.xlu0 %5395
    %5397 = vrot.lane.b32.xlu0 %v5237, 1
    %v5398 = vpop.permute.xlu0 %5397
    %5399 = vrot.lane.b32.xlu0 %v5238, 1
    %v5400 = vpop.permute.xlu0 %5399
    %5401 = vrot.lane.b32.xlu0 %v5239, 1
    %v5402 = vpop.permute.xlu0 %5401
    %5403 = vrot.lane.b32.xlu0 %v5240, 1
    %v5404 = vpop.permute.xlu0 %5403
    %5405 = vrot.lane.b32.xlu0 %v5241, 1
    %v5406 = vpop.permute.xlu0 %5405
    %5407 = vrot.lane.b32.xlu0 %v5242, 1
    %v5408 = vpop.permute.xlu0 %5407
    %5409 = vrot.lane.b32.xlu0 %v5243, 1
    %v5410 = vpop.permute.xlu0 %5409
    %5411 = vrot.lane.b32.xlu0 %v5244, 1
    %v5412 = vpop.permute.xlu0 %5411
    %5413 = vrot.lane.b32.xlu0 %v5245, 1
    %v5414 = vpop.permute.xlu0 %5413
    %5415 = vrot.lane.b32.xlu0 %v5246, 1
    %v5416 = vpop.permute.xlu0 %5415
    %5417 = vrot.lane.b32.xlu0 %v5247, 1
    %v5418 = vpop.permute.xlu0 %5417
    %5419 = vrot.lane.b32.xlu0 %v5248, 1
    %v5420 = vpop.permute.xlu0 %5419
    %5421 = vrot.lane.b32.xlu0 %v5249, 1
    %v5422 = vpop.permute.xlu0 %5421
    %5423 = vrot.lane.b32.xlu0 %v5250, 1
    %v5424 = vpop.permute.xlu0 %5423
    %5425 = vrot.lane.b32.xlu0 %v5251, 1
    %v5426 = vpop.permute.xlu0 %5425
    %5427 = vrot.lane.b32.xlu0 %v5252, 1
    %v5428 = vpop.permute.xlu0 %5427
    %5429 = vrot.lane.b32.xlu0 %v5253, 1
    %v5430 = vpop.permute.xlu0 %5429
    %5431 = vrot.lane.b32.xlu0 %v5254, 1
    %v5432 = vpop.permute.xlu0 %5431
    %5433 = vrot.lane.b32.xlu0 %v5255, 1
    %v5434 = vpop.permute.xlu0 %5433
    %5435 = vrot.lane.b32.xlu0 %v5256, 1
    %v5436 = vpop.permute.xlu0 %5435
    %5437 = vrot.lane.b32.xlu0 %v5257, 1
    %v5438 = vpop.permute.xlu0 %5437
    %5439 = vrot.lane.b32.xlu0 %v5258, 1
    %v5440 = vpop.permute.xlu0 %5439
    %5441 = vrot.lane.b32.xlu0 %v5259, 1
    %v5442 = vpop.permute.xlu0 %5441
    %5443 = vrot.lane.b32.xlu0 %v5260, 1
    %v5444 = vpop.permute.xlu0 %5443
    %5445 = vrot.lane.b32.xlu0 %v5261, 1
    %v5446 = vpop.permute.xlu0 %5445
    %5447 = vrot.lane.b32.xlu0 %v5262, 1
    %v5448 = vpop.permute.xlu0 %5447
    %5449 = vrot.lane.b32.xlu0 %v5263, 1
    %v5450 = vpop.permute.xlu0 %5449
    %5451 = vrot.lane.b32.xlu0 %v5264, 1
    %v5452 = vpop.permute.xlu0 %5451
    %5453 = vrot.lane.b32.xlu0 %v5265, 1
    %v5454 = vpop.permute.xlu0 %5453
    %5455 = vrot.lane.b32.xlu0 %v5266, 1
    %v5456 = vpop.permute.xlu0 %5455
    %5457 = vrot.lane.b32.xlu0 %v5267, 1
    %v5458 = vpop.permute.xlu0 %5457
    %5459 = vrot.lane.b32.xlu0 %v5268, 1
    %v5460 = vpop.permute.xlu0 %5459
    %v5525 = vsub.f32 %v159, %v5334
    %v5526 = vsub.f32 %v160, %v5336
    %v5527 = vsub.f32 %v161, %v5338
    %v5528 = vsub.f32 %v162, %v5340
    %v5529 = vsub.f32 %v163, %v5342
    %v5530 = vsub.f32 %v164, %v5344
    %v5531 = vsub.f32 %v165, %v5346
    %v5532 = vsub.f32 %v166, %v5348
    %v5533 = vsub.f32 %v167, %v5350
    %v5534 = vsub.f32 %v168, %v5352
    %v5535 = vsub.f32 %v169, %v5354
    %v5536 = vsub.f32 %v170, %v5356
    %v5537 = vsub.f32 %v171, %v5358
    %v5538 = vsub.f32 %v172, %v5360
    %v5539 = vsub.f32 %v173, %v5362
    %v5540 = vsub.f32 %v174, %v5364
    %v5541 = vsub.f32 %v175, %v5366
    %v5542 = vsub.f32 %v176, %v5368
    %v5543 = vsub.f32 %v177, %v5370
    %v5544 = vsub.f32 %v178, %v5372
    %v5545 = vsub.f32 %v179, %v5374
    %v5546 = vsub.f32 %v180, %v5376
    %v5547 = vsub.f32 %v181, %v5378
    %v5548 = vsub.f32 %v182, %v5380
    %v5549 = vsub.f32 %v183, %v5382
    %v5550 = vsub.f32 %v184, %v5384
    %v5551 = vsub.f32 %v185, %v5386
    %v5552 = vsub.f32 %v186, %v5388
    %v5553 = vsub.f32 %v187, %v5390
    %v5554 = vsub.f32 %v188, %v5392
    %v5555 = vsub.f32 %v189, %v5394
    %v5556 = vsub.f32 %v190, %v5396
    %v5557 = vsub.f32 %v191, %v5398
    %v5558 = vsub.f32 %v192, %v5400
    %v5559 = vsub.f32 %v193, %v5402
    %v5560 = vsub.f32 %v194, %v5404
    %v5561 = vsub.f32 %v195, %v5406
    %v5562 = vsub.f32 %v196, %v5408
    %v5563 = vsub.f32 %v197, %v5410
    %v5564 = vsub.f32 %v198, %v5412
    %v5565 = vsub.f32 %v199, %v5414
    %v5566 = vsub.f32 %v200, %v5416
    %v5567 = vsub.f32 %v201, %v5418
    %v5568 = vsub.f32 %v202, %v5420
    %v5569 = vsub.f32 %v203, %v5422
    %v5570 = vsub.f32 %v204, %v5424
    %v5571 = vsub.f32 %v205, %v5426
    %v5572 = vsub.f32 %v206, %v5428
    %v5573 = vsub.f32 %v207, %v5430
    %v5574 = vsub.f32 %v208, %v5432
    %v5575 = vsub.f32 %v209, %v5434
    %v5576 = vsub.f32 %v210, %v5436
    %v5577 = vsub.f32 %v211, %v5438
    %v5578 = vsub.f32 %v212, %v5440
    %v5579 = vsub.f32 %v213, %v5442
    %v5580 = vsub.f32 %v214, %v5444
    %v5581 = vsub.f32 %v215, %v5446
    %v5582 = vsub.f32 %v216, %v5448
    %v5583 = vsub.f32 %v217, %v5450
    %v5584 = vsub.f32 %v218, %v5452
    %v5585 = vsub.f32 %v219, %v5454
    %v5586 = vsub.f32 %v220, %v5456
    %v5587 = vsub.f32 %v221, %v5458
    %v5588 = vsub.f32 %v222, %v5460
    %5590 = vset.pattern.permute.xlu0 0
    %5591 = vperm.xlu0 %5590, %v5141
    %v5592 = vpop.permute.xlu0 %5591
    %5595 = vset.pattern.permute.xlu0 0
    %5596 = vperm.xlu0 %5595, %v5142
    %v5597 = vpop.permute.xlu0 %5596
    %5600 = vset.pattern.permute.xlu0 0
    %5601 = vperm.xlu0 %5600, %v5143
    %v5602 = vpop.permute.xlu0 %5601
    %5605 = vset.pattern.permute.xlu0 0
    %5606 = vperm.xlu0 %5605, %v5144
    %v5607 = vpop.permute.xlu0 %5606
    %5610 = vset.pattern.permute.xlu0 0
    %5611 = vperm.xlu0 %5610, %v5145
    %v5612 = vpop.permute.xlu0 %5611
    %5615 = vset.pattern.permute.xlu0 0
    %5616 = vperm.xlu0 %5615, %v5146
    %v5617 = vpop.permute.xlu0 %5616
    %5620 = vset.pattern.permute.xlu0 0
    %5621 = vperm.xlu0 %5620, %v5147
    %v5622 = vpop.permute.xlu0 %5621
    %5625 = vset.pattern.permute.xlu0 0
    %5626 = vperm.xlu0 %5625, %v5148
    %v5627 = vpop.permute.xlu0 %5626
    %5630 = vset.pattern.permute.xlu0 0
    %5631 = vperm.xlu0 %5630, %v5149
    %v5632 = vpop.permute.xlu0 %5631
    %5635 = vset.pattern.permute.xlu0 0
    %5636 = vperm.xlu0 %5635, %v5150
    %v5637 = vpop.permute.xlu0 %5636
    %5640 = vset.pattern.permute.xlu0 0
    %5641 = vperm.xlu0 %5640, %v5151
    %v5642 = vpop.permute.xlu0 %5641
    %5645 = vset.pattern.permute.xlu0 0
    %5646 = vperm.xlu0 %5645, %v5152
    %v5647 = vpop.permute.xlu0 %5646
    %5650 = vset.pattern.permute.xlu0 0
    %5651 = vperm.xlu0 %5650, %v5153
    %v5652 = vpop.permute.xlu0 %5651
    %5655 = vset.pattern.permute.xlu0 0
    %5656 = vperm.xlu0 %5655, %v5154
    %v5657 = vpop.permute.xlu0 %5656
    %5660 = vset.pattern.permute.xlu0 0
    %5661 = vperm.xlu0 %5660, %v5155
    %v5662 = vpop.permute.xlu0 %5661
    %5665 = vset.pattern.permute.xlu0 0
    %5666 = vperm.xlu0 %5665, %v5156
    %v5667 = vpop.permute.xlu0 %5666
    %5670 = vset.pattern.permute.xlu0 0
    %5671 = vperm.xlu0 %5670, %v5157
    %v5672 = vpop.permute.xlu0 %5671
    %5675 = vset.pattern.permute.xlu0 0
    %5676 = vperm.xlu0 %5675, %v5158
    %v5677 = vpop.permute.xlu0 %5676
    %5680 = vset.pattern.permute.xlu0 0
    %5681 = vperm.xlu0 %5680, %v5159
    %v5682 = vpop.permute.xlu0 %5681
    %5685 = vset.pattern.permute.xlu0 0
    %5686 = vperm.xlu0 %5685, %v5160
    %v5687 = vpop.permute.xlu0 %5686
    %5690 = vset.pattern.permute.xlu0 0
    %5691 = vperm.xlu0 %5690, %v5161
    %v5692 = vpop.permute.xlu0 %5691
    %5695 = vset.pattern.permute.xlu0 0
    %5696 = vperm.xlu0 %5695, %v5162
    %v5697 = vpop.permute.xlu0 %5696
    %5700 = vset.pattern.permute.xlu0 0
    %5701 = vperm.xlu0 %5700, %v5163
    %v5702 = vpop.permute.xlu0 %5701
    %5705 = vset.pattern.permute.xlu0 0
    %5706 = vperm.xlu0 %5705, %v5164
    %v5707 = vpop.permute.xlu0 %5706
    %5710 = vset.pattern.permute.xlu0 0
    %5711 = vperm.xlu0 %5710, %v5165
    %v5712 = vpop.permute.xlu0 %5711
    %5715 = vset.pattern.permute.xlu0 0
    %5716 = vperm.xlu0 %5715, %v5166
    %v5717 = vpop.permute.xlu0 %5716
    %5720 = vset.pattern.permute.xlu0 0
    %5721 = vperm.xlu0 %5720, %v5167
    %v5722 = vpop.permute.xlu0 %5721
    %5725 = vset.pattern.permute.xlu0 0
    %5726 = vperm.xlu0 %5725, %v5168
    %v5727 = vpop.permute.xlu0 %5726
    %5730 = vset.pattern.permute.xlu0 0
    %5731 = vperm.xlu0 %5730, %v5169
    %v5732 = vpop.permute.xlu0 %5731
    %5735 = vset.pattern.permute.xlu0 0
    %5736 = vperm.xlu0 %5735, %v5170
    %v5737 = vpop.permute.xlu0 %5736
    %5740 = vset.pattern.permute.xlu0 0
    %5741 = vperm.xlu0 %5740, %v5171
    %v5742 = vpop.permute.xlu0 %5741
    %5745 = vset.pattern.permute.xlu0 0
    %5746 = vperm.xlu0 %5745, %v5172
    %v5747 = vpop.permute.xlu0 %5746
    %5750 = vset.pattern.permute.xlu0 0
    %5751 = vperm.xlu0 %5750, %v5173
    %v5752 = vpop.permute.xlu0 %5751
    %5755 = vset.pattern.permute.xlu0 0
    %5756 = vperm.xlu0 %5755, %v5174
    %v5757 = vpop.permute.xlu0 %5756
    %5760 = vset.pattern.permute.xlu0 0
    %5761 = vperm.xlu0 %5760, %v5175
    %v5762 = vpop.permute.xlu0 %5761
    %5765 = vset.pattern.permute.xlu0 0
    %5766 = vperm.xlu0 %5765, %v5176
    %v5767 = vpop.permute.xlu0 %5766
    %5770 = vset.pattern.permute.xlu0 0
    %5771 = vperm.xlu0 %5770, %v5177
    %v5772 = vpop.permute.xlu0 %5771
    %5775 = vset.pattern.permute.xlu0 0
    %5776 = vperm.xlu0 %5775, %v5178
    %v5777 = vpop.permute.xlu0 %5776
    %5780 = vset.pattern.permute.xlu0 0
    %5781 = vperm.xlu0 %5780, %v5179
    %v5782 = vpop.permute.xlu0 %5781
    %5785 = vset.pattern.permute.xlu0 0
    %5786 = vperm.xlu0 %5785, %v5180
    %v5787 = vpop.permute.xlu0 %5786
    %5790 = vset.pattern.permute.xlu0 0
    %5791 = vperm.xlu0 %5790, %v5181
    %v5792 = vpop.permute.xlu0 %5791
    %5795 = vset.pattern.permute.xlu0 0
    %5796 = vperm.xlu0 %5795, %v5182
    %v5797 = vpop.permute.xlu0 %5796
    %5800 = vset.pattern.permute.xlu0 0
    %5801 = vperm.xlu0 %5800, %v5183
    %v5802 = vpop.permute.xlu0 %5801
    %5805 = vset.pattern.permute.xlu0 0
    %5806 = vperm.xlu0 %5805, %v5184
    %v5807 = vpop.permute.xlu0 %5806
    %5810 = vset.pattern.permute.xlu0 0
    %5811 = vperm.xlu0 %5810, %v5185
    %v5812 = vpop.permute.xlu0 %5811
    %5815 = vset.pattern.permute.xlu0 0
    %5816 = vperm.xlu0 %5815, %v5186
    %v5817 = vpop.permute.xlu0 %5816
    %5820 = vset.pattern.permute.xlu0 0
    %5821 = vperm.xlu0 %5820, %v5187
    %v5822 = vpop.permute.xlu0 %5821
    %5825 = vset.pattern.permute.xlu0 0
    %5826 = vperm.xlu0 %5825, %v5188
    %v5827 = vpop.permute.xlu0 %5826
    %5830 = vset.pattern.permute.xlu0 0
    %5831 = vperm.xlu0 %5830, %v5189
    %v5832 = vpop.permute.xlu0 %5831
    %5835 = vset.pattern.permute.xlu0 0
    %5836 = vperm.xlu0 %5835, %v5190
    %v5837 = vpop.permute.xlu0 %5836
    %5840 = vset.pattern.permute.xlu0 0
    %5841 = vperm.xlu0 %5840, %v5191
    %v5842 = vpop.permute.xlu0 %5841
    %5845 = vset.pattern.permute.xlu0 0
    %5846 = vperm.xlu0 %5845, %v5192
    %v5847 = vpop.permute.xlu0 %5846
    %5850 = vset.pattern.permute.xlu0 0
    %5851 = vperm.xlu0 %5850, %v5193
    %v5852 = vpop.permute.xlu0 %5851
    %5855 = vset.pattern.permute.xlu0 0
    %5856 = vperm.xlu0 %5855, %v5194
    %v5857 = vpop.permute.xlu0 %5856
    %5860 = vset.pattern.permute.xlu0 0
    %5861 = vperm.xlu0 %5860, %v5195
    %v5862 = vpop.permute.xlu0 %5861
    %5865 = vset.pattern.permute.xlu0 0
    %5866 = vperm.xlu0 %5865, %v5196
    %v5867 = vpop.permute.xlu0 %5866
    %5870 = vset.pattern.permute.xlu0 0
    %5871 = vperm.xlu0 %5870, %v5197
    %v5872 = vpop.permute.xlu0 %5871
    %5875 = vset.pattern.permute.xlu0 0
    %5876 = vperm.xlu0 %5875, %v5198
    %v5877 = vpop.permute.xlu0 %5876
    %5880 = vset.pattern.permute.xlu0 0
    %5881 = vperm.xlu0 %5880, %v5199
    %v5882 = vpop.permute.xlu0 %5881
    %5885 = vset.pattern.permute.xlu0 0
    %5886 = vperm.xlu0 %5885, %v5200
    %v5887 = vpop.permute.xlu0 %5886
    %5890 = vset.pattern.permute.xlu0 0
    %5891 = vperm.xlu0 %5890, %v5201
    %v5892 = vpop.permute.xlu0 %5891
    %5895 = vset.pattern.permute.xlu0 0
    %5896 = vperm.xlu0 %5895, %v5202
    %v5897 = vpop.permute.xlu0 %5896
    %5900 = vset.pattern.permute.xlu0 0
    %5901 = vperm.xlu0 %5900, %v5203
    %v5902 = vpop.permute.xlu0 %5901
    %5905 = vset.pattern.permute.xlu0 0
    %5906 = vperm.xlu0 %5905, %v5204
    %v5907 = vpop.permute.xlu0 %5906
    %v5909 = vmul.f32 %v1475, %v5592
    %v5910 = vmul.f32 %v1477, %v5592
    %v5911 = vmul.f32 %v1924, %v5592
    %v5912 = vmul.f32 %v1926, %v5592
    %v5913 = vmul.f32 %v2373, %v5592
    %v5914 = vmul.f32 %v2375, %v5592
    %v5915 = vmul.f32 %v2822, %v5592
    %v5916 = vmul.f32 %v1481, %v5597
    %v5917 = vmul.f32 %v1483, %v5597
    %v5918 = vmul.f32 %v1930, %v5597
    %v5919 = vmul.f32 %v1932, %v5597
    %v5920 = vmul.f32 %v2379, %v5597
    %v5921 = vmul.f32 %v2381, %v5597
    %v5922 = vmul.f32 %v2827, %v5597
    %v5923 = vmul.f32 %v1487, %v5602
    %v5924 = vmul.f32 %v1489, %v5602
    %v5925 = vmul.f32 %v1936, %v5602
    %v5926 = vmul.f32 %v1938, %v5602
    %v5927 = vmul.f32 %v2385, %v5602
    %v5928 = vmul.f32 %v2387, %v5602
    %v5929 = vmul.f32 %v2832, %v5602
    %v5930 = vmul.f32 %v1493, %v5607
    %v5931 = vmul.f32 %v1495, %v5607
    %v5932 = vmul.f32 %v1942, %v5607
    %v5933 = vmul.f32 %v1944, %v5607
    %v5934 = vmul.f32 %v2391, %v5607
    %v5935 = vmul.f32 %v2393, %v5607
    %v5936 = vmul.f32 %v2837, %v5607
    %v5937 = vmul.f32 %v1499, %v5612
    %v5938 = vmul.f32 %v1501, %v5612
    %v5939 = vmul.f32 %v1948, %v5612
    %v5940 = vmul.f32 %v1950, %v5612
    %v5941 = vmul.f32 %v2397, %v5612
    %v5942 = vmul.f32 %v2399, %v5612
    %v5943 = vmul.f32 %v2842, %v5612
    %v5944 = vmul.f32 %v1505, %v5617
    %v5945 = vmul.f32 %v1507, %v5617
    %v5946 = vmul.f32 %v1954, %v5617
    %v5947 = vmul.f32 %v1956, %v5617
    %v5948 = vmul.f32 %v2403, %v5617
    %v5949 = vmul.f32 %v2405, %v5617
    %v5950 = vmul.f32 %v2847, %v5617
    %v5951 = vmul.f32 %v1511, %v5622
    %v5952 = vmul.f32 %v1513, %v5622
    %v5953 = vmul.f32 %v1960, %v5622
    %v5954 = vmul.f32 %v1962, %v5622
    %v5955 = vmul.f32 %v2409, %v5622
    %v5956 = vmul.f32 %v2411, %v5622
    %v5957 = vmul.f32 %v2852, %v5622
    %v5958 = vmul.f32 %v1517, %v5627
    %v5959 = vmul.f32 %v1519, %v5627
    %v5960 = vmul.f32 %v1966, %v5627
    %v5961 = vmul.f32 %v1968, %v5627
    %v5962 = vmul.f32 %v2415, %v5627
    %v5963 = vmul.f32 %v2417, %v5627
    %v5964 = vmul.f32 %v2857, %v5627
    %v5965 = vmul.f32 %v1523, %v5632
    %v5966 = vmul.f32 %v1525, %v5632
    %v5967 = vmul.f32 %v1972, %v5632
    %v5968 = vmul.f32 %v1974, %v5632
    %v5969 = vmul.f32 %v2421, %v5632
    %v5970 = vmul.f32 %v2423, %v5632
    %v5971 = vmul.f32 %v2862, %v5632
    %v5972 = vmul.f32 %v1529, %v5637
    %v5973 = vmul.f32 %v1531, %v5637
    %v5974 = vmul.f32 %v1978, %v5637
    %v5975 = vmul.f32 %v1980, %v5637
    %v5976 = vmul.f32 %v2427, %v5637
    %v5977 = vmul.f32 %v2429, %v5637
    %v5978 = vmul.f32 %v2867, %v5637
    %v5979 = vmul.f32 %v1535, %v5642
    %v5980 = vmul.f32 %v1537, %v5642
    %v5981 = vmul.f32 %v1984, %v5642
    %v5982 = vmul.f32 %v1986, %v5642
    %v5983 = vmul.f32 %v2433, %v5642
    %v5984 = vmul.f32 %v2435, %v5642
    %v5985 = vmul.f32 %v2872, %v5642
    %v5986 = vmul.f32 %v1541, %v5647
    %v5987 = vmul.f32 %v1543, %v5647
    %v5988 = vmul.f32 %v1990, %v5647
    %v5989 = vmul.f32 %v1992, %v5647
    %v5990 = vmul.f32 %v2439, %v5647
    %v5991 = vmul.f32 %v2441, %v5647
    %v5992 = vmul.f32 %v2877, %v5647
    %v5993 = vmul.f32 %v1547, %v5652
    %v5994 = vmul.f32 %v1549, %v5652
    %v5995 = vmul.f32 %v1996, %v5652
    %v5996 = vmul.f32 %v1998, %v5652
    %v5997 = vmul.f32 %v2445, %v5652
    %v5998 = vmul.f32 %v2447, %v5652
    %v5999 = vmul.f32 %v2882, %v5652
    %v6000 = vmul.f32 %v1553, %v5657
    %v6001 = vmul.f32 %v1555, %v5657
    %v6002 = vmul.f32 %v2002, %v5657
    %v6003 = vmul.f32 %v2004, %v5657
    %v6004 = vmul.f32 %v2451, %v5657
    %v6005 = vmul.f32 %v2453, %v5657
    %v6006 = vmul.f32 %v2887, %v5657
    %v6007 = vmul.f32 %v1559, %v5662
    %v6008 = vmul.f32 %v1561, %v5662
    %v6009 = vmul.f32 %v2008, %v5662
    %v6010 = vmul.f32 %v2010, %v5662
    %v6011 = vmul.f32 %v2457, %v5662
    %v6012 = vmul.f32 %v2459, %v5662
    %v6013 = vmul.f32 %v2892, %v5662
    %v6014 = vmul.f32 %v1565, %v5667
    %v6015 = vmul.f32 %v1567, %v5667
    %v6016 = vmul.f32 %v2014, %v5667
    %v6017 = vmul.f32 %v2016, %v5667
    %v6018 = vmul.f32 %v2463, %v5667
    %v6019 = vmul.f32 %v2465, %v5667
    %v6020 = vmul.f32 %v2897, %v5667
    %v6021 = vmul.f32 %v1571, %v5672
    %v6022 = vmul.f32 %v1573, %v5672
    %v6023 = vmul.f32 %v2020, %v5672
    %v6024 = vmul.f32 %v2022, %v5672
    %v6025 = vmul.f32 %v2469, %v5672
    %v6026 = vmul.f32 %v2471, %v5672
    %v6027 = vmul.f32 %v2902, %v5672
    %v6028 = vmul.f32 %v1577, %v5677
    %v6029 = vmul.f32 %v1579, %v5677
    %v6030 = vmul.f32 %v2026, %v5677
    %v6031 = vmul.f32 %v2028, %v5677
    %v6032 = vmul.f32 %v2475, %v5677
    %v6033 = vmul.f32 %v2477, %v5677
    %v6034 = vmul.f32 %v2907, %v5677
    %v6035 = vmul.f32 %v1583, %v5682
    %v6036 = vmul.f32 %v1585, %v5682
    %v6037 = vmul.f32 %v2032, %v5682
    %v6038 = vmul.f32 %v2034, %v5682
    %v6039 = vmul.f32 %v2481, %v5682
    %v6040 = vmul.f32 %v2483, %v5682
    %v6041 = vmul.f32 %v2912, %v5682
    %v6042 = vmul.f32 %v1589, %v5687
    %v6043 = vmul.f32 %v1591, %v5687
    %v6044 = vmul.f32 %v2038, %v5687
    %v6045 = vmul.f32 %v2040, %v5687
    %v6046 = vmul.f32 %v2487, %v5687
    %v6047 = vmul.f32 %v2489, %v5687
    %v6048 = vmul.f32 %v2917, %v5687
    %v6049 = vmul.f32 %v1595, %v5692
    %v6050 = vmul.f32 %v1597, %v5692
    %v6051 = vmul.f32 %v2044, %v5692
    %v6052 = vmul.f32 %v2046, %v5692
    %v6053 = vmul.f32 %v2493, %v5692
    %v6054 = vmul.f32 %v2495, %v5692
    %v6055 = vmul.f32 %v2922, %v5692
    %v6056 = vmul.f32 %v1601, %v5697
    %v6057 = vmul.f32 %v1603, %v5697
    %v6058 = vmul.f32 %v2050, %v5697
    %v6059 = vmul.f32 %v2052, %v5697
    %v6060 = vmul.f32 %v2499, %v5697
    %v6061 = vmul.f32 %v2501, %v5697
    %v6062 = vmul.f32 %v2927, %v5697
    %v6063 = vmul.f32 %v1607, %v5702
    %v6064 = vmul.f32 %v1609, %v5702
    %v6065 = vmul.f32 %v2056, %v5702
    %v6066 = vmul.f32 %v2058, %v5702
    %v6067 = vmul.f32 %v2505, %v5702
    %v6068 = vmul.f32 %v2507, %v5702
    %v6069 = vmul.f32 %v2932, %v5702
    %v6070 = vmul.f32 %v1613, %v5707
    %v6071 = vmul.f32 %v1615, %v5707
    %v6072 = vmul.f32 %v2062, %v5707
    %v6073 = vmul.f32 %v2064, %v5707
    %v6074 = vmul.f32 %v2511, %v5707
    %v6075 = vmul.f32 %v2513, %v5707
    %v6076 = vmul.f32 %v2937, %v5707
    %v6077 = vmul.f32 %v1619, %v5712
    %v6078 = vmul.f32 %v1621, %v5712
    %v6079 = vmul.f32 %v2068, %v5712
    %v6080 = vmul.f32 %v2070, %v5712
    %v6081 = vmul.f32 %v2517, %v5712
    %v6082 = vmul.f32 %v2519, %v5712
    %v6083 = vmul.f32 %v2942, %v5712
    %v6084 = vmul.f32 %v1625, %v5717
    %v6085 = vmul.f32 %v1627, %v5717
    %v6086 = vmul.f32 %v2074, %v5717
    %v6087 = vmul.f32 %v2076, %v5717
    %v6088 = vmul.f32 %v2523, %v5717
    %v6089 = vmul.f32 %v2525, %v5717
    %v6090 = vmul.f32 %v2947, %v5717
    %v6091 = vmul.f32 %v1631, %v5722
    %v6092 = vmul.f32 %v1633, %v5722
    %v6093 = vmul.f32 %v2080, %v5722
    %v6094 = vmul.f32 %v2082, %v5722
    %v6095 = vmul.f32 %v2529, %v5722
    %v6096 = vmul.f32 %v2531, %v5722
    %v6097 = vmul.f32 %v2952, %v5722
    %v6098 = vmul.f32 %v1637, %v5727
    %v6099 = vmul.f32 %v1639, %v5727
    %v6100 = vmul.f32 %v2086, %v5727
    %v6101 = vmul.f32 %v2088, %v5727
    %v6102 = vmul.f32 %v2535, %v5727
    %v6103 = vmul.f32 %v2537, %v5727
    %v6104 = vmul.f32 %v2957, %v5727
    %v6105 = vmul.f32 %v1643, %v5732
    %v6106 = vmul.f32 %v1645, %v5732
    %v6107 = vmul.f32 %v2092, %v5732
    %v6108 = vmul.f32 %v2094, %v5732
    %v6109 = vmul.f32 %v2541, %v5732
    %v6110 = vmul.f32 %v2543, %v5732
    %v6111 = vmul.f32 %v2962, %v5732
    %v6112 = vmul.f32 %v1649, %v5737
    %v6113 = vmul.f32 %v1651, %v5737
    %v6114 = vmul.f32 %v2098, %v5737
    %v6115 = vmul.f32 %v2100, %v5737
    %v6116 = vmul.f32 %v2547, %v5737
    %v6117 = vmul.f32 %v2549, %v5737
    %v6118 = vmul.f32 %v2967, %v5737
    %v6119 = vmul.f32 %v1655, %v5742
    %v6120 = vmul.f32 %v1657, %v5742
    %v6121 = vmul.f32 %v2104, %v5742
    %v6122 = vmul.f32 %v2106, %v5742
    %v6123 = vmul.f32 %v2553, %v5742
    %v6124 = vmul.f32 %v2555, %v5742
    %v6125 = vmul.f32 %v2972, %v5742
    %v6126 = vmul.f32 %v1661, %v5747
    %v6127 = vmul.f32 %v1663, %v5747
    %v6128 = vmul.f32 %v2110, %v5747
    %v6129 = vmul.f32 %v2112, %v5747
    %v6130 = vmul.f32 %v2559, %v5747
    %v6131 = vmul.f32 %v2561, %v5747
    %v6132 = vmul.f32 %v2977, %v5747
    %v6133 = vmul.f32 %v1667, %v5752
    %v6134 = vmul.f32 %v1669, %v5752
    %v6135 = vmul.f32 %v2116, %v5752
    %v6136 = vmul.f32 %v2118, %v5752
    %v6137 = vmul.f32 %v2565, %v5752
    %v6138 = vmul.f32 %v2567, %v5752
    %v6139 = vmul.f32 %v2982, %v5752
    %v6140 = vmul.f32 %v1673, %v5757
    %v6141 = vmul.f32 %v1675, %v5757
    %v6142 = vmul.f32 %v2122, %v5757
    %v6143 = vmul.f32 %v2124, %v5757
    %v6144 = vmul.f32 %v2571, %v5757
    %v6145 = vmul.f32 %v2573, %v5757
    %v6146 = vmul.f32 %v2987, %v5757
    %v6147 = vmul.f32 %v1679, %v5762
    %v6148 = vmul.f32 %v1681, %v5762
    %v6149 = vmul.f32 %v2128, %v5762
    %v6150 = vmul.f32 %v2130, %v5762
    %v6151 = vmul.f32 %v2577, %v5762
    %v6152 = vmul.f32 %v2579, %v5762
    %v6153 = vmul.f32 %v2992, %v5762
    %v6154 = vmul.f32 %v1685, %v5767
    %v6155 = vmul.f32 %v1687, %v5767
    %v6156 = vmul.f32 %v2134, %v5767
    %v6157 = vmul.f32 %v2136, %v5767
    %v6158 = vmul.f32 %v2583, %v5767
    %v6159 = vmul.f32 %v2585, %v5767
    %v6160 = vmul.f32 %v2997, %v5767
    %v6161 = vmul.f32 %v1691, %v5772
    %v6162 = vmul.f32 %v1693, %v5772
    %v6163 = vmul.f32 %v2140, %v5772
    %v6164 = vmul.f32 %v2142, %v5772
    %v6165 = vmul.f32 %v2589, %v5772
    %v6166 = vmul.f32 %v2591, %v5772
    %v6167 = vmul.f32 %v3002, %v5772
    %v6168 = vmul.f32 %v1697, %v5777
    %v6169 = vmul.f32 %v1699, %v5777
    %v6170 = vmul.f32 %v2146, %v5777
    %v6171 = vmul.f32 %v2148, %v5777
    %v6172 = vmul.f32 %v2595, %v5777
    %v6173 = vmul.f32 %v2597, %v5777
    %v6174 = vmul.f32 %v3007, %v5777
    %v6175 = vmul.f32 %v1703, %v5782
    %v6176 = vmul.f32 %v1705, %v5782
    %v6177 = vmul.f32 %v2152, %v5782
    %v6178 = vmul.f32 %v2154, %v5782
    %v6179 = vmul.f32 %v2601, %v5782
    %v6180 = vmul.f32 %v2603, %v5782
    %v6181 = vmul.f32 %v3012, %v5782
    %v6182 = vmul.f32 %v1709, %v5787
    %v6183 = vmul.f32 %v1711, %v5787
    %v6184 = vmul.f32 %v2158, %v5787
    %v6185 = vmul.f32 %v2160, %v5787
    %v6186 = vmul.f32 %v2607, %v5787
    %v6187 = vmul.f32 %v2609, %v5787
    %v6188 = vmul.f32 %v3017, %v5787
    %v6189 = vmul.f32 %v1715, %v5792
    %v6190 = vmul.f32 %v1717, %v5792
    %v6191 = vmul.f32 %v2164, %v5792
    %v6192 = vmul.f32 %v2166, %v5792
    %v6193 = vmul.f32 %v2613, %v5792
    %v6194 = vmul.f32 %v2615, %v5792
    %v6195 = vmul.f32 %v3022, %v5792
    %v6196 = vmul.f32 %v1721, %v5797
    %v6197 = vmul.f32 %v1723, %v5797
    %v6198 = vmul.f32 %v2170, %v5797
    %v6199 = vmul.f32 %v2172, %v5797
    %v6200 = vmul.f32 %v2619, %v5797
    %v6201 = vmul.f32 %v2621, %v5797
    %v6202 = vmul.f32 %v3027, %v5797
    %v6203 = vmul.f32 %v1727, %v5802
    %v6204 = vmul.f32 %v1729, %v5802
    %v6205 = vmul.f32 %v2176, %v5802
    %v6206 = vmul.f32 %v2178, %v5802
    %v6207 = vmul.f32 %v2625, %v5802
    %v6208 = vmul.f32 %v2627, %v5802
    %v6209 = vmul.f32 %v3032, %v5802
    %v6210 = vmul.f32 %v1733, %v5807
    %v6211 = vmul.f32 %v1735, %v5807
    %v6212 = vmul.f32 %v2182, %v5807
    %v6213 = vmul.f32 %v2184, %v5807
    %v6214 = vmul.f32 %v2631, %v5807
    %v6215 = vmul.f32 %v2633, %v5807
    %v6216 = vmul.f32 %v3037, %v5807
    %v6217 = vmul.f32 %v1739, %v5812
    %v6218 = vmul.f32 %v1741, %v5812
    %v6219 = vmul.f32 %v2188, %v5812
    %v6220 = vmul.f32 %v2190, %v5812
    %v6221 = vmul.f32 %v2637, %v5812
    %v6222 = vmul.f32 %v2639, %v5812
    %v6223 = vmul.f32 %v3042, %v5812
    %v6224 = vmul.f32 %v1745, %v5817
    %v6225 = vmul.f32 %v1747, %v5817
    %v6226 = vmul.f32 %v2194, %v5817
    %v6227 = vmul.f32 %v2196, %v5817
    %v6228 = vmul.f32 %v2643, %v5817
    %v6229 = vmul.f32 %v2645, %v5817
    %v6230 = vmul.f32 %v3047, %v5817
    %v6231 = vmul.f32 %v1751, %v5822
    %v6232 = vmul.f32 %v1753, %v5822
    %v6233 = vmul.f32 %v2200, %v5822
    %v6234 = vmul.f32 %v2202, %v5822
    %v6235 = vmul.f32 %v2649, %v5822
    %v6236 = vmul.f32 %v2651, %v5822
    %v6237 = vmul.f32 %v3052, %v5822
    %v6238 = vmul.f32 %v1757, %v5827
    %v6239 = vmul.f32 %v1759, %v5827
    %v6240 = vmul.f32 %v2206, %v5827
    %v6241 = vmul.f32 %v2208, %v5827
    %v6242 = vmul.f32 %v2655, %v5827
    %v6243 = vmul.f32 %v2657, %v5827
    %v6244 = vmul.f32 %v3057, %v5827
    %v6245 = vmul.f32 %v1763, %v5832
    %v6246 = vmul.f32 %v1765, %v5832
    %v6247 = vmul.f32 %v2212, %v5832
    %v6248 = vmul.f32 %v2214, %v5832
    %v6249 = vmul.f32 %v2661, %v5832
    %v6250 = vmul.f32 %v2663, %v5832
    %v6251 = vmul.f32 %v3062, %v5832
    %v6252 = vmul.f32 %v1769, %v5837
    %v6253 = vmul.f32 %v1771, %v5837
    %v6254 = vmul.f32 %v2218, %v5837
    %v6255 = vmul.f32 %v2220, %v5837
    %v6256 = vmul.f32 %v2667, %v5837
    %v6257 = vmul.f32 %v2669, %v5837
    %v6258 = vmul.f32 %v3067, %v5837
    %v6259 = vmul.f32 %v1775, %v5842
    %v6260 = vmul.f32 %v1777, %v5842
    %v6261 = vmul.f32 %v2224, %v5842
    %v6262 = vmul.f32 %v2226, %v5842
    %v6263 = vmul.f32 %v2673, %v5842
    %v6264 = vmul.f32 %v2675, %v5842
    %v6265 = vmul.f32 %v3072, %v5842
    %v6266 = vmul.f32 %v1781, %v5847
    %v6267 = vmul.f32 %v1783, %v5847
    %v6268 = vmul.f32 %v2230, %v5847
    %v6269 = vmul.f32 %v2232, %v5847
    %v6270 = vmul.f32 %v2679, %v5847
    %v6271 = vmul.f32 %v2681, %v5847
    %v6272 = vmul.f32 %v3077, %v5847
    %v6273 = vmul.f32 %v1787, %v5852
    %v6274 = vmul.f32 %v1789, %v5852
    %v6275 = vmul.f32 %v2236, %v5852
    %v6276 = vmul.f32 %v2238, %v5852
    %v6277 = vmul.f32 %v2685, %v5852
    %v6278 = vmul.f32 %v2687, %v5852
    %v6279 = vmul.f32 %v3082, %v5852
    %v6280 = vmul.f32 %v1793, %v5857
    %v6281 = vmul.f32 %v1795, %v5857
    %v6282 = vmul.f32 %v2242, %v5857
    %v6283 = vmul.f32 %v2244, %v5857
    %v6284 = vmul.f32 %v2691, %v5857
    %v6285 = vmul.f32 %v2693, %v5857
    %v6286 = vmul.f32 %v3087, %v5857
    %v6287 = vmul.f32 %v1799, %v5862
    %v6288 = vmul.f32 %v1801, %v5862
    %v6289 = vmul.f32 %v2248, %v5862
    %v6290 = vmul.f32 %v2250, %v5862
    %v6291 = vmul.f32 %v2697, %v5862
    %v6292 = vmul.f32 %v2699, %v5862
    %v6293 = vmul.f32 %v3092, %v5862
    %v6294 = vmul.f32 %v1805, %v5867
    %v6295 = vmul.f32 %v1807, %v5867
    %v6296 = vmul.f32 %v2254, %v5867
    %v6297 = vmul.f32 %v2256, %v5867
    %v6298 = vmul.f32 %v2703, %v5867
    %v6299 = vmul.f32 %v2705, %v5867
    %v6300 = vmul.f32 %v3097, %v5867
    %v6301 = vmul.f32 %v1811, %v5872
    %v6302 = vmul.f32 %v1813, %v5872
    %v6303 = vmul.f32 %v2260, %v5872
    %v6304 = vmul.f32 %v2262, %v5872
    %v6305 = vmul.f32 %v2709, %v5872
    %v6306 = vmul.f32 %v2711, %v5872
    %v6307 = vmul.f32 %v3102, %v5872
    %v6308 = vmul.f32 %v1817, %v5877
    %v6309 = vmul.f32 %v1819, %v5877
    %v6310 = vmul.f32 %v2266, %v5877
    %v6311 = vmul.f32 %v2268, %v5877
    %v6312 = vmul.f32 %v2715, %v5877
    %v6313 = vmul.f32 %v2717, %v5877
    %v6314 = vmul.f32 %v3107, %v5877
    %v6315 = vmul.f32 %v1823, %v5882
    %v6316 = vmul.f32 %v1825, %v5882
    %v6317 = vmul.f32 %v2272, %v5882
    %v6318 = vmul.f32 %v2274, %v5882
    %v6319 = vmul.f32 %v2721, %v5882
    %v6320 = vmul.f32 %v2723, %v5882
    %v6321 = vmul.f32 %v3112, %v5882
    %v6322 = vmul.f32 %v1829, %v5887
    %v6323 = vmul.f32 %v1831, %v5887
    %v6324 = vmul.f32 %v2278, %v5887
    %v6325 = vmul.f32 %v2280, %v5887
    %v6326 = vmul.f32 %v2727, %v5887
    %v6327 = vmul.f32 %v2729, %v5887
    %v6328 = vmul.f32 %v3117, %v5887
    %v6329 = vmul.f32 %v1835, %v5892
    %v6330 = vmul.f32 %v1837, %v5892
    %v6331 = vmul.f32 %v2284, %v5892
    %v6332 = vmul.f32 %v2286, %v5892
    %v6333 = vmul.f32 %v2733, %v5892
    %v6334 = vmul.f32 %v2735, %v5892
    %v6335 = vmul.f32 %v3122, %v5892
    %v6336 = vmul.f32 %v1841, %v5897
    %v6337 = vmul.f32 %v1843, %v5897
    %v6338 = vmul.f32 %v2290, %v5897
    %v6339 = vmul.f32 %v2292, %v5897
    %v6340 = vmul.f32 %v2739, %v5897
    %v6341 = vmul.f32 %v2741, %v5897
    %v6342 = vmul.f32 %v3127, %v5897
    %v6343 = vmul.f32 %v1847, %v5902
    %v6344 = vmul.f32 %v1849, %v5902
    %v6345 = vmul.f32 %v2296, %v5902
    %v6346 = vmul.f32 %v2298, %v5902
    %v6347 = vmul.f32 %v2745, %v5902
    %v6348 = vmul.f32 %v2747, %v5902
    %v6349 = vmul.f32 %v3132, %v5902
    %v6350 = vmul.f32 %v1853, %v5907
    %v6351 = vmul.f32 %v1855, %v5907
    %v6352 = vmul.f32 %v2302, %v5907
    %v6353 = vmul.f32 %v2304, %v5907
    %v6354 = vmul.f32 %v2751, %v5907
    %v6355 = vmul.f32 %v2753, %v5907
    %v6356 = vmul.f32 %v3137, %v5907
    %6358 = vset.pattern.permute.xlu0 1
    %6359 = vperm.xlu0 %6358, %v5525
    %v6360 = vpop.permute.xlu0 %6359
    %6363 = vset.pattern.permute.xlu0 1
    %6364 = vperm.xlu0 %6363, %v5526
    %v6365 = vpop.permute.xlu0 %6364
    %6368 = vset.pattern.permute.xlu0 1
    %6369 = vperm.xlu0 %6368, %v5527
    %v6370 = vpop.permute.xlu0 %6369
    %6373 = vset.pattern.permute.xlu0 1
    %6374 = vperm.xlu0 %6373, %v5528
    %v6375 = vpop.permute.xlu0 %6374
    %6378 = vset.pattern.permute.xlu0 1
    %6379 = vperm.xlu0 %6378, %v5529
    %v6380 = vpop.permute.xlu0 %6379
    %6383 = vset.pattern.permute.xlu0 1
    %6384 = vperm.xlu0 %6383, %v5530
    %v6385 = vpop.permute.xlu0 %6384
    %6388 = vset.pattern.permute.xlu0 1
    %6389 = vperm.xlu0 %6388, %v5531
    %v6390 = vpop.permute.xlu0 %6389
    %6393 = vset.pattern.permute.xlu0 1
    %6394 = vperm.xlu0 %6393, %v5532
    %v6395 = vpop.permute.xlu0 %6394
    %6398 = vset.pattern.permute.xlu0 1
    %6399 = vperm.xlu0 %6398, %v5533
    %v6400 = vpop.permute.xlu0 %6399
    %6403 = vset.pattern.permute.xlu0 1
    %6404 = vperm.xlu0 %6403, %v5534
    %v6405 = vpop.permute.xlu0 %6404
    %6408 = vset.pattern.permute.xlu0 1
    %6409 = vperm.xlu0 %6408, %v5535
    %v6410 = vpop.permute.xlu0 %6409
    %6413 = vset.pattern.permute.xlu0 1
    %6414 = vperm.xlu0 %6413, %v5536
    %v6415 = vpop.permute.xlu0 %6414
    %6418 = vset.pattern.permute.xlu0 1
    %6419 = vperm.xlu0 %6418, %v5537
    %v6420 = vpop.permute.xlu0 %6419
    %6423 = vset.pattern.permute.xlu0 1
    %6424 = vperm.xlu0 %6423, %v5538
    %v6425 = vpop.permute.xlu0 %6424
    %6428 = vset.pattern.permute.xlu0 1
    %6429 = vperm.xlu0 %6428, %v5539
    %v6430 = vpop.permute.xlu0 %6429
    %6433 = vset.pattern.permute.xlu0 1
    %6434 = vperm.xlu0 %6433, %v5540
    %v6435 = vpop.permute.xlu0 %6434
    %6438 = vset.pattern.permute.xlu0 1
    %6439 = vperm.xlu0 %6438, %v5541
    %v6440 = vpop.permute.xlu0 %6439
    %6443 = vset.pattern.permute.xlu0 1
    %6444 = vperm.xlu0 %6443, %v5542
    %v6445 = vpop.permute.xlu0 %6444
    %6448 = vset.pattern.permute.xlu0 1
    %6449 = vperm.xlu0 %6448, %v5543
    %v6450 = vpop.permute.xlu0 %6449
    %6453 = vset.pattern.permute.xlu0 1
    %6454 = vperm.xlu0 %6453, %v5544
    %v6455 = vpop.permute.xlu0 %6454
    %6458 = vset.pattern.permute.xlu0 1
    %6459 = vperm.xlu0 %6458, %v5545
    %v6460 = vpop.permute.xlu0 %6459
    %6463 = vset.pattern.permute.xlu0 1
    %6464 = vperm.xlu0 %6463, %v5546
    %v6465 = vpop.permute.xlu0 %6464
    %6468 = vset.pattern.permute.xlu0 1
    %6469 = vperm.xlu0 %6468, %v5547
    %v6470 = vpop.permute.xlu0 %6469
    %6473 = vset.pattern.permute.xlu0 1
    %6474 = vperm.xlu0 %6473, %v5548
    %v6475 = vpop.permute.xlu0 %6474
    %6478 = vset.pattern.permute.xlu0 1
    %6479 = vperm.xlu0 %6478, %v5549
    %v6480 = vpop.permute.xlu0 %6479
    %6483 = vset.pattern.permute.xlu0 1
    %6484 = vperm.xlu0 %6483, %v5550
    %v6485 = vpop.permute.xlu0 %6484
    %6488 = vset.pattern.permute.xlu0 1
    %6489 = vperm.xlu0 %6488, %v5551
    %v6490 = vpop.permute.xlu0 %6489
    %6493 = vset.pattern.permute.xlu0 1
    %6494 = vperm.xlu0 %6493, %v5552
    %v6495 = vpop.permute.xlu0 %6494
    %6498 = vset.pattern.permute.xlu0 1
    %6499 = vperm.xlu0 %6498, %v5553
    %v6500 = vpop.permute.xlu0 %6499
    %6503 = vset.pattern.permute.xlu0 1
    %6504 = vperm.xlu0 %6503, %v5554
    %v6505 = vpop.permute.xlu0 %6504
    %6508 = vset.pattern.permute.xlu0 1
    %6509 = vperm.xlu0 %6508, %v5555
    %v6510 = vpop.permute.xlu0 %6509
    %6513 = vset.pattern.permute.xlu0 1
    %6514 = vperm.xlu0 %6513, %v5556
    %v6515 = vpop.permute.xlu0 %6514
    %6518 = vset.pattern.permute.xlu0 1
    %6519 = vperm.xlu0 %6518, %v5557
    %v6520 = vpop.permute.xlu0 %6519
    %6523 = vset.pattern.permute.xlu0 1
    %6524 = vperm.xlu0 %6523, %v5558
    %v6525 = vpop.permute.xlu0 %6524
    %6528 = vset.pattern.permute.xlu0 1
    %6529 = vperm.xlu0 %6528, %v5559
    %v6530 = vpop.permute.xlu0 %6529
    %6533 = vset.pattern.permute.xlu0 1
    %6534 = vperm.xlu0 %6533, %v5560
    %v6535 = vpop.permute.xlu0 %6534
    %6538 = vset.pattern.permute.xlu0 1
    %6539 = vperm.xlu0 %6538, %v5561
    %v6540 = vpop.permute.xlu0 %6539
    %6543 = vset.pattern.permute.xlu0 1
    %6544 = vperm.xlu0 %6543, %v5562
    %v6545 = vpop.permute.xlu0 %6544
    %6548 = vset.pattern.permute.xlu0 1
    %6549 = vperm.xlu0 %6548, %v5563
    %v6550 = vpop.permute.xlu0 %6549
    %6553 = vset.pattern.permute.xlu0 1
    %6554 = vperm.xlu0 %6553, %v5564
    %v6555 = vpop.permute.xlu0 %6554
    %6558 = vset.pattern.permute.xlu0 1
    %6559 = vperm.xlu0 %6558, %v5565
    %v6560 = vpop.permute.xlu0 %6559
    %6563 = vset.pattern.permute.xlu0 1
    %6564 = vperm.xlu0 %6563, %v5566
    %v6565 = vpop.permute.xlu0 %6564
    %6568 = vset.pattern.permute.xlu0 1
    %6569 = vperm.xlu0 %6568, %v5567
    %v6570 = vpop.permute.xlu0 %6569
    %6573 = vset.pattern.permute.xlu0 1
    %6574 = vperm.xlu0 %6573, %v5568
    %v6575 = vpop.permute.xlu0 %6574
    %6578 = vset.pattern.permute.xlu0 1
    %6579 = vperm.xlu0 %6578, %v5569
    %v6580 = vpop.permute.xlu0 %6579
    %6583 = vset.pattern.permute.xlu0 1
    %6584 = vperm.xlu0 %6583, %v5570
    %v6585 = vpop.permute.xlu0 %6584
    %6588 = vset.pattern.permute.xlu0 1
    %6589 = vperm.xlu0 %6588, %v5571
    %v6590 = vpop.permute.xlu0 %6589
    %6593 = vset.pattern.permute.xlu0 1
    %6594 = vperm.xlu0 %6593, %v5572
    %v6595 = vpop.permute.xlu0 %6594
    %6598 = vset.pattern.permute.xlu0 1
    %6599 = vperm.xlu0 %6598, %v5573
    %v6600 = vpop.permute.xlu0 %6599
    %6603 = vset.pattern.permute.xlu0 1
    %6604 = vperm.xlu0 %6603, %v5574
    %v6605 = vpop.permute.xlu0 %6604
    %6608 = vset.pattern.permute.xlu0 1
    %6609 = vperm.xlu0 %6608, %v5575
    %v6610 = vpop.permute.xlu0 %6609
    %6613 = vset.pattern.permute.xlu0 1
    %6614 = vperm.xlu0 %6613, %v5576
    %v6615 = vpop.permute.xlu0 %6614
    %6618 = vset.pattern.permute.xlu0 1
    %6619 = vperm.xlu0 %6618, %v5577
    %v6620 = vpop.permute.xlu0 %6619
    %6623 = vset.pattern.permute.xlu0 1
    %6624 = vperm.xlu0 %6623, %v5578
    %v6625 = vpop.permute.xlu0 %6624
    %6628 = vset.pattern.permute.xlu0 1
    %6629 = vperm.xlu0 %6628, %v5579
    %v6630 = vpop.permute.xlu0 %6629
    %6633 = vset.pattern.permute.xlu0 1
    %6634 = vperm.xlu0 %6633, %v5580
    %v6635 = vpop.permute.xlu0 %6634
    %6638 = vset.pattern.permute.xlu0 1
    %6639 = vperm.xlu0 %6638, %v5581
    %v6640 = vpop.permute.xlu0 %6639
    %6643 = vset.pattern.permute.xlu0 1
    %6644 = vperm.xlu0 %6643, %v5582
    %v6645 = vpop.permute.xlu0 %6644
    %6648 = vset.pattern.permute.xlu0 1
    %6649 = vperm.xlu0 %6648, %v5583
    %v6650 = vpop.permute.xlu0 %6649
    %6653 = vset.pattern.permute.xlu0 1
    %6654 = vperm.xlu0 %6653, %v5584
    %v6655 = vpop.permute.xlu0 %6654
    %6658 = vset.pattern.permute.xlu0 1
    %6659 = vperm.xlu0 %6658, %v5585
    %v6660 = vpop.permute.xlu0 %6659
    %6663 = vset.pattern.permute.xlu0 1
    %6664 = vperm.xlu0 %6663, %v5586
    %v6665 = vpop.permute.xlu0 %6664
    %6668 = vset.pattern.permute.xlu0 1
    %6669 = vperm.xlu0 %6668, %v5587
    %v6670 = vpop.permute.xlu0 %6669
    %6673 = vset.pattern.permute.xlu0 1
    %6674 = vperm.xlu0 %6673, %v5588
    %v6675 = vpop.permute.xlu0 %6674
    %v6677 = vadd.f32 %v5909, %v6360
    %v6678 = vadd.f32 %v5910, %v6360
    %v6679 = vadd.f32 %v5911, %v6360
    %v6680 = vadd.f32 %v5912, %v6360
    %v6681 = vadd.f32 %v5913, %v6360
    %v6682 = vadd.f32 %v5914, %v6360
    %v6683 = vadd.f32 %v5915, %v6360
    %v6684 = vadd.f32 %v5916, %v6365
    %v6685 = vadd.f32 %v5917, %v6365
    %v6686 = vadd.f32 %v5918, %v6365
    %v6687 = vadd.f32 %v5919, %v6365
    %v6688 = vadd.f32 %v5920, %v6365
    %v6689 = vadd.f32 %v5921, %v6365
    %v6690 = vadd.f32 %v5922, %v6365
    %v6691 = vadd.f32 %v5923, %v6370
    %v6692 = vadd.f32 %v5924, %v6370
    %v6693 = vadd.f32 %v5925, %v6370
    %v6694 = vadd.f32 %v5926, %v6370
    %v6695 = vadd.f32 %v5927, %v6370
    %v6696 = vadd.f32 %v5928, %v6370
    %v6697 = vadd.f32 %v5929, %v6370
    %v6698 = vadd.f32 %v5930, %v6375
    %v6699 = vadd.f32 %v5931, %v6375
    %v6700 = vadd.f32 %v5932, %v6375
    %v6701 = vadd.f32 %v5933, %v6375
    %v6702 = vadd.f32 %v5934, %v6375
    %v6703 = vadd.f32 %v5935, %v6375
    %v6704 = vadd.f32 %v5936, %v6375
    %v6705 = vadd.f32 %v5937, %v6380
    %v6706 = vadd.f32 %v5938, %v6380
    %v6707 = vadd.f32 %v5939, %v6380
    %v6708 = vadd.f32 %v5940, %v6380
    %v6709 = vadd.f32 %v5941, %v6380
    %v6710 = vadd.f32 %v5942, %v6380
    %v6711 = vadd.f32 %v5943, %v6380
    %v6712 = vadd.f32 %v5944, %v6385
    %v6713 = vadd.f32 %v5945, %v6385
    %v6714 = vadd.f32 %v5946, %v6385
    %v6715 = vadd.f32 %v5947, %v6385
    %v6716 = vadd.f32 %v5948, %v6385
    %v6717 = vadd.f32 %v5949, %v6385
    %v6718 = vadd.f32 %v5950, %v6385
    %v6719 = vadd.f32 %v5951, %v6390
    %v6720 = vadd.f32 %v5952, %v6390
    %v6721 = vadd.f32 %v5953, %v6390
    %v6722 = vadd.f32 %v5954, %v6390
    %v6723 = vadd.f32 %v5955, %v6390
    %v6724 = vadd.f32 %v5956, %v6390
    %v6725 = vadd.f32 %v5957, %v6390
    %v6726 = vadd.f32 %v5958, %v6395
    %v6727 = vadd.f32 %v5959, %v6395
    %v6728 = vadd.f32 %v5960, %v6395
    %v6729 = vadd.f32 %v5961, %v6395
    %v6730 = vadd.f32 %v5962, %v6395
    %v6731 = vadd.f32 %v5963, %v6395
    %v6732 = vadd.f32 %v5964, %v6395
    %v6733 = vadd.f32 %v5965, %v6400
    %v6734 = vadd.f32 %v5966, %v6400
    %v6735 = vadd.f32 %v5967, %v6400
    %v6736 = vadd.f32 %v5968, %v6400
    %v6737 = vadd.f32 %v5969, %v6400
    %v6738 = vadd.f32 %v5970, %v6400
    %v6739 = vadd.f32 %v5971, %v6400
    %v6740 = vadd.f32 %v5972, %v6405
    %v6741 = vadd.f32 %v5973, %v6405
    %v6742 = vadd.f32 %v5974, %v6405
    %v6743 = vadd.f32 %v5975, %v6405
    %v6744 = vadd.f32 %v5976, %v6405
    %v6745 = vadd.f32 %v5977, %v6405
    %v6746 = vadd.f32 %v5978, %v6405
    %v6747 = vadd.f32 %v5979, %v6410
    %v6748 = vadd.f32 %v5980, %v6410
    %v6749 = vadd.f32 %v5981, %v6410
    %v6750 = vadd.f32 %v5982, %v6410
    %v6751 = vadd.f32 %v5983, %v6410
    %v6752 = vadd.f32 %v5984, %v6410
    %v6753 = vadd.f32 %v5985, %v6410
    %v6754 = vadd.f32 %v5986, %v6415
    %v6755 = vadd.f32 %v5987, %v6415
    %v6756 = vadd.f32 %v5988, %v6415
    %v6757 = vadd.f32 %v5989, %v6415
    %v6758 = vadd.f32 %v5990, %v6415
    %v6759 = vadd.f32 %v5991, %v6415
    %v6760 = vadd.f32 %v5992, %v6415
    %v6761 = vadd.f32 %v5993, %v6420
    %v6762 = vadd.f32 %v5994, %v6420
    %v6763 = vadd.f32 %v5995, %v6420
    %v6764 = vadd.f32 %v5996, %v6420
    %v6765 = vadd.f32 %v5997, %v6420
    %v6766 = vadd.f32 %v5998, %v6420
    %v6767 = vadd.f32 %v5999, %v6420
    %v6768 = vadd.f32 %v6000, %v6425
    %v6769 = vadd.f32 %v6001, %v6425
    %v6770 = vadd.f32 %v6002, %v6425
    %v6771 = vadd.f32 %v6003, %v6425
    %v6772 = vadd.f32 %v6004, %v6425
    %v6773 = vadd.f32 %v6005, %v6425
    %v6774 = vadd.f32 %v6006, %v6425
    %v6775 = vadd.f32 %v6007, %v6430
    %v6776 = vadd.f32 %v6008, %v6430
    %v6777 = vadd.f32 %v6009, %v6430
    %v6778 = vadd.f32 %v6010, %v6430
    %v6779 = vadd.f32 %v6011, %v6430
    %v6780 = vadd.f32 %v6012, %v6430
    %v6781 = vadd.f32 %v6013, %v6430
    %v6782 = vadd.f32 %v6014, %v6435
    %v6783 = vadd.f32 %v6015, %v6435
    %v6784 = vadd.f32 %v6016, %v6435
    %v6785 = vadd.f32 %v6017, %v6435
    %v6786 = vadd.f32 %v6018, %v6435
    %v6787 = vadd.f32 %v6019, %v6435
    %v6788 = vadd.f32 %v6020, %v6435
    %v6789 = vadd.f32 %v6021, %v6440
    %v6790 = vadd.f32 %v6022, %v6440
    %v6791 = vadd.f32 %v6023, %v6440
    %v6792 = vadd.f32 %v6024, %v6440
    %v6793 = vadd.f32 %v6025, %v6440
    %v6794 = vadd.f32 %v6026, %v6440
    %v6795 = vadd.f32 %v6027, %v6440
    %v6796 = vadd.f32 %v6028, %v6445
    %v6797 = vadd.f32 %v6029, %v6445
    %v6798 = vadd.f32 %v6030, %v6445
    %v6799 = vadd.f32 %v6031, %v6445
    %v6800 = vadd.f32 %v6032, %v6445
    %v6801 = vadd.f32 %v6033, %v6445
    %v6802 = vadd.f32 %v6034, %v6445
    %v6803 = vadd.f32 %v6035, %v6450
    %v6804 = vadd.f32 %v6036, %v6450
    %v6805 = vadd.f32 %v6037, %v6450
    %v6806 = vadd.f32 %v6038, %v6450
    %v6807 = vadd.f32 %v6039, %v6450
    %v6808 = vadd.f32 %v6040, %v6450
    %v6809 = vadd.f32 %v6041, %v6450
    %v6810 = vadd.f32 %v6042, %v6455
    %v6811 = vadd.f32 %v6043, %v6455
    %v6812 = vadd.f32 %v6044, %v6455
    %v6813 = vadd.f32 %v6045, %v6455
    %v6814 = vadd.f32 %v6046, %v6455
    %v6815 = vadd.f32 %v6047, %v6455
    %v6816 = vadd.f32 %v6048, %v6455
    %v6817 = vadd.f32 %v6049, %v6460
    %v6818 = vadd.f32 %v6050, %v6460
    %v6819 = vadd.f32 %v6051, %v6460
    %v6820 = vadd.f32 %v6052, %v6460
    %v6821 = vadd.f32 %v6053, %v6460
    %v6822 = vadd.f32 %v6054, %v6460
    %v6823 = vadd.f32 %v6055, %v6460
    %v6824 = vadd.f32 %v6056, %v6465
    %v6825 = vadd.f32 %v6057, %v6465
    %v6826 = vadd.f32 %v6058, %v6465
    %v6827 = vadd.f32 %v6059, %v6465
    %v6828 = vadd.f32 %v6060, %v6465
    %v6829 = vadd.f32 %v6061, %v6465
    %v6830 = vadd.f32 %v6062, %v6465
    %v6831 = vadd.f32 %v6063, %v6470
    %v6832 = vadd.f32 %v6064, %v6470
    %v6833 = vadd.f32 %v6065, %v6470
    %v6834 = vadd.f32 %v6066, %v6470
    %v6835 = vadd.f32 %v6067, %v6470
    %v6836 = vadd.f32 %v6068, %v6470
    %v6837 = vadd.f32 %v6069, %v6470
    %v6838 = vadd.f32 %v6070, %v6475
    %v6839 = vadd.f32 %v6071, %v6475
    %v6840 = vadd.f32 %v6072, %v6475
    %v6841 = vadd.f32 %v6073, %v6475
    %v6842 = vadd.f32 %v6074, %v6475
    %v6843 = vadd.f32 %v6075, %v6475
    %v6844 = vadd.f32 %v6076, %v6475
    %v6845 = vadd.f32 %v6077, %v6480
    %v6846 = vadd.f32 %v6078, %v6480
    %v6847 = vadd.f32 %v6079, %v6480
    %v6848 = vadd.f32 %v6080, %v6480
    %v6849 = vadd.f32 %v6081, %v6480
    %v6850 = vadd.f32 %v6082, %v6480
    %v6851 = vadd.f32 %v6083, %v6480
    %v6852 = vadd.f32 %v6084, %v6485
    %v6853 = vadd.f32 %v6085, %v6485
    %v6854 = vadd.f32 %v6086, %v6485
    %v6855 = vadd.f32 %v6087, %v6485
    %v6856 = vadd.f32 %v6088, %v6485
    %v6857 = vadd.f32 %v6089, %v6485
    %v6858 = vadd.f32 %v6090, %v6485
    %v6859 = vadd.f32 %v6091, %v6490
    %v6860 = vadd.f32 %v6092, %v6490
    %v6861 = vadd.f32 %v6093, %v6490
    %v6862 = vadd.f32 %v6094, %v6490
    %v6863 = vadd.f32 %v6095, %v6490
    %v6864 = vadd.f32 %v6096, %v6490
    %v6865 = vadd.f32 %v6097, %v6490
    %v6866 = vadd.f32 %v6098, %v6495
    %v6867 = vadd.f32 %v6099, %v6495
    %v6868 = vadd.f32 %v6100, %v6495
    %v6869 = vadd.f32 %v6101, %v6495
    %v6870 = vadd.f32 %v6102, %v6495
    %v6871 = vadd.f32 %v6103, %v6495
    %v6872 = vadd.f32 %v6104, %v6495
    %v6873 = vadd.f32 %v6105, %v6500
    %v6874 = vadd.f32 %v6106, %v6500
    %v6875 = vadd.f32 %v6107, %v6500
    %v6876 = vadd.f32 %v6108, %v6500
    %v6877 = vadd.f32 %v6109, %v6500
    %v6878 = vadd.f32 %v6110, %v6500
    %v6879 = vadd.f32 %v6111, %v6500
    %v6880 = vadd.f32 %v6112, %v6505
    %v6881 = vadd.f32 %v6113, %v6505
    %v6882 = vadd.f32 %v6114, %v6505
    %v6883 = vadd.f32 %v6115, %v6505
    %v6884 = vadd.f32 %v6116, %v6505
    %v6885 = vadd.f32 %v6117, %v6505
    %v6886 = vadd.f32 %v6118, %v6505
    %v6887 = vadd.f32 %v6119, %v6510
    %v6888 = vadd.f32 %v6120, %v6510
    %v6889 = vadd.f32 %v6121, %v6510
    %v6890 = vadd.f32 %v6122, %v6510
    %v6891 = vadd.f32 %v6123, %v6510
    %v6892 = vadd.f32 %v6124, %v6510
    %v6893 = vadd.f32 %v6125, %v6510
    %v6894 = vadd.f32 %v6126, %v6515
    %v6895 = vadd.f32 %v6127, %v6515
    %v6896 = vadd.f32 %v6128, %v6515
    %v6897 = vadd.f32 %v6129, %v6515
    %v6898 = vadd.f32 %v6130, %v6515
    %v6899 = vadd.f32 %v6131, %v6515
    %v6900 = vadd.f32 %v6132, %v6515
    %v6901 = vadd.f32 %v6133, %v6520
    %v6902 = vadd.f32 %v6134, %v6520
    %v6903 = vadd.f32 %v6135, %v6520
    %v6904 = vadd.f32 %v6136, %v6520
    %v6905 = vadd.f32 %v6137, %v6520
    %v6906 = vadd.f32 %v6138, %v6520
    %v6907 = vadd.f32 %v6139, %v6520
    %v6908 = vadd.f32 %v6140, %v6525
    %v6909 = vadd.f32 %v6141, %v6525
    %v6910 = vadd.f32 %v6142, %v6525
    %v6911 = vadd.f32 %v6143, %v6525
    %v6912 = vadd.f32 %v6144, %v6525
    %v6913 = vadd.f32 %v6145, %v6525
    %v6914 = vadd.f32 %v6146, %v6525
    %v6915 = vadd.f32 %v6147, %v6530
    %v6916 = vadd.f32 %v6148, %v6530
    %v6917 = vadd.f32 %v6149, %v6530
    %v6918 = vadd.f32 %v6150, %v6530
    %v6919 = vadd.f32 %v6151, %v6530
    %v6920 = vadd.f32 %v6152, %v6530
    %v6921 = vadd.f32 %v6153, %v6530
    %v6922 = vadd.f32 %v6154, %v6535
    %v6923 = vadd.f32 %v6155, %v6535
    %v6924 = vadd.f32 %v6156, %v6535
    %v6925 = vadd.f32 %v6157, %v6535
    %v6926 = vadd.f32 %v6158, %v6535
    %v6927 = vadd.f32 %v6159, %v6535
    %v6928 = vadd.f32 %v6160, %v6535
    %v6929 = vadd.f32 %v6161, %v6540
    %v6930 = vadd.f32 %v6162, %v6540
    %v6931 = vadd.f32 %v6163, %v6540
    %v6932 = vadd.f32 %v6164, %v6540
    %v6933 = vadd.f32 %v6165, %v6540
    %v6934 = vadd.f32 %v6166, %v6540
    %v6935 = vadd.f32 %v6167, %v6540
    %v6936 = vadd.f32 %v6168, %v6545
    %v6937 = vadd.f32 %v6169, %v6545
    %v6938 = vadd.f32 %v6170, %v6545
    %v6939 = vadd.f32 %v6171, %v6545
    %v6940 = vadd.f32 %v6172, %v6545
    %v6941 = vadd.f32 %v6173, %v6545
    %v6942 = vadd.f32 %v6174, %v6545
    %v6943 = vadd.f32 %v6175, %v6550
    %v6944 = vadd.f32 %v6176, %v6550
    %v6945 = vadd.f32 %v6177, %v6550
    %v6946 = vadd.f32 %v6178, %v6550
    %v6947 = vadd.f32 %v6179, %v6550
    %v6948 = vadd.f32 %v6180, %v6550
    %v6949 = vadd.f32 %v6181, %v6550
    %v6950 = vadd.f32 %v6182, %v6555
    %v6951 = vadd.f32 %v6183, %v6555
    %v6952 = vadd.f32 %v6184, %v6555
    %v6953 = vadd.f32 %v6185, %v6555
    %v6954 = vadd.f32 %v6186, %v6555
    %v6955 = vadd.f32 %v6187, %v6555
    %v6956 = vadd.f32 %v6188, %v6555
    %v6957 = vadd.f32 %v6189, %v6560
    %v6958 = vadd.f32 %v6190, %v6560
    %v6959 = vadd.f32 %v6191, %v6560
    %v6960 = vadd.f32 %v6192, %v6560
    %v6961 = vadd.f32 %v6193, %v6560
    %v6962 = vadd.f32 %v6194, %v6560
    %v6963 = vadd.f32 %v6195, %v6560
    %v6964 = vadd.f32 %v6196, %v6565
    %v6965 = vadd.f32 %v6197, %v6565
    %v6966 = vadd.f32 %v6198, %v6565
    %v6967 = vadd.f32 %v6199, %v6565
    %v6968 = vadd.f32 %v6200, %v6565
    %v6969 = vadd.f32 %v6201, %v6565
    %v6970 = vadd.f32 %v6202, %v6565
    %v6971 = vadd.f32 %v6203, %v6570
    %v6972 = vadd.f32 %v6204, %v6570
    %v6973 = vadd.f32 %v6205, %v6570
    %v6974 = vadd.f32 %v6206, %v6570
    %v6975 = vadd.f32 %v6207, %v6570
    %v6976 = vadd.f32 %v6208, %v6570
    %v6977 = vadd.f32 %v6209, %v6570
    %v6978 = vadd.f32 %v6210, %v6575
    %v6979 = vadd.f32 %v6211, %v6575
    %v6980 = vadd.f32 %v6212, %v6575
    %v6981 = vadd.f32 %v6213, %v6575
    %v6982 = vadd.f32 %v6214, %v6575
    %v6983 = vadd.f32 %v6215, %v6575
    %v6984 = vadd.f32 %v6216, %v6575
    %v6985 = vadd.f32 %v6217, %v6580
    %v6986 = vadd.f32 %v6218, %v6580
    %v6987 = vadd.f32 %v6219, %v6580
    %v6988 = vadd.f32 %v6220, %v6580
    %v6989 = vadd.f32 %v6221, %v6580
    %v6990 = vadd.f32 %v6222, %v6580
    %v6991 = vadd.f32 %v6223, %v6580
    %v6992 = vadd.f32 %v6224, %v6585
    %v6993 = vadd.f32 %v6225, %v6585
    %v6994 = vadd.f32 %v6226, %v6585
    %v6995 = vadd.f32 %v6227, %v6585
    %v6996 = vadd.f32 %v6228, %v6585
    %v6997 = vadd.f32 %v6229, %v6585
    %v6998 = vadd.f32 %v6230, %v6585
    %v6999 = vadd.f32 %v6231, %v6590
    %v7000 = vadd.f32 %v6232, %v6590
    %v7001 = vadd.f32 %v6233, %v6590
    %v7002 = vadd.f32 %v6234, %v6590
    %v7003 = vadd.f32 %v6235, %v6590
    %v7004 = vadd.f32 %v6236, %v6590
    %v7005 = vadd.f32 %v6237, %v6590
    %v7006 = vadd.f32 %v6238, %v6595
    %v7007 = vadd.f32 %v6239, %v6595
    %v7008 = vadd.f32 %v6240, %v6595
    %v7009 = vadd.f32 %v6241, %v6595
    %v7010 = vadd.f32 %v6242, %v6595
    %v7011 = vadd.f32 %v6243, %v6595
    %v7012 = vadd.f32 %v6244, %v6595
    %v7013 = vadd.f32 %v6245, %v6600
    %v7014 = vadd.f32 %v6246, %v6600
    %v7015 = vadd.f32 %v6247, %v6600
    %v7016 = vadd.f32 %v6248, %v6600
    %v7017 = vadd.f32 %v6249, %v6600
    %v7018 = vadd.f32 %v6250, %v6600
    %v7019 = vadd.f32 %v6251, %v6600
    %v7020 = vadd.f32 %v6252, %v6605
    %v7021 = vadd.f32 %v6253, %v6605
    %v7022 = vadd.f32 %v6254, %v6605
    %v7023 = vadd.f32 %v6255, %v6605
    %v7024 = vadd.f32 %v6256, %v6605
    %v7025 = vadd.f32 %v6257, %v6605
    %v7026 = vadd.f32 %v6258, %v6605
    %v7027 = vadd.f32 %v6259, %v6610
    %v7028 = vadd.f32 %v6260, %v6610
    %v7029 = vadd.f32 %v6261, %v6610
    %v7030 = vadd.f32 %v6262, %v6610
    %v7031 = vadd.f32 %v6263, %v6610
    %v7032 = vadd.f32 %v6264, %v6610
    %v7033 = vadd.f32 %v6265, %v6610
    %v7034 = vadd.f32 %v6266, %v6615
    %v7035 = vadd.f32 %v6267, %v6615
    %v7036 = vadd.f32 %v6268, %v6615
    %v7037 = vadd.f32 %v6269, %v6615
    %v7038 = vadd.f32 %v6270, %v6615
    %v7039 = vadd.f32 %v6271, %v6615
    %v7040 = vadd.f32 %v6272, %v6615
    %v7041 = vadd.f32 %v6273, %v6620
    %v7042 = vadd.f32 %v6274, %v6620
    %v7043 = vadd.f32 %v6275, %v6620
    %v7044 = vadd.f32 %v6276, %v6620
    %v7045 = vadd.f32 %v6277, %v6620
    %v7046 = vadd.f32 %v6278, %v6620
    %v7047 = vadd.f32 %v6279, %v6620
    %v7048 = vadd.f32 %v6280, %v6625
    %v7049 = vadd.f32 %v6281, %v6625
    %v7050 = vadd.f32 %v6282, %v6625
    %v7051 = vadd.f32 %v6283, %v6625
    %v7052 = vadd.f32 %v6284, %v6625
    %v7053 = vadd.f32 %v6285, %v6625
    %v7054 = vadd.f32 %v6286, %v6625
    %v7055 = vadd.f32 %v6287, %v6630
    %v7056 = vadd.f32 %v6288, %v6630
    %v7057 = vadd.f32 %v6289, %v6630
    %v7058 = vadd.f32 %v6290, %v6630
    %v7059 = vadd.f32 %v6291, %v6630
    %v7060 = vadd.f32 %v6292, %v6630
    %v7061 = vadd.f32 %v6293, %v6630
    %v7062 = vadd.f32 %v6294, %v6635
    %v7063 = vadd.f32 %v6295, %v6635
    %v7064 = vadd.f32 %v6296, %v6635
    %v7065 = vadd.f32 %v6297, %v6635
    %v7066 = vadd.f32 %v6298, %v6635
    %v7067 = vadd.f32 %v6299, %v6635
    %v7068 = vadd.f32 %v6300, %v6635
    %v7069 = vadd.f32 %v6301, %v6640
    %v7070 = vadd.f32 %v6302, %v6640
    %v7071 = vadd.f32 %v6303, %v6640
    %v7072 = vadd.f32 %v6304, %v6640
    %v7073 = vadd.f32 %v6305, %v6640
    %v7074 = vadd.f32 %v6306, %v6640
    %v7075 = vadd.f32 %v6307, %v6640
    %v7076 = vadd.f32 %v6308, %v6645
    %v7077 = vadd.f32 %v6309, %v6645
    %v7078 = vadd.f32 %v6310, %v6645
    %v7079 = vadd.f32 %v6311, %v6645
    %v7080 = vadd.f32 %v6312, %v6645
    %v7081 = vadd.f32 %v6313, %v6645
    %v7082 = vadd.f32 %v6314, %v6645
    %v7083 = vadd.f32 %v6315, %v6650
    %v7084 = vadd.f32 %v6316, %v6650
    %v7085 = vadd.f32 %v6317, %v6650
    %v7086 = vadd.f32 %v6318, %v6650
    %v7087 = vadd.f32 %v6319, %v6650
    %v7088 = vadd.f32 %v6320, %v6650
    %v7089 = vadd.f32 %v6321, %v6650
    %v7090 = vadd.f32 %v6322, %v6655
    %v7091 = vadd.f32 %v6323, %v6655
    %v7092 = vadd.f32 %v6324, %v6655
    %v7093 = vadd.f32 %v6325, %v6655
    %v7094 = vadd.f32 %v6326, %v6655
    %v7095 = vadd.f32 %v6327, %v6655
    %v7096 = vadd.f32 %v6328, %v6655
    %v7097 = vadd.f32 %v6329, %v6660
    %v7098 = vadd.f32 %v6330, %v6660
    %v7099 = vadd.f32 %v6331, %v6660
    %v7100 = vadd.f32 %v6332, %v6660
    %v7101 = vadd.f32 %v6333, %v6660
    %v7102 = vadd.f32 %v6334, %v6660
    %v7103 = vadd.f32 %v6335, %v6660
    %v7104 = vadd.f32 %v6336, %v6665
    %v7105 = vadd.f32 %v6337, %v6665
    %v7106 = vadd.f32 %v6338, %v6665
    %v7107 = vadd.f32 %v6339, %v6665
    %v7108 = vadd.f32 %v6340, %v6665
    %v7109 = vadd.f32 %v6341, %v6665
    %v7110 = vadd.f32 %v6342, %v6665
    %v7111 = vadd.f32 %v6343, %v6670
    %v7112 = vadd.f32 %v6344, %v6670
    %v7113 = vadd.f32 %v6345, %v6670
    %v7114 = vadd.f32 %v6346, %v6670
    %v7115 = vadd.f32 %v6347, %v6670
    %v7116 = vadd.f32 %v6348, %v6670
    %v7117 = vadd.f32 %v6349, %v6670
    %v7118 = vadd.f32 %v6350, %v6675
    %v7119 = vadd.f32 %v6351, %v6675
    %v7120 = vadd.f32 %v6352, %v6675
    %v7121 = vadd.f32 %v6353, %v6675
    %v7122 = vadd.f32 %v6354, %v6675
    %v7123 = vadd.f32 %v6355, %v6675
    %v7124 = vadd.f32 %v6356, %v6675
    %7125 = vst [vmem:[%s4] sm:$0xff] %v6677
    %7126 = vst [vmem:[%s4 + $0x8] sm:$0xff] %v6678
    %7127 = vst [vmem:[%s4 + $0x10] sm:$0xff] %v6679
    %7128 = vst [vmem:[%s4 + $0x18] sm:$0xff] %v6680
    %7129 = vst [vmem:[%s4 + $0x20] sm:$0xff] %v6681
    %7130 = vst [vmem:[%s4 + $0x28] sm:$0xff] %v6682
    %7131 = vst.msk [vmem:[%s4 + $0x30] sm:$0xff] %vm228, %v6683
    %7132 = vst [vmem:[%s4 + $0x38] sm:$0xff] %v6684
    %7133 = vst [vmem:[%s4 + $0x40] sm:$0xff] %v6685
    %7134 = vst [vmem:[%s4 + $0x48] sm:$0xff] %v6686
    %7135 = vst [vmem:[%s4 + $0x50] sm:$0xff] %v6687
    %7136 = vst [vmem:[%s4 + $0x58] sm:$0xff] %v6688
    %7137 = vst [vmem:[%s4 + $0x60] sm:$0xff] %v6689
    %7138 = vst.msk [vmem:[%s4 + $0x68] sm:$0xff] %vm228, %v6690
    %7139 = vst [vmem:[%s4 + $0x70] sm:$0xff] %v6691
    %7140 = vst [vmem:[%s4 + $0x78] sm:$0xff] %v6692
    %7141 = vst [vmem:[%s4 + $0x80] sm:$0xff] %v6693
    %7142 = vst [vmem:[%s4 + $0x88] sm:$0xff] %v6694
    %7143 = vst [vmem:[%s4 + $0x90] sm:$0xff] %v6695
    %7144 = vst [vmem:[%s4 + $0x98] sm:$0xff] %v6696
    %7145 = vst.msk [vmem:[%s4 + $0xa0] sm:$0xff] %vm228, %v6697
    %7146 = vst [vmem:[%s4 + $0xa8] sm:$0xff] %v6698
    %7147 = vst [vmem:[%s4 + $0xb0] sm:$0xff] %v6699
    %7148 = vst [vmem:[%s4 + $0xb8] sm:$0xff] %v6700
    %7149 = vst [vmem:[%s4 + $0xc0] sm:$0xff] %v6701
    %7150 = vst [vmem:[%s4 + $0xc8] sm:$0xff] %v6702
    %7151 = vst [vmem:[%s4 + $0xd0] sm:$0xff] %v6703
    %7152 = vst.msk [vmem:[%s4 + $0xd8] sm:$0xff] %vm228, %v6704
    %7153 = vst [vmem:[%s4 + $0xe0] sm:$0xff] %v6705
    %7154 = vst [vmem:[%s4 + $0xe8] sm:$0xff] %v6706
    %7155 = vst [vmem:[%s4 + $0xf0] sm:$0xff] %v6707
    %7156 = vst [vmem:[%s4 + $0xf8] sm:$0xff] %v6708
    %7157 = vst [vmem:[%s4 + $0x100] sm:$0xff] %v6709
    %7158 = vst [vmem:[%s4 + $0x108] sm:$0xff] %v6710
    %7159 = vst.msk [vmem:[%s4 + $0x110] sm:$0xff] %vm228, %v6711
    %7160 = vst [vmem:[%s4 + $0x118] sm:$0xff] %v6712
    %7161 = vst [vmem:[%s4 + $0x120] sm:$0xff] %v6713
    %7162 = vst [vmem:[%s4 + $0x128] sm:$0xff] %v6714
    %7163 = vst [vmem:[%s4 + $0x130] sm:$0xff] %v6715
    %7164 = vst [vmem:[%s4 + $0x138] sm:$0xff] %v6716
    %7165 = vst [vmem:[%s4 + $0x140] sm:$0xff] %v6717
    %7166 = vst.msk [vmem:[%s4 + $0x148] sm:$0xff] %vm228, %v6718
    %7167 = vst [vmem:[%s4 + $0x150] sm:$0xff] %v6719
    %7168 = vst [vmem:[%s4 + $0x158] sm:$0xff] %v6720
    %7169 = vst [vmem:[%s4 + $0x160] sm:$0xff] %v6721
    %7170 = vst [vmem:[%s4 + $0x168] sm:$0xff] %v6722
    %7171 = vst [vmem:[%s4 + $0x170] sm:$0xff] %v6723
    %7172 = vst [vmem:[%s4 + $0x178] sm:$0xff] %v6724
    %7173 = vst.msk [vmem:[%s4 + $0x180] sm:$0xff] %vm228, %v6725
    %7174 = vst [vmem:[%s4 + $0x188] sm:$0xff] %v6726
    %7175 = vst [vmem:[%s4 + $0x190] sm:$0xff] %v6727
    %7176 = vst [vmem:[%s4 + $0x198] sm:$0xff] %v6728
    %7177 = vst [vmem:[%s4 + $0x1a0] sm:$0xff] %v6729
    %7178 = vst [vmem:[%s4 + $0x1a8] sm:$0xff] %v6730
    %7179 = vst [vmem:[%s4 + $0x1b0] sm:$0xff] %v6731
    %7180 = vst.msk [vmem:[%s4 + $0x1b8] sm:$0xff] %vm228, %v6732
    %7181 = vst [vmem:[%s4 + $0x1c0] sm:$0xff] %v6733
    %7182 = vst [vmem:[%s4 + $0x1c8] sm:$0xff] %v6734
    %7183 = vst [vmem:[%s4 + $0x1d0] sm:$0xff] %v6735
    %7184 = vst [vmem:[%s4 + $0x1d8] sm:$0xff] %v6736
    %7185 = vst [vmem:[%s4 + $0x1e0] sm:$0xff] %v6737
    %7186 = vst [vmem:[%s4 + $0x1e8] sm:$0xff] %v6738
    %7187 = vst.msk [vmem:[%s4 + $0x1f0] sm:$0xff] %vm228, %v6739
    %7188 = vst [vmem:[%s4 + $0x1f8] sm:$0xff] %v6740
    %7189 = vst [vmem:[%s4 + $0x200] sm:$0xff] %v6741
    %7190 = vst [vmem:[%s4 + $0x208] sm:$0xff] %v6742
    %7191 = vst [vmem:[%s4 + $0x210] sm:$0xff] %v6743
    %7192 = vst [vmem:[%s4 + $0x218] sm:$0xff] %v6744
    %7193 = vst [vmem:[%s4 + $0x220] sm:$0xff] %v6745
    %7194 = vst.msk [vmem:[%s4 + $0x228] sm:$0xff] %vm228, %v6746
    %7195 = vst [vmem:[%s4 + $0x230] sm:$0xff] %v6747
    %7196 = vst [vmem:[%s4 + $0x238] sm:$0xff] %v6748
    %7197 = vst [vmem:[%s4 + $0x240] sm:$0xff] %v6749
    %7198 = vst [vmem:[%s4 + $0x248] sm:$0xff] %v6750
    %7199 = vst [vmem:[%s4 + $0x250] sm:$0xff] %v6751
    %7200 = vst [vmem:[%s4 + $0x258] sm:$0xff] %v6752
    %7201 = vst.msk [vmem:[%s4 + $0x260] sm:$0xff] %vm228, %v6753
    %7202 = vst [vmem:[%s4 + $0x268] sm:$0xff] %v6754
    %7203 = vst [vmem:[%s4 + $0x270] sm:$0xff] %v6755
    %7204 = vst [vmem:[%s4 + $0x278] sm:$0xff] %v6756
    %7205 = vst [vmem:[%s4 + $0x280] sm:$0xff] %v6757
    %7206 = vst [vmem:[%s4 + $0x288] sm:$0xff] %v6758
    %7207 = vst [vmem:[%s4 + $0x290] sm:$0xff] %v6759
    %7208 = vst.msk [vmem:[%s4 + $0x298] sm:$0xff] %vm228, %v6760
    %7209 = vst [vmem:[%s4 + $0x2a0] sm:$0xff] %v6761
    %7210 = vst [vmem:[%s4 + $0x2a8] sm:$0xff] %v6762
    %7211 = vst [vmem:[%s4 + $0x2b0] sm:$0xff] %v6763
    %7212 = vst [vmem:[%s4 + $0x2b8] sm:$0xff] %v6764
    %7213 = vst [vmem:[%s4 + $0x2c0] sm:$0xff] %v6765
    %7214 = vst [vmem:[%s4 + $0x2c8] sm:$0xff] %v6766
    %7215 = vst.msk [vmem:[%s4 + $0x2d0] sm:$0xff] %vm228, %v6767
    %7216 = vst [vmem:[%s4 + $0x2d8] sm:$0xff] %v6768
    %7217 = vst [vmem:[%s4 + $0x2e0] sm:$0xff] %v6769
    %7218 = vst [vmem:[%s4 + $0x2e8] sm:$0xff] %v6770
    %7219 = vst [vmem:[%s4 + $0x2f0] sm:$0xff] %v6771
    %7220 = vst [vmem:[%s4 + $0x2f8] sm:$0xff] %v6772
    %7221 = vst [vmem:[%s4 + $0x300] sm:$0xff] %v6773
    %7222 = vst.msk [vmem:[%s4 + $0x308] sm:$0xff] %vm228, %v6774
    %7223 = vst [vmem:[%s4 + $0x310] sm:$0xff] %v6775
    %7224 = vst [vmem:[%s4 + $0x318] sm:$0xff] %v6776
    %7225 = vst [vmem:[%s4 + $0x320] sm:$0xff] %v6777
    %7226 = vst [vmem:[%s4 + $0x328] sm:$0xff] %v6778
    %7227 = vst [vmem:[%s4 + $0x330] sm:$0xff] %v6779
    %7228 = vst [vmem:[%s4 + $0x338] sm:$0xff] %v6780
    %7229 = vst.msk [vmem:[%s4 + $0x340] sm:$0xff] %vm228, %v6781
    %7230 = vst [vmem:[%s4 + $0x348] sm:$0xff] %v6782
    %7231 = vst [vmem:[%s4 + $0x350] sm:$0xff] %v6783
    %7232 = vst [vmem:[%s4 + $0x358] sm:$0xff] %v6784
    %7233 = vst [vmem:[%s4 + $0x360] sm:$0xff] %v6785
    %7234 = vst [vmem:[%s4 + $0x368] sm:$0xff] %v6786
    %7235 = vst [vmem:[%s4 + $0x370] sm:$0xff] %v6787
    %7236 = vst.msk [vmem:[%s4 + $0x378] sm:$0xff] %vm228, %v6788
    %7237 = vst [vmem:[%s4 + $0x380] sm:$0xff] %v6789
    %7238 = vst [vmem:[%s4 + $0x388] sm:$0xff] %v6790
    %7239 = vst [vmem:[%s4 + $0x390] sm:$0xff] %v6791
    %7240 = vst [vmem:[%s4 + $0x398] sm:$0xff] %v6792
    %7241 = vst [vmem:[%s4 + $0x3a0] sm:$0xff] %v6793
    %7242 = vst [vmem:[%s4 + $0x3a8] sm:$0xff] %v6794
    %7243 = vst.msk [vmem:[%s4 + $0x3b0] sm:$0xff] %vm228, %v6795
    %7244 = vst [vmem:[%s4 + $0x3b8] sm:$0xff] %v6796
    %7245 = vst [vmem:[%s4 + $0x3c0] sm:$0xff] %v6797
    %7246 = vst [vmem:[%s4 + $0x3c8] sm:$0xff] %v6798
    %7247 = vst [vmem:[%s4 + $0x3d0] sm:$0xff] %v6799
    %7248 = vst [vmem:[%s4 + $0x3d8] sm:$0xff] %v6800
    %7249 = vst [vmem:[%s4 + $0x3e0] sm:$0xff] %v6801
    %7250 = vst.msk [vmem:[%s4 + $0x3e8] sm:$0xff] %vm228, %v6802
    %7251 = vst [vmem:[%s4 + $0x3f0] sm:$0xff] %v6803
    %7252 = vst [vmem:[%s4 + $0x3f8] sm:$0xff] %v6804
    %7253 = vst [vmem:[%s4 + $0x400] sm:$0xff] %v6805
    %7254 = vst [vmem:[%s4 + $0x408] sm:$0xff] %v6806
    %7255 = vst [vmem:[%s4 + $0x410] sm:$0xff] %v6807
    %7256 = vst [vmem:[%s4 + $0x418] sm:$0xff] %v6808
    %7257 = vst.msk [vmem:[%s4 + $0x420] sm:$0xff] %vm228, %v6809
    %7258 = vst [vmem:[%s4 + $0x428] sm:$0xff] %v6810
    %7259 = vst [vmem:[%s4 + $0x430] sm:$0xff] %v6811
    %7260 = vst [vmem:[%s4 + $0x438] sm:$0xff] %v6812
    %7261 = vst [vmem:[%s4 + $0x440] sm:$0xff] %v6813
    %7262 = vst [vmem:[%s4 + $0x448] sm:$0xff] %v6814
    %7263 = vst [vmem:[%s4 + $0x450] sm:$0xff] %v6815
    %7264 = vst.msk [vmem:[%s4 + $0x458] sm:$0xff] %vm228, %v6816
    %7265 = vst [vmem:[%s4 + $0x460] sm:$0xff] %v6817
    %7266 = vst [vmem:[%s4 + $0x468] sm:$0xff] %v6818
    %7267 = vst [vmem:[%s4 + $0x470] sm:$0xff] %v6819
    %7268 = vst [vmem:[%s4 + $0x478] sm:$0xff] %v6820
    %7269 = vst [vmem:[%s4 + $0x480] sm:$0xff] %v6821
    %7270 = vst [vmem:[%s4 + $0x488] sm:$0xff] %v6822
    %7271 = vst.msk [vmem:[%s4 + $0x490] sm:$0xff] %vm228, %v6823
    %7272 = vst [vmem:[%s4 + $0x498] sm:$0xff] %v6824
    %7273 = vst [vmem:[%s4 + $0x4a0] sm:$0xff] %v6825
    %7274 = vst [vmem:[%s4 + $0x4a8] sm:$0xff] %v6826
    %7275 = vst [vmem:[%s4 + $0x4b0] sm:$0xff] %v6827
    %7276 = vst [vmem:[%s4 + $0x4b8] sm:$0xff] %v6828
    %7277 = vst [vmem:[%s4 + $0x4c0] sm:$0xff] %v6829
    %7278 = vst.msk [vmem:[%s4 + $0x4c8] sm:$0xff] %vm228, %v6830
    %7279 = vst [vmem:[%s4 + $0x4d0] sm:$0xff] %v6831
    %7280 = vst [vmem:[%s4 + $0x4d8] sm:$0xff] %v6832
    %7281 = vst [vmem:[%s4 + $0x4e0] sm:$0xff] %v6833
    %7282 = vst [vmem:[%s4 + $0x4e8] sm:$0xff] %v6834
    %7283 = vst [vmem:[%s4 + $0x4f0] sm:$0xff] %v6835
    %7284 = vst [vmem:[%s4 + $0x4f8] sm:$0xff] %v6836
    %7285 = vst.msk [vmem:[%s4 + $0x500] sm:$0xff] %vm228, %v6837
    %7286 = vst [vmem:[%s4 + $0x508] sm:$0xff] %v6838
    %7287 = vst [vmem:[%s4 + $0x510] sm:$0xff] %v6839
    %7288 = vst [vmem:[%s4 + $0x518] sm:$0xff] %v6840
    %7289 = vst [vmem:[%s4 + $0x520] sm:$0xff] %v6841
    %7290 = vst [vmem:[%s4 + $0x528] sm:$0xff] %v6842
    %7291 = vst [vmem:[%s4 + $0x530] sm:$0xff] %v6843
    %7292 = vst.msk [vmem:[%s4 + $0x538] sm:$0xff] %vm228, %v6844
    %7293 = vst [vmem:[%s4 + $0x540] sm:$0xff] %v6845
    %7294 = vst [vmem:[%s4 + $0x548] sm:$0xff] %v6846
    %7295 = vst [vmem:[%s4 + $0x550] sm:$0xff] %v6847
    %7296 = vst [vmem:[%s4 + $0x558] sm:$0xff] %v6848
    %7297 = vst [vmem:[%s4 + $0x560] sm:$0xff] %v6849
    %7298 = vst [vmem:[%s4 + $0x568] sm:$0xff] %v6850
    %7299 = vst.msk [vmem:[%s4 + $0x570] sm:$0xff] %vm228, %v6851
    %7300 = vst [vmem:[%s4 + $0x578] sm:$0xff] %v6852
    %7301 = vst [vmem:[%s4 + $0x580] sm:$0xff] %v6853
    %7302 = vst [vmem:[%s4 + $0x588] sm:$0xff] %v6854
    %7303 = vst [vmem:[%s4 + $0x590] sm:$0xff] %v6855
    %7304 = vst [vmem:[%s4 + $0x598] sm:$0xff] %v6856
    %7305 = vst [vmem:[%s4 + $0x5a0] sm:$0xff] %v6857
    %7306 = vst.msk [vmem:[%s4 + $0x5a8] sm:$0xff] %vm228, %v6858
    %7307 = vst [vmem:[%s4 + $0x5b0] sm:$0xff] %v6859
    %7308 = vst [vmem:[%s4 + $0x5b8] sm:$0xff] %v6860
    %7309 = vst [vmem:[%s4 + $0x5c0] sm:$0xff] %v6861
    %7310 = vst [vmem:[%s4 + $0x5c8] sm:$0xff] %v6862
    %7311 = vst [vmem:[%s4 + $0x5d0] sm:$0xff] %v6863
    %7312 = vst [vmem:[%s4 + $0x5d8] sm:$0xff] %v6864
    %7313 = vst.msk [vmem:[%s4 + $0x5e0] sm:$0xff] %vm228, %v6865
    %7314 = vst [vmem:[%s4 + $0x5e8] sm:$0xff] %v6866
    %7315 = vst [vmem:[%s4 + $0x5f0] sm:$0xff] %v6867
    %7316 = vst [vmem:[%s4 + $0x5f8] sm:$0xff] %v6868
    %7317 = vst [vmem:[%s4 + $0x600] sm:$0xff] %v6869
    %7318 = vst [vmem:[%s4 + $0x608] sm:$0xff] %v6870
    %7319 = vst [vmem:[%s4 + $0x610] sm:$0xff] %v6871
    %7320 = vst.msk [vmem:[%s4 + $0x618] sm:$0xff] %vm228, %v6872
    %7321 = vst [vmem:[%s4 + $0x620] sm:$0xff] %v6873
    %7322 = vst [vmem:[%s4 + $0x628] sm:$0xff] %v6874
    %7323 = vst [vmem:[%s4 + $0x630] sm:$0xff] %v6875
    %7324 = vst [vmem:[%s4 + $0x638] sm:$0xff] %v6876
    %7325 = vst [vmem:[%s4 + $0x640] sm:$0xff] %v6877
    %7326 = vst [vmem:[%s4 + $0x648] sm:$0xff] %v6878
    %7327 = vst.msk [vmem:[%s4 + $0x650] sm:$0xff] %vm228, %v6879
    %7328 = vst [vmem:[%s4 + $0x658] sm:$0xff] %v6880
    %7329 = vst [vmem:[%s4 + $0x660] sm:$0xff] %v6881
    %7330 = vst [vmem:[%s4 + $0x668] sm:$0xff] %v6882
    %7331 = vst [vmem:[%s4 + $0x670] sm:$0xff] %v6883
    %7332 = vst [vmem:[%s4 + $0x678] sm:$0xff] %v6884
    %7333 = vst [vmem:[%s4 + $0x680] sm:$0xff] %v6885
    %7334 = vst.msk [vmem:[%s4 + $0x688] sm:$0xff] %vm228, %v6886
    %7335 = vst [vmem:[%s4 + $0x690] sm:$0xff] %v6887
    %7336 = vst [vmem:[%s4 + $0x698] sm:$0xff] %v6888
    %7337 = vst [vmem:[%s4 + $0x6a0] sm:$0xff] %v6889
    %7338 = vst [vmem:[%s4 + $0x6a8] sm:$0xff] %v6890
    %7339 = vst [vmem:[%s4 + $0x6b0] sm:$0xff] %v6891
    %7340 = vst [vmem:[%s4 + $0x6b8] sm:$0xff] %v6892
    %7341 = vst.msk [vmem:[%s4 + $0x6c0] sm:$0xff] %vm228, %v6893
    %7342 = vst [vmem:[%s4 + $0x6c8] sm:$0xff] %v6894
    %7343 = vst [vmem:[%s4 + $0x6d0] sm:$0xff] %v6895
    %7344 = vst [vmem:[%s4 + $0x6d8] sm:$0xff] %v6896
    %7345 = vst [vmem:[%s4 + $0x6e0] sm:$0xff] %v6897
    %7346 = vst [vmem:[%s4 + $0x6e8] sm:$0xff] %v6898
    %7347 = vst [vmem:[%s4 + $0x6f0] sm:$0xff] %v6899
    %7348 = vst.msk [vmem:[%s4 + $0x6f8] sm:$0xff] %vm228, %v6900
    %7349 = vst [vmem:[%s4 + $0x700] sm:$0xff] %v6901
    %7350 = vst [vmem:[%s4 + $0x708] sm:$0xff] %v6902
    %7351 = vst [vmem:[%s4 + $0x710] sm:$0xff] %v6903
    %7352 = vst [vmem:[%s4 + $0x718] sm:$0xff] %v6904
    %7353 = vst [vmem:[%s4 + $0x720] sm:$0xff] %v6905
    %7354 = vst [vmem:[%s4 + $0x728] sm:$0xff] %v6906
    %7355 = vst.msk [vmem:[%s4 + $0x730] sm:$0xff] %vm228, %v6907
    %7356 = vst [vmem:[%s4 + $0x738] sm:$0xff] %v6908
    %7357 = vst [vmem:[%s4 + $0x740] sm:$0xff] %v6909
    %7358 = vst [vmem:[%s4 + $0x748] sm:$0xff] %v6910
    %7359 = vst [vmem:[%s4 + $0x750] sm:$0xff] %v6911
    %7360 = vst [vmem:[%s4 + $0x758] sm:$0xff] %v6912
    %7361 = vst [vmem:[%s4 + $0x760] sm:$0xff] %v6913
    %7362 = vst.msk [vmem:[%s4 + $0x768] sm:$0xff] %vm228, %v6914
    %7363 = vst [vmem:[%s4 + $0x770] sm:$0xff] %v6915
    %7364 = vst [vmem:[%s4 + $0x778] sm:$0xff] %v6916
    %7365 = vst [vmem:[%s4 + $0x780] sm:$0xff] %v6917
    %7366 = vst [vmem:[%s4 + $0x788] sm:$0xff] %v6918
    %7367 = vst [vmem:[%s4 + $0x790] sm:$0xff] %v6919
    %7368 = vst [vmem:[%s4 + $0x798] sm:$0xff] %v6920
    %7369 = vst.msk [vmem:[%s4 + $0x7a0] sm:$0xff] %vm228, %v6921
    %7370 = vst [vmem:[%s4 + $0x7a8] sm:$0xff] %v6922
    %7371 = vst [vmem:[%s4 + $0x7b0] sm:$0xff] %v6923
    %7372 = vst [vmem:[%s4 + $0x7b8] sm:$0xff] %v6924
    %7373 = vst [vmem:[%s4 + $0x7c0] sm:$0xff] %v6925
    %7374 = vst [vmem:[%s4 + $0x7c8] sm:$0xff] %v6926
    %7375 = vst [vmem:[%s4 + $0x7d0] sm:$0xff] %v6927
    %7376 = vst.msk [vmem:[%s4 + $0x7d8] sm:$0xff] %vm228, %v6928
    %7377 = vst [vmem:[%s4 + $0x7e0] sm:$0xff] %v6929
    %7378 = vst [vmem:[%s4 + $0x7e8] sm:$0xff] %v6930
    %7379 = vst [vmem:[%s4 + $0x7f0] sm:$0xff] %v6931
    %7380 = vst [vmem:[%s4 + $0x7f8] sm:$0xff] %v6932
    %7381 = vst [vmem:[%s4 + $0x800] sm:$0xff] %v6933
    %7382 = vst [vmem:[%s4 + $0x808] sm:$0xff] %v6934
    %7383 = vst.msk [vmem:[%s4 + $0x810] sm:$0xff] %vm228, %v6935
    %7384 = vst [vmem:[%s4 + $0x818] sm:$0xff] %v6936
    %7385 = vst [vmem:[%s4 + $0x820] sm:$0xff] %v6937
    %7386 = vst [vmem:[%s4 + $0x828] sm:$0xff] %v6938
    %7387 = vst [vmem:[%s4 + $0x830] sm:$0xff] %v6939
    %7388 = vst [vmem:[%s4 + $0x838] sm:$0xff] %v6940
    %7389 = vst [vmem:[%s4 + $0x840] sm:$0xff] %v6941
    %7390 = vst.msk [vmem:[%s4 + $0x848] sm:$0xff] %vm228, %v6942
    %7391 = vst [vmem:[%s4 + $0x850] sm:$0xff] %v6943
    %7392 = vst [vmem:[%s4 + $0x858] sm:$0xff] %v6944
    %7393 = vst [vmem:[%s4 + $0x860] sm:$0xff] %v6945
    %7394 = vst [vmem:[%s4 + $0x868] sm:$0xff] %v6946
    %7395 = vst [vmem:[%s4 + $0x870] sm:$0xff] %v6947
    %7396 = vst [vmem:[%s4 + $0x878] sm:$0xff] %v6948
    %7397 = vst.msk [vmem:[%s4 + $0x880] sm:$0xff] %vm228, %v6949
    %7398 = vst [vmem:[%s4 + $0x888] sm:$0xff] %v6950
    %7399 = vst [vmem:[%s4 + $0x890] sm:$0xff] %v6951
    %7400 = vst [vmem:[%s4 + $0x898] sm:$0xff] %v6952
    %7401 = vst [vmem:[%s4 + $0x8a0] sm:$0xff] %v6953
    %7402 = vst [vmem:[%s4 + $0x8a8] sm:$0xff] %v6954
    %7403 = vst [vmem:[%s4 + $0x8b0] sm:$0xff] %v6955
    %7404 = vst.msk [vmem:[%s4 + $0x8b8] sm:$0xff] %vm228, %v6956
    %7405 = vst [vmem:[%s4 + $0x8c0] sm:$0xff] %v6957
    %7406 = vst [vmem:[%s4 + $0x8c8] sm:$0xff] %v6958
    %7407 = vst [vmem:[%s4 + $0x8d0] sm:$0xff] %v6959
    %7408 = vst [vmem:[%s4 + $0x8d8] sm:$0xff] %v6960
    %7409 = vst [vmem:[%s4 + $0x8e0] sm:$0xff] %v6961
    %7410 = vst [vmem:[%s4 + $0x8e8] sm:$0xff] %v6962
    %7411 = vst.msk [vmem:[%s4 + $0x8f0] sm:$0xff] %vm228, %v6963
    %7412 = vst [vmem:[%s4 + $0x8f8] sm:$0xff] %v6964
    %7413 = vst [vmem:[%s4 + $0x900] sm:$0xff] %v6965
    %7414 = vst [vmem:[%s4 + $0x908] sm:$0xff] %v6966
    %7415 = vst [vmem:[%s4 + $0x910] sm:$0xff] %v6967
    %7416 = vst [vmem:[%s4 + $0x918] sm:$0xff] %v6968
    %7417 = vst [vmem:[%s4 + $0x920] sm:$0xff] %v6969
    %7418 = vst.msk [vmem:[%s4 + $0x928] sm:$0xff] %vm228, %v6970
    %7419 = vst [vmem:[%s4 + $0x930] sm:$0xff] %v6971
    %7420 = vst [vmem:[%s4 + $0x938] sm:$0xff] %v6972
    %7421 = vst [vmem:[%s4 + $0x940] sm:$0xff] %v6973
    %7422 = vst [vmem:[%s4 + $0x948] sm:$0xff] %v6974
    %7423 = vst [vmem:[%s4 + $0x950] sm:$0xff] %v6975
    %7424 = vst [vmem:[%s4 + $0x958] sm:$0xff] %v6976
    %7425 = vst.msk [vmem:[%s4 + $0x960] sm:$0xff] %vm228, %v6977
    %7426 = vst [vmem:[%s4 + $0x968] sm:$0xff] %v6978
    %7427 = vst [vmem:[%s4 + $0x970] sm:$0xff] %v6979
    %7428 = vst [vmem:[%s4 + $0x978] sm:$0xff] %v6980
    %7429 = vst [vmem:[%s4 + $0x980] sm:$0xff] %v6981
    %7430 = vst [vmem:[%s4 + $0x988] sm:$0xff] %v6982
    %7431 = vst [vmem:[%s4 + $0x990] sm:$0xff] %v6983
    %7432 = vst.msk [vmem:[%s4 + $0x998] sm:$0xff] %vm228, %v6984
    %7433 = vst [vmem:[%s4 + $0x9a0] sm:$0xff] %v6985
    %7434 = vst [vmem:[%s4 + $0x9a8] sm:$0xff] %v6986
    %7435 = vst [vmem:[%s4 + $0x9b0] sm:$0xff] %v6987
    %7436 = vst [vmem:[%s4 + $0x9b8] sm:$0xff] %v6988
    %7437 = vst [vmem:[%s4 + $0x9c0] sm:$0xff] %v6989
    %7438 = vst [vmem:[%s4 + $0x9c8] sm:$0xff] %v6990
    %7439 = vst.msk [vmem:[%s4 + $0x9d0] sm:$0xff] %vm228, %v6991
    %7440 = vst [vmem:[%s4 + $0x9d8] sm:$0xff] %v6992
    %7441 = vst [vmem:[%s4 + $0x9e0] sm:$0xff] %v6993
    %7442 = vst [vmem:[%s4 + $0x9e8] sm:$0xff] %v6994
    %7443 = vst [vmem:[%s4 + $0x9f0] sm:$0xff] %v6995
    %7444 = vst [vmem:[%s4 + $0x9f8] sm:$0xff] %v6996
    %7445 = vst [vmem:[%s4 + $0xa00] sm:$0xff] %v6997
    %7446 = vst.msk [vmem:[%s4 + $0xa08] sm:$0xff] %vm228, %v6998
    %7447 = vst [vmem:[%s4 + $0xa10] sm:$0xff] %v6999
    %7448 = vst [vmem:[%s4 + $0xa18] sm:$0xff] %v7000
    %7449 = vst [vmem:[%s4 + $0xa20] sm:$0xff] %v7001
    %7450 = vst [vmem:[%s4 + $0xa28] sm:$0xff] %v7002
    %7451 = vst [vmem:[%s4 + $0xa30] sm:$0xff] %v7003
    %7452 = vst [vmem:[%s4 + $0xa38] sm:$0xff] %v7004
    %7453 = vst.msk [vmem:[%s4 + $0xa40] sm:$0xff] %vm228, %v7005
    %7454 = vst [vmem:[%s4 + $0xa48] sm:$0xff] %v7006
    %7455 = vst [vmem:[%s4 + $0xa50] sm:$0xff] %v7007
    %7456 = vst [vmem:[%s4 + $0xa58] sm:$0xff] %v7008
    %7457 = vst [vmem:[%s4 + $0xa60] sm:$0xff] %v7009
    %7458 = vst [vmem:[%s4 + $0xa68] sm:$0xff] %v7010
    %7459 = vst [vmem:[%s4 + $0xa70] sm:$0xff] %v7011
    %7460 = vst.msk [vmem:[%s4 + $0xa78] sm:$0xff] %vm228, %v7012
    %7461 = vst [vmem:[%s4 + $0xa80] sm:$0xff] %v7013
    %7462 = vst [vmem:[%s4 + $0xa88] sm:$0xff] %v7014
    %7463 = vst [vmem:[%s4 + $0xa90] sm:$0xff] %v7015
    %7464 = vst [vmem:[%s4 + $0xa98] sm:$0xff] %v7016
    %7465 = vst [vmem:[%s4 + $0xaa0] sm:$0xff] %v7017
    %7466 = vst [vmem:[%s4 + $0xaa8] sm:$0xff] %v7018
    %7467 = vst.msk [vmem:[%s4 + $0xab0] sm:$0xff] %vm228, %v7019
    %7468 = vst [vmem:[%s4 + $0xab8] sm:$0xff] %v7020
    %7469 = vst [vmem:[%s4 + $0xac0] sm:$0xff] %v7021
    %7470 = vst [vmem:[%s4 + $0xac8] sm:$0xff] %v7022
    %7471 = vst [vmem:[%s4 + $0xad0] sm:$0xff] %v7023
    %7472 = vst [vmem:[%s4 + $0xad8] sm:$0xff] %v7024
    %7473 = vst [vmem:[%s4 + $0xae0] sm:$0xff] %v7025
    %7474 = vst.msk [vmem:[%s4 + $0xae8] sm:$0xff] %vm228, %v7026
    %7475 = vst [vmem:[%s4 + $0xaf0] sm:$0xff] %v7027
    %7476 = vst [vmem:[%s4 + $0xaf8] sm:$0xff] %v7028
    %7477 = vst [vmem:[%s4 + $0xb00] sm:$0xff] %v7029
    %7478 = vst [vmem:[%s4 + $0xb08] sm:$0xff] %v7030
    %7479 = vst [vmem:[%s4 + $0xb10] sm:$0xff] %v7031
    %7480 = vst [vmem:[%s4 + $0xb18] sm:$0xff] %v7032
    %7481 = vst.msk [vmem:[%s4 + $0xb20] sm:$0xff] %vm228, %v7033
    %7482 = vst [vmem:[%s4 + $0xb28] sm:$0xff] %v7034
    %7483 = vst [vmem:[%s4 + $0xb30] sm:$0xff] %v7035
    %7484 = vst [vmem:[%s4 + $0xb38] sm:$0xff] %v7036
    %7485 = vst [vmem:[%s4 + $0xb40] sm:$0xff] %v7037
    %7486 = vst [vmem:[%s4 + $0xb48] sm:$0xff] %v7038
    %7487 = vst [vmem:[%s4 + $0xb50] sm:$0xff] %v7039
    %7488 = vst.msk [vmem:[%s4 + $0xb58] sm:$0xff] %vm228, %v7040
    %7489 = vst [vmem:[%s4 + $0xb60] sm:$0xff] %v7041
    %7490 = vst [vmem:[%s4 + $0xb68] sm:$0xff] %v7042
    %7491 = vst [vmem:[%s4 + $0xb70] sm:$0xff] %v7043
    %7492 = vst [vmem:[%s4 + $0xb78] sm:$0xff] %v7044
    %7493 = vst [vmem:[%s4 + $0xb80] sm:$0xff] %v7045
    %7494 = vst [vmem:[%s4 + $0xb88] sm:$0xff] %v7046
    %7495 = vst.msk [vmem:[%s4 + $0xb90] sm:$0xff] %vm228, %v7047
    %7496 = vst [vmem:[%s4 + $0xb98] sm:$0xff] %v7048
    %7497 = vst [vmem:[%s4 + $0xba0] sm:$0xff] %v7049
    %7498 = vst [vmem:[%s4 + $0xba8] sm:$0xff] %v7050
    %7499 = vst [vmem:[%s4 + $0xbb0] sm:$0xff] %v7051
    %7500 = vst [vmem:[%s4 + $0xbb8] sm:$0xff] %v7052
    %7501 = vst [vmem:[%s4 + $0xbc0] sm:$0xff] %v7053
    %7502 = vst.msk [vmem:[%s4 + $0xbc8] sm:$0xff] %vm228, %v7054
    %7503 = vst [vmem:[%s4 + $0xbd0] sm:$0xff] %v7055
    %7504 = vst [vmem:[%s4 + $0xbd8] sm:$0xff] %v7056
    %7505 = vst [vmem:[%s4 + $0xbe0] sm:$0xff] %v7057
    %7506 = vst [vmem:[%s4 + $0xbe8] sm:$0xff] %v7058
    %7507 = vst [vmem:[%s4 + $0xbf0] sm:$0xff] %v7059
    %7508 = vst [vmem:[%s4 + $0xbf8] sm:$0xff] %v7060
    %7509 = vst.msk [vmem:[%s4 + $0xc00] sm:$0xff] %vm228, %v7061
    %7510 = vst [vmem:[%s4 + $0xc08] sm:$0xff] %v7062
    %7511 = vst [vmem:[%s4 + $0xc10] sm:$0xff] %v7063
    %7512 = vst [vmem:[%s4 + $0xc18] sm:$0xff] %v7064
    %7513 = vst [vmem:[%s4 + $0xc20] sm:$0xff] %v7065
    %7514 = vst [vmem:[%s4 + $0xc28] sm:$0xff] %v7066
    %7515 = vst [vmem:[%s4 + $0xc30] sm:$0xff] %v7067
    %7516 = vst.msk [vmem:[%s4 + $0xc38] sm:$0xff] %vm228, %v7068
    %7517 = vst [vmem:[%s4 + $0xc40] sm:$0xff] %v7069
    %7518 = vst [vmem:[%s4 + $0xc48] sm:$0xff] %v7070
    %7519 = vst [vmem:[%s4 + $0xc50] sm:$0xff] %v7071
    %7520 = vst [vmem:[%s4 + $0xc58] sm:$0xff] %v7072
    %7521 = vst [vmem:[%s4 + $0xc60] sm:$0xff] %v7073
    %7522 = vst [vmem:[%s4 + $0xc68] sm:$0xff] %v7074
    %7523 = vst.msk [vmem:[%s4 + $0xc70] sm:$0xff] %vm228, %v7075
    %7524 = vst [vmem:[%s4 + $0xc78] sm:$0xff] %v7076
    %7525 = vst [vmem:[%s4 + $0xc80] sm:$0xff] %v7077
    %7526 = vst [vmem:[%s4 + $0xc88] sm:$0xff] %v7078
    %7527 = vst [vmem:[%s4 + $0xc90] sm:$0xff] %v7079
    %7528 = vst [vmem:[%s4 + $0xc98] sm:$0xff] %v7080
    %7529 = vst [vmem:[%s4 + $0xca0] sm:$0xff] %v7081
    %7530 = vst.msk [vmem:[%s4 + $0xca8] sm:$0xff] %vm228, %v7082
    %7531 = vst [vmem:[%s4 + $0xcb0] sm:$0xff] %v7083
    %7532 = vst [vmem:[%s4 + $0xcb8] sm:$0xff] %v7084
    %7533 = vst [vmem:[%s4 + $0xcc0] sm:$0xff] %v7085
    %7534 = vst [vmem:[%s4 + $0xcc8] sm:$0xff] %v7086
    %7535 = vst [vmem:[%s4 + $0xcd0] sm:$0xff] %v7087
    %7536 = vst [vmem:[%s4 + $0xcd8] sm:$0xff] %v7088
    %7537 = vst.msk [vmem:[%s4 + $0xce0] sm:$0xff] %vm228, %v7089
    %7538 = vst [vmem:[%s4 + $0xce8] sm:$0xff] %v7090
    %7539 = vst [vmem:[%s4 + $0xcf0] sm:$0xff] %v7091
    %7540 = vst [vmem:[%s4 + $0xcf8] sm:$0xff] %v7092
    %7541 = vst [vmem:[%s4 + $0xd00] sm:$0xff] %v7093
    %7542 = vst [vmem:[%s4 + $0xd08] sm:$0xff] %v7094
    %7543 = vst [vmem:[%s4 + $0xd10] sm:$0xff] %v7095
    %7544 = vst.msk [vmem:[%s4 + $0xd18] sm:$0xff] %vm228, %v7096
    %7545 = vst [vmem:[%s4 + $0xd20] sm:$0xff] %v7097
    %7546 = vst [vmem:[%s4 + $0xd28] sm:$0xff] %v7098
    %7547 = vst [vmem:[%s4 + $0xd30] sm:$0xff] %v7099
    %7548 = vst [vmem:[%s4 + $0xd38] sm:$0xff] %v7100
    %7549 = vst [vmem:[%s4 + $0xd40] sm:$0xff] %v7101
    %7550 = vst [vmem:[%s4 + $0xd48] sm:$0xff] %v7102
    %7551 = vst.msk [vmem:[%s4 + $0xd50] sm:$0xff] %vm228, %v7103
    %7552 = vst [vmem:[%s4 + $0xd58] sm:$0xff] %v7104
    %7553 = vst [vmem:[%s4 + $0xd60] sm:$0xff] %v7105
    %7554 = vst [vmem:[%s4 + $0xd68] sm:$0xff] %v7106
    %7555 = vst [vmem:[%s4 + $0xd70] sm:$0xff] %v7107
    %7556 = vst [vmem:[%s4 + $0xd78] sm:$0xff] %v7108
    %7557 = vst [vmem:[%s4 + $0xd80] sm:$0xff] %v7109
    %7558 = vst.msk [vmem:[%s4 + $0xd88] sm:$0xff] %vm228, %v7110
    %7559 = vst [vmem:[%s4 + $0xd90] sm:$0xff] %v7111
    %7560 = vst [vmem:[%s4 + $0xd98] sm:$0xff] %v7112
    %7561 = vst [vmem:[%s4 + $0xda0] sm:$0xff] %v7113
    %7562 = vst [vmem:[%s4 + $0xda8] sm:$0xff] %v7114
    %7563 = vst [vmem:[%s4 + $0xdb0] sm:$0xff] %v7115
    %7564 = vst [vmem:[%s4 + $0xdb8] sm:$0xff] %v7116
    %7565 = vst.msk [vmem:[%s4 + $0xdc0] sm:$0xff] %vm228, %v7117
    %7566 = vst [vmem:[%s4 + $0xdc8] sm:$0xff] %v7118
    %7567 = vst [vmem:[%s4 + $0xdd0] sm:$0xff] %v7119
    %7568 = vst [vmem:[%s4 + $0xdd8] sm:$0xff] %v7120
    %7569 = vst [vmem:[%s4 + $0xde0] sm:$0xff] %v7121
    %7570 = vst [vmem:[%s4 + $0xde8] sm:$0xff] %v7122
    %7571 = vst [vmem:[%s4 + $0xdf0] sm:$0xff] %v7123
    %7572 = vst.msk [vmem:[%s4 + $0xdf8] sm:$0xff] %vm228, %v7124
    // Predicated region
    $region22: #{tpu_custom_call.1} parent=1 // pred_check
      _
    $region23: #{tpu_custom_call.1} parent=1 // pred_check_branch
      %7574 = sbr.rel (0) target = $region25
    $region24: #{tpu_custom_call.1} parent=1 // pred_region
      _
    $region25: #{tpu_custom_call.1} parent=1 // pred_fallthru
      _
    // Predicated region
    $region26: #{tpu_custom_call.1} parent=1 // pred_check
      _
    $region27: #{tpu_custom_call.1} parent=1 // pred_check_branch
      %7576 = sbr.rel (0) target = $region29
    $region28: #{tpu_custom_call.1} parent=1 // pred_region
      _
    $region29: #{tpu_custom_call.1} parent=1 // pred_fallthru
      _
    %7577 = vsyncpa [#allocation3], 1

</llo_original>
